<compile_context>
chip_gen: v6e
topology: v6e:2x2x1
jax: 0.10.0
libtpu: 0.0.40
codegen_flags: <defaults>
</compile_context>

<pallas_src>
import math
import functools

import jax
import jax.numpy as jnp
import numpy as np
from jax import lax
from jax.experimental import pallas as pl
from jax.experimental.pallas import tpu as pltpu


def _round_up(x, m):
    return ((x + m - 1) // m) * m


# -----------------------------------------------------------------------------
# Fused bi-GRU stack kernel.
# Inputs : x_ref (T, B_pad, E_pad) time-major padded embeddings, then for each
#          (layer, direction): wih (F_pad, 3*H_pad) [mxu dtype],
#          whh (H_pad, 3*H_pad) [mxu dtype], bihf (1, 3*H_pad) f32 (= b_ih with
#          the r/z slabs of b_hh folded in), bhhn (1, H_pad) f32 (n-slab of
#          b_hh). Gate order [r, z, n], each gate in an aligned H_pad slab.
# Output : (B_pad, H_pad) = elementwise max over directions of the last
#          layer's final hidden state.
# Scratch: min(2, num_lyr-1) ping-pong sequence buffers (T, B_pad, D*H_pad)
#          and a per-direction input-projection slab (D, T, B_pad, 3*H_pad).
# -----------------------------------------------------------------------------
def make_bigru_kernel(num_lyr, directions, T, B_pad, H_pad, n_seq, compute_dtype):
    n_w = num_lyr * directions * 4
    HP = H_pad

    def kernel(*refs):
        x_ref = refs[0]
        w_refs = refs[1:1 + n_w]
        out_ref = refs[1 + n_w]
        scratch = refs[2 + n_w:]
        seq_bufs = scratch[:n_seq]
        gi_buf = scratch[n_seq]

        def wdx(l, d):
            base = (l * directions + d) * 4
            return (w_refs[base], w_refs[base + 1],
                    w_refs[base + 2], w_refs[base + 3])

        for l in range(num_lyr):
            in_ref = x_ref if l == 0 else seq_bufs[(l - 1) % n_seq]
            write_ref = None if l == num_lyr - 1 else seq_bufs[l % n_seq]

            # ---- Hoisted input projection: one batched MXU matmul over all
            # timesteps per (layer, direction); bf16 operands, f32 accumulate.
            # The r/z slabs of b_hh were folded into bihf on the host, so the
            # serial step below only adds the n-slab of b_hh (under the r*).
            F = in_ref.shape[-1]
            x2d = in_ref[...].reshape(T * B_pad, F).astype(compute_dtype)

            whh_vals, bhhn_vals = [], []
            for d in range(directions):
                wih_ref, whh_ref, bihf_ref, bhhn_ref = wdx(l, d)
                gi_all = jnp.dot(x2d, wih_ref[...],
                                 preferred_element_type=jnp.float32) + bihf_ref[...]
                gi_buf[d] = gi_all.reshape(T, B_pad, 3 * HP)
                # Keep W_hh / b_hh(n) resident across the unrolled time loop.
                whh_vals.append(whh_ref[...])
                bhhn_vals.append(bhhn_ref[...])

            # ---- Interleaved fwd/bwd recurrence: both directions' h @ W_hh
            # dots are issued inside the same unrolled step -> two independent
            # MXU dependency chains overlap on the latency-bound serial path.
            # TODO(synk): for large T, replace the full Python unroll with
            # lax.fori_loop(..., unroll=4..8) + pl.ds/pl.multiple_of indices to
            # bound vreg live ranges; T=8 here so full unroll is fine.
            hs = [jnp.zeros((B_pad, HP), jnp.float32) for _ in range(directions)]
            for s in range(T):
                ts = [s if d == 0 else T - 1 - s for d in range(directions)]
                ghs = [jnp.dot(hs[d].astype(compute_dtype), whh_vals[d],
                               preferred_element_type=jnp.float32)
                       for d in range(directions)]
                new_hs = []
                for d in range(directions):
                    gi = gi_buf[d, ts[d]]                 # (B_pad, 3*HP) f32
                    gh = ghs[d]
                    r = jax.nn.sigmoid(gi[:, 0:HP] + gh[:, 0:HP])
                    z = jax.nn.sigmoid(gi[:, HP:2 * HP] + gh[:, HP:2 * HP])
                    n = jnp.tanh(gi[:, 2 * HP:3 * HP]
                                 + r * (gh[:, 2 * HP:3 * HP] + bhhn_vals[d]))
                    h_new = n + z * (hs[d] - n)           # == (1-z)*n + z*h
                    if write_ref is not None:
                        write_ref[ts[d], :, d * HP:(d + 1) * HP] = h_new
                    new_hs.append(h_new)
                hs = new_hs

            if l == num_lyr - 1:
                h_last = hs[0]
                for d in range(1, directions):
                    h_last = jnp.maximum(h_last, hs[d])   # torch.max over dirs
                out_ref[...] = h_last

    return kernel


def bigru_stack(x_pad, flat_w, *, num_lyr, directions, T, B_pad, H_pad,
                compute_dtype):
    n_seq = min(2, max(num_lyr - 1, 0))
    kernel = make_bigru_kernel(num_lyr, directions, T, B_pad, H_pad, n_seq,
                               compute_dtype)
    vmem = pl.BlockSpec(memory_space=pltpu.MemorySpace.VMEM)

    scratch_shapes = (
        [pltpu.VMEM((T, B_pad, directions * H_pad), jnp.float32)] * n_seq
        + [pltpu.VMEM((directions, T, B_pad, 3 * H_pad), jnp.float32)])

    # VMEM budget for this everything-resident, grid-less design, sized against
    # the v7x 64 MiB/TC cap (2x headroom for compiler-internal scratch).
    def nbytes(a):
        return int(np.prod(a.shape)) * jnp.dtype(a.dtype).itemsize
    resident = (nbytes(x_pad) + sum(nbytes(w) for w in flat_w)
                + B_pad * H_pad * 4
                + n_seq * T * B_pad * directions * H_pad * 4
                + directions * T * B_pad * 3 * H_pad * 4)
    vmem_limit = int(min(max(2 * resident + (4 << 20), 16 << 20), 64 << 20))
    # TODO(synk): for production H/T this exceeds v7x's 64 MiB VMEM -> stream
    # per-(layer,dir) weights via memory_space=pl.ANY + pltpu.make_async_copy
    # double-buffering, and add a batch grid axis (dimension_semantics=
    # ('parallel',)) so both v7x TensorCores take half the batch.

    return pl.pallas_call(
        kernel,
        out_shape=jax.ShapeDtypeStruct((B_pad, H_pad), jnp.float32),
        in_specs=[vmem] * (1 + len(flat_w)),
        out_specs=vmem,
        scratch_shapes=scratch_shapes,
        compiler_params=pltpu.CompilerParams(vmem_limit_bytes=vmem_limit),
    )(x_pad, *flat_w)


# -----------------------------------------------------------------------------
# Host-side layout plumbing: pad/transpose PyTorch-layout GRU weights into the
# lane-dense kernel layout (each gate in its own aligned H_pad column slab;
# padded rows/cols are exactly zero so padding never contaminates real values,
# in bf16 as well). b_hh's r/z slabs are folded into the hoisted bias.
# -----------------------------------------------------------------------------
def pack_params_for_kernel(params, *, num_lyr, directions, emb_size, hid_size,
                           mxu_dtype):
    H = hid_size
    H_pad = _round_up(H, 128)
    E_pad = _round_up(emb_size, 128)
    flat = []
    for l in range(num_lyr):
        for d in range(directions):
            p = params["gru"][(l, d)]
            w_ih_t = p["w_ih"].T          # (in_size, 3H)
            w_hh_t = p["w_hh"].T          # (H, 3H)
            in_size = w_ih_t.shape[0]
            in_pad = E_pad if l == 0 else directions * H_pad

            wih_p = jnp.zeros((in_pad, 3 * H_pad), jnp.float32)
            whh_p = jnp.zeros((H_pad, 3 * H_pad), jnp.float32)
            bihf_p = jnp.zeros((1, 3 * H_pad), jnp.float32)
            bhhn_p = jnp.zeros((1, H_pad), jnp.float32)
            for g in range(3):
                col = slice(g * H_pad, g * H_pad + H)
                wg_i = w_ih_t[:, g * H:(g + 1) * H]    # (in_size, H)
                wg_h = w_hh_t[:, g * H:(g + 1) * H]    # (H, H)
                if l == 0:
                    wih_p = wih_p.at[:in_size, col].set(wg_i)
                else:
                    # layer input is [fwd | bwd] hidden, each padded to H_pad
                    for dd in range(directions):
                        wih_p = wih_p.at[dd * H_pad:dd * H_pad + H, col].set(
                            wg_i[dd * H:(dd + 1) * H])
                whh_p = whh_p.at[:H, col].set(wg_h)
                b = p["b_ih"][g * H:(g + 1) * H]
                if g < 2:      # fold b_hh r/z slabs into the hoisted projection
                    b = b + p["b_hh"][g * H:(g + 1) * H]
                bihf_p = bihf_p.at[0, col].set(b)
            bhhn_p = bhhn_p.at[0, :H].set(p["b_hh"][2 * H:3 * H])  # stays under r*
            flat += [wih_p.astype(mxu_dtype), whh_p.astype(mxu_dtype),
                     bihf_p, bhhn_p]
    return flat, H_pad, E_pad


# -----------------------------------------------------------------------------
# BaseEncoder forward (Pallas-backed). Returns (B, 1, H) like the PyTorch module.
# -----------------------------------------------------------------------------
def base_encoder_forward(x_ids, params, *, num_lyr, bidi,
                         mxu_dtype=jnp.bfloat16):
    directions = 2 if bidi else 1
    emb = params["embed"]
    B, T = x_ids.shape
    E = emb.shape[1]
    H = params["gru"][(0, 0)]["w_hh"].shape[1]

    flat_w, H_pad, E_pad = pack_params_for_kernel(
        params, num_lyr=num_lyr, directions=directions, emb_size=E,
        hid_size=H, mxu_dtype=mxu_dtype)
    B_pad = _round_up(B, 8)

    # Embedding lookup + dropout (eval mode / p=0 -> identity): plain-JAX glue.
    x_emb = jnp.take(emb, x_ids, axis=0)             # (B, T, E)
    x_tbf = jnp.transpose(x_emb, (1, 0, 2))          # (T, B, E) time-major
    x_pad = jnp.pad(x_tbf, ((0, 0), (0, B_pad - B), (0, E_pad - E)))

    h_out = bigru_stack(x_pad, flat_w, num_lyr=num_lyr, directions=directions,
                        T=T, B_pad=B_pad, H_pad=H_pad, compute_dtype=mxu_dtype)
    return h_out[:B, :H][:, None, :]                 # (B, 1, H)


# -----------------------------------------------------------------------------
# Deterministic parameter init (PyTorch nn.Embedding / nn.GRU layouts).
# -----------------------------------------------------------------------------
def init_params(key, vocab_size, emb_size, hid_size, num_lyr, bidi):
    directions = 2 if bidi else 1
    k_emb, k_gru = jax.random.split(key)
    embed = jax.random.normal(k_emb, (vocab_size, emb_size), jnp.float32)
    embed = embed.at[0].set(0.0)                     # padding_idx=0
    bound = 1.0 / math.sqrt(hid_size)
    gru = {}
    keys = jax.random.split(k_gru, num_lyr * directions * 4)
    ki = 0
    for l in range(num_lyr):
        in_size = emb_size if l == 0 else hid_size * directions
        for d in range(directions):
            w_ih = jax.random.uniform(keys[ki], (3 * hid_size, in_size),
                                      jnp.float32, -bound, bound); ki += 1
            w_hh = jax.random.uniform(keys[ki], (3 * hid_size, hid_size),
                                      jnp.float32, -bound, bound); ki += 1
            b_ih = jax.random.uniform(keys[ki], (3 * hid_size,), jnp.float32,
                                      -bound, bound); ki += 1
            b_hh = jax.random.uniform(keys[ki], (3 * hid_size,), jnp.float32,
                                      -bound, bound); ki += 1
            gru[(l, d)] = dict(w_ih=w_ih, w_hh=w_hh, b_ih=b_ih, b_hh=b_hh)
    return {"embed": embed, "gru": gru}


# -----------------------------------------------------------------------------
# Pure-JAX reference (lax.scan, PyTorch layouts) for correctness check.
# -----------------------------------------------------------------------------
def _ref_gru_dir(x_tbf, p, H):
    def step(h, x_t):
        gi = x_t @ p["w_ih"].T + p["b_ih"]
        gh = h @ p["w_hh"].T + p["b_hh"]
        r = jax.nn.sigmoid(gi[:, :H] + gh[:, :H])
        z = jax.nn.sigmoid(gi[:, H:2 * H] + gh[:, H:2 * H])
        n = jnp.tanh(gi[:, 2 * H:] + r * gh[:, 2 * H:])
        h_new = (1.0 - z) * n + z * h
        return h_new, h_new
    B = x_tbf.shape[1]
    h_fin, out = lax.scan(step, jnp.zeros((B, H), jnp.float32), x_tbf)
    return out, h_fin


def ref_forward(x_ids, params, *, num_lyr, bidi):
    directions = 2 if bidi else 1
    H = params["gru"][(0, 0)]["w_hh"].shape[1]
    emb = params["embed"]
    layer_in = jnp.transpose(jnp.take(emb, x_ids, axis=0), (1, 0, 2))
    final_hiddens = []
    for l in range(num_lyr):
        dir_outs = []
        for d in range(directions):
            p = params["gru"][(l, d)]
            seq_in = layer_in if d == 0 else layer_in[::-1]
            out_seq, h_fin = _ref_gru_dir(seq_in, p, H)
            if d == 1:
                out_seq = out_seq[::-1]
            dir_outs.append(out_seq)
            final_hiddens.append(h_fin)
        layer_in = (jnp.concatenate(dir_outs, axis=-1)
                    if directions == 2 else dir_outs[0])
    x_hid = jnp.stack(final_hiddens, axis=0)
    if directions == 2:
        x_hid = jnp.stack(
            [jnp.maximum(x_hid[2 * i], x_hid[2 * i + 1]) for i in range(num_lyr)], 0)
    return jnp.transpose(x_hid[num_lyr - 1][None], (1, 0, 2))


if __name__ == "__main__":
    # Options: num_lyr=2, bidi=True, drp=0.0 (dropout is identity in eval / p=0).
    vocab_size, emb_size, hid_size = 32, 32, 32
    num_lyr, bidi = 2, True
    batch, seq_len = 2, 8

    key = jax.random.PRNGKey(0)
    k_par, k_inp = jax.random.split(key)
    params = init_params(k_par, vocab_size, emb_size, hid_size, num_lyr, bidi)
    x_ids = jax.random.randint(k_inp, (batch, seq_len), 0, vocab_size,
                               dtype=jnp.int32)

    ref = jax.block_until_ready(
        ref_forward(x_ids, params, num_lyr=num_lyr, bidi=bidi))

    # Primary (perf) path: bf16 MXU operands, f32 accumulation / elementwise.
    fwd_bf16 = jax.jit(functools.partial(base_encoder_forward, num_lyr=num_lyr,
                                         bidi=bidi, mxu_dtype=jnp.bfloat16))
    out = jax.block_until_ready(fwd_bf16(x_ids, params))
    assert out.shape == (batch, 1, hid_size), out.shape
    # bf16 operand rounding accumulates over T steps x 2 layers -> looser tol.
    np.testing.assert_allclose(np.asarray(out), np.asarray(ref),
                               rtol=5e-2, atol=5e-2)

    # f32 MXU path: validates the kernel structure tightly against the reference.
    fwd_f32 = jax.jit(functools.partial(base_encoder_forward, num_lyr=num_lyr,
                                        bidi=bidi, mxu_dtype=jnp.float32))
    out32 = jax.block_until_ready(fwd_f32(x_ids, params))
    np.testing.assert_allclose(np.asarray(out32), np.asarray(ref),
                               rtol=1e-3, atol=1e-3)

    print("KERNEL_OK")
</pallas_src>

<mosaic_0001>
module attributes {stable_mosaic.version = 11 : i64} {
  func.func @kernel(%arg0: memref<8x8x128xf32, #tpu.memory_space<vmem>>, %arg1: memref<128x384xbf16, #tpu.memory_space<vmem>>, %arg2: memref<128x384xbf16, #tpu.memory_space<vmem>>, %arg3: memref<1x384xf32, #tpu.memory_space<vmem>>, %arg4: memref<1x128xf32, #tpu.memory_space<vmem>>, %arg5: memref<128x384xbf16, #tpu.memory_space<vmem>>, %arg6: memref<128x384xbf16, #tpu.memory_space<vmem>>, %arg7: memref<1x384xf32, #tpu.memory_space<vmem>>, %arg8: memref<1x128xf32, #tpu.memory_space<vmem>>, %arg9: memref<256x384xbf16, #tpu.memory_space<vmem>>, %arg10: memref<128x384xbf16, #tpu.memory_space<vmem>>, %arg11: memref<1x384xf32, #tpu.memory_space<vmem>>, %arg12: memref<1x128xf32, #tpu.memory_space<vmem>>, %arg13: memref<256x384xbf16, #tpu.memory_space<vmem>>, %arg14: memref<128x384xbf16, #tpu.memory_space<vmem>>, %arg15: memref<1x384xf32, #tpu.memory_space<vmem>>, %arg16: memref<1x128xf32, #tpu.memory_space<vmem>>, %arg17: memref<8x128xf32, #tpu.memory_space<vmem>>, %arg18: memref<8x8x256xf32, #tpu.memory_space<vmem>>, %arg19: memref<2x8x8x384xf32, #tpu.memory_space<vmem>>) attributes {dimension_semantics = [], scalar_prefetch = 0 : i64, scratch_operands = 2 : i64, tpu.core_type = #tpu.core_type<tc>} {
    %c0 = arith.constant 0 : index
    %c0_0 = arith.constant 0 : index
    %c0_1 = arith.constant 0 : index
    %0 = vector.load %arg0[%c0, %c0_0, %c0_1] : memref<8x8x128xf32, #tpu.memory_space<vmem>>, vector<8x8x128xf32>
    %1 = vector.shape_cast %0 : vector<8x8x128xf32> to vector<64x128xf32>
    %2 = arith.truncf %1 : vector<64x128xf32> to vector<64x128xbf16>
    %c0_2 = arith.constant 0 : index
    %c0_3 = arith.constant 0 : index
    %3 = vector.load %arg1[%c0_2, %c0_3] : memref<128x384xbf16, #tpu.memory_space<vmem>>, vector<128x384xbf16>
    %cst = arith.constant dense<0.000000e+00> : vector<64x384xf32>
    %4 = tpu.matmul %2, %3, %cst {dimension_numbers = #tpu.dot_dimension_numbers<[1], [0], [0], [1], [0, 0, 1, 1], [], []>} : vector<64x128xbf16>, vector<128x384xbf16>, vector<64x384xf32> -> vector<64x384xf32>
    %c0_4 = arith.constant 0 : index
    %c0_5 = arith.constant 0 : index
    %5 = vector.load %arg3[%c0_4, %c0_5] : memref<1x384xf32, #tpu.memory_space<vmem>>, vector<1x384xf32>
    %6 = vector.broadcast %5 : vector<1x384xf32> to vector<64x384xf32>
    %7 = arith.addf %4, %6 : vector<64x384xf32>
    %8 = vector.shape_cast %7 : vector<64x384xf32> to vector<8x8x384xf32>
    %c0_6 = arith.constant 0 : index
    %c0_7 = arith.constant 0 : index
    %c0_8 = arith.constant 0 : index
    %c0_9 = arith.constant 0 : index
    %9 = vector.load %arg19[%c0_6, %c0_7, %c0_8, %c0_9] : memref<2x8x8x384xf32, #tpu.memory_space<vmem>>, vector<1x8x8x384xf32>
    %10 = vector.shape_cast %9 : vector<1x8x8x384xf32> to vector<8x8x384xf32>
    %11 = vector.shape_cast %8 : vector<8x8x384xf32> to vector<1x8x8x384xf32>
    tpu.vector_store %arg19[%c0_6, %c0_7, %c0_8, %c0_9], %11 {strides = array<i32>} : memref<2x8x8x384xf32, #tpu.memory_space<vmem>>, vector<1x8x8x384xf32>,
    %c0_10 = arith.constant 0 : index
    %c0_11 = arith.constant 0 : index
    %12 = vector.load %arg2[%c0_10, %c0_11] : memref<128x384xbf16, #tpu.memory_space<vmem>>, vector<128x384xbf16>
    %c0_12 = arith.constant 0 : index
    %c0_13 = arith.constant 0 : index
    %13 = vector.load %arg4[%c0_12, %c0_13] : memref<1x128xf32, #tpu.memory_space<vmem>>, vector<1x128xf32>
    %c0_14 = arith.constant 0 : index
    %c0_15 = arith.constant 0 : index
    %14 = vector.load %arg5[%c0_14, %c0_15] : memref<128x384xbf16, #tpu.memory_space<vmem>>, vector<128x384xbf16>
    %cst_16 = arith.constant dense<0.000000e+00> : vector<64x384xf32>
    %15 = tpu.matmul %2, %14, %cst_16 {dimension_numbers = #tpu.dot_dimension_numbers<[1], [0], [0], [1], [0, 0, 1, 1], [], []>} : vector<64x128xbf16>, vector<128x384xbf16>, vector<64x384xf32> -> vector<64x384xf32>
    %c0_17 = arith.constant 0 : index
    %c0_18 = arith.constant 0 : index
    %16 = vector.load %arg7[%c0_17, %c0_18] : memref<1x384xf32, #tpu.memory_space<vmem>>, vector<1x384xf32>
    %17 = vector.broadcast %16 : vector<1x384xf32> to vector<64x384xf32>
    %18 = arith.addf %15, %17 : vector<64x384xf32>
    %19 = vector.shape_cast %18 : vector<64x384xf32> to vector<8x8x384xf32>
    %c1 = arith.constant 1 : index
    %c0_19 = arith.constant 0 : index
    %c0_20 = arith.constant 0 : index
    %c0_21 = arith.constant 0 : index
    %20 = vector.load %arg19[%c1, %c0_19, %c0_20, %c0_21] : memref<2x8x8x384xf32, #tpu.memory_space<vmem>>, vector<1x8x8x384xf32>
    %21 = vector.shape_cast %20 : vector<1x8x8x384xf32> to vector<8x8x384xf32>
    %22 = vector.shape_cast %19 : vector<8x8x384xf32> to vector<1x8x8x384xf32>
    tpu.vector_store %arg19[%c1, %c0_19, %c0_20, %c0_21], %22 {strides = array<i32>} : memref<2x8x8x384xf32, #tpu.memory_space<vmem>>, vector<1x8x8x384xf32>,
    %c0_22 = arith.constant 0 : index
    %c0_23 = arith.constant 0 : index
    %23 = vector.load %arg6[%c0_22, %c0_23] : memref<128x384xbf16, #tpu.memory_space<vmem>>, vector<128x384xbf16>
    %c0_24 = arith.constant 0 : index
    %c0_25 = arith.constant 0 : index
    %24 = vector.load %arg8[%c0_24, %c0_25] : memref<1x128xf32, #tpu.memory_space<vmem>>, vector<1x128xf32>
    %cst_26 = arith.constant 0.000000e+00 : f32
    %25 = vector.broadcast %cst_26 : f32 to vector<8x128xf32>
    %cst_27 = arith.constant 0.000000e+00 : f32
    %26 = vector.broadcast %cst_27 : f32 to vector<8x128xf32>
    %27 = arith.truncf %25 : vector<8x128xf32> to vector<8x128xbf16>
    %cst_28 = arith.constant dense<0.000000e+00> : vector<8x384xf32>
    %28 = tpu.matmul %27, %12, %cst_28 {dimension_numbers = #tpu.dot_dimension_numbers<[1], [0], [0], [1], [0, 0, 1, 1], [], []>} : vector<8x128xbf16>, vector<128x384xbf16>, vector<8x384xf32> -> vector<8x384xf32>
    %29 = arith.truncf %26 : vector<8x128xf32> to vector<8x128xbf16>
    %cst_29 = arith.constant dense<0.000000e+00> : vector<8x384xf32>
    %30 = tpu.matmul %29, %23, %cst_29 {dimension_numbers = #tpu.dot_dimension_numbers<[1], [0], [0], [1], [0, 0, 1, 1], [], []>} : vector<8x128xbf16>, vector<128x384xbf16>, vector<8x384xf32> -> vector<8x384xf32>
    %c0_30 = arith.constant 0 : index
    %c0_31 = arith.constant 0 : index
    %c0_32 = arith.constant 0 : index
    %c0_33 = arith.constant 0 : index
    %31 = vector.load %arg19[%c0_30, %c0_31, %c0_32, %c0_33] : memref<2x8x8x384xf32, #tpu.memory_space<vmem>>, vector<1x1x8x384xf32>
    %32 = vector.shape_cast %31 : vector<1x1x8x384xf32> to vector<8x384xf32>
    %33 = vector.extract_strided_slice %32 {offsets = [0, 0], sizes = [8, 128], strides = [1, 1]} : vector<8x384xf32> to vector<8x128xf32>
    %34 = vector.extract_strided_slice %28 {offsets = [0, 0], sizes = [8, 128], strides = [1, 1]} : vector<8x384xf32> to vector<8x128xf32>
    %35 = arith.addf %33, %34 : vector<8x128xf32>
    %36 = arith.negf %35 : vector<8x128xf32>
    %37 = math.exp %36 : vector<8x128xf32>
    %cst_34 = arith.constant 1.000000e+00 : f32
    %38 = vector.broadcast %cst_34 : f32 to vector<8x128xf32>
    %39 = arith.addf %38, %37 : vector<8x128xf32>
    %40 = arith.divf %38, %39 : vector<8x128xf32>
    %41 = vector.extract_strided_slice %32 {offsets = [0, 128], sizes = [8, 128], strides = [1, 1]} : vector<8x384xf32> to vector<8x128xf32>
    %42 = vector.extract_strided_slice %28 {offsets = [0, 128], sizes = [8, 128], strides = [1, 1]} : vector<8x384xf32> to vector<8x128xf32>
    %43 = arith.addf %41, %42 : vector<8x128xf32>
    %44 = arith.negf %43 : vector<8x128xf32>
    %45 = math.exp %44 : vector<8x128xf32>
    %cst_35 = arith.constant 1.000000e+00 : f32
    %46 = vector.broadcast %cst_35 : f32 to vector<8x128xf32>
    %47 = arith.addf %46, %45 : vector<8x128xf32>
    %48 = arith.divf %46, %47 : vector<8x128xf32>
    %49 = vector.extract_strided_slice %32 {offsets = [0, 256], sizes = [8, 128], strides = [1, 1]} : vector<8x384xf32> to vector<8x128xf32>
    %50 = vector.extract_strided_slice %28 {offsets = [0, 256], sizes = [8, 128], strides = [1, 1]} : vector<8x384xf32> to vector<8x128xf32>
    %51 = vector.broadcast %13 : vector<1x128xf32> to vector<8x128xf32>
    %52 = arith.addf %50, %51 : vector<8x128xf32>
    %53 = arith.mulf %40, %52 : vector<8x128xf32>
    %54 = arith.addf %49, %53 : vector<8x128xf32>
    %55 = math.tanh %54 : vector<8x128xf32>
    %56 = arith.subf %25, %55 : vector<8x128xf32>
    %57 = arith.mulf %48, %56 : vector<8x128xf32>
    %58 = arith.addf %55, %57 : vector<8x128xf32>
    %c0_36 = arith.constant 0 : index
    %c0_37 = arith.constant 0 : index
    %c0_38 = arith.constant 0 : index
    %59 = vector.load %arg18[%c0_36, %c0_37, %c0_38] : memref<8x8x256xf32, #tpu.memory_space<vmem>>, vector<1x8x128xf32>
    %60 = vector.shape_cast %59 : vector<1x8x128xf32> to vector<8x128xf32>
    %61 = vector.shape_cast %58 : vector<8x128xf32> to vector<1x8x128xf32>
    tpu.vector_store %arg18[%c0_36, %c0_37, %c0_38], %61 {strides = array<i32>} : memref<8x8x256xf32, #tpu.memory_space<vmem>>, vector<1x8x128xf32>,
    %c1_39 = arith.constant 1 : index
    %c7 = arith.constant 7 : index
    %c0_40 = arith.constant 0 : index
    %c0_41 = arith.constant 0 : index
    %62 = vector.load %arg19[%c1_39, %c7, %c0_40, %c0_41] : memref<2x8x8x384xf32, #tpu.memory_space<vmem>>, vector<1x1x8x384xf32>
    %63 = vector.shape_cast %62 : vector<1x1x8x384xf32> to vector<8x384xf32>
    %64 = vector.extract_strided_slice %63 {offsets = [0, 0], sizes = [8, 128], strides = [1, 1]} : vector<8x384xf32> to vector<8x128xf32>
    %65 = vector.extract_strided_slice %30 {offsets = [0, 0], sizes = [8, 128], strides = [1, 1]} : vector<8x384xf32> to vector<8x128xf32>
    %66 = arith.addf %64, %65 : vector<8x128xf32>
    %67 = arith.negf %66 : vector<8x128xf32>
    %68 = math.exp %67 : vector<8x128xf32>
    %cst_42 = arith.constant 1.000000e+00 : f32
    %69 = vector.broadcast %cst_42 : f32 to vector<8x128xf32>
    %70 = arith.addf %69, %68 : vector<8x128xf32>
    %71 = arith.divf %69, %70 : vector<8x128xf32>
    %72 = vector.extract_strided_slice %63 {offsets = [0, 128], sizes = [8, 128], strides = [1, 1]} : vector<8x384xf32> to vector<8x128xf32>
    %73 = vector.extract_strided_slice %30 {offsets = [0, 128], sizes = [8, 128], strides = [1, 1]} : vector<8x384xf32> to vector<8x128xf32>
    %74 = arith.addf %72, %73 : vector<8x128xf32>
    %75 = arith.negf %74 : vector<8x128xf32>
    %76 = math.exp %75 : vector<8x128xf32>
    %cst_43 = arith.constant 1.000000e+00 : f32
    %77 = vector.broadcast %cst_43 : f32 to vector<8x128xf32>
    %78 = arith.addf %77, %76 : vector<8x128xf32>
    %79 = arith.divf %77, %78 : vector<8x128xf32>
    %80 = vector.extract_strided_slice %63 {offsets = [0, 256], sizes = [8, 128], strides = [1, 1]} : vector<8x384xf32> to vector<8x128xf32>
    %81 = vector.extract_strided_slice %30 {offsets = [0, 256], sizes = [8, 128], strides = [1, 1]} : vector<8x384xf32> to vector<8x128xf32>
    %82 = vector.broadcast %24 : vector<1x128xf32> to vector<8x128xf32>
    %83 = arith.addf %81, %82 : vector<8x128xf32>
    %84 = arith.mulf %71, %83 : vector<8x128xf32>
    %85 = arith.addf %80, %84 : vector<8x128xf32>
    %86 = math.tanh %85 : vector<8x128xf32>
    %87 = arith.subf %26, %86 : vector<8x128xf32>
    %88 = arith.mulf %79, %87 : vector<8x128xf32>
    %89 = arith.addf %86, %88 : vector<8x128xf32>
    %c7_44 = arith.constant 7 : index
    %c0_45 = arith.constant 0 : index
    %c128 = arith.constant 128 : index
    %90 = vector.load %arg18[%c7_44, %c0_45, %c128] : memref<8x8x256xf32, #tpu.memory_space<vmem>>, vector<1x8x128xf32>
    %91 = vector.shape_cast %90 : vector<1x8x128xf32> to vector<8x128xf32>
    %92 = vector.shape_cast %89 : vector<8x128xf32> to vector<1x8x128xf32>
    tpu.vector_store %arg18[%c7_44, %c0_45, %c128], %92 {strides = array<i32>} : memref<8x8x256xf32, #tpu.memory_space<vmem>>, vector<1x8x128xf32>,
    %93 = arith.truncf %58 : vector<8x128xf32> to vector<8x128xbf16>
    %cst_46 = arith.constant dense<0.000000e+00> : vector<8x384xf32>
    %94 = tpu.matmul %93, %12, %cst_46 {dimension_numbers = #tpu.dot_dimension_numbers<[1], [0], [0], [1], [0, 0, 1, 1], [], []>} : vector<8x128xbf16>, vector<128x384xbf16>, vector<8x384xf32> -> vector<8x384xf32>
    %95 = arith.truncf %89 : vector<8x128xf32> to vector<8x128xbf16>
    %cst_47 = arith.constant dense<0.000000e+00> : vector<8x384xf32>
    %96 = tpu.matmul %95, %23, %cst_47 {dimension_numbers = #tpu.dot_dimension_numbers<[1], [0], [0], [1], [0, 0, 1, 1], [], []>} : vector<8x128xbf16>, vector<128x384xbf16>, vector<8x384xf32> -> vector<8x384xf32>
    %c0_48 = arith.constant 0 : index
    %c1_49 = arith.constant 1 : index
    %c0_50 = arith.constant 0 : index
    %c0_51 = arith.constant 0 : index
    %97 = vector.load %arg19[%c0_48, %c1_49, %c0_50, %c0_51] : memref<2x8x8x384xf32, #tpu.memory_space<vmem>>, vector<1x1x8x384xf32>
    %98 = vector.shape_cast %97 : vector<1x1x8x384xf32> to vector<8x384xf32>
    %99 = vector.extract_strided_slice %98 {offsets = [0, 0], sizes = [8, 128], strides = [1, 1]} : vector<8x384xf32> to vector<8x128xf32>
    %100 = vector.extract_strided_slice %94 {offsets = [0, 0], sizes = [8, 128], strides = [1, 1]} : vector<8x384xf32> to vector<8x128xf32>
    %101 = arith.addf %99, %100 : vector<8x128xf32>
    %102 = arith.negf %101 : vector<8x128xf32>
    %103 = math.exp %102 : vector<8x128xf32>
    %cst_52 = arith.constant 1.000000e+00 : f32
    %104 = vector.broadcast %cst_52 : f32 to vector<8x128xf32>
    %105 = arith.addf %104, %103 : vector<8x128xf32>
    %106 = arith.divf %104, %105 : vector<8x128xf32>
    %107 = vector.extract_strided_slice %98 {offsets = [0, 128], sizes = [8, 128], strides = [1, 1]} : vector<8x384xf32> to vector<8x128xf32>
    %108 = vector.extract_strided_slice %94 {offsets = [0, 128], sizes = [8, 128], strides = [1, 1]} : vector<8x384xf32> to vector<8x128xf32>
    %109 = arith.addf %107, %108 : vector<8x128xf32>
    %110 = arith.negf %109 : vector<8x128xf32>
    %111 = math.exp %110 : vector<8x128xf32>
    %cst_53 = arith.constant 1.000000e+00 : f32
    %112 = vector.broadcast %cst_53 : f32 to vector<8x128xf32>
    %113 = arith.addf %112, %111 : vector<8x128xf32>
    %114 = arith.divf %112, %113 : vector<8x128xf32>
    %115 = vector.extract_strided_slice %98 {offsets = [0, 256], sizes = [8, 128], strides = [1, 1]} : vector<8x384xf32> to vector<8x128xf32>
    %116 = vector.extract_strided_slice %94 {offsets = [0, 256], sizes = [8, 128], strides = [1, 1]} : vector<8x384xf32> to vector<8x128xf32>
    %117 = vector.broadcast %13 : vector<1x128xf32> to vector<8x128xf32>
    %118 = arith.addf %116, %117 : vector<8x128xf32>
    %119 = arith.mulf %106, %118 : vector<8x128xf32>
    %120 = arith.addf %115, %119 : vector<8x128xf32>
    %121 = math.tanh %120 : vector<8x128xf32>
    %122 = arith.subf %58, %121 : vector<8x128xf32>
    %123 = arith.mulf %114, %122 : vector<8x128xf32>
    %124 = arith.addf %121, %123 : vector<8x128xf32>
    %c1_54 = arith.constant 1 : index
    %c0_55 = arith.constant 0 : index
    %c0_56 = arith.constant 0 : index
    %125 = vector.load %arg18[%c1_54, %c0_55, %c0_56] : memref<8x8x256xf32, #tpu.memory_space<vmem>>, vector<1x8x128xf32>
    %126 = vector.shape_cast %125 : vector<1x8x128xf32> to vector<8x128xf32>
    %127 = vector.shape_cast %124 : vector<8x128xf32> to vector<1x8x128xf32>
    tpu.vector_store %arg18[%c1_54, %c0_55, %c0_56], %127 {strides = array<i32>} : memref<8x8x256xf32, #tpu.memory_space<vmem>>, vector<1x8x128xf32>,
    %c1_57 = arith.constant 1 : index
    %c6 = arith.constant 6 : index
    %c0_58 = arith.constant 0 : index
    %c0_59 = arith.constant 0 : index
    %128 = vector.load %arg19[%c1_57, %c6, %c0_58, %c0_59] : memref<2x8x8x384xf32, #tpu.memory_space<vmem>>, vector<1x1x8x384xf32>
    %129 = vector.shape_cast %128 : vector<1x1x8x384xf32> to vector<8x384xf32>
    %130 = vector.extract_strided_slice %129 {offsets = [0, 0], sizes = [8, 128], strides = [1, 1]} : vector<8x384xf32> to vector<8x128xf32>
    %131 = vector.extract_strided_slice %96 {offsets = [0, 0], sizes = [8, 128], strides = [1, 1]} : vector<8x384xf32> to vector<8x128xf32>
    %132 = arith.addf %130, %131 : vector<8x128xf32>
    %133 = arith.negf %132 : vector<8x128xf32>
    %134 = math.exp %133 : vector<8x128xf32>
    %cst_60 = arith.constant 1.000000e+00 : f32
    %135 = vector.broadcast %cst_60 : f32 to vector<8x128xf32>
    %136 = arith.addf %135, %134 : vector<8x128xf32>
    %137 = arith.divf %135, %136 : vector<8x128xf32>
    %138 = vector.extract_strided_slice %129 {offsets = [0, 128], sizes = [8, 128], strides = [1, 1]} : vector<8x384xf32> to vector<8x128xf32>
    %139 = vector.extract_strided_slice %96 {offsets = [0, 128], sizes = [8, 128], strides = [1, 1]} : vector<8x384xf32> to vector<8x128xf32>
    %140 = arith.addf %138, %139 : vector<8x128xf32>
    %141 = arith.negf %140 : vector<8x128xf32>
    %142 = math.exp %141 : vector<8x128xf32>
    %cst_61 = arith.constant 1.000000e+00 : f32
    %143 = vector.broadcast %cst_61 : f32 to vector<8x128xf32>
    %144 = arith.addf %143, %142 : vector<8x128xf32>
    %145 = arith.divf %143, %144 : vector<8x128xf32>
    %146 = vector.extract_strided_slice %129 {offsets = [0, 256], sizes = [8, 128], strides = [1, 1]} : vector<8x384xf32> to vector<8x128xf32>
    %147 = vector.extract_strided_slice %96 {offsets = [0, 256], sizes = [8, 128], strides = [1, 1]} : vector<8x384xf32> to vector<8x128xf32>
    %148 = vector.broadcast %24 : vector<1x128xf32> to vector<8x128xf32>
    %149 = arith.addf %147, %148 : vector<8x128xf32>
    %150 = arith.mulf %137, %149 : vector<8x128xf32>
    %151 = arith.addf %146, %150 : vector<8x128xf32>
    %152 = math.tanh %151 : vector<8x128xf32>
    %153 = arith.subf %89, %152 : vector<8x128xf32>
    %154 = arith.mulf %145, %153 : vector<8x128xf32>
    %155 = arith.addf %152, %154 : vector<8x128xf32>
    %c6_62 = arith.constant 6 : index
    %c0_63 = arith.constant 0 : index
    %c128_64 = arith.constant 128 : index
    %156 = vector.load %arg18[%c6_62, %c0_63, %c128_64] : memref<8x8x256xf32, #tpu.memory_space<vmem>>, vector<1x8x128xf32>
    %157 = vector.shape_cast %156 : vector<1x8x128xf32> to vector<8x128xf32>
    %158 = vector.shape_cast %155 : vector<8x128xf32> to vector<1x8x128xf32>
    tpu.vector_store %arg18[%c6_62, %c0_63, %c128_64], %158 {strides = array<i32>} : memref<8x8x256xf32, #tpu.memory_space<vmem>>, vector<1x8x128xf32>,
    %159 = arith.truncf %124 : vector<8x128xf32> to vector<8x128xbf16>
    %cst_65 = arith.constant dense<0.000000e+00> : vector<8x384xf32>
    %160 = tpu.matmul %159, %12, %cst_65 {dimension_numbers = #tpu.dot_dimension_numbers<[1], [0], [0], [1], [0, 0, 1, 1], [], []>} : vector<8x128xbf16>, vector<128x384xbf16>, vector<8x384xf32> -> vector<8x384xf32>
    %161 = arith.truncf %155 : vector<8x128xf32> to vector<8x128xbf16>
    %cst_66 = arith.constant dense<0.000000e+00> : vector<8x384xf32>
    %162 = tpu.matmul %161, %23, %cst_66 {dimension_numbers = #tpu.dot_dimension_numbers<[1], [0], [0], [1], [0, 0, 1, 1], [], []>} : vector<8x128xbf16>, vector<128x384xbf16>, vector<8x384xf32> -> vector<8x384xf32>
    %c0_67 = arith.constant 0 : index
    %c2 = arith.constant 2 : index
    %c0_68 = arith.constant 0 : index
    %c0_69 = arith.constant 0 : index
    %163 = vector.load %arg19[%c0_67, %c2, %c0_68, %c0_69] : memref<2x8x8x384xf32, #tpu.memory_space<vmem>>, vector<1x1x8x384xf32>
    %164 = vector.shape_cast %163 : vector<1x1x8x384xf32> to vector<8x384xf32>
    %165 = vector.extract_strided_slice %164 {offsets = [0, 0], sizes = [8, 128], strides = [1, 1]} : vector<8x384xf32> to vector<8x128xf32>
    %166 = vector.extract_strided_slice %160 {offsets = [0, 0], sizes = [8, 128], strides = [1, 1]} : vector<8x384xf32> to vector<8x128xf32>
    %167 = arith.addf %165, %166 : vector<8x128xf32>
    %168 = arith.negf %167 : vector<8x128xf32>
    %169 = math.exp %168 : vector<8x128xf32>
    %cst_70 = arith.constant 1.000000e+00 : f32
    %170 = vector.broadcast %cst_70 : f32 to vector<8x128xf32>
    %171 = arith.addf %170, %169 : vector<8x128xf32>
    %172 = arith.divf %170, %171 : vector<8x128xf32>
    %173 = vector.extract_strided_slice %164 {offsets = [0, 128], sizes = [8, 128], strides = [1, 1]} : vector<8x384xf32> to vector<8x128xf32>
    %174 = vector.extract_strided_slice %160 {offsets = [0, 128], sizes = [8, 128], strides = [1, 1]} : vector<8x384xf32> to vector<8x128xf32>
    %175 = arith.addf %173, %174 : vector<8x128xf32>
    %176 = arith.negf %175 : vector<8x128xf32>
    %177 = math.exp %176 : vector<8x128xf32>
    %cst_71 = arith.constant 1.000000e+00 : f32
    %178 = vector.broadcast %cst_71 : f32 to vector<8x128xf32>
    %179 = arith.addf %178, %177 : vector<8x128xf32>
    %180 = arith.divf %178, %179 : vector<8x128xf32>
    %181 = vector.extract_strided_slice %164 {offsets = [0, 256], sizes = [8, 128], strides = [1, 1]} : vector<8x384xf32> to vector<8x128xf32>
    %182 = vector.extract_strided_slice %160 {offsets = [0, 256], sizes = [8, 128], strides = [1, 1]} : vector<8x384xf32> to vector<8x128xf32>
    %183 = vector.broadcast %13 : vector<1x128xf32> to vector<8x128xf32>
    %184 = arith.addf %182, %183 : vector<8x128xf32>
    %185 = arith.mulf %172, %184 : vector<8x128xf32>
    %186 = arith.addf %181, %185 : vector<8x128xf32>
    %187 = math.tanh %186 : vector<8x128xf32>
    %188 = arith.subf %124, %187 : vector<8x128xf32>
    %189 = arith.mulf %180, %188 : vector<8x128xf32>
    %190 = arith.addf %187, %189 : vector<8x128xf32>
    %c2_72 = arith.constant 2 : index
    %c0_73 = arith.constant 0 : index
    %c0_74 = arith.constant 0 : index
    %191 = vector.load %arg18[%c2_72, %c0_73, %c0_74] : memref<8x8x256xf32, #tpu.memory_space<vmem>>, vector<1x8x128xf32>
    %192 = vector.shape_cast %191 : vector<1x8x128xf32> to vector<8x128xf32>
    %193 = vector.shape_cast %190 : vector<8x128xf32> to vector<1x8x128xf32>
    tpu.vector_store %arg18[%c2_72, %c0_73, %c0_74], %193 {strides = array<i32>} : memref<8x8x256xf32, #tpu.memory_space<vmem>>, vector<1x8x128xf32>,
    %c1_75 = arith.constant 1 : index
    %c5 = arith.constant 5 : index
    %c0_76 = arith.constant 0 : index
    %c0_77 = arith.constant 0 : index
    %194 = vector.load %arg19[%c1_75, %c5, %c0_76, %c0_77] : memref<2x8x8x384xf32, #tpu.memory_space<vmem>>, vector<1x1x8x384xf32>
    %195 = vector.shape_cast %194 : vector<1x1x8x384xf32> to vector<8x384xf32>
    %196 = vector.extract_strided_slice %195 {offsets = [0, 0], sizes = [8, 128], strides = [1, 1]} : vector<8x384xf32> to vector<8x128xf32>
    %197 = vector.extract_strided_slice %162 {offsets = [0, 0], sizes = [8, 128], strides = [1, 1]} : vector<8x384xf32> to vector<8x128xf32>
    %198 = arith.addf %196, %197 : vector<8x128xf32>
    %199 = arith.negf %198 : vector<8x128xf32>
    %200 = math.exp %199 : vector<8x128xf32>
    %cst_78 = arith.constant 1.000000e+00 : f32
    %201 = vector.broadcast %cst_78 : f32 to vector<8x128xf32>
    %202 = arith.addf %201, %200 : vector<8x128xf32>
    %203 = arith.divf %201, %202 : vector<8x128xf32>
    %204 = vector.extract_strided_slice %195 {offsets = [0, 128], sizes = [8, 128], strides = [1, 1]} : vector<8x384xf32> to vector<8x128xf32>
    %205 = vector.extract_strided_slice %162 {offsets = [0, 128], sizes = [8, 128], strides = [1, 1]} : vector<8x384xf32> to vector<8x128xf32>
    %206 = arith.addf %204, %205 : vector<8x128xf32>
    %207 = arith.negf %206 : vector<8x128xf32>
    %208 = math.exp %207 : vector<8x128xf32>
    %cst_79 = arith.constant 1.000000e+00 : f32
    %209 = vector.broadcast %cst_79 : f32 to vector<8x128xf32>
    %210 = arith.addf %209, %208 : vector<8x128xf32>
    %211 = arith.divf %209, %210 : vector<8x128xf32>
    %212 = vector.extract_strided_slice %195 {offsets = [0, 256], sizes = [8, 128], strides = [1, 1]} : vector<8x384xf32> to vector<8x128xf32>
    %213 = vector.extract_strided_slice %162 {offsets = [0, 256], sizes = [8, 128], strides = [1, 1]} : vector<8x384xf32> to vector<8x128xf32>
    %214 = vector.broadcast %24 : vector<1x128xf32> to vector<8x128xf32>
    %215 = arith.addf %213, %214 : vector<8x128xf32>
    %216 = arith.mulf %203, %215 : vector<8x128xf32>
    %217 = arith.addf %212, %216 : vector<8x128xf32>
    %218 = math.tanh %217 : vector<8x128xf32>
    %219 = arith.subf %155, %218 : vector<8x128xf32>
    %220 = arith.mulf %211, %219 : vector<8x128xf32>
    %221 = arith.addf %218, %220 : vector<8x128xf32>
    %c5_80 = arith.constant 5 : index
    %c0_81 = arith.constant 0 : index
    %c128_82 = arith.constant 128 : index
    %222 = vector.load %arg18[%c5_80, %c0_81, %c128_82] : memref<8x8x256xf32, #tpu.memory_space<vmem>>, vector<1x8x128xf32>
    %223 = vector.shape_cast %222 : vector<1x8x128xf32> to vector<8x128xf32>
    %224 = vector.shape_cast %221 : vector<8x128xf32> to vector<1x8x128xf32>
    tpu.vector_store %arg18[%c5_80, %c0_81, %c128_82], %224 {strides = array<i32>} : memref<8x8x256xf32, #tpu.memory_space<vmem>>, vector<1x8x128xf32>,
    %225 = arith.truncf %190 : vector<8x128xf32> to vector<8x128xbf16>
    %cst_83 = arith.constant dense<0.000000e+00> : vector<8x384xf32>
    %226 = tpu.matmul %225, %12, %cst_83 {dimension_numbers = #tpu.dot_dimension_numbers<[1], [0], [0], [1], [0, 0, 1, 1], [], []>} : vector<8x128xbf16>, vector<128x384xbf16>, vector<8x384xf32> -> vector<8x384xf32>
    %227 = arith.truncf %221 : vector<8x128xf32> to vector<8x128xbf16>
    %cst_84 = arith.constant dense<0.000000e+00> : vector<8x384xf32>
    %228 = tpu.matmul %227, %23, %cst_84 {dimension_numbers = #tpu.dot_dimension_numbers<[1], [0], [0], [1], [0, 0, 1, 1], [], []>} : vector<8x128xbf16>, vector<128x384xbf16>, vector<8x384xf32> -> vector<8x384xf32>
    %c0_85 = arith.constant 0 : index
    %c3 = arith.constant 3 : index
    %c0_86 = arith.constant 0 : index
    %c0_87 = arith.constant 0 : index
    %229 = vector.load %arg19[%c0_85, %c3, %c0_86, %c0_87] : memref<2x8x8x384xf32, #tpu.memory_space<vmem>>, vector<1x1x8x384xf32>
    %230 = vector.shape_cast %229 : vector<1x1x8x384xf32> to vector<8x384xf32>
    %231 = vector.extract_strided_slice %230 {offsets = [0, 0], sizes = [8, 128], strides = [1, 1]} : vector<8x384xf32> to vector<8x128xf32>
    %232 = vector.extract_strided_slice %226 {offsets = [0, 0], sizes = [8, 128], strides = [1, 1]} : vector<8x384xf32> to vector<8x128xf32>
    %233 = arith.addf %231, %232 : vector<8x128xf32>
    %234 = arith.negf %233 : vector<8x128xf32>
    %235 = math.exp %234 : vector<8x128xf32>
    %cst_88 = arith.constant 1.000000e+00 : f32
    %236 = vector.broadcast %cst_88 : f32 to vector<8x128xf32>
    %237 = arith.addf %236, %235 : vector<8x128xf32>
    %238 = arith.divf %236, %237 : vector<8x128xf32>
    %239 = vector.extract_strided_slice %230 {offsets = [0, 128], sizes = [8, 128], strides = [1, 1]} : vector<8x384xf32> to vector<8x128xf32>
    %240 = vector.extract_strided_slice %226 {offsets = [0, 128], sizes = [8, 128], strides = [1, 1]} : vector<8x384xf32> to vector<8x128xf32>
    %241 = arith.addf %239, %240 : vector<8x128xf32>
    %242 = arith.negf %241 : vector<8x128xf32>
    %243 = math.exp %242 : vector<8x128xf32>
    %cst_89 = arith.constant 1.000000e+00 : f32
    %244 = vector.broadcast %cst_89 : f32 to vector<8x128xf32>
    %245 = arith.addf %244, %243 : vector<8x128xf32>
    %246 = arith.divf %244, %245 : vector<8x128xf32>
    %247 = vector.extract_strided_slice %230 {offsets = [0, 256], sizes = [8, 128], strides = [1, 1]} : vector<8x384xf32> to vector<8x128xf32>
    %248 = vector.extract_strided_slice %226 {offsets = [0, 256], sizes = [8, 128], strides = [1, 1]} : vector<8x384xf32> to vector<8x128xf32>
    %249 = vector.broadcast %13 : vector<1x128xf32> to vector<8x128xf32>
    %250 = arith.addf %248, %249 : vector<8x128xf32>
    %251 = arith.mulf %238, %250 : vector<8x128xf32>
    %252 = arith.addf %247, %251 : vector<8x128xf32>
    %253 = math.tanh %252 : vector<8x128xf32>
    %254 = arith.subf %190, %253 : vector<8x128xf32>
    %255 = arith.mulf %246, %254 : vector<8x128xf32>
    %256 = arith.addf %253, %255 : vector<8x128xf32>
    %c3_90 = arith.constant 3 : index
    %c0_91 = arith.constant 0 : index
    %c0_92 = arith.constant 0 : index
    %257 = vector.load %arg18[%c3_90, %c0_91, %c0_92] : memref<8x8x256xf32, #tpu.memory_space<vmem>>, vector<1x8x128xf32>
    %258 = vector.shape_cast %257 : vector<1x8x128xf32> to vector<8x128xf32>
    %259 = vector.shape_cast %256 : vector<8x128xf32> to vector<1x8x128xf32>
    tpu.vector_store %arg18[%c3_90, %c0_91, %c0_92], %259 {strides = array<i32>} : memref<8x8x256xf32, #tpu.memory_space<vmem>>, vector<1x8x128xf32>,
    %c1_93 = arith.constant 1 : index
    %c4 = arith.constant 4 : index
    %c0_94 = arith.constant 0 : index
    %c0_95 = arith.constant 0 : index
    %260 = vector.load %arg19[%c1_93, %c4, %c0_94, %c0_95] : memref<2x8x8x384xf32, #tpu.memory_space<vmem>>, vector<1x1x8x384xf32>
    %261 = vector.shape_cast %260 : vector<1x1x8x384xf32> to vector<8x384xf32>
    %262 = vector.extract_strided_slice %261 {offsets = [0, 0], sizes = [8, 128], strides = [1, 1]} : vector<8x384xf32> to vector<8x128xf32>
    %263 = vector.extract_strided_slice %228 {offsets = [0, 0], sizes = [8, 128], strides = [1, 1]} : vector<8x384xf32> to vector<8x128xf32>
    %264 = arith.addf %262, %263 : vector<8x128xf32>
    %265 = arith.negf %264 : vector<8x128xf32>
    %266 = math.exp %265 : vector<8x128xf32>
    %cst_96 = arith.constant 1.000000e+00 : f32
    %267 = vector.broadcast %cst_96 : f32 to vector<8x128xf32>
    %268 = arith.addf %267, %266 : vector<8x128xf32>
    %269 = arith.divf %267, %268 : vector<8x128xf32>
    %270 = vector.extract_strided_slice %261 {offsets = [0, 128], sizes = [8, 128], strides = [1, 1]} : vector<8x384xf32> to vector<8x128xf32>
    %271 = vector.extract_strided_slice %228 {offsets = [0, 128], sizes = [8, 128], strides = [1, 1]} : vector<8x384xf32> to vector<8x128xf32>
    %272 = arith.addf %270, %271 : vector<8x128xf32>
    %273 = arith.negf %272 : vector<8x128xf32>
    %274 = math.exp %273 : vector<8x128xf32>
    %cst_97 = arith.constant 1.000000e+00 : f32
    %275 = vector.broadcast %cst_97 : f32 to vector<8x128xf32>
    %276 = arith.addf %275, %274 : vector<8x128xf32>
    %277 = arith.divf %275, %276 : vector<8x128xf32>
    %278 = vector.extract_strided_slice %261 {offsets = [0, 256], sizes = [8, 128], strides = [1, 1]} : vector<8x384xf32> to vector<8x128xf32>
    %279 = vector.extract_strided_slice %228 {offsets = [0, 256], sizes = [8, 128], strides = [1, 1]} : vector<8x384xf32> to vector<8x128xf32>
    %280 = vector.broadcast %24 : vector<1x128xf32> to vector<8x128xf32>
    %281 = arith.addf %279, %280 : vector<8x128xf32>
    %282 = arith.mulf %269, %281 : vector<8x128xf32>
    %283 = arith.addf %278, %282 : vector<8x128xf32>
    %284 = math.tanh %283 : vector<8x128xf32>
    %285 = arith.subf %221, %284 : vector<8x128xf32>
    %286 = arith.mulf %277, %285 : vector<8x128xf32>
    %287 = arith.addf %284, %286 : vector<8x128xf32>
    %c4_98 = arith.constant 4 : index
    %c0_99 = arith.constant 0 : index
    %c128_100 = arith.constant 128 : index
    %288 = vector.load %arg18[%c4_98, %c0_99, %c128_100] : memref<8x8x256xf32, #tpu.memory_space<vmem>>, vector<1x8x128xf32>
    %289 = vector.shape_cast %288 : vector<1x8x128xf32> to vector<8x128xf32>
    %290 = vector.shape_cast %287 : vector<8x128xf32> to vector<1x8x128xf32>
    tpu.vector_store %arg18[%c4_98, %c0_99, %c128_100], %290 {strides = array<i32>} : memref<8x8x256xf32, #tpu.memory_space<vmem>>, vector<1x8x128xf32>,
    %291 = arith.truncf %256 : vector<8x128xf32> to vector<8x128xbf16>
    %cst_101 = arith.constant dense<0.000000e+00> : vector<8x384xf32>
    %292 = tpu.matmul %291, %12, %cst_101 {dimension_numbers = #tpu.dot_dimension_numbers<[1], [0], [0], [1], [0, 0, 1, 1], [], []>} : vector<8x128xbf16>, vector<128x384xbf16>, vector<8x384xf32> -> vector<8x384xf32>
    %293 = arith.truncf %287 : vector<8x128xf32> to vector<8x128xbf16>
    %cst_102 = arith.constant dense<0.000000e+00> : vector<8x384xf32>
    %294 = tpu.matmul %293, %23, %cst_102 {dimension_numbers = #tpu.dot_dimension_numbers<[1], [0], [0], [1], [0, 0, 1, 1], [], []>} : vector<8x128xbf16>, vector<128x384xbf16>, vector<8x384xf32> -> vector<8x384xf32>
    %c0_103 = arith.constant 0 : index
    %c4_104 = arith.constant 4 : index
    %c0_105 = arith.constant 0 : index
    %c0_106 = arith.constant 0 : index
    %295 = vector.load %arg19[%c0_103, %c4_104, %c0_105, %c0_106] : memref<2x8x8x384xf32, #tpu.memory_space<vmem>>, vector<1x1x8x384xf32>
    %296 = vector.shape_cast %295 : vector<1x1x8x384xf32> to vector<8x384xf32>
    %297 = vector.extract_strided_slice %296 {offsets = [0, 0], sizes = [8, 128], strides = [1, 1]} : vector<8x384xf32> to vector<8x128xf32>
    %298 = vector.extract_strided_slice %292 {offsets = [0, 0], sizes = [8, 128], strides = [1, 1]} : vector<8x384xf32> to vector<8x128xf32>
    %299 = arith.addf %297, %298 : vector<8x128xf32>
    %300 = arith.negf %299 : vector<8x128xf32>
    %301 = math.exp %300 : vector<8x128xf32>
    %cst_107 = arith.constant 1.000000e+00 : f32
    %302 = vector.broadcast %cst_107 : f32 to vector<8x128xf32>
    %303 = arith.addf %302, %301 : vector<8x128xf32>
    %304 = arith.divf %302, %303 : vector<8x128xf32>
    %305 = vector.extract_strided_slice %296 {offsets = [0, 128], sizes = [8, 128], strides = [1, 1]} : vector<8x384xf32> to vector<8x128xf32>
    %306 = vector.extract_strided_slice %292 {offsets = [0, 128], sizes = [8, 128], strides = [1, 1]} : vector<8x384xf32> to vector<8x128xf32>
    %307 = arith.addf %305, %306 : vector<8x128xf32>
    %308 = arith.negf %307 : vector<8x128xf32>
    %309 = math.exp %308 : vector<8x128xf32>
    %cst_108 = arith.constant 1.000000e+00 : f32
    %310 = vector.broadcast %cst_108 : f32 to vector<8x128xf32>
    %311 = arith.addf %310, %309 : vector<8x128xf32>
    %312 = arith.divf %310, %311 : vector<8x128xf32>
    %313 = vector.extract_strided_slice %296 {offsets = [0, 256], sizes = [8, 128], strides = [1, 1]} : vector<8x384xf32> to vector<8x128xf32>
    %314 = vector.extract_strided_slice %292 {offsets = [0, 256], sizes = [8, 128], strides = [1, 1]} : vector<8x384xf32> to vector<8x128xf32>
    %315 = vector.broadcast %13 : vector<1x128xf32> to vector<8x128xf32>
    %316 = arith.addf %314, %315 : vector<8x128xf32>
    %317 = arith.mulf %304, %316 : vector<8x128xf32>
    %318 = arith.addf %313, %317 : vector<8x128xf32>
    %319 = math.tanh %318 : vector<8x128xf32>
    %320 = arith.subf %256, %319 : vector<8x128xf32>
    %321 = arith.mulf %312, %320 : vector<8x128xf32>
    %322 = arith.addf %319, %321 : vector<8x128xf32>
    %c4_109 = arith.constant 4 : index
    %c0_110 = arith.constant 0 : index
    %c0_111 = arith.constant 0 : index
    %323 = vector.load %arg18[%c4_109, %c0_110, %c0_111] : memref<8x8x256xf32, #tpu.memory_space<vmem>>, vector<1x8x128xf32>
    %324 = vector.shape_cast %323 : vector<1x8x128xf32> to vector<8x128xf32>
    %325 = vector.shape_cast %322 : vector<8x128xf32> to vector<1x8x128xf32>
    tpu.vector_store %arg18[%c4_109, %c0_110, %c0_111], %325 {strides = array<i32>} : memref<8x8x256xf32, #tpu.memory_space<vmem>>, vector<1x8x128xf32>,
    %c1_112 = arith.constant 1 : index
    %c3_113 = arith.constant 3 : index
    %c0_114 = arith.constant 0 : index
    %c0_115 = arith.constant 0 : index
    %326 = vector.load %arg19[%c1_112, %c3_113, %c0_114, %c0_115] : memref<2x8x8x384xf32, #tpu.memory_space<vmem>>, vector<1x1x8x384xf32>
    %327 = vector.shape_cast %326 : vector<1x1x8x384xf32> to vector<8x384xf32>
    %328 = vector.extract_strided_slice %327 {offsets = [0, 0], sizes = [8, 128], strides = [1, 1]} : vector<8x384xf32> to vector<8x128xf32>
    %329 = vector.extract_strided_slice %294 {offsets = [0, 0], sizes = [8, 128], strides = [1, 1]} : vector<8x384xf32> to vector<8x128xf32>
    %330 = arith.addf %328, %329 : vector<8x128xf32>
    %331 = arith.negf %330 : vector<8x128xf32>
    %332 = math.exp %331 : vector<8x128xf32>
    %cst_116 = arith.constant 1.000000e+00 : f32
    %333 = vector.broadcast %cst_116 : f32 to vector<8x128xf32>
    %334 = arith.addf %333, %332 : vector<8x128xf32>
    %335 = arith.divf %333, %334 : vector<8x128xf32>
    %336 = vector.extract_strided_slice %327 {offsets = [0, 128], sizes = [8, 128], strides = [1, 1]} : vector<8x384xf32> to vector<8x128xf32>
    %337 = vector.extract_strided_slice %294 {offsets = [0, 128], sizes = [8, 128], strides = [1, 1]} : vector<8x384xf32> to vector<8x128xf32>
    %338 = arith.addf %336, %337 : vector<8x128xf32>
    %339 = arith.negf %338 : vector<8x128xf32>
    %340 = math.exp %339 : vector<8x128xf32>
    %cst_117 = arith.constant 1.000000e+00 : f32
    %341 = vector.broadcast %cst_117 : f32 to vector<8x128xf32>
    %342 = arith.addf %341, %340 : vector<8x128xf32>
    %343 = arith.divf %341, %342 : vector<8x128xf32>
    %344 = vector.extract_strided_slice %327 {offsets = [0, 256], sizes = [8, 128], strides = [1, 1]} : vector<8x384xf32> to vector<8x128xf32>
    %345 = vector.extract_strided_slice %294 {offsets = [0, 256], sizes = [8, 128], strides = [1, 1]} : vector<8x384xf32> to vector<8x128xf32>
    %346 = vector.broadcast %24 : vector<1x128xf32> to vector<8x128xf32>
    %347 = arith.addf %345, %346 : vector<8x128xf32>
    %348 = arith.mulf %335, %347 : vector<8x128xf32>
    %349 = arith.addf %344, %348 : vector<8x128xf32>
    %350 = math.tanh %349 : vector<8x128xf32>
    %351 = arith.subf %287, %350 : vector<8x128xf32>
    %352 = arith.mulf %343, %351 : vector<8x128xf32>
    %353 = arith.addf %350, %352 : vector<8x128xf32>
    %c3_118 = arith.constant 3 : index
    %c0_119 = arith.constant 0 : index
    %c128_120 = arith.constant 128 : index
    %354 = vector.load %arg18[%c3_118, %c0_119, %c128_120] : memref<8x8x256xf32, #tpu.memory_space<vmem>>, vector<1x8x128xf32>
    %355 = vector.shape_cast %354 : vector<1x8x128xf32> to vector<8x128xf32>
    %356 = vector.shape_cast %353 : vector<8x128xf32> to vector<1x8x128xf32>
    tpu.vector_store %arg18[%c3_118, %c0_119, %c128_120], %356 {strides = array<i32>} : memref<8x8x256xf32, #tpu.memory_space<vmem>>, vector<1x8x128xf32>,
    %357 = arith.truncf %322 : vector<8x128xf32> to vector<8x128xbf16>
    %cst_121 = arith.constant dense<0.000000e+00> : vector<8x384xf32>
    %358 = tpu.matmul %357, %12, %cst_121 {dimension_numbers = #tpu.dot_dimension_numbers<[1], [0], [0], [1], [0, 0, 1, 1], [], []>} : vector<8x128xbf16>, vector<128x384xbf16>, vector<8x384xf32> -> vector<8x384xf32>
    %359 = arith.truncf %353 : vector<8x128xf32> to vector<8x128xbf16>
    %cst_122 = arith.constant dense<0.000000e+00> : vector<8x384xf32>
    %360 = tpu.matmul %359, %23, %cst_122 {dimension_numbers = #tpu.dot_dimension_numbers<[1], [0], [0], [1], [0, 0, 1, 1], [], []>} : vector<8x128xbf16>, vector<128x384xbf16>, vector<8x384xf32> -> vector<8x384xf32>
    %c0_123 = arith.constant 0 : index
    %c5_124 = arith.constant 5 : index
    %c0_125 = arith.constant 0 : index
    %c0_126 = arith.constant 0 : index
    %361 = vector.load %arg19[%c0_123, %c5_124, %c0_125, %c0_126] : memref<2x8x8x384xf32, #tpu.memory_space<vmem>>, vector<1x1x8x384xf32>
    %362 = vector.shape_cast %361 : vector<1x1x8x384xf32> to vector<8x384xf32>
    %363 = vector.extract_strided_slice %362 {offsets = [0, 0], sizes = [8, 128], strides = [1, 1]} : vector<8x384xf32> to vector<8x128xf32>
    %364 = vector.extract_strided_slice %358 {offsets = [0, 0], sizes = [8, 128], strides = [1, 1]} : vector<8x384xf32> to vector<8x128xf32>
    %365 = arith.addf %363, %364 : vector<8x128xf32>
    %366 = arith.negf %365 : vector<8x128xf32>
    %367 = math.exp %366 : vector<8x128xf32>
    %cst_127 = arith.constant 1.000000e+00 : f32
    %368 = vector.broadcast %cst_127 : f32 to vector<8x128xf32>
    %369 = arith.addf %368, %367 : vector<8x128xf32>
    %370 = arith.divf %368, %369 : vector<8x128xf32>
    %371 = vector.extract_strided_slice %362 {offsets = [0, 128], sizes = [8, 128], strides = [1, 1]} : vector<8x384xf32> to vector<8x128xf32>
    %372 = vector.extract_strided_slice %358 {offsets = [0, 128], sizes = [8, 128], strides = [1, 1]} : vector<8x384xf32> to vector<8x128xf32>
    %373 = arith.addf %371, %372 : vector<8x128xf32>
    %374 = arith.negf %373 : vector<8x128xf32>
    %375 = math.exp %374 : vector<8x128xf32>
    %cst_128 = arith.constant 1.000000e+00 : f32
    %376 = vector.broadcast %cst_128 : f32 to vector<8x128xf32>
    %377 = arith.addf %376, %375 : vector<8x128xf32>
    %378 = arith.divf %376, %377 : vector<8x128xf32>
    %379 = vector.extract_strided_slice %362 {offsets = [0, 256], sizes = [8, 128], strides = [1, 1]} : vector<8x384xf32> to vector<8x128xf32>
    %380 = vector.extract_strided_slice %358 {offsets = [0, 256], sizes = [8, 128], strides = [1, 1]} : vector<8x384xf32> to vector<8x128xf32>
    %381 = vector.broadcast %13 : vector<1x128xf32> to vector<8x128xf32>
    %382 = arith.addf %380, %381 : vector<8x128xf32>
    %383 = arith.mulf %370, %382 : vector<8x128xf32>
    %384 = arith.addf %379, %383 : vector<8x128xf32>
    %385 = math.tanh %384 : vector<8x128xf32>
    %386 = arith.subf %322, %385 : vector<8x128xf32>
    %387 = arith.mulf %378, %386 : vector<8x128xf32>
    %388 = arith.addf %385, %387 : vector<8x128xf32>
    %c5_129 = arith.constant 5 : index
    %c0_130 = arith.constant 0 : index
    %c0_131 = arith.constant 0 : index
    %389 = vector.load %arg18[%c5_129, %c0_130, %c0_131] : memref<8x8x256xf32, #tpu.memory_space<vmem>>, vector<1x8x128xf32>
    %390 = vector.shape_cast %389 : vector<1x8x128xf32> to vector<8x128xf32>
    %391 = vector.shape_cast %388 : vector<8x128xf32> to vector<1x8x128xf32>
    tpu.vector_store %arg18[%c5_129, %c0_130, %c0_131], %391 {strides = array<i32>} : memref<8x8x256xf32, #tpu.memory_space<vmem>>, vector<1x8x128xf32>,
    %c1_132 = arith.constant 1 : index
    %c2_133 = arith.constant 2 : index
    %c0_134 = arith.constant 0 : index
    %c0_135 = arith.constant 0 : index
    %392 = vector.load %arg19[%c1_132, %c2_133, %c0_134, %c0_135] : memref<2x8x8x384xf32, #tpu.memory_space<vmem>>, vector<1x1x8x384xf32>
    %393 = vector.shape_cast %392 : vector<1x1x8x384xf32> to vector<8x384xf32>
    %394 = vector.extract_strided_slice %393 {offsets = [0, 0], sizes = [8, 128], strides = [1, 1]} : vector<8x384xf32> to vector<8x128xf32>
    %395 = vector.extract_strided_slice %360 {offsets = [0, 0], sizes = [8, 128], strides = [1, 1]} : vector<8x384xf32> to vector<8x128xf32>
    %396 = arith.addf %394, %395 : vector<8x128xf32>
    %397 = arith.negf %396 : vector<8x128xf32>
    %398 = math.exp %397 : vector<8x128xf32>
    %cst_136 = arith.constant 1.000000e+00 : f32
    %399 = vector.broadcast %cst_136 : f32 to vector<8x128xf32>
    %400 = arith.addf %399, %398 : vector<8x128xf32>
    %401 = arith.divf %399, %400 : vector<8x128xf32>
    %402 = vector.extract_strided_slice %393 {offsets = [0, 128], sizes = [8, 128], strides = [1, 1]} : vector<8x384xf32> to vector<8x128xf32>
    %403 = vector.extract_strided_slice %360 {offsets = [0, 128], sizes = [8, 128], strides = [1, 1]} : vector<8x384xf32> to vector<8x128xf32>
    %404 = arith.addf %402, %403 : vector<8x128xf32>
    %405 = arith.negf %404 : vector<8x128xf32>
    %406 = math.exp %405 : vector<8x128xf32>
    %cst_137 = arith.constant 1.000000e+00 : f32
    %407 = vector.broadcast %cst_137 : f32 to vector<8x128xf32>
    %408 = arith.addf %407, %406 : vector<8x128xf32>
    %409 = arith.divf %407, %408 : vector<8x128xf32>
    %410 = vector.extract_strided_slice %393 {offsets = [0, 256], sizes = [8, 128], strides = [1, 1]} : vector<8x384xf32> to vector<8x128xf32>
    %411 = vector.extract_strided_slice %360 {offsets = [0, 256], sizes = [8, 128], strides = [1, 1]} : vector<8x384xf32> to vector<8x128xf32>
    %412 = vector.broadcast %24 : vector<1x128xf32> to vector<8x128xf32>
    %413 = arith.addf %411, %412 : vector<8x128xf32>
    %414 = arith.mulf %401, %413 : vector<8x128xf32>
    %415 = arith.addf %410, %414 : vector<8x128xf32>
    %416 = math.tanh %415 : vector<8x128xf32>
    %417 = arith.subf %353, %416 : vector<8x128xf32>
    %418 = arith.mulf %409, %417 : vector<8x128xf32>
    %419 = arith.addf %416, %418 : vector<8x128xf32>
    %c2_138 = arith.constant 2 : index
    %c0_139 = arith.constant 0 : index
    %c128_140 = arith.constant 128 : index
    %420 = vector.load %arg18[%c2_138, %c0_139, %c128_140] : memref<8x8x256xf32, #tpu.memory_space<vmem>>, vector<1x8x128xf32>
    %421 = vector.shape_cast %420 : vector<1x8x128xf32> to vector<8x128xf32>
    %422 = vector.shape_cast %419 : vector<8x128xf32> to vector<1x8x128xf32>
    tpu.vector_store %arg18[%c2_138, %c0_139, %c128_140], %422 {strides = array<i32>} : memref<8x8x256xf32, #tpu.memory_space<vmem>>, vector<1x8x128xf32>,
    %423 = arith.truncf %388 : vector<8x128xf32> to vector<8x128xbf16>
    %cst_141 = arith.constant dense<0.000000e+00> : vector<8x384xf32>
    %424 = tpu.matmul %423, %12, %cst_141 {dimension_numbers = #tpu.dot_dimension_numbers<[1], [0], [0], [1], [0, 0, 1, 1], [], []>} : vector<8x128xbf16>, vector<128x384xbf16>, vector<8x384xf32> -> vector<8x384xf32>
    %425 = arith.truncf %419 : vector<8x128xf32> to vector<8x128xbf16>
    %cst_142 = arith.constant dense<0.000000e+00> : vector<8x384xf32>
    %426 = tpu.matmul %425, %23, %cst_142 {dimension_numbers = #tpu.dot_dimension_numbers<[1], [0], [0], [1], [0, 0, 1, 1], [], []>} : vector<8x128xbf16>, vector<128x384xbf16>, vector<8x384xf32> -> vector<8x384xf32>
    %c0_143 = arith.constant 0 : index
    %c6_144 = arith.constant 6 : index
    %c0_145 = arith.constant 0 : index
    %c0_146 = arith.constant 0 : index
    %427 = vector.load %arg19[%c0_143, %c6_144, %c0_145, %c0_146] : memref<2x8x8x384xf32, #tpu.memory_space<vmem>>, vector<1x1x8x384xf32>
    %428 = vector.shape_cast %427 : vector<1x1x8x384xf32> to vector<8x384xf32>
    %429 = vector.extract_strided_slice %428 {offsets = [0, 0], sizes = [8, 128], strides = [1, 1]} : vector<8x384xf32> to vector<8x128xf32>
    %430 = vector.extract_strided_slice %424 {offsets = [0, 0], sizes = [8, 128], strides = [1, 1]} : vector<8x384xf32> to vector<8x128xf32>
    %431 = arith.addf %429, %430 : vector<8x128xf32>
    %432 = arith.negf %431 : vector<8x128xf32>
    %433 = math.exp %432 : vector<8x128xf32>
    %cst_147 = arith.constant 1.000000e+00 : f32
    %434 = vector.broadcast %cst_147 : f32 to vector<8x128xf32>
    %435 = arith.addf %434, %433 : vector<8x128xf32>
    %436 = arith.divf %434, %435 : vector<8x128xf32>
    %437 = vector.extract_strided_slice %428 {offsets = [0, 128], sizes = [8, 128], strides = [1, 1]} : vector<8x384xf32> to vector<8x128xf32>
    %438 = vector.extract_strided_slice %424 {offsets = [0, 128], sizes = [8, 128], strides = [1, 1]} : vector<8x384xf32> to vector<8x128xf32>
    %439 = arith.addf %437, %438 : vector<8x128xf32>
    %440 = arith.negf %439 : vector<8x128xf32>
    %441 = math.exp %440 : vector<8x128xf32>
    %cst_148 = arith.constant 1.000000e+00 : f32
    %442 = vector.broadcast %cst_148 : f32 to vector<8x128xf32>
    %443 = arith.addf %442, %441 : vector<8x128xf32>
    %444 = arith.divf %442, %443 : vector<8x128xf32>
    %445 = vector.extract_strided_slice %428 {offsets = [0, 256], sizes = [8, 128], strides = [1, 1]} : vector<8x384xf32> to vector<8x128xf32>
    %446 = vector.extract_strided_slice %424 {offsets = [0, 256], sizes = [8, 128], strides = [1, 1]} : vector<8x384xf32> to vector<8x128xf32>
    %447 = vector.broadcast %13 : vector<1x128xf32> to vector<8x128xf32>
    %448 = arith.addf %446, %447 : vector<8x128xf32>
    %449 = arith.mulf %436, %448 : vector<8x128xf32>
    %450 = arith.addf %445, %449 : vector<8x128xf32>
    %451 = math.tanh %450 : vector<8x128xf32>
    %452 = arith.subf %388, %451 : vector<8x128xf32>
    %453 = arith.mulf %444, %452 : vector<8x128xf32>
    %454 = arith.addf %451, %453 : vector<8x128xf32>
    %c6_149 = arith.constant 6 : index
    %c0_150 = arith.constant 0 : index
    %c0_151 = arith.constant 0 : index
    %455 = vector.load %arg18[%c6_149, %c0_150, %c0_151] : memref<8x8x256xf32, #tpu.memory_space<vmem>>, vector<1x8x128xf32>
    %456 = vector.shape_cast %455 : vector<1x8x128xf32> to vector<8x128xf32>
    %457 = vector.shape_cast %454 : vector<8x128xf32> to vector<1x8x128xf32>
    tpu.vector_store %arg18[%c6_149, %c0_150, %c0_151], %457 {strides = array<i32>} : memref<8x8x256xf32, #tpu.memory_space<vmem>>, vector<1x8x128xf32>,
    %c1_152 = arith.constant 1 : index
    %c1_153 = arith.constant 1 : index
    %c0_154 = arith.constant 0 : index
    %c0_155 = arith.constant 0 : index
    %458 = vector.load %arg19[%c1_152, %c1_153, %c0_154, %c0_155] : memref<2x8x8x384xf32, #tpu.memory_space<vmem>>, vector<1x1x8x384xf32>
    %459 = vector.shape_cast %458 : vector<1x1x8x384xf32> to vector<8x384xf32>
    %460 = vector.extract_strided_slice %459 {offsets = [0, 0], sizes = [8, 128], strides = [1, 1]} : vector<8x384xf32> to vector<8x128xf32>
    %461 = vector.extract_strided_slice %426 {offsets = [0, 0], sizes = [8, 128], strides = [1, 1]} : vector<8x384xf32> to vector<8x128xf32>
    %462 = arith.addf %460, %461 : vector<8x128xf32>
    %463 = arith.negf %462 : vector<8x128xf32>
    %464 = math.exp %463 : vector<8x128xf32>
    %cst_156 = arith.constant 1.000000e+00 : f32
    %465 = vector.broadcast %cst_156 : f32 to vector<8x128xf32>
    %466 = arith.addf %465, %464 : vector<8x128xf32>
    %467 = arith.divf %465, %466 : vector<8x128xf32>
    %468 = vector.extract_strided_slice %459 {offsets = [0, 128], sizes = [8, 128], strides = [1, 1]} : vector<8x384xf32> to vector<8x128xf32>
    %469 = vector.extract_strided_slice %426 {offsets = [0, 128], sizes = [8, 128], strides = [1, 1]} : vector<8x384xf32> to vector<8x128xf32>
    %470 = arith.addf %468, %469 : vector<8x128xf32>
    %471 = arith.negf %470 : vector<8x128xf32>
    %472 = math.exp %471 : vector<8x128xf32>
    %cst_157 = arith.constant 1.000000e+00 : f32
    %473 = vector.broadcast %cst_157 : f32 to vector<8x128xf32>
    %474 = arith.addf %473, %472 : vector<8x128xf32>
    %475 = arith.divf %473, %474 : vector<8x128xf32>
    %476 = vector.extract_strided_slice %459 {offsets = [0, 256], sizes = [8, 128], strides = [1, 1]} : vector<8x384xf32> to vector<8x128xf32>
    %477 = vector.extract_strided_slice %426 {offsets = [0, 256], sizes = [8, 128], strides = [1, 1]} : vector<8x384xf32> to vector<8x128xf32>
    %478 = vector.broadcast %24 : vector<1x128xf32> to vector<8x128xf32>
    %479 = arith.addf %477, %478 : vector<8x128xf32>
    %480 = arith.mulf %467, %479 : vector<8x128xf32>
    %481 = arith.addf %476, %480 : vector<8x128xf32>
    %482 = math.tanh %481 : vector<8x128xf32>
    %483 = arith.subf %419, %482 : vector<8x128xf32>
    %484 = arith.mulf %475, %483 : vector<8x128xf32>
    %485 = arith.addf %482, %484 : vector<8x128xf32>
    %c1_158 = arith.constant 1 : index
    %c0_159 = arith.constant 0 : index
    %c128_160 = arith.constant 128 : index
    %486 = vector.load %arg18[%c1_158, %c0_159, %c128_160] : memref<8x8x256xf32, #tpu.memory_space<vmem>>, vector<1x8x128xf32>
    %487 = vector.shape_cast %486 : vector<1x8x128xf32> to vector<8x128xf32>
    %488 = vector.shape_cast %485 : vector<8x128xf32> to vector<1x8x128xf32>
    tpu.vector_store %arg18[%c1_158, %c0_159, %c128_160], %488 {strides = array<i32>} : memref<8x8x256xf32, #tpu.memory_space<vmem>>, vector<1x8x128xf32>,
    %489 = arith.truncf %454 : vector<8x128xf32> to vector<8x128xbf16>
    %cst_161 = arith.constant dense<0.000000e+00> : vector<8x384xf32>
    %490 = tpu.matmul %489, %12, %cst_161 {dimension_numbers = #tpu.dot_dimension_numbers<[1], [0], [0], [1], [0, 0, 1, 1], [], []>} : vector<8x128xbf16>, vector<128x384xbf16>, vector<8x384xf32> -> vector<8x384xf32>
    %491 = arith.truncf %485 : vector<8x128xf32> to vector<8x128xbf16>
    %cst_162 = arith.constant dense<0.000000e+00> : vector<8x384xf32>
    %492 = tpu.matmul %491, %23, %cst_162 {dimension_numbers = #tpu.dot_dimension_numbers<[1], [0], [0], [1], [0, 0, 1, 1], [], []>} : vector<8x128xbf16>, vector<128x384xbf16>, vector<8x384xf32> -> vector<8x384xf32>
    %c0_163 = arith.constant 0 : index
    %c7_164 = arith.constant 7 : index
    %c0_165 = arith.constant 0 : index
    %c0_166 = arith.constant 0 : index
    %493 = vector.load %arg19[%c0_163, %c7_164, %c0_165, %c0_166] : memref<2x8x8x384xf32, #tpu.memory_space<vmem>>, vector<1x1x8x384xf32>
    %494 = vector.shape_cast %493 : vector<1x1x8x384xf32> to vector<8x384xf32>
    %495 = vector.extract_strided_slice %494 {offsets = [0, 0], sizes = [8, 128], strides = [1, 1]} : vector<8x384xf32> to vector<8x128xf32>
    %496 = vector.extract_strided_slice %490 {offsets = [0, 0], sizes = [8, 128], strides = [1, 1]} : vector<8x384xf32> to vector<8x128xf32>
    %497 = arith.addf %495, %496 : vector<8x128xf32>
    %498 = arith.negf %497 : vector<8x128xf32>
    %499 = math.exp %498 : vector<8x128xf32>
    %cst_167 = arith.constant 1.000000e+00 : f32
    %500 = vector.broadcast %cst_167 : f32 to vector<8x128xf32>
    %501 = arith.addf %500, %499 : vector<8x128xf32>
    %502 = arith.divf %500, %501 : vector<8x128xf32>
    %503 = vector.extract_strided_slice %494 {offsets = [0, 128], sizes = [8, 128], strides = [1, 1]} : vector<8x384xf32> to vector<8x128xf32>
    %504 = vector.extract_strided_slice %490 {offsets = [0, 128], sizes = [8, 128], strides = [1, 1]} : vector<8x384xf32> to vector<8x128xf32>
    %505 = arith.addf %503, %504 : vector<8x128xf32>
    %506 = arith.negf %505 : vector<8x128xf32>
    %507 = math.exp %506 : vector<8x128xf32>
    %cst_168 = arith.constant 1.000000e+00 : f32
    %508 = vector.broadcast %cst_168 : f32 to vector<8x128xf32>
    %509 = arith.addf %508, %507 : vector<8x128xf32>
    %510 = arith.divf %508, %509 : vector<8x128xf32>
    %511 = vector.extract_strided_slice %494 {offsets = [0, 256], sizes = [8, 128], strides = [1, 1]} : vector<8x384xf32> to vector<8x128xf32>
    %512 = vector.extract_strided_slice %490 {offsets = [0, 256], sizes = [8, 128], strides = [1, 1]} : vector<8x384xf32> to vector<8x128xf32>
    %513 = vector.broadcast %13 : vector<1x128xf32> to vector<8x128xf32>
    %514 = arith.addf %512, %513 : vector<8x128xf32>
    %515 = arith.mulf %502, %514 : vector<8x128xf32>
    %516 = arith.addf %511, %515 : vector<8x128xf32>
    %517 = math.tanh %516 : vector<8x128xf32>
    %518 = arith.subf %454, %517 : vector<8x128xf32>
    %519 = arith.mulf %510, %518 : vector<8x128xf32>
    %520 = arith.addf %517, %519 : vector<8x128xf32>
    %c7_169 = arith.constant 7 : index
    %c0_170 = arith.constant 0 : index
    %c0_171 = arith.constant 0 : index
    %521 = vector.load %arg18[%c7_169, %c0_170, %c0_171] : memref<8x8x256xf32, #tpu.memory_space<vmem>>, vector<1x8x128xf32>
    %522 = vector.shape_cast %521 : vector<1x8x128xf32> to vector<8x128xf32>
    %523 = vector.shape_cast %520 : vector<8x128xf32> to vector<1x8x128xf32>
    tpu.vector_store %arg18[%c7_169, %c0_170, %c0_171], %523 {strides = array<i32>} : memref<8x8x256xf32, #tpu.memory_space<vmem>>, vector<1x8x128xf32>,
    %c1_172 = arith.constant 1 : index
    %c0_173 = arith.constant 0 : index
    %c0_174 = arith.constant 0 : index
    %c0_175 = arith.constant 0 : index
    %524 = vector.load %arg19[%c1_172, %c0_173, %c0_174, %c0_175] : memref<2x8x8x384xf32, #tpu.memory_space<vmem>>, vector<1x1x8x384xf32>
    %525 = vector.shape_cast %524 : vector<1x1x8x384xf32> to vector<8x384xf32>
    %526 = vector.extract_strided_slice %525 {offsets = [0, 0], sizes = [8, 128], strides = [1, 1]} : vector<8x384xf32> to vector<8x128xf32>
    %527 = vector.extract_strided_slice %492 {offsets = [0, 0], sizes = [8, 128], strides = [1, 1]} : vector<8x384xf32> to vector<8x128xf32>
    %528 = arith.addf %526, %527 : vector<8x128xf32>
    %529 = arith.negf %528 : vector<8x128xf32>
    %530 = math.exp %529 : vector<8x128xf32>
    %cst_176 = arith.constant 1.000000e+00 : f32
    %531 = vector.broadcast %cst_176 : f32 to vector<8x128xf32>
    %532 = arith.addf %531, %530 : vector<8x128xf32>
    %533 = arith.divf %531, %532 : vector<8x128xf32>
    %534 = vector.extract_strided_slice %525 {offsets = [0, 128], sizes = [8, 128], strides = [1, 1]} : vector<8x384xf32> to vector<8x128xf32>
    %535 = vector.extract_strided_slice %492 {offsets = [0, 128], sizes = [8, 128], strides = [1, 1]} : vector<8x384xf32> to vector<8x128xf32>
    %536 = arith.addf %534, %535 : vector<8x128xf32>
    %537 = arith.negf %536 : vector<8x128xf32>
    %538 = math.exp %537 : vector<8x128xf32>
    %cst_177 = arith.constant 1.000000e+00 : f32
    %539 = vector.broadcast %cst_177 : f32 to vector<8x128xf32>
    %540 = arith.addf %539, %538 : vector<8x128xf32>
    %541 = arith.divf %539, %540 : vector<8x128xf32>
    %542 = vector.extract_strided_slice %525 {offsets = [0, 256], sizes = [8, 128], strides = [1, 1]} : vector<8x384xf32> to vector<8x128xf32>
    %543 = vector.extract_strided_slice %492 {offsets = [0, 256], sizes = [8, 128], strides = [1, 1]} : vector<8x384xf32> to vector<8x128xf32>
    %544 = vector.broadcast %24 : vector<1x128xf32> to vector<8x128xf32>
    %545 = arith.addf %543, %544 : vector<8x128xf32>
    %546 = arith.mulf %533, %545 : vector<8x128xf32>
    %547 = arith.addf %542, %546 : vector<8x128xf32>
    %548 = math.tanh %547 : vector<8x128xf32>
    %549 = arith.subf %485, %548 : vector<8x128xf32>
    %550 = arith.mulf %541, %549 : vector<8x128xf32>
    %551 = arith.addf %548, %550 : vector<8x128xf32>
    %c0_178 = arith.constant 0 : index
    %c0_179 = arith.constant 0 : index
    %c128_180 = arith.constant 128 : index
    %552 = vector.load %arg18[%c0_178, %c0_179, %c128_180] : memref<8x8x256xf32, #tpu.memory_space<vmem>>, vector<1x8x128xf32>
    %553 = vector.shape_cast %552 : vector<1x8x128xf32> to vector<8x128xf32>
    %554 = vector.shape_cast %551 : vector<8x128xf32> to vector<1x8x128xf32>
    tpu.vector_store %arg18[%c0_178, %c0_179, %c128_180], %554 {strides = array<i32>} : memref<8x8x256xf32, #tpu.memory_space<vmem>>, vector<1x8x128xf32>,
    %c0_181 = arith.constant 0 : index
    %c0_182 = arith.constant 0 : index
    %c0_183 = arith.constant 0 : index
    %555 = vector.load %arg18[%c0_181, %c0_182, %c0_183] : memref<8x8x256xf32, #tpu.memory_space<vmem>>, vector<8x8x256xf32>
    %556 = vector.shape_cast %555 : vector<8x8x256xf32> to vector<64x256xf32>
    %557 = arith.truncf %556 : vector<64x256xf32> to vector<64x256xbf16>
    %c0_184 = arith.constant 0 : index
    %c0_185 = arith.constant 0 : index
    %558 = vector.load %arg9[%c0_184, %c0_185] : memref<256x384xbf16, #tpu.memory_space<vmem>>, vector<256x384xbf16>
    %cst_186 = arith.constant dense<0.000000e+00> : vector<64x384xf32>
    %559 = tpu.matmul %557, %558, %cst_186 {dimension_numbers = #tpu.dot_dimension_numbers<[1], [0], [0], [1], [0, 0, 1, 1], [], []>} : vector<64x256xbf16>, vector<256x384xbf16>, vector<64x384xf32> -> vector<64x384xf32>
    %c0_187 = arith.constant 0 : index
    %c0_188 = arith.constant 0 : index
    %560 = vector.load %arg11[%c0_187, %c0_188] : memref<1x384xf32, #tpu.memory_space<vmem>>, vector<1x384xf32>
    %561 = vector.broadcast %560 : vector<1x384xf32> to vector<64x384xf32>
    %562 = arith.addf %559, %561 : vector<64x384xf32>
    %563 = vector.shape_cast %562 : vector<64x384xf32> to vector<8x8x384xf32>
    %c0_189 = arith.constant 0 : index
    %c0_190 = arith.constant 0 : index
    %c0_191 = arith.constant 0 : index
    %c0_192 = arith.constant 0 : index
    %564 = vector.load %arg19[%c0_189, %c0_190, %c0_191, %c0_192] : memref<2x8x8x384xf32, #tpu.memory_space<vmem>>, vector<1x8x8x384xf32>
    %565 = vector.shape_cast %564 : vector<1x8x8x384xf32> to vector<8x8x384xf32>
    %566 = vector.shape_cast %563 : vector<8x8x384xf32> to vector<1x8x8x384xf32>
    tpu.vector_store %arg19[%c0_189, %c0_190, %c0_191, %c0_192], %566 {strides = array<i32>} : memref<2x8x8x384xf32, #tpu.memory_space<vmem>>, vector<1x8x8x384xf32>,
    %c0_193 = arith.constant 0 : index
    %c0_194 = arith.constant 0 : index
    %567 = vector.load %arg10[%c0_193, %c0_194] : memref<128x384xbf16, #tpu.memory_space<vmem>>, vector<128x384xbf16>
    %c0_195 = arith.constant 0 : index
    %c0_196 = arith.constant 0 : index
    %568 = vector.load %arg12[%c0_195, %c0_196] : memref<1x128xf32, #tpu.memory_space<vmem>>, vector<1x128xf32>
    %c0_197 = arith.constant 0 : index
    %c0_198 = arith.constant 0 : index
    %569 = vector.load %arg13[%c0_197, %c0_198] : memref<256x384xbf16, #tpu.memory_space<vmem>>, vector<256x384xbf16>
    %cst_199 = arith.constant dense<0.000000e+00> : vector<64x384xf32>
    %570 = tpu.matmul %557, %569, %cst_199 {dimension_numbers = #tpu.dot_dimension_numbers<[1], [0], [0], [1], [0, 0, 1, 1], [], []>} : vector<64x256xbf16>, vector<256x384xbf16>, vector<64x384xf32> -> vector<64x384xf32>
    %c0_200 = arith.constant 0 : index
    %c0_201 = arith.constant 0 : index
    %571 = vector.load %arg15[%c0_200, %c0_201] : memref<1x384xf32, #tpu.memory_space<vmem>>, vector<1x384xf32>
    %572 = vector.broadcast %571 : vector<1x384xf32> to vector<64x384xf32>
    %573 = arith.addf %570, %572 : vector<64x384xf32>
    %574 = vector.shape_cast %573 : vector<64x384xf32> to vector<8x8x384xf32>
    %c1_202 = arith.constant 1 : index
    %c0_203 = arith.constant 0 : index
    %c0_204 = arith.constant 0 : index
    %c0_205 = arith.constant 0 : index
    %575 = vector.load %arg19[%c1_202, %c0_203, %c0_204, %c0_205] : memref<2x8x8x384xf32, #tpu.memory_space<vmem>>, vector<1x8x8x384xf32>
    %576 = vector.shape_cast %575 : vector<1x8x8x384xf32> to vector<8x8x384xf32>
    %577 = vector.shape_cast %574 : vector<8x8x384xf32> to vector<1x8x8x384xf32>
    tpu.vector_store %arg19[%c1_202, %c0_203, %c0_204, %c0_205], %577 {strides = array<i32>} : memref<2x8x8x384xf32, #tpu.memory_space<vmem>>, vector<1x8x8x384xf32>,
    %c0_206 = arith.constant 0 : index
    %c0_207 = arith.constant 0 : index
    %578 = vector.load %arg14[%c0_206, %c0_207] : memref<128x384xbf16, #tpu.memory_space<vmem>>, vector<128x384xbf16>
    %c0_208 = arith.constant 0 : index
    %c0_209 = arith.constant 0 : index
    %579 = vector.load %arg16[%c0_208, %c0_209] : memref<1x128xf32, #tpu.memory_space<vmem>>, vector<1x128xf32>
    %cst_210 = arith.constant 0.000000e+00 : f32
    %580 = vector.broadcast %cst_210 : f32 to vector<8x128xf32>
    %cst_211 = arith.constant 0.000000e+00 : f32
    %581 = vector.broadcast %cst_211 : f32 to vector<8x128xf32>
    %582 = arith.truncf %580 : vector<8x128xf32> to vector<8x128xbf16>
    %cst_212 = arith.constant dense<0.000000e+00> : vector<8x384xf32>
    %583 = tpu.matmul %582, %567, %cst_212 {dimension_numbers = #tpu.dot_dimension_numbers<[1], [0], [0], [1], [0, 0, 1, 1], [], []>} : vector<8x128xbf16>, vector<128x384xbf16>, vector<8x384xf32> -> vector<8x384xf32>
    %584 = arith.truncf %581 : vector<8x128xf32> to vector<8x128xbf16>
    %cst_213 = arith.constant dense<0.000000e+00> : vector<8x384xf32>
    %585 = tpu.matmul %584, %578, %cst_213 {dimension_numbers = #tpu.dot_dimension_numbers<[1], [0], [0], [1], [0, 0, 1, 1], [], []>} : vector<8x128xbf16>, vector<128x384xbf16>, vector<8x384xf32> -> vector<8x384xf32>
    %c0_214 = arith.constant 0 : index
    %c0_215 = arith.constant 0 : index
    %c0_216 = arith.constant 0 : index
    %c0_217 = arith.constant 0 : index
    %586 = vector.load %arg19[%c0_214, %c0_215, %c0_216, %c0_217] : memref<2x8x8x384xf32, #tpu.memory_space<vmem>>, vector<1x1x8x384xf32>
    %587 = vector.shape_cast %586 : vector<1x1x8x384xf32> to vector<8x384xf32>
    %588 = vector.extract_strided_slice %587 {offsets = [0, 0], sizes = [8, 128], strides = [1, 1]} : vector<8x384xf32> to vector<8x128xf32>
    %589 = vector.extract_strided_slice %583 {offsets = [0, 0], sizes = [8, 128], strides = [1, 1]} : vector<8x384xf32> to vector<8x128xf32>
    %590 = arith.addf %588, %589 : vector<8x128xf32>
    %591 = arith.negf %590 : vector<8x128xf32>
    %592 = math.exp %591 : vector<8x128xf32>
    %cst_218 = arith.constant 1.000000e+00 : f32
    %593 = vector.broadcast %cst_218 : f32 to vector<8x128xf32>
    %594 = arith.addf %593, %592 : vector<8x128xf32>
    %595 = arith.divf %593, %594 : vector<8x128xf32>
    %596 = vector.extract_strided_slice %587 {offsets = [0, 128], sizes = [8, 128], strides = [1, 1]} : vector<8x384xf32> to vector<8x128xf32>
    %597 = vector.extract_strided_slice %583 {offsets = [0, 128], sizes = [8, 128], strides = [1, 1]} : vector<8x384xf32> to vector<8x128xf32>
    %598 = arith.addf %596, %597 : vector<8x128xf32>
    %599 = arith.negf %598 : vector<8x128xf32>
    %600 = math.exp %599 : vector<8x128xf32>
    %cst_219 = arith.constant 1.000000e+00 : f32
    %601 = vector.broadcast %cst_219 : f32 to vector<8x128xf32>
    %602 = arith.addf %601, %600 : vector<8x128xf32>
    %603 = arith.divf %601, %602 : vector<8x128xf32>
    %604 = vector.extract_strided_slice %587 {offsets = [0, 256], sizes = [8, 128], strides = [1, 1]} : vector<8x384xf32> to vector<8x128xf32>
    %605 = vector.extract_strided_slice %583 {offsets = [0, 256], sizes = [8, 128], strides = [1, 1]} : vector<8x384xf32> to vector<8x128xf32>
    %606 = vector.broadcast %568 : vector<1x128xf32> to vector<8x128xf32>
    %607 = arith.addf %605, %606 : vector<8x128xf32>
    %608 = arith.mulf %595, %607 : vector<8x128xf32>
    %609 = arith.addf %604, %608 : vector<8x128xf32>
    %610 = math.tanh %609 : vector<8x128xf32>
    %611 = arith.subf %580, %610 : vector<8x128xf32>
    %612 = arith.mulf %603, %611 : vector<8x128xf32>
    %613 = arith.addf %610, %612 : vector<8x128xf32>
    %c1_220 = arith.constant 1 : index
    %c7_221 = arith.constant 7 : index
    %c0_222 = arith.constant 0 : index
    %c0_223 = arith.constant 0 : index
    %614 = vector.load %arg19[%c1_220, %c7_221, %c0_222, %c0_223] : memref<2x8x8x384xf32, #tpu.memory_space<vmem>>, vector<1x1x8x384xf32>
    %615 = vector.shape_cast %614 : vector<1x1x8x384xf32> to vector<8x384xf32>
    %616 = vector.extract_strided_slice %615 {offsets = [0, 0], sizes = [8, 128], strides = [1, 1]} : vector<8x384xf32> to vector<8x128xf32>
    %617 = vector.extract_strided_slice %585 {offsets = [0, 0], sizes = [8, 128], strides = [1, 1]} : vector<8x384xf32> to vector<8x128xf32>
    %618 = arith.addf %616, %617 : vector<8x128xf32>
    %619 = arith.negf %618 : vector<8x128xf32>
    %620 = math.exp %619 : vector<8x128xf32>
    %cst_224 = arith.constant 1.000000e+00 : f32
    %621 = vector.broadcast %cst_224 : f32 to vector<8x128xf32>
    %622 = arith.addf %621, %620 : vector<8x128xf32>
    %623 = arith.divf %621, %622 : vector<8x128xf32>
    %624 = vector.extract_strided_slice %615 {offsets = [0, 128], sizes = [8, 128], strides = [1, 1]} : vector<8x384xf32> to vector<8x128xf32>
    %625 = vector.extract_strided_slice %585 {offsets = [0, 128], sizes = [8, 128], strides = [1, 1]} : vector<8x384xf32> to vector<8x128xf32>
    %626 = arith.addf %624, %625 : vector<8x128xf32>
    %627 = arith.negf %626 : vector<8x128xf32>
    %628 = math.exp %627 : vector<8x128xf32>
    %cst_225 = arith.constant 1.000000e+00 : f32
    %629 = vector.broadcast %cst_225 : f32 to vector<8x128xf32>
    %630 = arith.addf %629, %628 : vector<8x128xf32>
    %631 = arith.divf %629, %630 : vector<8x128xf32>
    %632 = vector.extract_strided_slice %615 {offsets = [0, 256], sizes = [8, 128], strides = [1, 1]} : vector<8x384xf32> to vector<8x128xf32>
    %633 = vector.extract_strided_slice %585 {offsets = [0, 256], sizes = [8, 128], strides = [1, 1]} : vector<8x384xf32> to vector<8x128xf32>
    %634 = vector.broadcast %579 : vector<1x128xf32> to vector<8x128xf32>
    %635 = arith.addf %633, %634 : vector<8x128xf32>
    %636 = arith.mulf %623, %635 : vector<8x128xf32>
    %637 = arith.addf %632, %636 : vector<8x128xf32>
    %638 = math.tanh %637 : vector<8x128xf32>
    %639 = arith.subf %581, %638 : vector<8x128xf32>
    %640 = arith.mulf %631, %639 : vector<8x128xf32>
    %641 = arith.addf %638, %640 : vector<8x128xf32>
    %642 = arith.truncf %613 : vector<8x128xf32> to vector<8x128xbf16>
    %cst_226 = arith.constant dense<0.000000e+00> : vector<8x384xf32>
    %643 = tpu.matmul %642, %567, %cst_226 {dimension_numbers = #tpu.dot_dimension_numbers<[1], [0], [0], [1], [0, 0, 1, 1], [], []>} : vector<8x128xbf16>, vector<128x384xbf16>, vector<8x384xf32> -> vector<8x384xf32>
    %644 = arith.truncf %641 : vector<8x128xf32> to vector<8x128xbf16>
    %cst_227 = arith.constant dense<0.000000e+00> : vector<8x384xf32>
    %645 = tpu.matmul %644, %578, %cst_227 {dimension_numbers = #tpu.dot_dimension_numbers<[1], [0], [0], [1], [0, 0, 1, 1], [], []>} : vector<8x128xbf16>, vector<128x384xbf16>, vector<8x384xf32> -> vector<8x384xf32>
    %c0_228 = arith.constant 0 : index
    %c1_229 = arith.constant 1 : index
    %c0_230 = arith.constant 0 : index
    %c0_231 = arith.constant 0 : index
    %646 = vector.load %arg19[%c0_228, %c1_229, %c0_230, %c0_231] : memref<2x8x8x384xf32, #tpu.memory_space<vmem>>, vector<1x1x8x384xf32>
    %647 = vector.shape_cast %646 : vector<1x1x8x384xf32> to vector<8x384xf32>
    %648 = vector.extract_strided_slice %647 {offsets = [0, 0], sizes = [8, 128], strides = [1, 1]} : vector<8x384xf32> to vector<8x128xf32>
    %649 = vector.extract_strided_slice %643 {offsets = [0, 0], sizes = [8, 128], strides = [1, 1]} : vector<8x384xf32> to vector<8x128xf32>
    %650 = arith.addf %648, %649 : vector<8x128xf32>
    %651 = arith.negf %650 : vector<8x128xf32>
    %652 = math.exp %651 : vector<8x128xf32>
    %cst_232 = arith.constant 1.000000e+00 : f32
    %653 = vector.broadcast %cst_232 : f32 to vector<8x128xf32>
    %654 = arith.addf %653, %652 : vector<8x128xf32>
    %655 = arith.divf %653, %654 : vector<8x128xf32>
    %656 = vector.extract_strided_slice %647 {offsets = [0, 128], sizes = [8, 128], strides = [1, 1]} : vector<8x384xf32> to vector<8x128xf32>
    %657 = vector.extract_strided_slice %643 {offsets = [0, 128], sizes = [8, 128], strides = [1, 1]} : vector<8x384xf32> to vector<8x128xf32>
    %658 = arith.addf %656, %657 : vector<8x128xf32>
    %659 = arith.negf %658 : vector<8x128xf32>
    %660 = math.exp %659 : vector<8x128xf32>
    %cst_233 = arith.constant 1.000000e+00 : f32
    %661 = vector.broadcast %cst_233 : f32 to vector<8x128xf32>
    %662 = arith.addf %661, %660 : vector<8x128xf32>
    %663 = arith.divf %661, %662 : vector<8x128xf32>
    %664 = vector.extract_strided_slice %647 {offsets = [0, 256], sizes = [8, 128], strides = [1, 1]} : vector<8x384xf32> to vector<8x128xf32>
    %665 = vector.extract_strided_slice %643 {offsets = [0, 256], sizes = [8, 128], strides = [1, 1]} : vector<8x384xf32> to vector<8x128xf32>
    %666 = vector.broadcast %568 : vector<1x128xf32> to vector<8x128xf32>
    %667 = arith.addf %665, %666 : vector<8x128xf32>
    %668 = arith.mulf %655, %667 : vector<8x128xf32>
    %669 = arith.addf %664, %668 : vector<8x128xf32>
    %670 = math.tanh %669 : vector<8x128xf32>
    %671 = arith.subf %613, %670 : vector<8x128xf32>
    %672 = arith.mulf %663, %671 : vector<8x128xf32>
    %673 = arith.addf %670, %672 : vector<8x128xf32>
    %c1_234 = arith.constant 1 : index
    %c6_235 = arith.constant 6 : index
    %c0_236 = arith.constant 0 : index
    %c0_237 = arith.constant 0 : index
    %674 = vector.load %arg19[%c1_234, %c6_235, %c0_236, %c0_237] : memref<2x8x8x384xf32, #tpu.memory_space<vmem>>, vector<1x1x8x384xf32>
    %675 = vector.shape_cast %674 : vector<1x1x8x384xf32> to vector<8x384xf32>
    %676 = vector.extract_strided_slice %675 {offsets = [0, 0], sizes = [8, 128], strides = [1, 1]} : vector<8x384xf32> to vector<8x128xf32>
    %677 = vector.extract_strided_slice %645 {offsets = [0, 0], sizes = [8, 128], strides = [1, 1]} : vector<8x384xf32> to vector<8x128xf32>
    %678 = arith.addf %676, %677 : vector<8x128xf32>
    %679 = arith.negf %678 : vector<8x128xf32>
    %680 = math.exp %679 : vector<8x128xf32>
    %cst_238 = arith.constant 1.000000e+00 : f32
    %681 = vector.broadcast %cst_238 : f32 to vector<8x128xf32>
    %682 = arith.addf %681, %680 : vector<8x128xf32>
    %683 = arith.divf %681, %682 : vector<8x128xf32>
    %684 = vector.extract_strided_slice %675 {offsets = [0, 128], sizes = [8, 128], strides = [1, 1]} : vector<8x384xf32> to vector<8x128xf32>
    %685 = vector.extract_strided_slice %645 {offsets = [0, 128], sizes = [8, 128], strides = [1, 1]} : vector<8x384xf32> to vector<8x128xf32>
    %686 = arith.addf %684, %685 : vector<8x128xf32>
    %687 = arith.negf %686 : vector<8x128xf32>
    %688 = math.exp %687 : vector<8x128xf32>
    %cst_239 = arith.constant 1.000000e+00 : f32
    %689 = vector.broadcast %cst_239 : f32 to vector<8x128xf32>
    %690 = arith.addf %689, %688 : vector<8x128xf32>
    %691 = arith.divf %689, %690 : vector<8x128xf32>
    %692 = vector.extract_strided_slice %675 {offsets = [0, 256], sizes = [8, 128], strides = [1, 1]} : vector<8x384xf32> to vector<8x128xf32>
    %693 = vector.extract_strided_slice %645 {offsets = [0, 256], sizes = [8, 128], strides = [1, 1]} : vector<8x384xf32> to vector<8x128xf32>
    %694 = vector.broadcast %579 : vector<1x128xf32> to vector<8x128xf32>
    %695 = arith.addf %693, %694 : vector<8x128xf32>
    %696 = arith.mulf %683, %695 : vector<8x128xf32>
    %697 = arith.addf %692, %696 : vector<8x128xf32>
    %698 = math.tanh %697 : vector<8x128xf32>
    %699 = arith.subf %641, %698 : vector<8x128xf32>
    %700 = arith.mulf %691, %699 : vector<8x128xf32>
    %701 = arith.addf %698, %700 : vector<8x128xf32>
    %702 = arith.truncf %673 : vector<8x128xf32> to vector<8x128xbf16>
    %cst_240 = arith.constant dense<0.000000e+00> : vector<8x384xf32>
    %703 = tpu.matmul %702, %567, %cst_240 {dimension_numbers = #tpu.dot_dimension_numbers<[1], [0], [0], [1], [0, 0, 1, 1], [], []>} : vector<8x128xbf16>, vector<128x384xbf16>, vector<8x384xf32> -> vector<8x384xf32>
    %704 = arith.truncf %701 : vector<8x128xf32> to vector<8x128xbf16>
    %cst_241 = arith.constant dense<0.000000e+00> : vector<8x384xf32>
    %705 = tpu.matmul %704, %578, %cst_241 {dimension_numbers = #tpu.dot_dimension_numbers<[1], [0], [0], [1], [0, 0, 1, 1], [], []>} : vector<8x128xbf16>, vector<128x384xbf16>, vector<8x384xf32> -> vector<8x384xf32>
    %c0_242 = arith.constant 0 : index
    %c2_243 = arith.constant 2 : index
    %c0_244 = arith.constant 0 : index
    %c0_245 = arith.constant 0 : index
    %706 = vector.load %arg19[%c0_242, %c2_243, %c0_244, %c0_245] : memref<2x8x8x384xf32, #tpu.memory_space<vmem>>, vector<1x1x8x384xf32>
    %707 = vector.shape_cast %706 : vector<1x1x8x384xf32> to vector<8x384xf32>
    %708 = vector.extract_strided_slice %707 {offsets = [0, 0], sizes = [8, 128], strides = [1, 1]} : vector<8x384xf32> to vector<8x128xf32>
    %709 = vector.extract_strided_slice %703 {offsets = [0, 0], sizes = [8, 128], strides = [1, 1]} : vector<8x384xf32> to vector<8x128xf32>
    %710 = arith.addf %708, %709 : vector<8x128xf32>
    %711 = arith.negf %710 : vector<8x128xf32>
    %712 = math.exp %711 : vector<8x128xf32>
    %cst_246 = arith.constant 1.000000e+00 : f32
    %713 = vector.broadcast %cst_246 : f32 to vector<8x128xf32>
    %714 = arith.addf %713, %712 : vector<8x128xf32>
    %715 = arith.divf %713, %714 : vector<8x128xf32>
    %716 = vector.extract_strided_slice %707 {offsets = [0, 128], sizes = [8, 128], strides = [1, 1]} : vector<8x384xf32> to vector<8x128xf32>
    %717 = vector.extract_strided_slice %703 {offsets = [0, 128], sizes = [8, 128], strides = [1, 1]} : vector<8x384xf32> to vector<8x128xf32>
    %718 = arith.addf %716, %717 : vector<8x128xf32>
    %719 = arith.negf %718 : vector<8x128xf32>
    %720 = math.exp %719 : vector<8x128xf32>
    %cst_247 = arith.constant 1.000000e+00 : f32
    %721 = vector.broadcast %cst_247 : f32 to vector<8x128xf32>
    %722 = arith.addf %721, %720 : vector<8x128xf32>
    %723 = arith.divf %721, %722 : vector<8x128xf32>
    %724 = vector.extract_strided_slice %707 {offsets = [0, 256], sizes = [8, 128], strides = [1, 1]} : vector<8x384xf32> to vector<8x128xf32>
    %725 = vector.extract_strided_slice %703 {offsets = [0, 256], sizes = [8, 128], strides = [1, 1]} : vector<8x384xf32> to vector<8x128xf32>
    %726 = vector.broadcast %568 : vector<1x128xf32> to vector<8x128xf32>
    %727 = arith.addf %725, %726 : vector<8x128xf32>
    %728 = arith.mulf %715, %727 : vector<8x128xf32>
    %729 = arith.addf %724, %728 : vector<8x128xf32>
    %730 = math.tanh %729 : vector<8x128xf32>
    %731 = arith.subf %673, %730 : vector<8x128xf32>
    %732 = arith.mulf %723, %731 : vector<8x128xf32>
    %733 = arith.addf %730, %732 : vector<8x128xf32>
    %c1_248 = arith.constant 1 : index
    %c5_249 = arith.constant 5 : index
    %c0_250 = arith.constant 0 : index
    %c0_251 = arith.constant 0 : index
    %734 = vector.load %arg19[%c1_248, %c5_249, %c0_250, %c0_251] : memref<2x8x8x384xf32, #tpu.memory_space<vmem>>, vector<1x1x8x384xf32>
    %735 = vector.shape_cast %734 : vector<1x1x8x384xf32> to vector<8x384xf32>
    %736 = vector.extract_strided_slice %735 {offsets = [0, 0], sizes = [8, 128], strides = [1, 1]} : vector<8x384xf32> to vector<8x128xf32>
    %737 = vector.extract_strided_slice %705 {offsets = [0, 0], sizes = [8, 128], strides = [1, 1]} : vector<8x384xf32> to vector<8x128xf32>
    %738 = arith.addf %736, %737 : vector<8x128xf32>
    %739 = arith.negf %738 : vector<8x128xf32>
    %740 = math.exp %739 : vector<8x128xf32>
    %cst_252 = arith.constant 1.000000e+00 : f32
    %741 = vector.broadcast %cst_252 : f32 to vector<8x128xf32>
    %742 = arith.addf %741, %740 : vector<8x128xf32>
    %743 = arith.divf %741, %742 : vector<8x128xf32>
    %744 = vector.extract_strided_slice %735 {offsets = [0, 128], sizes = [8, 128], strides = [1, 1]} : vector<8x384xf32> to vector<8x128xf32>
    %745 = vector.extract_strided_slice %705 {offsets = [0, 128], sizes = [8, 128], strides = [1, 1]} : vector<8x384xf32> to vector<8x128xf32>
    %746 = arith.addf %744, %745 : vector<8x128xf32>
    %747 = arith.negf %746 : vector<8x128xf32>
    %748 = math.exp %747 : vector<8x128xf32>
    %cst_253 = arith.constant 1.000000e+00 : f32
    %749 = vector.broadcast %cst_253 : f32 to vector<8x128xf32>
    %750 = arith.addf %749, %748 : vector<8x128xf32>
    %751 = arith.divf %749, %750 : vector<8x128xf32>
    %752 = vector.extract_strided_slice %735 {offsets = [0, 256], sizes = [8, 128], strides = [1, 1]} : vector<8x384xf32> to vector<8x128xf32>
    %753 = vector.extract_strided_slice %705 {offsets = [0, 256], sizes = [8, 128], strides = [1, 1]} : vector<8x384xf32> to vector<8x128xf32>
    %754 = vector.broadcast %579 : vector<1x128xf32> to vector<8x128xf32>
    %755 = arith.addf %753, %754 : vector<8x128xf32>
    %756 = arith.mulf %743, %755 : vector<8x128xf32>
    %757 = arith.addf %752, %756 : vector<8x128xf32>
    %758 = math.tanh %757 : vector<8x128xf32>
    %759 = arith.subf %701, %758 : vector<8x128xf32>
    %760 = arith.mulf %751, %759 : vector<8x128xf32>
    %761 = arith.addf %758, %760 : vector<8x128xf32>
    %762 = arith.truncf %733 : vector<8x128xf32> to vector<8x128xbf16>
    %cst_254 = arith.constant dense<0.000000e+00> : vector<8x384xf32>
    %763 = tpu.matmul %762, %567, %cst_254 {dimension_numbers = #tpu.dot_dimension_numbers<[1], [0], [0], [1], [0, 0, 1, 1], [], []>} : vector<8x128xbf16>, vector<128x384xbf16>, vector<8x384xf32> -> vector<8x384xf32>
    %764 = arith.truncf %761 : vector<8x128xf32> to vector<8x128xbf16>
    %cst_255 = arith.constant dense<0.000000e+00> : vector<8x384xf32>
    %765 = tpu.matmul %764, %578, %cst_255 {dimension_numbers = #tpu.dot_dimension_numbers<[1], [0], [0], [1], [0, 0, 1, 1], [], []>} : vector<8x128xbf16>, vector<128x384xbf16>, vector<8x384xf32> -> vector<8x384xf32>
    %c0_256 = arith.constant 0 : index
    %c3_257 = arith.constant 3 : index
    %c0_258 = arith.constant 0 : index
    %c0_259 = arith.constant 0 : index
    %766 = vector.load %arg19[%c0_256, %c3_257, %c0_258, %c0_259] : memref<2x8x8x384xf32, #tpu.memory_space<vmem>>, vector<1x1x8x384xf32>
    %767 = vector.shape_cast %766 : vector<1x1x8x384xf32> to vector<8x384xf32>
    %768 = vector.extract_strided_slice %767 {offsets = [0, 0], sizes = [8, 128], strides = [1, 1]} : vector<8x384xf32> to vector<8x128xf32>
    %769 = vector.extract_strided_slice %763 {offsets = [0, 0], sizes = [8, 128], strides = [1, 1]} : vector<8x384xf32> to vector<8x128xf32>
    %770 = arith.addf %768, %769 : vector<8x128xf32>
    %771 = arith.negf %770 : vector<8x128xf32>
    %772 = math.exp %771 : vector<8x128xf32>
    %cst_260 = arith.constant 1.000000e+00 : f32
    %773 = vector.broadcast %cst_260 : f32 to vector<8x128xf32>
    %774 = arith.addf %773, %772 : vector<8x128xf32>
    %775 = arith.divf %773, %774 : vector<8x128xf32>
    %776 = vector.extract_strided_slice %767 {offsets = [0, 128], sizes = [8, 128], strides = [1, 1]} : vector<8x384xf32> to vector<8x128xf32>
    %777 = vector.extract_strided_slice %763 {offsets = [0, 128], sizes = [8, 128], strides = [1, 1]} : vector<8x384xf32> to vector<8x128xf32>
    %778 = arith.addf %776, %777 : vector<8x128xf32>
    %779 = arith.negf %778 : vector<8x128xf32>
    %780 = math.exp %779 : vector<8x128xf32>
    %cst_261 = arith.constant 1.000000e+00 : f32
    %781 = vector.broadcast %cst_261 : f32 to vector<8x128xf32>
    %782 = arith.addf %781, %780 : vector<8x128xf32>
    %783 = arith.divf %781, %782 : vector<8x128xf32>
    %784 = vector.extract_strided_slice %767 {offsets = [0, 256], sizes = [8, 128], strides = [1, 1]} : vector<8x384xf32> to vector<8x128xf32>
    %785 = vector.extract_strided_slice %763 {offsets = [0, 256], sizes = [8, 128], strides = [1, 1]} : vector<8x384xf32> to vector<8x128xf32>
    %786 = vector.broadcast %568 : vector<1x128xf32> to vector<8x128xf32>
    %787 = arith.addf %785, %786 : vector<8x128xf32>
    %788 = arith.mulf %775, %787 : vector<8x128xf32>
    %789 = arith.addf %784, %788 : vector<8x128xf32>
    %790 = math.tanh %789 : vector<8x128xf32>
    %791 = arith.subf %733, %790 : vector<8x128xf32>
    %792 = arith.mulf %783, %791 : vector<8x128xf32>
    %793 = arith.addf %790, %792 : vector<8x128xf32>
    %c1_262 = arith.constant 1 : index
    %c4_263 = arith.constant 4 : index
    %c0_264 = arith.constant 0 : index
    %c0_265 = arith.constant 0 : index
    %794 = vector.load %arg19[%c1_262, %c4_263, %c0_264, %c0_265] : memref<2x8x8x384xf32, #tpu.memory_space<vmem>>, vector<1x1x8x384xf32>
    %795 = vector.shape_cast %794 : vector<1x1x8x384xf32> to vector<8x384xf32>
    %796 = vector.extract_strided_slice %795 {offsets = [0, 0], sizes = [8, 128], strides = [1, 1]} : vector<8x384xf32> to vector<8x128xf32>
    %797 = vector.extract_strided_slice %765 {offsets = [0, 0], sizes = [8, 128], strides = [1, 1]} : vector<8x384xf32> to vector<8x128xf32>
    %798 = arith.addf %796, %797 : vector<8x128xf32>
    %799 = arith.negf %798 : vector<8x128xf32>
    %800 = math.exp %799 : vector<8x128xf32>
    %cst_266 = arith.constant 1.000000e+00 : f32
    %801 = vector.broadcast %cst_266 : f32 to vector<8x128xf32>
    %802 = arith.addf %801, %800 : vector<8x128xf32>
    %803 = arith.divf %801, %802 : vector<8x128xf32>
    %804 = vector.extract_strided_slice %795 {offsets = [0, 128], sizes = [8, 128], strides = [1, 1]} : vector<8x384xf32> to vector<8x128xf32>
    %805 = vector.extract_strided_slice %765 {offsets = [0, 128], sizes = [8, 128], strides = [1, 1]} : vector<8x384xf32> to vector<8x128xf32>
    %806 = arith.addf %804, %805 : vector<8x128xf32>
    %807 = arith.negf %806 : vector<8x128xf32>
    %808 = math.exp %807 : vector<8x128xf32>
    %cst_267 = arith.constant 1.000000e+00 : f32
    %809 = vector.broadcast %cst_267 : f32 to vector<8x128xf32>
    %810 = arith.addf %809, %808 : vector<8x128xf32>
    %811 = arith.divf %809, %810 : vector<8x128xf32>
    %812 = vector.extract_strided_slice %795 {offsets = [0, 256], sizes = [8, 128], strides = [1, 1]} : vector<8x384xf32> to vector<8x128xf32>
    %813 = vector.extract_strided_slice %765 {offsets = [0, 256], sizes = [8, 128], strides = [1, 1]} : vector<8x384xf32> to vector<8x128xf32>
    %814 = vector.broadcast %579 : vector<1x128xf32> to vector<8x128xf32>
    %815 = arith.addf %813, %814 : vector<8x128xf32>
    %816 = arith.mulf %803, %815 : vector<8x128xf32>
    %817 = arith.addf %812, %816 : vector<8x128xf32>
    %818 = math.tanh %817 : vector<8x128xf32>
    %819 = arith.subf %761, %818 : vector<8x128xf32>
    %820 = arith.mulf %811, %819 : vector<8x128xf32>
    %821 = arith.addf %818, %820 : vector<8x128xf32>
    %822 = arith.truncf %793 : vector<8x128xf32> to vector<8x128xbf16>
    %cst_268 = arith.constant dense<0.000000e+00> : vector<8x384xf32>
    %823 = tpu.matmul %822, %567, %cst_268 {dimension_numbers = #tpu.dot_dimension_numbers<[1], [0], [0], [1], [0, 0, 1, 1], [], []>} : vector<8x128xbf16>, vector<128x384xbf16>, vector<8x384xf32> -> vector<8x384xf32>
    %824 = arith.truncf %821 : vector<8x128xf32> to vector<8x128xbf16>
    %cst_269 = arith.constant dense<0.000000e+00> : vector<8x384xf32>
    %825 = tpu.matmul %824, %578, %cst_269 {dimension_numbers = #tpu.dot_dimension_numbers<[1], [0], [0], [1], [0, 0, 1, 1], [], []>} : vector<8x128xbf16>, vector<128x384xbf16>, vector<8x384xf32> -> vector<8x384xf32>
    %c0_270 = arith.constant 0 : index
    %c4_271 = arith.constant 4 : index
    %c0_272 = arith.constant 0 : index
    %c0_273 = arith.constant 0 : index
    %826 = vector.load %arg19[%c0_270, %c4_271, %c0_272, %c0_273] : memref<2x8x8x384xf32, #tpu.memory_space<vmem>>, vector<1x1x8x384xf32>
    %827 = vector.shape_cast %826 : vector<1x1x8x384xf32> to vector<8x384xf32>
    %828 = vector.extract_strided_slice %827 {offsets = [0, 0], sizes = [8, 128], strides = [1, 1]} : vector<8x384xf32> to vector<8x128xf32>
    %829 = vector.extract_strided_slice %823 {offsets = [0, 0], sizes = [8, 128], strides = [1, 1]} : vector<8x384xf32> to vector<8x128xf32>
    %830 = arith.addf %828, %829 : vector<8x128xf32>
    %831 = arith.negf %830 : vector<8x128xf32>
    %832 = math.exp %831 : vector<8x128xf32>
    %cst_274 = arith.constant 1.000000e+00 : f32
    %833 = vector.broadcast %cst_274 : f32 to vector<8x128xf32>
    %834 = arith.addf %833, %832 : vector<8x128xf32>
    %835 = arith.divf %833, %834 : vector<8x128xf32>
    %836 = vector.extract_strided_slice %827 {offsets = [0, 128], sizes = [8, 128], strides = [1, 1]} : vector<8x384xf32> to vector<8x128xf32>
    %837 = vector.extract_strided_slice %823 {offsets = [0, 128], sizes = [8, 128], strides = [1, 1]} : vector<8x384xf32> to vector<8x128xf32>
    %838 = arith.addf %836, %837 : vector<8x128xf32>
    %839 = arith.negf %838 : vector<8x128xf32>
    %840 = math.exp %839 : vector<8x128xf32>
    %cst_275 = arith.constant 1.000000e+00 : f32
    %841 = vector.broadcast %cst_275 : f32 to vector<8x128xf32>
    %842 = arith.addf %841, %840 : vector<8x128xf32>
    %843 = arith.divf %841, %842 : vector<8x128xf32>
    %844 = vector.extract_strided_slice %827 {offsets = [0, 256], sizes = [8, 128], strides = [1, 1]} : vector<8x384xf32> to vector<8x128xf32>
    %845 = vector.extract_strided_slice %823 {offsets = [0, 256], sizes = [8, 128], strides = [1, 1]} : vector<8x384xf32> to vector<8x128xf32>
    %846 = vector.broadcast %568 : vector<1x128xf32> to vector<8x128xf32>
    %847 = arith.addf %845, %846 : vector<8x128xf32>
    %848 = arith.mulf %835, %847 : vector<8x128xf32>
    %849 = arith.addf %844, %848 : vector<8x128xf32>
    %850 = math.tanh %849 : vector<8x128xf32>
    %851 = arith.subf %793, %850 : vector<8x128xf32>
    %852 = arith.mulf %843, %851 : vector<8x128xf32>
    %853 = arith.addf %850, %852 : vector<8x128xf32>
    %c1_276 = arith.constant 1 : index
    %c3_277 = arith.constant 3 : index
    %c0_278 = arith.constant 0 : index
    %c0_279 = arith.constant 0 : index
    %854 = vector.load %arg19[%c1_276, %c3_277, %c0_278, %c0_279] : memref<2x8x8x384xf32, #tpu.memory_space<vmem>>, vector<1x1x8x384xf32>
    %855 = vector.shape_cast %854 : vector<1x1x8x384xf32> to vector<8x384xf32>
    %856 = vector.extract_strided_slice %855 {offsets = [0, 0], sizes = [8, 128], strides = [1, 1]} : vector<8x384xf32> to vector<8x128xf32>
    %857 = vector.extract_strided_slice %825 {offsets = [0, 0], sizes = [8, 128], strides = [1, 1]} : vector<8x384xf32> to vector<8x128xf32>
    %858 = arith.addf %856, %857 : vector<8x128xf32>
    %859 = arith.negf %858 : vector<8x128xf32>
    %860 = math.exp %859 : vector<8x128xf32>
    %cst_280 = arith.constant 1.000000e+00 : f32
    %861 = vector.broadcast %cst_280 : f32 to vector<8x128xf32>
    %862 = arith.addf %861, %860 : vector<8x128xf32>
    %863 = arith.divf %861, %862 : vector<8x128xf32>
    %864 = vector.extract_strided_slice %855 {offsets = [0, 128], sizes = [8, 128], strides = [1, 1]} : vector<8x384xf32> to vector<8x128xf32>
    %865 = vector.extract_strided_slice %825 {offsets = [0, 128], sizes = [8, 128], strides = [1, 1]} : vector<8x384xf32> to vector<8x128xf32>
    %866 = arith.addf %864, %865 : vector<8x128xf32>
    %867 = arith.negf %866 : vector<8x128xf32>
    %868 = math.exp %867 : vector<8x128xf32>
    %cst_281 = arith.constant 1.000000e+00 : f32
    %869 = vector.broadcast %cst_281 : f32 to vector<8x128xf32>
    %870 = arith.addf %869, %868 : vector<8x128xf32>
    %871 = arith.divf %869, %870 : vector<8x128xf32>
    %872 = vector.extract_strided_slice %855 {offsets = [0, 256], sizes = [8, 128], strides = [1, 1]} : vector<8x384xf32> to vector<8x128xf32>
    %873 = vector.extract_strided_slice %825 {offsets = [0, 256], sizes = [8, 128], strides = [1, 1]} : vector<8x384xf32> to vector<8x128xf32>
    %874 = vector.broadcast %579 : vector<1x128xf32> to vector<8x128xf32>
    %875 = arith.addf %873, %874 : vector<8x128xf32>
    %876 = arith.mulf %863, %875 : vector<8x128xf32>
    %877 = arith.addf %872, %876 : vector<8x128xf32>
    %878 = math.tanh %877 : vector<8x128xf32>
    %879 = arith.subf %821, %878 : vector<8x128xf32>
    %880 = arith.mulf %871, %879 : vector<8x128xf32>
    %881 = arith.addf %878, %880 : vector<8x128xf32>
    %882 = arith.truncf %853 : vector<8x128xf32> to vector<8x128xbf16>
    %cst_282 = arith.constant dense<0.000000e+00> : vector<8x384xf32>
    %883 = tpu.matmul %882, %567, %cst_282 {dimension_numbers = #tpu.dot_dimension_numbers<[1], [0], [0], [1], [0, 0, 1, 1], [], []>} : vector<8x128xbf16>, vector<128x384xbf16>, vector<8x384xf32> -> vector<8x384xf32>
    %884 = arith.truncf %881 : vector<8x128xf32> to vector<8x128xbf16>
    %cst_283 = arith.constant dense<0.000000e+00> : vector<8x384xf32>
    %885 = tpu.matmul %884, %578, %cst_283 {dimension_numbers = #tpu.dot_dimension_numbers<[1], [0], [0], [1], [0, 0, 1, 1], [], []>} : vector<8x128xbf16>, vector<128x384xbf16>, vector<8x384xf32> -> vector<8x384xf32>
    %c0_284 = arith.constant 0 : index
    %c5_285 = arith.constant 5 : index
    %c0_286 = arith.constant 0 : index
    %c0_287 = arith.constant 0 : index
    %886 = vector.load %arg19[%c0_284, %c5_285, %c0_286, %c0_287] : memref<2x8x8x384xf32, #tpu.memory_space<vmem>>, vector<1x1x8x384xf32>
    %887 = vector.shape_cast %886 : vector<1x1x8x384xf32> to vector<8x384xf32>
    %888 = vector.extract_strided_slice %887 {offsets = [0, 0], sizes = [8, 128], strides = [1, 1]} : vector<8x384xf32> to vector<8x128xf32>
    %889 = vector.extract_strided_slice %883 {offsets = [0, 0], sizes = [8, 128], strides = [1, 1]} : vector<8x384xf32> to vector<8x128xf32>
    %890 = arith.addf %888, %889 : vector<8x128xf32>
    %891 = arith.negf %890 : vector<8x128xf32>
    %892 = math.exp %891 : vector<8x128xf32>
    %cst_288 = arith.constant 1.000000e+00 : f32
    %893 = vector.broadcast %cst_288 : f32 to vector<8x128xf32>
    %894 = arith.addf %893, %892 : vector<8x128xf32>
    %895 = arith.divf %893, %894 : vector<8x128xf32>
    %896 = vector.extract_strided_slice %887 {offsets = [0, 128], sizes = [8, 128], strides = [1, 1]} : vector<8x384xf32> to vector<8x128xf32>
    %897 = vector.extract_strided_slice %883 {offsets = [0, 128], sizes = [8, 128], strides = [1, 1]} : vector<8x384xf32> to vector<8x128xf32>
    %898 = arith.addf %896, %897 : vector<8x128xf32>
    %899 = arith.negf %898 : vector<8x128xf32>
    %900 = math.exp %899 : vector<8x128xf32>
    %cst_289 = arith.constant 1.000000e+00 : f32
    %901 = vector.broadcast %cst_289 : f32 to vector<8x128xf32>
    %902 = arith.addf %901, %900 : vector<8x128xf32>
    %903 = arith.divf %901, %902 : vector<8x128xf32>
    %904 = vector.extract_strided_slice %887 {offsets = [0, 256], sizes = [8, 128], strides = [1, 1]} : vector<8x384xf32> to vector<8x128xf32>
    %905 = vector.extract_strided_slice %883 {offsets = [0, 256], sizes = [8, 128], strides = [1, 1]} : vector<8x384xf32> to vector<8x128xf32>
    %906 = vector.broadcast %568 : vector<1x128xf32> to vector<8x128xf32>
    %907 = arith.addf %905, %906 : vector<8x128xf32>
    %908 = arith.mulf %895, %907 : vector<8x128xf32>
    %909 = arith.addf %904, %908 : vector<8x128xf32>
    %910 = math.tanh %909 : vector<8x128xf32>
    %911 = arith.subf %853, %910 : vector<8x128xf32>
    %912 = arith.mulf %903, %911 : vector<8x128xf32>
    %913 = arith.addf %910, %912 : vector<8x128xf32>
    %c1_290 = arith.constant 1 : index
    %c2_291 = arith.constant 2 : index
    %c0_292 = arith.constant 0 : index
    %c0_293 = arith.constant 0 : index
    %914 = vector.load %arg19[%c1_290, %c2_291, %c0_292, %c0_293] : memref<2x8x8x384xf32, #tpu.memory_space<vmem>>, vector<1x1x8x384xf32>
    %915 = vector.shape_cast %914 : vector<1x1x8x384xf32> to vector<8x384xf32>
    %916 = vector.extract_strided_slice %915 {offsets = [0, 0], sizes = [8, 128], strides = [1, 1]} : vector<8x384xf32> to vector<8x128xf32>
    %917 = vector.extract_strided_slice %885 {offsets = [0, 0], sizes = [8, 128], strides = [1, 1]} : vector<8x384xf32> to vector<8x128xf32>
    %918 = arith.addf %916, %917 : vector<8x128xf32>
    %919 = arith.negf %918 : vector<8x128xf32>
    %920 = math.exp %919 : vector<8x128xf32>
    %cst_294 = arith.constant 1.000000e+00 : f32
    %921 = vector.broadcast %cst_294 : f32 to vector<8x128xf32>
    %922 = arith.addf %921, %920 : vector<8x128xf32>
    %923 = arith.divf %921, %922 : vector<8x128xf32>
    %924 = vector.extract_strided_slice %915 {offsets = [0, 128], sizes = [8, 128], strides = [1, 1]} : vector<8x384xf32> to vector<8x128xf32>
    %925 = vector.extract_strided_slice %885 {offsets = [0, 128], sizes = [8, 128], strides = [1, 1]} : vector<8x384xf32> to vector<8x128xf32>
    %926 = arith.addf %924, %925 : vector<8x128xf32>
    %927 = arith.negf %926 : vector<8x128xf32>
    %928 = math.exp %927 : vector<8x128xf32>
    %cst_295 = arith.constant 1.000000e+00 : f32
    %929 = vector.broadcast %cst_295 : f32 to vector<8x128xf32>
    %930 = arith.addf %929, %928 : vector<8x128xf32>
    %931 = arith.divf %929, %930 : vector<8x128xf32>
    %932 = vector.extract_strided_slice %915 {offsets = [0, 256], sizes = [8, 128], strides = [1, 1]} : vector<8x384xf32> to vector<8x128xf32>
    %933 = vector.extract_strided_slice %885 {offsets = [0, 256], sizes = [8, 128], strides = [1, 1]} : vector<8x384xf32> to vector<8x128xf32>
    %934 = vector.broadcast %579 : vector<1x128xf32> to vector<8x128xf32>
    %935 = arith.addf %933, %934 : vector<8x128xf32>
    %936 = arith.mulf %923, %935 : vector<8x128xf32>
    %937 = arith.addf %932, %936 : vector<8x128xf32>
    %938 = math.tanh %937 : vector<8x128xf32>
    %939 = arith.subf %881, %938 : vector<8x128xf32>
    %940 = arith.mulf %931, %939 : vector<8x128xf32>
    %941 = arith.addf %938, %940 : vector<8x128xf32>
    %942 = arith.truncf %913 : vector<8x128xf32> to vector<8x128xbf16>
    %cst_296 = arith.constant dense<0.000000e+00> : vector<8x384xf32>
    %943 = tpu.matmul %942, %567, %cst_296 {dimension_numbers = #tpu.dot_dimension_numbers<[1], [0], [0], [1], [0, 0, 1, 1], [], []>} : vector<8x128xbf16>, vector<128x384xbf16>, vector<8x384xf32> -> vector<8x384xf32>
    %944 = arith.truncf %941 : vector<8x128xf32> to vector<8x128xbf16>
    %cst_297 = arith.constant dense<0.000000e+00> : vector<8x384xf32>
    %945 = tpu.matmul %944, %578, %cst_297 {dimension_numbers = #tpu.dot_dimension_numbers<[1], [0], [0], [1], [0, 0, 1, 1], [], []>} : vector<8x128xbf16>, vector<128x384xbf16>, vector<8x384xf32> -> vector<8x384xf32>
    %c0_298 = arith.constant 0 : index
    %c6_299 = arith.constant 6 : index
    %c0_300 = arith.constant 0 : index
    %c0_301 = arith.constant 0 : index
    %946 = vector.load %arg19[%c0_298, %c6_299, %c0_300, %c0_301] : memref<2x8x8x384xf32, #tpu.memory_space<vmem>>, vector<1x1x8x384xf32>
    %947 = vector.shape_cast %946 : vector<1x1x8x384xf32> to vector<8x384xf32>
    %948 = vector.extract_strided_slice %947 {offsets = [0, 0], sizes = [8, 128], strides = [1, 1]} : vector<8x384xf32> to vector<8x128xf32>
    %949 = vector.extract_strided_slice %943 {offsets = [0, 0], sizes = [8, 128], strides = [1, 1]} : vector<8x384xf32> to vector<8x128xf32>
    %950 = arith.addf %948, %949 : vector<8x128xf32>
    %951 = arith.negf %950 : vector<8x128xf32>
    %952 = math.exp %951 : vector<8x128xf32>
    %cst_302 = arith.constant 1.000000e+00 : f32
    %953 = vector.broadcast %cst_302 : f32 to vector<8x128xf32>
    %954 = arith.addf %953, %952 : vector<8x128xf32>
    %955 = arith.divf %953, %954 : vector<8x128xf32>
    %956 = vector.extract_strided_slice %947 {offsets = [0, 128], sizes = [8, 128], strides = [1, 1]} : vector<8x384xf32> to vector<8x128xf32>
    %957 = vector.extract_strided_slice %943 {offsets = [0, 128], sizes = [8, 128], strides = [1, 1]} : vector<8x384xf32> to vector<8x128xf32>
    %958 = arith.addf %956, %957 : vector<8x128xf32>
    %959 = arith.negf %958 : vector<8x128xf32>
    %960 = math.exp %959 : vector<8x128xf32>
    %cst_303 = arith.constant 1.000000e+00 : f32
    %961 = vector.broadcast %cst_303 : f32 to vector<8x128xf32>
    %962 = arith.addf %961, %960 : vector<8x128xf32>
    %963 = arith.divf %961, %962 : vector<8x128xf32>
    %964 = vector.extract_strided_slice %947 {offsets = [0, 256], sizes = [8, 128], strides = [1, 1]} : vector<8x384xf32> to vector<8x128xf32>
    %965 = vector.extract_strided_slice %943 {offsets = [0, 256], sizes = [8, 128], strides = [1, 1]} : vector<8x384xf32> to vector<8x128xf32>
    %966 = vector.broadcast %568 : vector<1x128xf32> to vector<8x128xf32>
    %967 = arith.addf %965, %966 : vector<8x128xf32>
    %968 = arith.mulf %955, %967 : vector<8x128xf32>
    %969 = arith.addf %964, %968 : vector<8x128xf32>
    %970 = math.tanh %969 : vector<8x128xf32>
    %971 = arith.subf %913, %970 : vector<8x128xf32>
    %972 = arith.mulf %963, %971 : vector<8x128xf32>
    %973 = arith.addf %970, %972 : vector<8x128xf32>
    %c1_304 = arith.constant 1 : index
    %c1_305 = arith.constant 1 : index
    %c0_306 = arith.constant 0 : index
    %c0_307 = arith.constant 0 : index
    %974 = vector.load %arg19[%c1_304, %c1_305, %c0_306, %c0_307] : memref<2x8x8x384xf32, #tpu.memory_space<vmem>>, vector<1x1x8x384xf32>
    %975 = vector.shape_cast %974 : vector<1x1x8x384xf32> to vector<8x384xf32>
    %976 = vector.extract_strided_slice %975 {offsets = [0, 0], sizes = [8, 128], strides = [1, 1]} : vector<8x384xf32> to vector<8x128xf32>
    %977 = vector.extract_strided_slice %945 {offsets = [0, 0], sizes = [8, 128], strides = [1, 1]} : vector<8x384xf32> to vector<8x128xf32>
    %978 = arith.addf %976, %977 : vector<8x128xf32>
    %979 = arith.negf %978 : vector<8x128xf32>
    %980 = math.exp %979 : vector<8x128xf32>
    %cst_308 = arith.constant 1.000000e+00 : f32
    %981 = vector.broadcast %cst_308 : f32 to vector<8x128xf32>
    %982 = arith.addf %981, %980 : vector<8x128xf32>
    %983 = arith.divf %981, %982 : vector<8x128xf32>
    %984 = vector.extract_strided_slice %975 {offsets = [0, 128], sizes = [8, 128], strides = [1, 1]} : vector<8x384xf32> to vector<8x128xf32>
    %985 = vector.extract_strided_slice %945 {offsets = [0, 128], sizes = [8, 128], strides = [1, 1]} : vector<8x384xf32> to vector<8x128xf32>
    %986 = arith.addf %984, %985 : vector<8x128xf32>
    %987 = arith.negf %986 : vector<8x128xf32>
    %988 = math.exp %987 : vector<8x128xf32>
    %cst_309 = arith.constant 1.000000e+00 : f32
    %989 = vector.broadcast %cst_309 : f32 to vector<8x128xf32>
    %990 = arith.addf %989, %988 : vector<8x128xf32>
    %991 = arith.divf %989, %990 : vector<8x128xf32>
    %992 = vector.extract_strided_slice %975 {offsets = [0, 256], sizes = [8, 128], strides = [1, 1]} : vector<8x384xf32> to vector<8x128xf32>
    %993 = vector.extract_strided_slice %945 {offsets = [0, 256], sizes = [8, 128], strides = [1, 1]} : vector<8x384xf32> to vector<8x128xf32>
    %994 = vector.broadcast %579 : vector<1x128xf32> to vector<8x128xf32>
    %995 = arith.addf %993, %994 : vector<8x128xf32>
    %996 = arith.mulf %983, %995 : vector<8x128xf32>
    %997 = arith.addf %992, %996 : vector<8x128xf32>
    %998 = math.tanh %997 : vector<8x128xf32>
    %999 = arith.subf %941, %998 : vector<8x128xf32>
    %1000 = arith.mulf %991, %999 : vector<8x128xf32>
    %1001 = arith.addf %998, %1000 : vector<8x128xf32>
    %1002 = arith.truncf %973 : vector<8x128xf32> to vector<8x128xbf16>
    %cst_310 = arith.constant dense<0.000000e+00> : vector<8x384xf32>
    %1003 = tpu.matmul %1002, %567, %cst_310 {dimension_numbers = #tpu.dot_dimension_numbers<[1], [0], [0], [1], [0, 0, 1, 1], [], []>} : vector<8x128xbf16>, vector<128x384xbf16>, vector<8x384xf32> -> vector<8x384xf32>
    %1004 = arith.truncf %1001 : vector<8x128xf32> to vector<8x128xbf16>
    %cst_311 = arith.constant dense<0.000000e+00> : vector<8x384xf32>
    %1005 = tpu.matmul %1004, %578, %cst_311 {dimension_numbers = #tpu.dot_dimension_numbers<[1], [0], [0], [1], [0, 0, 1, 1], [], []>} : vector<8x128xbf16>, vector<128x384xbf16>, vector<8x384xf32> -> vector<8x384xf32>
    %c0_312 = arith.constant 0 : index
    %c7_313 = arith.constant 7 : index
    %c0_314 = arith.constant 0 : index
    %c0_315 = arith.constant 0 : index
    %1006 = vector.load %arg19[%c0_312, %c7_313, %c0_314, %c0_315] : memref<2x8x8x384xf32, #tpu.memory_space<vmem>>, vector<1x1x8x384xf32>
    %1007 = vector.shape_cast %1006 : vector<1x1x8x384xf32> to vector<8x384xf32>
    %1008 = vector.extract_strided_slice %1007 {offsets = [0, 0], sizes = [8, 128], strides = [1, 1]} : vector<8x384xf32> to vector<8x128xf32>
    %1009 = vector.extract_strided_slice %1003 {offsets = [0, 0], sizes = [8, 128], strides = [1, 1]} : vector<8x384xf32> to vector<8x128xf32>
    %1010 = arith.addf %1008, %1009 : vector<8x128xf32>
    %1011 = arith.negf %1010 : vector<8x128xf32>
    %1012 = math.exp %1011 : vector<8x128xf32>
    %cst_316 = arith.constant 1.000000e+00 : f32
    %1013 = vector.broadcast %cst_316 : f32 to vector<8x128xf32>
    %1014 = arith.addf %1013, %1012 : vector<8x128xf32>
    %1015 = arith.divf %1013, %1014 : vector<8x128xf32>
    %1016 = vector.extract_strided_slice %1007 {offsets = [0, 128], sizes = [8, 128], strides = [1, 1]} : vector<8x384xf32> to vector<8x128xf32>
    %1017 = vector.extract_strided_slice %1003 {offsets = [0, 128], sizes = [8, 128], strides = [1, 1]} : vector<8x384xf32> to vector<8x128xf32>
    %1018 = arith.addf %1016, %1017 : vector<8x128xf32>
    %1019 = arith.negf %1018 : vector<8x128xf32>
    %1020 = math.exp %1019 : vector<8x128xf32>
    %cst_317 = arith.constant 1.000000e+00 : f32
    %1021 = vector.broadcast %cst_317 : f32 to vector<8x128xf32>
    %1022 = arith.addf %1021, %1020 : vector<8x128xf32>
    %1023 = arith.divf %1021, %1022 : vector<8x128xf32>
    %1024 = vector.extract_strided_slice %1007 {offsets = [0, 256], sizes = [8, 128], strides = [1, 1]} : vector<8x384xf32> to vector<8x128xf32>
    %1025 = vector.extract_strided_slice %1003 {offsets = [0, 256], sizes = [8, 128], strides = [1, 1]} : vector<8x384xf32> to vector<8x128xf32>
    %1026 = vector.broadcast %568 : vector<1x128xf32> to vector<8x128xf32>
    %1027 = arith.addf %1025, %1026 : vector<8x128xf32>
    %1028 = arith.mulf %1015, %1027 : vector<8x128xf32>
    %1029 = arith.addf %1024, %1028 : vector<8x128xf32>
    %1030 = math.tanh %1029 : vector<8x128xf32>
    %1031 = arith.subf %973, %1030 : vector<8x128xf32>
    %1032 = arith.mulf %1023, %1031 : vector<8x128xf32>
    %1033 = arith.addf %1030, %1032 : vector<8x128xf32>
    %c1_318 = arith.constant 1 : index
    %c0_319 = arith.constant 0 : index
    %c0_320 = arith.constant 0 : index
    %c0_321 = arith.constant 0 : index
    %1034 = vector.load %arg19[%c1_318, %c0_319, %c0_320, %c0_321] : memref<2x8x8x384xf32, #tpu.memory_space<vmem>>, vector<1x1x8x384xf32>
    %1035 = vector.shape_cast %1034 : vector<1x1x8x384xf32> to vector<8x384xf32>
    %1036 = vector.extract_strided_slice %1035 {offsets = [0, 0], sizes = [8, 128], strides = [1, 1]} : vector<8x384xf32> to vector<8x128xf32>
    %1037 = vector.extract_strided_slice %1005 {offsets = [0, 0], sizes = [8, 128], strides = [1, 1]} : vector<8x384xf32> to vector<8x128xf32>
    %1038 = arith.addf %1036, %1037 : vector<8x128xf32>
    %1039 = arith.negf %1038 : vector<8x128xf32>
    %1040 = math.exp %1039 : vector<8x128xf32>
    %cst_322 = arith.constant 1.000000e+00 : f32
    %1041 = vector.broadcast %cst_322 : f32 to vector<8x128xf32>
    %1042 = arith.addf %1041, %1040 : vector<8x128xf32>
    %1043 = arith.divf %1041, %1042 : vector<8x128xf32>
    %1044 = vector.extract_strided_slice %1035 {offsets = [0, 128], sizes = [8, 128], strides = [1, 1]} : vector<8x384xf32> to vector<8x128xf32>
    %1045 = vector.extract_strided_slice %1005 {offsets = [0, 128], sizes = [8, 128], strides = [1, 1]} : vector<8x384xf32> to vector<8x128xf32>
    %1046 = arith.addf %1044, %1045 : vector<8x128xf32>
    %1047 = arith.negf %1046 : vector<8x128xf32>
    %1048 = math.exp %1047 : vector<8x128xf32>
    %cst_323 = arith.constant 1.000000e+00 : f32
    %1049 = vector.broadcast %cst_323 : f32 to vector<8x128xf32>
    %1050 = arith.addf %1049, %1048 : vector<8x128xf32>
    %1051 = arith.divf %1049, %1050 : vector<8x128xf32>
    %1052 = vector.extract_strided_slice %1035 {offsets = [0, 256], sizes = [8, 128], strides = [1, 1]} : vector<8x384xf32> to vector<8x128xf32>
    %1053 = vector.extract_strided_slice %1005 {offsets = [0, 256], sizes = [8, 128], strides = [1, 1]} : vector<8x384xf32> to vector<8x128xf32>
    %1054 = vector.broadcast %579 : vector<1x128xf32> to vector<8x128xf32>
    %1055 = arith.addf %1053, %1054 : vector<8x128xf32>
    %1056 = arith.mulf %1043, %1055 : vector<8x128xf32>
    %1057 = arith.addf %1052, %1056 : vector<8x128xf32>
    %1058 = math.tanh %1057 : vector<8x128xf32>
    %1059 = arith.subf %1001, %1058 : vector<8x128xf32>
    %1060 = arith.mulf %1051, %1059 : vector<8x128xf32>
    %1061 = arith.addf %1058, %1060 : vector<8x128xf32>
    %1062 = arith.maximumf %1033, %1061 : vector<8x128xf32>
    %c0_324 = arith.constant 0 : index
    %c0_325 = arith.constant 0 : index
    %1063 = vector.load %arg17[%c0_324, %c0_325] : memref<8x128xf32, #tpu.memory_space<vmem>>, vector<8x128xf32>
    tpu.vector_store %arg17[%c0_324, %c0_325], %1062 {strides = array<i32>} : memref<8x128xf32, #tpu.memory_space<vmem>>, vector<8x128xf32>,
    return
  }
}

</mosaic_0001>

<llo_original>
// kernel: base_encoder_forward.1
$region0: #{base_encoder_forward.1}
  #allocation0 [shape = 'u32[]', space=smem, size = 0x4, offset = 0x4, fixed_abs, tag = 'smem constant byte address 0x4 - core index']
  #allocation1 [shape = 'u32[144,128]{1,0:T(1,128)}', space=vmem, size = 0x12000, scoped, tag = 'internal scratch']
  #allocation2 [shape = 'f32[8,8,256]{2,1,0:T(8,128)}', space=vmem, size = 0x10000, scoped, tag = 'scratch operand']
  #allocation3 [shape = 'f32[2,8,8,384]{3,2,1,0:T(8,128)}', space=vmem, size = 0x30000, scoped, tag = 'scratch operand']
  %s0 = inlined_call_operand.vmem [shape: f32[8,8,128], index: 0, kind: input, shape index: {}]
  %s1 = inlined_call_operand.vmem [shape: bf16[128,384], index: 1, kind: input, shape index: {}]
  %s2 = inlined_call_operand.vmem [shape: bf16[128,384], index: 2, kind: input, shape index: {}]
  %s3 = inlined_call_operand.vmem [shape: f32[1,384], index: 3, kind: input, shape index: {}]
  %s4 = inlined_call_operand.vmem [shape: f32[1,128], index: 4, kind: input, shape index: {}]
  %s5 = inlined_call_operand.vmem [shape: bf16[128,384], index: 5, kind: input, shape index: {}]
  %s6 = inlined_call_operand.vmem [shape: bf16[128,384], index: 6, kind: input, shape index: {}]
  %s7 = inlined_call_operand.vmem [shape: f32[1,384], index: 7, kind: input, shape index: {}]
  %s8 = inlined_call_operand.vmem [shape: f32[1,128], index: 8, kind: input, shape index: {}]
  %s9 = inlined_call_operand.vmem [shape: bf16[256,384], index: 9, kind: input, shape index: {}]
  %s10 = inlined_call_operand.vmem [shape: bf16[128,384], index: 10, kind: input, shape index: {}]
  %s11 = inlined_call_operand.vmem [shape: f32[1,384], index: 11, kind: input, shape index: {}]
  %s12 = inlined_call_operand.vmem [shape: f32[1,128], index: 12, kind: input, shape index: {}]
  %s13 = inlined_call_operand.vmem [shape: bf16[256,384], index: 13, kind: input, shape index: {}]
  %s14 = inlined_call_operand.vmem [shape: bf16[128,384], index: 14, kind: input, shape index: {}]
  %s15 = inlined_call_operand.vmem [shape: f32[1,384], index: 15, kind: input, shape index: {}]
  %s16 = inlined_call_operand.vmem [shape: f32[1,128], index: 16, kind: input, shape index: {}]
  %s17 = inlined_call_operand.vmem [shape: f32[8,128], index: 17, kind: output, shape index: {}]
  %s18 = sld [smem:[#allocation0]]
  $region78: #{base_encoder_forward.1} parent=0
    _
  %s20 = ssub.s32 1, %s18
  %s21 = scalar_select 0, %s20, %s18
  // Predicated region
  $region2: #{base_encoder_forward.1} parent=0 // pred_check
    _
  $region3: #{base_encoder_forward.1} parent=0 // pred_check_branch
    %23 = sbr.rel (0) target = $region5
  $region4: #{base_encoder_forward.1} parent=0 // pred_region
    _
  $region5: #{base_encoder_forward.1} parent=0 // pred_fallthru
    _
  // Predicated region
  $region6: #{base_encoder_forward.1} parent=0 // pred_check
    _
  $region7: #{base_encoder_forward.1} parent=0 // pred_check_branch
    %25 = sbr.rel (0) target = $region9
  $region8: #{base_encoder_forward.1} parent=0 // pred_region
    _
  $region9: #{base_encoder_forward.1} parent=0 // pred_fallthru
    _
  // Predicated region
  $region10: #{base_encoder_forward.1} parent=0 // pred_check
    _
  $region11: #{base_encoder_forward.1} parent=0 // pred_check_branch
    %27 = sbr.rel (0) target = $region13
  $region12: #{base_encoder_forward.1} parent=0 // pred_region
    _
  $region13: #{base_encoder_forward.1} parent=0 // pred_fallthru
    _
  // Predicated region
  $region14: #{base_encoder_forward.1} parent=0 // pred_check
    _
  $region15: #{base_encoder_forward.1} parent=0 // pred_check_branch
    %29 = sbr.rel (0) target = $region17
  $region16: #{base_encoder_forward.1} parent=0 // pred_region
    _
  $region17: #{base_encoder_forward.1} parent=0 // pred_fallthru
    _
  // Predicated region
  $region18: #{base_encoder_forward.1} parent=0 // pred_check
    _
  $region19: #{base_encoder_forward.1} parent=0 // pred_check_branch
    %31 = sbr.rel (0) target = $region21
  $region20: #{base_encoder_forward.1} parent=0 // pred_region
    _
  $region21: #{base_encoder_forward.1} parent=0 // pred_fallthru
    _
  // Predicated region
  $region22: #{base_encoder_forward.1} parent=0 // pred_check
    _
  $region23: #{base_encoder_forward.1} parent=0 // pred_check_branch
    %33 = sbr.rel (0) target = $region25
  $region24: #{base_encoder_forward.1} parent=0 // pred_region
    _
  $region25: #{base_encoder_forward.1} parent=0 // pred_fallthru
    _
  // Predicated region
  $region26: #{base_encoder_forward.1} parent=0 // pred_check
    _
  $region27: #{base_encoder_forward.1} parent=0 // pred_check_branch
    %35 = sbr.rel (0) target = $region29
  $region28: #{base_encoder_forward.1} parent=0 // pred_region
    _
  $region29: #{base_encoder_forward.1} parent=0 // pred_fallthru
    _
  // Predicated region
  $region30: #{base_encoder_forward.1} parent=0 // pred_check
    _
  $region31: #{base_encoder_forward.1} parent=0 // pred_check_branch
    %37 = sbr.rel (0) target = $region33
  $region32: #{base_encoder_forward.1} parent=0 // pred_region
    _
  $region33: #{base_encoder_forward.1} parent=0 // pred_fallthru
    _
  // Predicated region
  $region34: #{base_encoder_forward.1} parent=0 // pred_check
    _
  $region35: #{base_encoder_forward.1} parent=0 // pred_check_branch
    %39 = sbr.rel (0) target = $region37
  $region36: #{base_encoder_forward.1} parent=0 // pred_region
    _
  $region37: #{base_encoder_forward.1} parent=0 // pred_fallthru
    _
  // Predicated region
  $region38: #{base_encoder_forward.1} parent=0 // pred_check
    _
  $region39: #{base_encoder_forward.1} parent=0 // pred_check_branch
    %41 = sbr.rel (0) target = $region41
  $region40: #{base_encoder_forward.1} parent=0 // pred_region
    _
  $region41: #{base_encoder_forward.1} parent=0 // pred_fallthru
    _
  // Predicated region
  $region42: #{base_encoder_forward.1} parent=0 // pred_check
    _
  $region43: #{base_encoder_forward.1} parent=0 // pred_check_branch
    %43 = sbr.rel (0) target = $region45
  $region44: #{base_encoder_forward.1} parent=0 // pred_region
    _
  $region45: #{base_encoder_forward.1} parent=0 // pred_fallthru
    _
  // Predicated region
  $region46: #{base_encoder_forward.1} parent=0 // pred_check
    _
  $region47: #{base_encoder_forward.1} parent=0 // pred_check_branch
    %45 = sbr.rel (0) target = $region49
  $region48: #{base_encoder_forward.1} parent=0 // pred_region
    _
  $region49: #{base_encoder_forward.1} parent=0 // pred_fallthru
    _
  // Predicated region
  $region50: #{base_encoder_forward.1} parent=0 // pred_check
    _
  $region51: #{base_encoder_forward.1} parent=0 // pred_check_branch
    %47 = sbr.rel (0) target = $region53
  $region52: #{base_encoder_forward.1} parent=0 // pred_region
    _
  $region53: #{base_encoder_forward.1} parent=0 // pred_fallthru
    _
  // Predicated region
  $region54: #{base_encoder_forward.1} parent=0 // pred_check
    _
  $region55: #{base_encoder_forward.1} parent=0 // pred_check_branch
    %49 = sbr.rel (0) target = $region57
  $region56: #{base_encoder_forward.1} parent=0 // pred_region
    _
  $region57: #{base_encoder_forward.1} parent=0 // pred_fallthru
    _
  // Predicated region
  $region58: #{base_encoder_forward.1} parent=0 // pred_check
    _
  $region59: #{base_encoder_forward.1} parent=0 // pred_check_branch
    %51 = sbr.rel (0) target = $region61
  $region60: #{base_encoder_forward.1} parent=0 // pred_region
    _
  $region61: #{base_encoder_forward.1} parent=0 // pred_fallthru
    _
  // Predicated region
  $region62: #{base_encoder_forward.1} parent=0 // pred_check
    _
  $region63: #{base_encoder_forward.1} parent=0 // pred_check_branch
    %53 = sbr.rel (0) target = $region65
  $region64: #{base_encoder_forward.1} parent=0 // pred_region
    _
  $region65: #{base_encoder_forward.1} parent=0 // pred_fallthru
    _
  // Predicated region
  $region66: #{base_encoder_forward.1} parent=0 // pred_check
    _
  $region67: #{base_encoder_forward.1} parent=0 // pred_check_branch
    %55 = sbr.rel (0) target = $region69
  $region68: #{base_encoder_forward.1} parent=0 // pred_region
    _
  $region69: #{base_encoder_forward.1} parent=0 // pred_fallthru
    _
  %v57 = vld [vmem:[%s0] sm:$0xff]
  %v58 = vld [vmem:[%s0 + $0x8] sm:$0xff]
  %v59 = vld [vmem:[%s0 + $0x10] sm:$0xff]
  %v60 = vld [vmem:[%s0 + $0x18] sm:$0xff]
  %v61 = vld [vmem:[%s0 + $0x20] sm:$0xff]
  %v62 = vld [vmem:[%s0 + $0x28] sm:$0xff]
  %v63 = vld [vmem:[%s0 + $0x30] sm:$0xff]
  %v64 = vld [vmem:[%s0 + $0x38] sm:$0xff]
  %v65 = vpack.c.bf16 %v58, %v57
  %v66 = vpack.c.bf16 %v60, %v59
  %v67 = vpack.c.bf16 %v62, %v61
  %v68 = vpack.c.bf16 %v64, %v63
  %v69 = vld [vmem:[%s1] sm:$0xff]
  %v70 = vld [vmem:[%s1 + $0x8] sm:$0xf]
  %v71 = vld [vmem:[%s1 + $0xc] sm:$0xff]
  %v72 = vld [vmem:[%s1 + $0x14] sm:$0xf]
  %v73 = vld [vmem:[%s1 + $0x18] sm:$0xff]
  %v74 = vld [vmem:[%s1 + $0x20] sm:$0xf]
  %v75 = vld [vmem:[%s1 + $0x24] sm:$0xff]
  %v76 = vld [vmem:[%s1 + $0x2c] sm:$0xf]
  %v77 = vld [vmem:[%s1 + $0x30] sm:$0xff]
  %v78 = vld [vmem:[%s1 + $0x38] sm:$0xf]
  %v79 = vld [vmem:[%s1 + $0x3c] sm:$0xff]
  %v80 = vld [vmem:[%s1 + $0x44] sm:$0xf]
  %v81 = vld [vmem:[%s1 + $0x48] sm:$0xff]
  %v82 = vld [vmem:[%s1 + $0x50] sm:$0xf]
  %v83 = vld [vmem:[%s1 + $0x54] sm:$0xff]
  %v84 = vld [vmem:[%s1 + $0x5c] sm:$0xf]
  %v85 = vld [vmem:[%s1 + $0x60] sm:$0xff]
  %v86 = vld [vmem:[%s1 + $0x68] sm:$0xf]
  %v87 = vld [vmem:[%s1 + $0x6c] sm:$0xff]
  %v88 = vld [vmem:[%s1 + $0x74] sm:$0xf]
  %v89 = vld [vmem:[%s1 + $0x78] sm:$0xff]
  %v90 = vld [vmem:[%s1 + $0x80] sm:$0xf]
  %v91 = vld [vmem:[%s1 + $0x84] sm:$0xff]
  %v92 = vld [vmem:[%s1 + $0x8c] sm:$0xf]
  %v93 = vld [vmem:[%s1 + $0x90] sm:$0xff]
  %v94 = vld [vmem:[%s1 + $0x98] sm:$0xf]
  %v95 = vld [vmem:[%s1 + $0x9c] sm:$0xff]
  %v96 = vld [vmem:[%s1 + $0xa4] sm:$0xf]
  %v97 = vld [vmem:[%s1 + $0xa8] sm:$0xff]
  %v98 = vld [vmem:[%s1 + $0xb0] sm:$0xf]
  %v99 = vld [vmem:[%s1 + $0xb4] sm:$0xff]
  %v100 = vld [vmem:[%s1 + $0xbc] sm:$0xf]
  %v101 = vld [vmem:[%s3] sm:$0x7]
  %v103 = vlaneseq
  %v104 = vshrl.u32 %v103, 7
  %v105 = vsub.s32 0, %v104
  %v106 = vrot.slane %v101, %v105
  %v107 = vlaneseq
  %v108 = vshrl.u32 %v107, 7
  %v109 = vsub.s32 1, %v108
  %v110 = vrot.slane %v101, %v109
  %v111 = vlaneseq
  %v112 = vshrl.u32 %v111, 7
  %v113 = vsub.s32 2, %v112
  %v114 = vrot.slane %v101, %v113
  %v150 = vunpack.c.l.b16 %v69
  %v151 = vunpack.c.h.b16 %v69
  %v152 = vunpack.c.l.b16 %v70
  %v153 = vunpack.c.l.b16 %v71
  %v154 = vunpack.c.h.b16 %v71
  %v155 = vunpack.c.l.b16 %v72
  %v156 = vunpack.c.l.b16 %v73
  %v157 = vunpack.c.h.b16 %v73
  %v158 = vunpack.c.l.b16 %v74
  %v159 = vunpack.c.l.b16 %v75
  %v160 = vunpack.c.h.b16 %v75
  %v161 = vunpack.c.l.b16 %v76
  %v162 = vunpack.c.l.b16 %v77
  %v163 = vunpack.c.h.b16 %v77
  %v164 = vunpack.c.l.b16 %v78
  %v165 = vunpack.c.l.b16 %v79
  %v166 = vunpack.c.h.b16 %v79
  %v167 = vunpack.c.l.b16 %v80
  %v168 = vunpack.c.l.b16 %v81
  %v169 = vunpack.c.h.b16 %v81
  %v170 = vunpack.c.l.b16 %v82
  %v171 = vunpack.c.l.b16 %v83
  %v172 = vunpack.c.h.b16 %v83
  %v173 = vunpack.c.l.b16 %v84
  %v174 = vunpack.c.l.b16 %v85
  %v175 = vunpack.c.h.b16 %v85
  %v176 = vunpack.c.l.b16 %v86
  %v177 = vunpack.c.l.b16 %v87
  %v178 = vunpack.c.h.b16 %v87
  %v179 = vunpack.c.l.b16 %v88
  %v180 = vunpack.c.l.b16 %v89
  %v181 = vunpack.c.h.b16 %v89
  %v182 = vunpack.c.l.b16 %v90
  %v183 = vunpack.c.l.b16 %v91
  %v184 = vunpack.c.h.b16 %v91
  %v185 = vunpack.c.l.b16 %v92
  %v186 = vunpack.c.l.b16 %v93
  %v187 = vunpack.c.h.b16 %v93
  %v188 = vunpack.c.l.b16 %v94
  %v189 = vunpack.c.l.b16 %v95
  %v190 = vunpack.c.h.b16 %v95
  %v191 = vunpack.c.l.b16 %v96
  %v192 = vunpack.c.l.b16 %v97
  %v193 = vunpack.c.h.b16 %v97
  %v194 = vunpack.c.l.b16 %v98
  %v195 = vunpack.c.l.b16 %v99
  %v196 = vunpack.c.h.b16 %v99
  %v197 = vunpack.c.l.b16 %v100
  %v198 = vpack.c.b16 %v153, %v150
  %v199 = vpack.c.b16 %v154, %v151
  %v200 = vpack.c.b16 %v155, %v152
  %v201 = vpack.c.b16 %v159, %v156
  %v202 = vpack.c.b16 %v160, %v157
  %v203 = vpack.c.b16 %v161, %v158
  %v204 = vpack.c.b16 %v165, %v162
  %v205 = vpack.c.b16 %v166, %v163
  %v206 = vpack.c.b16 %v167, %v164
  %v207 = vpack.c.b16 %v171, %v168
  %v208 = vpack.c.b16 %v172, %v169
  %v209 = vpack.c.b16 %v173, %v170
  %v210 = vpack.c.b16 %v177, %v174
  %v211 = vpack.c.b16 %v178, %v175
  %v212 = vpack.c.b16 %v179, %v176
  %v213 = vpack.c.b16 %v183, %v180
  %v214 = vpack.c.b16 %v184, %v181
  %v215 = vpack.c.b16 %v185, %v182
  %v216 = vpack.c.b16 %v189, %v186
  %v217 = vpack.c.b16 %v190, %v187
  %v218 = vpack.c.b16 %v191, %v188
  %v219 = vpack.c.b16 %v195, %v192
  %v220 = vpack.c.b16 %v196, %v193
  %v221 = vpack.c.b16 %v197, %v194
  %246 = vmatprep.subr.bf16.mxu0 %v220
  %247 = vmatpush1.bf16.msra.mxu0 %v219
  %248 = vmatprep.subr.bf16.mxu0 %v217
  %249 = vmatpush1.bf16.msra.mxu0 %v216
  %250 = vmatprep.subr.bf16.mxu0 %v214
  %251 = vmatpush1.bf16.msra.mxu0 %v213
  %252 = vmatprep.subr.bf16.mxu0 %v211
  %253 = vmatpush1.bf16.msra.mxu0 %v210
  %254 = vmatprep.subr.bf16.mxu0 %v208
  %255 = vmatpush1.bf16.msra.mxu0 %v207
  %256 = vmatprep.subr.bf16.mxu0 %v205
  %257 = vmatpush1.bf16.msra.mxu0 %v204
  %258 = vmatprep.subr.bf16.mxu0 %v202
  %259 = vmatpush1.bf16.msra.mxu0 %v201
  %260 = vmatprep.subr.bf16.mxu0 %v199
  %261 = vmatpush1.bf16.msra.mxu0 %v198
  %262 = vmatprep.subr.bf16.mxu0 0
  %263 = vmatpush2.bf16.msra.mxu0 0
  %264 = vmatprep.subr.bf16.mxu0 0
  %265 = vmatpush2.bf16.msra.mxu0 0
  %266 = vmatprep.subr.bf16.mxu0 0
  %267 = vmatpush2.bf16.msra.mxu0 0
  %268 = vmatprep.subr.bf16.mxu0 0
  %269 = vmatpush2.bf16.msra.mxu0 0
  %270 = vmatprep.subr.bf16.mxu0 0
  %271 = vmatpush2.bf16.msra.mxu0 0
  %272 = vmatprep.subr.bf16.mxu0 0
  %273 = vmatpush2.bf16.msra.mxu0 0
  %274 = vmatprep.subr.bf16.mxu0 0
  %275 = vmatpush2.bf16.msra.mxu0 0
  %276 = vmatprep.subr.bf16.mxu0 0
  %277 = vmatpush2.bf16.msra.mxu0 0
  %278 = vmatprep.mubr.bf16.mxu0 0
  %279 = vmatmul.mubr.bf16.gmra.mxu0 %v65
  %v280 = vpop.f32.mrf.mxu0
  %v281 = vadd.f32 %v106, %v280
  %v282 = vpop.f32.mrf.mxu0
  %v283 = vadd.f32 %v110, %v282
  %v284 = vpop.f32.mrf.mxu0
  %v285 = vadd.f32 %v106, %v284
  %v286 = vpop.f32.mrf.mxu0
  %v287 = vadd.f32 %v110, %v286
  %288 = vmatprep.mubr.bf16.mxu0 0
  %289 = vmatmul.mubr.bf16.gmra.mxu0 %v66
  %v290 = vpop.f32.mrf.mxu0
  %v291 = vadd.f32 %v106, %v290
  %v292 = vpop.f32.mrf.mxu0
  %v293 = vadd.f32 %v110, %v292
  %v294 = vpop.f32.mrf.mxu0
  %v295 = vadd.f32 %v106, %v294
  %v296 = vpop.f32.mrf.mxu0
  %v297 = vadd.f32 %v110, %v296
  %298 = vmatprep.mubr.bf16.mxu0 0
  %299 = vmatmul.mubr.bf16.gmra.mxu0 %v67
  %v300 = vpop.f32.mrf.mxu0
  %v301 = vadd.f32 %v106, %v300
  %v302 = vpop.f32.mrf.mxu0
  %v303 = vadd.f32 %v110, %v302
  %v304 = vpop.f32.mrf.mxu0
  %v305 = vadd.f32 %v106, %v304
  %v306 = vpop.f32.mrf.mxu0
  %v307 = vadd.f32 %v110, %v306
  %308 = vmatprep.mubr.bf16.mxu0 0
  %309 = vmatmul.mubr.bf16.gmra.mxu0 %v68
  %v310 = vpop.f32.mrf.mxu0
  %v311 = vadd.f32 %v106, %v310
  %v312 = vpop.f32.mrf.mxu0
  %v313 = vadd.f32 %v110, %v312
  %v314 = vpop.f32.mrf.mxu0
  %v315 = vadd.f32 %v106, %v314
  %v316 = vpop.f32.mrf.mxu0
  %v317 = vadd.f32 %v110, %v316
  %318 = vdwg.mxu0
  %319 = vmatprep.subr.bf16.mxu0 0
  %320 = vmatpush1.bf16.msra.mxu0 %v221
  %321 = vmatprep.subr.bf16.mxu0 0
  %322 = vmatpush1.bf16.msra.mxu0 %v218
  %323 = vmatprep.subr.bf16.mxu0 0
  %324 = vmatpush1.bf16.msra.mxu0 %v215
  %325 = vmatprep.subr.bf16.mxu0 0
  %326 = vmatpush1.bf16.msra.mxu0 %v212
  %327 = vmatprep.subr.bf16.mxu0 0
  %328 = vmatpush1.bf16.msra.mxu0 %v209
  %329 = vmatprep.subr.bf16.mxu0 0
  %330 = vmatpush1.bf16.msra.mxu0 %v206
  %331 = vmatprep.subr.bf16.mxu0 0
  %332 = vmatpush1.bf16.msra.mxu0 %v203
  %333 = vmatprep.subr.bf16.mxu0 0
  %334 = vmatpush1.bf16.msra.mxu0 %v200
  %335 = vmatprep.subr.bf16.mxu0 0
  %336 = vmatpush2.bf16.msra.mxu0 0
  %337 = vmatprep.subr.bf16.mxu0 0
  %338 = vmatpush2.bf16.msra.mxu0 0
  %339 = vmatprep.subr.bf16.mxu0 0
  %340 = vmatpush2.bf16.msra.mxu0 0
  %341 = vmatprep.subr.bf16.mxu0 0
  %342 = vmatpush2.bf16.msra.mxu0 0
  %343 = vmatprep.subr.bf16.mxu0 0
  %344 = vmatpush2.bf16.msra.mxu0 0
  %345 = vmatprep.subr.bf16.mxu0 0
  %346 = vmatpush2.bf16.msra.mxu0 0
  %347 = vmatprep.subr.bf16.mxu0 0
  %348 = vmatpush2.bf16.msra.mxu0 0
  %349 = vmatprep.subr.bf16.mxu0 0
  %350 = vmatpush2.bf16.msra.mxu0 0
  %351 = vmatprep.mubr.bf16.mxu0 0
  %352 = vmatmul.mubr.bf16.gmra.mxu0 %v65
  %v353 = vpop.f32.mrf.mxu0
  %v354 = vadd.f32 %v114, %v353
  %v355 = vpop.f32.mrf.mxu0
  %v356 = vpop.f32.mrf.mxu0
  %v357 = vadd.f32 %v114, %v356
  %v358 = vpop.f32.mrf.mxu0
  %359 = vmatprep.mubr.bf16.mxu0 0
  %360 = vmatmul.mubr.bf16.gmra.mxu0 %v66
  %v361 = vpop.f32.mrf.mxu0
  %v362 = vadd.f32 %v114, %v361
  %v363 = vpop.f32.mrf.mxu0
  %v364 = vpop.f32.mrf.mxu0
  %v365 = vadd.f32 %v114, %v364
  %v366 = vpop.f32.mrf.mxu0
  %367 = vmatprep.mubr.bf16.mxu0 0
  %368 = vmatmul.mubr.bf16.gmra.mxu0 %v67
  %v369 = vpop.f32.mrf.mxu0
  %v370 = vadd.f32 %v114, %v369
  %v371 = vpop.f32.mrf.mxu0
  %v372 = vpop.f32.mrf.mxu0
  %v373 = vadd.f32 %v114, %v372
  %v374 = vpop.f32.mrf.mxu0
  %375 = vmatprep.mubr.bf16.mxu0 0
  %376 = vmatmul.mubr.bf16.gmra.mxu0 %v68
  %v377 = vpop.f32.mrf.mxu0
  %v378 = vadd.f32 %v114, %v377
  %v379 = vpop.f32.mrf.mxu0
  %v380 = vpop.f32.mrf.mxu0
  %v381 = vadd.f32 %v114, %v380
  %v382 = vpop.f32.mrf.mxu0
  %383 = vdwg.mxu0
  %384 = vst [vmem:[#allocation3] sm:$0xff] %v281
  %385 = vst [vmem:[#allocation3 + $0x8] sm:$0xff] %v283
  %386 = vst [vmem:[#allocation3 + $0x10] sm:$0xff] %v354
  %387 = vst [vmem:[#allocation3 + $0x18] sm:$0xff] %v285
  %388 = vst [vmem:[#allocation3 + $0x20] sm:$0xff] %v287
  %389 = vst [vmem:[#allocation3 + $0x28] sm:$0xff] %v357
  %390 = vst [vmem:[#allocation3 + $0x30] sm:$0xff] %v291
  %391 = vst [vmem:[#allocation3 + $0x38] sm:$0xff] %v293
  %392 = vst [vmem:[#allocation3 + $0x40] sm:$0xff] %v362
  %393 = vst [vmem:[#allocation3 + $0x48] sm:$0xff] %v295
  %394 = vst [vmem:[#allocation3 + $0x50] sm:$0xff] %v297
  %395 = vst [vmem:[#allocation3 + $0x58] sm:$0xff] %v365
  %396 = vst [vmem:[#allocation3 + $0x60] sm:$0xff] %v301
  %397 = vst [vmem:[#allocation3 + $0x68] sm:$0xff] %v303
  %398 = vst [vmem:[#allocation3 + $0x70] sm:$0xff] %v370
  %399 = vst [vmem:[#allocation3 + $0x78] sm:$0xff] %v305
  %400 = vst [vmem:[#allocation3 + $0x80] sm:$0xff] %v307
  %401 = vst [vmem:[#allocation3 + $0x88] sm:$0xff] %v373
  %402 = vst [vmem:[#allocation3 + $0x90] sm:$0xff] %v311
  %403 = vst [vmem:[#allocation3 + $0x98] sm:$0xff] %v313
  %404 = vst [vmem:[#allocation3 + $0xa0] sm:$0xff] %v378
  %405 = vst [vmem:[#allocation3 + $0xa8] sm:$0xff] %v315
  %406 = vst [vmem:[#allocation3 + $0xb0] sm:$0xff] %v317
  %407 = vst [vmem:[#allocation3 + $0xb8] sm:$0xff] %v381
  %v408 = vld [vmem:[%s2] sm:$0xff]
  %v409 = vld [vmem:[%s2 + $0x8] sm:$0xf]
  %v410 = vld [vmem:[%s2 + $0xc] sm:$0xff]
  %v411 = vld [vmem:[%s2 + $0x14] sm:$0xf]
  %v412 = vld [vmem:[%s2 + $0x18] sm:$0xff]
  %v413 = vld [vmem:[%s2 + $0x20] sm:$0xf]
  %v414 = vld [vmem:[%s2 + $0x24] sm:$0xff]
  %v415 = vld [vmem:[%s2 + $0x2c] sm:$0xf]
  %v416 = vld [vmem:[%s2 + $0x30] sm:$0xff]
  %v417 = vld [vmem:[%s2 + $0x38] sm:$0xf]
  %v418 = vld [vmem:[%s2 + $0x3c] sm:$0xff]
  %v419 = vld [vmem:[%s2 + $0x44] sm:$0xf]
  %v420 = vld [vmem:[%s2 + $0x48] sm:$0xff]
  %v421 = vld [vmem:[%s2 + $0x50] sm:$0xf]
  %v422 = vld [vmem:[%s2 + $0x54] sm:$0xff]
  %v423 = vld [vmem:[%s2 + $0x5c] sm:$0xf]
  %v424 = vld [vmem:[%s2 + $0x60] sm:$0xff]
  %v425 = vld [vmem:[%s2 + $0x68] sm:$0xf]
  %v426 = vld [vmem:[%s2 + $0x6c] sm:$0xff]
  %v427 = vld [vmem:[%s2 + $0x74] sm:$0xf]
  %v428 = vld [vmem:[%s2 + $0x78] sm:$0xff]
  %v429 = vld [vmem:[%s2 + $0x80] sm:$0xf]
  %v430 = vld [vmem:[%s2 + $0x84] sm:$0xff]
  %v431 = vld [vmem:[%s2 + $0x8c] sm:$0xf]
  %v432 = vld [vmem:[%s2 + $0x90] sm:$0xff]
  %v433 = vld [vmem:[%s2 + $0x98] sm:$0xf]
  %v434 = vld [vmem:[%s2 + $0x9c] sm:$0xff]
  %v435 = vld [vmem:[%s2 + $0xa4] sm:$0xf]
  %v436 = vld [vmem:[%s2 + $0xa8] sm:$0xff]
  %v437 = vld [vmem:[%s2 + $0xb0] sm:$0xf]
  %v438 = vld [vmem:[%s2 + $0xb4] sm:$0xff]
  %v439 = vld [vmem:[%s2 + $0xbc] sm:$0xf]
  %v440 = vld [vmem:[%s4] sm:$0x1]
  %v441 = vld [vmem:[%s5] sm:$0xff]
  %v442 = vld [vmem:[%s5 + $0x8] sm:$0xf]
  %v443 = vld [vmem:[%s5 + $0xc] sm:$0xff]
  %v444 = vld [vmem:[%s5 + $0x14] sm:$0xf]
  %v445 = vld [vmem:[%s5 + $0x18] sm:$0xff]
  %v446 = vld [vmem:[%s5 + $0x20] sm:$0xf]
  %v447 = vld [vmem:[%s5 + $0x24] sm:$0xff]
  %v448 = vld [vmem:[%s5 + $0x2c] sm:$0xf]
  %v449 = vld [vmem:[%s5 + $0x30] sm:$0xff]
  %v450 = vld [vmem:[%s5 + $0x38] sm:$0xf]
  %v451 = vld [vmem:[%s5 + $0x3c] sm:$0xff]
  %v452 = vld [vmem:[%s5 + $0x44] sm:$0xf]
  %v453 = vld [vmem:[%s5 + $0x48] sm:$0xff]
  %v454 = vld [vmem:[%s5 + $0x50] sm:$0xf]
  %v455 = vld [vmem:[%s5 + $0x54] sm:$0xff]
  %v456 = vld [vmem:[%s5 + $0x5c] sm:$0xf]
  %v457 = vld [vmem:[%s5 + $0x60] sm:$0xff]
  %v458 = vld [vmem:[%s5 + $0x68] sm:$0xf]
  %v459 = vld [vmem:[%s5 + $0x6c] sm:$0xff]
  %v460 = vld [vmem:[%s5 + $0x74] sm:$0xf]
  %v461 = vld [vmem:[%s5 + $0x78] sm:$0xff]
  %v462 = vld [vmem:[%s5 + $0x80] sm:$0xf]
  %v463 = vld [vmem:[%s5 + $0x84] sm:$0xff]
  %v464 = vld [vmem:[%s5 + $0x8c] sm:$0xf]
  %v465 = vld [vmem:[%s5 + $0x90] sm:$0xff]
  %v466 = vld [vmem:[%s5 + $0x98] sm:$0xf]
  %v467 = vld [vmem:[%s5 + $0x9c] sm:$0xff]
  %v468 = vld [vmem:[%s5 + $0xa4] sm:$0xf]
  %v469 = vld [vmem:[%s5 + $0xa8] sm:$0xff]
  %v470 = vld [vmem:[%s5 + $0xb0] sm:$0xf]
  %v471 = vld [vmem:[%s5 + $0xb4] sm:$0xff]
  %v472 = vld [vmem:[%s5 + $0xbc] sm:$0xf]
  %v473 = vld [vmem:[%s7] sm:$0x7]
  %v475 = vlaneseq
  %v476 = vshrl.u32 %v475, 7
  %v477 = vsub.s32 0, %v476
  %v478 = vrot.slane %v473, %v477
  %v479 = vlaneseq
  %v480 = vshrl.u32 %v479, 7
  %v481 = vsub.s32 1, %v480
  %v482 = vrot.slane %v473, %v481
  %v483 = vlaneseq
  %v484 = vshrl.u32 %v483, 7
  %v485 = vsub.s32 2, %v484
  %v486 = vrot.slane %v473, %v485
  %v522 = vunpack.c.l.b16 %v441
  %v523 = vunpack.c.h.b16 %v441
  %v524 = vunpack.c.l.b16 %v442
  %v525 = vunpack.c.l.b16 %v443
  %v526 = vunpack.c.h.b16 %v443
  %v527 = vunpack.c.l.b16 %v444
  %v528 = vunpack.c.l.b16 %v445
  %v529 = vunpack.c.h.b16 %v445
  %v530 = vunpack.c.l.b16 %v446
  %v531 = vunpack.c.l.b16 %v447
  %v532 = vunpack.c.h.b16 %v447
  %v533 = vunpack.c.l.b16 %v448
  %v534 = vunpack.c.l.b16 %v449
  %v535 = vunpack.c.h.b16 %v449
  %v536 = vunpack.c.l.b16 %v450
  %v537 = vunpack.c.l.b16 %v451
  %v538 = vunpack.c.h.b16 %v451
  %v539 = vunpack.c.l.b16 %v452
  %v540 = vunpack.c.l.b16 %v453
  %v541 = vunpack.c.h.b16 %v453
  %v542 = vunpack.c.l.b16 %v454
  %v543 = vunpack.c.l.b16 %v455
  %v544 = vunpack.c.h.b16 %v455
  %v545 = vunpack.c.l.b16 %v456
  %v546 = vunpack.c.l.b16 %v457
  %v547 = vunpack.c.h.b16 %v457
  %v548 = vunpack.c.l.b16 %v458
  %v549 = vunpack.c.l.b16 %v459
  %v550 = vunpack.c.h.b16 %v459
  %v551 = vunpack.c.l.b16 %v460
  %v552 = vunpack.c.l.b16 %v461
  %v553 = vunpack.c.h.b16 %v461
  %v554 = vunpack.c.l.b16 %v462
  %v555 = vunpack.c.l.b16 %v463
  %v556 = vunpack.c.h.b16 %v463
  %v557 = vunpack.c.l.b16 %v464
  %v558 = vunpack.c.l.b16 %v465
  %v559 = vunpack.c.h.b16 %v465
  %v560 = vunpack.c.l.b16 %v466
  %v561 = vunpack.c.l.b16 %v467
  %v562 = vunpack.c.h.b16 %v467
  %v563 = vunpack.c.l.b16 %v468
  %v564 = vunpack.c.l.b16 %v469
  %v565 = vunpack.c.h.b16 %v469
  %v566 = vunpack.c.l.b16 %v470
  %v567 = vunpack.c.l.b16 %v471
  %v568 = vunpack.c.h.b16 %v471
  %v569 = vunpack.c.l.b16 %v472
  %v570 = vpack.c.b16 %v525, %v522
  %v571 = vpack.c.b16 %v526, %v523
  %v572 = vpack.c.b16 %v527, %v524
  %v573 = vpack.c.b16 %v531, %v528
  %v574 = vpack.c.b16 %v532, %v529
  %v575 = vpack.c.b16 %v533, %v530
  %v576 = vpack.c.b16 %v537, %v534
  %v577 = vpack.c.b16 %v538, %v535
  %v578 = vpack.c.b16 %v539, %v536
  %v579 = vpack.c.b16 %v543, %v540
  %v580 = vpack.c.b16 %v544, %v541
  %v581 = vpack.c.b16 %v545, %v542
  %v582 = vpack.c.b16 %v549, %v546
  %v583 = vpack.c.b16 %v550, %v547
  %v584 = vpack.c.b16 %v551, %v548
  %v585 = vpack.c.b16 %v555, %v552
  %v586 = vpack.c.b16 %v556, %v553
  %v587 = vpack.c.b16 %v557, %v554
  %v588 = vpack.c.b16 %v561, %v558
  %v589 = vpack.c.b16 %v562, %v559
  %v590 = vpack.c.b16 %v563, %v560
  %v591 = vpack.c.b16 %v567, %v564
  %v592 = vpack.c.b16 %v568, %v565
  %v593 = vpack.c.b16 %v569, %v566
  %618 = vmatprep.subr.bf16.mxu0 %v592
  %619 = vmatpush1.bf16.msra.mxu0 %v591
  %620 = vmatprep.subr.bf16.mxu0 %v589
  %621 = vmatpush1.bf16.msra.mxu0 %v588
  %622 = vmatprep.subr.bf16.mxu0 %v586
  %623 = vmatpush1.bf16.msra.mxu0 %v585
  %624 = vmatprep.subr.bf16.mxu0 %v583
  %625 = vmatpush1.bf16.msra.mxu0 %v582
  %626 = vmatprep.subr.bf16.mxu0 %v580
  %627 = vmatpush1.bf16.msra.mxu0 %v579
  %628 = vmatprep.subr.bf16.mxu0 %v577
  %629 = vmatpush1.bf16.msra.mxu0 %v576
  %630 = vmatprep.subr.bf16.mxu0 %v574
  %631 = vmatpush1.bf16.msra.mxu0 %v573
  %632 = vmatprep.subr.bf16.mxu0 %v571
  %633 = vmatpush1.bf16.msra.mxu0 %v570
  %634 = vmatprep.subr.bf16.mxu0 0
  %635 = vmatpush2.bf16.msra.mxu0 0
  %636 = vmatprep.subr.bf16.mxu0 0
  %637 = vmatpush2.bf16.msra.mxu0 0
  %638 = vmatprep.subr.bf16.mxu0 0
  %639 = vmatpush2.bf16.msra.mxu0 0
  %640 = vmatprep.subr.bf16.mxu0 0
  %641 = vmatpush2.bf16.msra.mxu0 0
  %642 = vmatprep.subr.bf16.mxu0 0
  %643 = vmatpush2.bf16.msra.mxu0 0
  %644 = vmatprep.subr.bf16.mxu0 0
  %645 = vmatpush2.bf16.msra.mxu0 0
  %646 = vmatprep.subr.bf16.mxu0 0
  %647 = vmatpush2.bf16.msra.mxu0 0
  %648 = vmatprep.subr.bf16.mxu0 0
  %649 = vmatpush2.bf16.msra.mxu0 0
  %650 = vmatprep.mubr.bf16.mxu0 0
  %651 = vmatmul.mubr.bf16.gmra.mxu0 %v65
  %v652 = vpop.f32.mrf.mxu0
  %v653 = vadd.f32 %v478, %v652
  %v654 = vpop.f32.mrf.mxu0
  %v655 = vadd.f32 %v482, %v654
  %v656 = vpop.f32.mrf.mxu0
  %v657 = vadd.f32 %v478, %v656
  %v658 = vpop.f32.mrf.mxu0
  %v659 = vadd.f32 %v482, %v658
  %660 = vmatprep.mubr.bf16.mxu0 0
  %661 = vmatmul.mubr.bf16.gmra.mxu0 %v66
  %v662 = vpop.f32.mrf.mxu0
  %v663 = vadd.f32 %v478, %v662
  %v664 = vpop.f32.mrf.mxu0
  %v665 = vadd.f32 %v482, %v664
  %v666 = vpop.f32.mrf.mxu0
  %v667 = vadd.f32 %v478, %v666
  %v668 = vpop.f32.mrf.mxu0
  %v669 = vadd.f32 %v482, %v668
  %670 = vmatprep.mubr.bf16.mxu0 0
  %671 = vmatmul.mubr.bf16.gmra.mxu0 %v67
  %v672 = vpop.f32.mrf.mxu0
  %v673 = vadd.f32 %v478, %v672
  %v674 = vpop.f32.mrf.mxu0
  %v675 = vadd.f32 %v482, %v674
  %v676 = vpop.f32.mrf.mxu0
  %v677 = vadd.f32 %v478, %v676
  %v678 = vpop.f32.mrf.mxu0
  %v679 = vadd.f32 %v482, %v678
  %680 = vmatprep.mubr.bf16.mxu0 0
  %681 = vmatmul.mubr.bf16.gmra.mxu0 %v68
  %v682 = vpop.f32.mrf.mxu0
  %v683 = vadd.f32 %v478, %v682
  %v684 = vpop.f32.mrf.mxu0
  %v685 = vadd.f32 %v482, %v684
  %v686 = vpop.f32.mrf.mxu0
  %v687 = vadd.f32 %v478, %v686
  %v688 = vpop.f32.mrf.mxu0
  %v689 = vadd.f32 %v482, %v688
  %690 = vdwg.mxu0
  %691 = vmatprep.subr.bf16.mxu0 0
  %692 = vmatpush1.bf16.msra.mxu0 %v593
  %693 = vmatprep.subr.bf16.mxu0 0
  %694 = vmatpush1.bf16.msra.mxu0 %v590
  %695 = vmatprep.subr.bf16.mxu0 0
  %696 = vmatpush1.bf16.msra.mxu0 %v587
  %697 = vmatprep.subr.bf16.mxu0 0
  %698 = vmatpush1.bf16.msra.mxu0 %v584
  %699 = vmatprep.subr.bf16.mxu0 0
  %700 = vmatpush1.bf16.msra.mxu0 %v581
  %701 = vmatprep.subr.bf16.mxu0 0
  %702 = vmatpush1.bf16.msra.mxu0 %v578
  %703 = vmatprep.subr.bf16.mxu0 0
  %704 = vmatpush1.bf16.msra.mxu0 %v575
  %705 = vmatprep.subr.bf16.mxu0 0
  %706 = vmatpush1.bf16.msra.mxu0 %v572
  %707 = vmatprep.subr.bf16.mxu0 0
  %708 = vmatpush2.bf16.msra.mxu0 0
  %709 = vmatprep.subr.bf16.mxu0 0
  %710 = vmatpush2.bf16.msra.mxu0 0
  %711 = vmatprep.subr.bf16.mxu0 0
  %712 = vmatpush2.bf16.msra.mxu0 0
  %713 = vmatprep.subr.bf16.mxu0 0
  %714 = vmatpush2.bf16.msra.mxu0 0
  %715 = vmatprep.subr.bf16.mxu0 0
  %716 = vmatpush2.bf16.msra.mxu0 0
  %717 = vmatprep.subr.bf16.mxu0 0
  %718 = vmatpush2.bf16.msra.mxu0 0
  %719 = vmatprep.subr.bf16.mxu0 0
  %720 = vmatpush2.bf16.msra.mxu0 0
  %721 = vmatprep.subr.bf16.mxu0 0
  %722 = vmatpush2.bf16.msra.mxu0 0
  %723 = vmatprep.mubr.bf16.mxu0 0
  %724 = vmatmul.mubr.bf16.gmra.mxu0 %v65
  %v725 = vpop.f32.mrf.mxu0
  %v726 = vadd.f32 %v486, %v725
  %v727 = vpop.f32.mrf.mxu0
  %v728 = vpop.f32.mrf.mxu0
  %v729 = vadd.f32 %v486, %v728
  %v730 = vpop.f32.mrf.mxu0
  %731 = vmatprep.mubr.bf16.mxu0 0
  %732 = vmatmul.mubr.bf16.gmra.mxu0 %v66
  %v733 = vpop.f32.mrf.mxu0
  %v734 = vadd.f32 %v486, %v733
  %v735 = vpop.f32.mrf.mxu0
  %v736 = vpop.f32.mrf.mxu0
  %v737 = vadd.f32 %v486, %v736
  %v738 = vpop.f32.mrf.mxu0
  %739 = vmatprep.mubr.bf16.mxu0 0
  %740 = vmatmul.mubr.bf16.gmra.mxu0 %v67
  %v741 = vpop.f32.mrf.mxu0
  %v742 = vadd.f32 %v486, %v741
  %v743 = vpop.f32.mrf.mxu0
  %v744 = vpop.f32.mrf.mxu0
  %v745 = vadd.f32 %v486, %v744
  %v746 = vpop.f32.mrf.mxu0
  %747 = vmatprep.mubr.bf16.mxu0 0
  %748 = vmatmul.mubr.bf16.gmra.mxu0 %v68
  %v749 = vpop.f32.mrf.mxu0
  %v750 = vadd.f32 %v486, %v749
  %v751 = vpop.f32.mrf.mxu0
  %v752 = vpop.f32.mrf.mxu0
  %v753 = vadd.f32 %v486, %v752
  %v754 = vpop.f32.mrf.mxu0
  %755 = vdwg.mxu0
  %s756 = scalar_lea.vmem [#allocation3], 192
  %757 = vst [vmem:[%s756] sm:$0xff] %v653
  %758 = vst [vmem:[%s756 + $0x8] sm:$0xff] %v655
  %759 = vst [vmem:[%s756 + $0x10] sm:$0xff] %v726
  %760 = vst [vmem:[%s756 + $0x18] sm:$0xff] %v657
  %761 = vst [vmem:[%s756 + $0x20] sm:$0xff] %v659
  %762 = vst [vmem:[%s756 + $0x28] sm:$0xff] %v729
  %763 = vst [vmem:[%s756 + $0x30] sm:$0xff] %v663
  %764 = vst [vmem:[%s756 + $0x38] sm:$0xff] %v665
  %765 = vst [vmem:[%s756 + $0x40] sm:$0xff] %v734
  %766 = vst [vmem:[%s756 + $0x48] sm:$0xff] %v667
  %767 = vst [vmem:[%s756 + $0x50] sm:$0xff] %v669
  %768 = vst [vmem:[%s756 + $0x58] sm:$0xff] %v737
  %769 = vst [vmem:[%s756 + $0x60] sm:$0xff] %v673
  %770 = vst [vmem:[%s756 + $0x68] sm:$0xff] %v675
  %771 = vst [vmem:[%s756 + $0x70] sm:$0xff] %v742
  %772 = vst [vmem:[%s756 + $0x78] sm:$0xff] %v677
  %773 = vst [vmem:[%s756 + $0x80] sm:$0xff] %v679
  %774 = vst [vmem:[%s756 + $0x88] sm:$0xff] %v745
  %775 = vst [vmem:[%s756 + $0x90] sm:$0xff] %v683
  %776 = vst [vmem:[%s756 + $0x98] sm:$0xff] %v685
  %777 = vst [vmem:[%s756 + $0xa0] sm:$0xff] %v750
  %778 = vst [vmem:[%s756 + $0xa8] sm:$0xff] %v687
  %779 = vst [vmem:[%s756 + $0xb0] sm:$0xff] %v689
  %780 = vst [vmem:[%s756 + $0xb8] sm:$0xff] %v753
  %v781 = vld [vmem:[%s6] sm:$0xff]
  %v782 = vld [vmem:[%s6 + $0x8] sm:$0xf]
  %v783 = vld [vmem:[%s6 + $0xc] sm:$0xff]
  %v784 = vld [vmem:[%s6 + $0x14] sm:$0xf]
  %v785 = vld [vmem:[%s6 + $0x18] sm:$0xff]
  %v786 = vld [vmem:[%s6 + $0x20] sm:$0xf]
  %v787 = vld [vmem:[%s6 + $0x24] sm:$0xff]
  %v788 = vld [vmem:[%s6 + $0x2c] sm:$0xf]
  %v789 = vld [vmem:[%s6 + $0x30] sm:$0xff]
  %v790 = vld [vmem:[%s6 + $0x38] sm:$0xf]
  %v791 = vld [vmem:[%s6 + $0x3c] sm:$0xff]
  %v792 = vld [vmem:[%s6 + $0x44] sm:$0xf]
  %v793 = vld [vmem:[%s6 + $0x48] sm:$0xff]
  %v794 = vld [vmem:[%s6 + $0x50] sm:$0xf]
  %v795 = vld [vmem:[%s6 + $0x54] sm:$0xff]
  %v796 = vld [vmem:[%s6 + $0x5c] sm:$0xf]
  %v797 = vld [vmem:[%s6 + $0x60] sm:$0xff]
  %v798 = vld [vmem:[%s6 + $0x68] sm:$0xf]
  %v799 = vld [vmem:[%s6 + $0x6c] sm:$0xff]
  %v800 = vld [vmem:[%s6 + $0x74] sm:$0xf]
  %v801 = vld [vmem:[%s6 + $0x78] sm:$0xff]
  %v802 = vld [vmem:[%s6 + $0x80] sm:$0xf]
  %v803 = vld [vmem:[%s6 + $0x84] sm:$0xff]
  %v804 = vld [vmem:[%s6 + $0x8c] sm:$0xf]
  %v805 = vld [vmem:[%s6 + $0x90] sm:$0xff]
  %v806 = vld [vmem:[%s6 + $0x98] sm:$0xf]
  %v807 = vld [vmem:[%s6 + $0x9c] sm:$0xff]
  %v808 = vld [vmem:[%s6 + $0xa4] sm:$0xf]
  %v809 = vld [vmem:[%s6 + $0xa8] sm:$0xff]
  %v810 = vld [vmem:[%s6 + $0xb0] sm:$0xf]
  %v811 = vld [vmem:[%s6 + $0xb4] sm:$0xff]
  %v812 = vld [vmem:[%s6 + $0xbc] sm:$0xf]
  %v813 = vld [vmem:[%s8] sm:$0x1]
  %v846 = vunpack.c.l.b16 %v408
  %v847 = vunpack.c.h.b16 %v408
  %v848 = vunpack.c.l.b16 %v409
  %v849 = vunpack.c.l.b16 %v410
  %v850 = vunpack.c.h.b16 %v410
  %v851 = vunpack.c.l.b16 %v411
  %v852 = vunpack.c.l.b16 %v412
  %v853 = vunpack.c.h.b16 %v412
  %v854 = vunpack.c.l.b16 %v413
  %v855 = vunpack.c.l.b16 %v414
  %v856 = vunpack.c.h.b16 %v414
  %v857 = vunpack.c.l.b16 %v415
  %v858 = vunpack.c.l.b16 %v416
  %v859 = vunpack.c.h.b16 %v416
  %v860 = vunpack.c.l.b16 %v417
  %v861 = vunpack.c.l.b16 %v418
  %v862 = vunpack.c.h.b16 %v418
  %v863 = vunpack.c.l.b16 %v419
  %v864 = vunpack.c.l.b16 %v420
  %v865 = vunpack.c.h.b16 %v420
  %v866 = vunpack.c.l.b16 %v421
  %v867 = vunpack.c.l.b16 %v422
  %v868 = vunpack.c.h.b16 %v422
  %v869 = vunpack.c.l.b16 %v423
  %v870 = vunpack.c.l.b16 %v424
  %v871 = vunpack.c.h.b16 %v424
  %v872 = vunpack.c.l.b16 %v425
  %v873 = vunpack.c.l.b16 %v426
  %v874 = vunpack.c.h.b16 %v426
  %v875 = vunpack.c.l.b16 %v427
  %v876 = vunpack.c.l.b16 %v428
  %v877 = vunpack.c.h.b16 %v428
  %v878 = vunpack.c.l.b16 %v429
  %v879 = vunpack.c.l.b16 %v430
  %v880 = vunpack.c.h.b16 %v430
  %v881 = vunpack.c.l.b16 %v431
  %v882 = vunpack.c.l.b16 %v432
  %v883 = vunpack.c.h.b16 %v432
  %v884 = vunpack.c.l.b16 %v433
  %v885 = vunpack.c.l.b16 %v434
  %v886 = vunpack.c.h.b16 %v434
  %v887 = vunpack.c.l.b16 %v435
  %v888 = vunpack.c.l.b16 %v436
  %v889 = vunpack.c.h.b16 %v436
  %v890 = vunpack.c.l.b16 %v437
  %v891 = vunpack.c.l.b16 %v438
  %v892 = vunpack.c.h.b16 %v438
  %v893 = vunpack.c.l.b16 %v439
  %v894 = vpack.c.b16 %v849, %v846
  %v895 = vpack.c.b16 %v850, %v847
  %v896 = vpack.c.b16 %v851, %v848
  %v897 = vpack.c.b16 %v855, %v852
  %v898 = vpack.c.b16 %v856, %v853
  %v899 = vpack.c.b16 %v857, %v854
  %v900 = vpack.c.b16 %v861, %v858
  %v901 = vpack.c.b16 %v862, %v859
  %v902 = vpack.c.b16 %v863, %v860
  %v903 = vpack.c.b16 %v867, %v864
  %v904 = vpack.c.b16 %v868, %v865
  %v905 = vpack.c.b16 %v869, %v866
  %v906 = vpack.c.b16 %v873, %v870
  %v907 = vpack.c.b16 %v874, %v871
  %v908 = vpack.c.b16 %v875, %v872
  %v909 = vpack.c.b16 %v879, %v876
  %v910 = vpack.c.b16 %v880, %v877
  %v911 = vpack.c.b16 %v881, %v878
  %v912 = vpack.c.b16 %v885, %v882
  %v913 = vpack.c.b16 %v886, %v883
  %v914 = vpack.c.b16 %v887, %v884
  %v915 = vpack.c.b16 %v891, %v888
  %v916 = vpack.c.b16 %v892, %v889
  %v917 = vpack.c.b16 %v893, %v890
  %942 = vmatprep.subr.bf16.mxu0 %v916
  %943 = vmatpush1.bf16.msra.mxu0 %v915
  %944 = vmatprep.subr.bf16.mxu0 %v913
  %945 = vmatpush1.bf16.msra.mxu0 %v912
  %946 = vmatprep.subr.bf16.mxu0 %v910
  %947 = vmatpush1.bf16.msra.mxu0 %v909
  %948 = vmatprep.subr.bf16.mxu0 %v907
  %949 = vmatpush1.bf16.msra.mxu0 %v906
  %950 = vmatprep.subr.bf16.mxu0 %v904
  %951 = vmatpush1.bf16.msra.mxu0 %v903
  %952 = vmatprep.subr.bf16.mxu0 %v901
  %953 = vmatpush1.bf16.msra.mxu0 %v900
  %954 = vmatprep.subr.bf16.mxu0 %v898
  %955 = vmatpush1.bf16.msra.mxu0 %v897
  %956 = vmatprep.subr.bf16.mxu0 %v895
  %957 = vmatpush1.bf16.msra.mxu0 %v894
  %958 = vmatprep.subr.bf16.mxu0 0
  %959 = vmatpush2.bf16.msra.mxu0 0
  %960 = vmatprep.subr.bf16.mxu0 0
  %961 = vmatpush2.bf16.msra.mxu0 0
  %962 = vmatprep.subr.bf16.mxu0 0
  %963 = vmatpush2.bf16.msra.mxu0 0
  %964 = vmatprep.subr.bf16.mxu0 0
  %965 = vmatpush2.bf16.msra.mxu0 0
  %966 = vmatprep.subr.bf16.mxu0 0
  %967 = vmatpush2.bf16.msra.mxu0 0
  %968 = vmatprep.subr.bf16.mxu0 0
  %969 = vmatpush2.bf16.msra.mxu0 0
  %970 = vmatprep.subr.bf16.mxu0 0
  %971 = vmatpush2.bf16.msra.mxu0 0
  %972 = vmatprep.subr.bf16.mxu0 0
  %973 = vmatpush2.bf16.msra.mxu0 0
  %974 = vmatprep.mubr.bf16.mxu0 0
  %975 = vmatmul.mubr.bf16.gmra.mxu0 0
  %v976 = vpop.f32.mrf.mxu0
  %v977 = vadd.f32 0.0, %v976
  %v978 = vpop.f32.mrf.mxu0
  %v979 = vadd.f32 0.0, %v978
  %v980 = vpop.f32.mrf.mxu0
  %v981 = vpop.f32.mrf.mxu0
  %982 = vdwg.mxu0
  %983 = vmatprep.subr.bf16.mxu0 0
  %984 = vmatpush1.bf16.msra.mxu0 %v917
  %985 = vmatprep.subr.bf16.mxu0 0
  %986 = vmatpush1.bf16.msra.mxu0 %v914
  %987 = vmatprep.subr.bf16.mxu0 0
  %988 = vmatpush1.bf16.msra.mxu0 %v911
  %989 = vmatprep.subr.bf16.mxu0 0
  %990 = vmatpush1.bf16.msra.mxu0 %v908
  %991 = vmatprep.subr.bf16.mxu0 0
  %992 = vmatpush1.bf16.msra.mxu0 %v905
  %993 = vmatprep.subr.bf16.mxu0 0
  %994 = vmatpush1.bf16.msra.mxu0 %v902
  %995 = vmatprep.subr.bf16.mxu0 0
  %996 = vmatpush1.bf16.msra.mxu0 %v899
  %997 = vmatprep.subr.bf16.mxu0 0
  %998 = vmatpush1.bf16.msra.mxu0 %v896
  %999 = vmatprep.subr.bf16.mxu0 0
  %1000 = vmatpush2.bf16.msra.mxu0 0
  %1001 = vmatprep.subr.bf16.mxu0 0
  %1002 = vmatpush2.bf16.msra.mxu0 0
  %1003 = vmatprep.subr.bf16.mxu0 0
  %1004 = vmatpush2.bf16.msra.mxu0 0
  %1005 = vmatprep.subr.bf16.mxu0 0
  %1006 = vmatpush2.bf16.msra.mxu0 0
  %1007 = vmatprep.subr.bf16.mxu0 0
  %1008 = vmatpush2.bf16.msra.mxu0 0
  %1009 = vmatprep.subr.bf16.mxu0 0
  %1010 = vmatpush2.bf16.msra.mxu0 0
  %1011 = vmatprep.subr.bf16.mxu0 0
  %1012 = vmatpush2.bf16.msra.mxu0 0
  %1013 = vmatprep.subr.bf16.mxu0 0
  %1014 = vmatpush2.bf16.msra.mxu0 0
  %1015 = vmatprep.mubr.bf16.mxu0 0
  %1016 = vmatmul.mubr.bf16.gmra.mxu0 0
  %v1017 = vpop.f32.mrf.mxu0
  %v1018 = vadd.f32 0.0, %v1017
  %v1019 = vpop.f32.mrf.mxu0
  %v1020 = vpop.f32.mrf.mxu0
  %v1021 = vpop.f32.mrf.mxu0
  %1022 = vdwg.mxu0
  %v1055 = vunpack.c.l.b16 %v781
  %v1056 = vunpack.c.h.b16 %v781
  %v1057 = vunpack.c.l.b16 %v782
  %v1058 = vunpack.c.l.b16 %v783
  %v1059 = vunpack.c.h.b16 %v783
  %v1060 = vunpack.c.l.b16 %v784
  %v1061 = vunpack.c.l.b16 %v785
  %v1062 = vunpack.c.h.b16 %v785
  %v1063 = vunpack.c.l.b16 %v786
  %v1064 = vunpack.c.l.b16 %v787
  %v1065 = vunpack.c.h.b16 %v787
  %v1066 = vunpack.c.l.b16 %v788
  %v1067 = vunpack.c.l.b16 %v789
  %v1068 = vunpack.c.h.b16 %v789
  %v1069 = vunpack.c.l.b16 %v790
  %v1070 = vunpack.c.l.b16 %v791
  %v1071 = vunpack.c.h.b16 %v791
  %v1072 = vunpack.c.l.b16 %v792
  %v1073 = vunpack.c.l.b16 %v793
  %v1074 = vunpack.c.h.b16 %v793
  %v1075 = vunpack.c.l.b16 %v794
  %v1076 = vunpack.c.l.b16 %v795
  %v1077 = vunpack.c.h.b16 %v795
  %v1078 = vunpack.c.l.b16 %v796
  %v1079 = vunpack.c.l.b16 %v797
  %v1080 = vunpack.c.h.b16 %v797
  %v1081 = vunpack.c.l.b16 %v798
  %v1082 = vunpack.c.l.b16 %v799
  %v1083 = vunpack.c.h.b16 %v799
  %v1084 = vunpack.c.l.b16 %v800
  %v1085 = vunpack.c.l.b16 %v801
  %v1086 = vunpack.c.h.b16 %v801
  %v1087 = vunpack.c.l.b16 %v802
  %v1088 = vunpack.c.l.b16 %v803
  %v1089 = vunpack.c.h.b16 %v803
  %v1090 = vunpack.c.l.b16 %v804
  %v1091 = vunpack.c.l.b16 %v805
  %v1092 = vunpack.c.h.b16 %v805
  %v1093 = vunpack.c.l.b16 %v806
  %v1094 = vunpack.c.l.b16 %v807
  %v1095 = vunpack.c.h.b16 %v807
  %v1096 = vunpack.c.l.b16 %v808
  %v1097 = vunpack.c.l.b16 %v809
  %v1098 = vunpack.c.h.b16 %v809
  %v1099 = vunpack.c.l.b16 %v810
  %v1100 = vunpack.c.l.b16 %v811
  %v1101 = vunpack.c.h.b16 %v811
  %v1102 = vunpack.c.l.b16 %v812
  %v1103 = vpack.c.b16 %v1058, %v1055
  %v1104 = vpack.c.b16 %v1059, %v1056
  %v1105 = vpack.c.b16 %v1060, %v1057
  %v1106 = vpack.c.b16 %v1064, %v1061
  %v1107 = vpack.c.b16 %v1065, %v1062
  %v1108 = vpack.c.b16 %v1066, %v1063
  %v1109 = vpack.c.b16 %v1070, %v1067
  %v1110 = vpack.c.b16 %v1071, %v1068
  %v1111 = vpack.c.b16 %v1072, %v1069
  %v1112 = vpack.c.b16 %v1076, %v1073
  %v1113 = vpack.c.b16 %v1077, %v1074
  %v1114 = vpack.c.b16 %v1078, %v1075
  %v1115 = vpack.c.b16 %v1082, %v1079
  %v1116 = vpack.c.b16 %v1083, %v1080
  %v1117 = vpack.c.b16 %v1084, %v1081
  %v1118 = vpack.c.b16 %v1088, %v1085
  %v1119 = vpack.c.b16 %v1089, %v1086
  %v1120 = vpack.c.b16 %v1090, %v1087
  %v1121 = vpack.c.b16 %v1094, %v1091
  %v1122 = vpack.c.b16 %v1095, %v1092
  %v1123 = vpack.c.b16 %v1096, %v1093
  %v1124 = vpack.c.b16 %v1100, %v1097
  %v1125 = vpack.c.b16 %v1101, %v1098
  %v1126 = vpack.c.b16 %v1102, %v1099
  %1151 = vmatprep.subr.bf16.mxu0 %v1125
  %1152 = vmatpush1.bf16.msra.mxu0 %v1124
  %1153 = vmatprep.subr.bf16.mxu0 %v1122
  %1154 = vmatpush1.bf16.msra.mxu0 %v1121
  %1155 = vmatprep.subr.bf16.mxu0 %v1119
  %1156 = vmatpush1.bf16.msra.mxu0 %v1118
  %1157 = vmatprep.subr.bf16.mxu0 %v1116
  %1158 = vmatpush1.bf16.msra.mxu0 %v1115
  %1159 = vmatprep.subr.bf16.mxu0 %v1113
  %1160 = vmatpush1.bf16.msra.mxu0 %v1112
  %1161 = vmatprep.subr.bf16.mxu0 %v1110
  %1162 = vmatpush1.bf16.msra.mxu0 %v1109
  %1163 = vmatprep.subr.bf16.mxu0 %v1107
  %1164 = vmatpush1.bf16.msra.mxu0 %v1106
  %1165 = vmatprep.subr.bf16.mxu0 %v1104
  %1166 = vmatpush1.bf16.msra.mxu0 %v1103
  %1167 = vmatprep.subr.bf16.mxu0 0
  %1168 = vmatpush2.bf16.msra.mxu0 0
  %1169 = vmatprep.subr.bf16.mxu0 0
  %1170 = vmatpush2.bf16.msra.mxu0 0
  %1171 = vmatprep.subr.bf16.mxu0 0
  %1172 = vmatpush2.bf16.msra.mxu0 0
  %1173 = vmatprep.subr.bf16.mxu0 0
  %1174 = vmatpush2.bf16.msra.mxu0 0
  %1175 = vmatprep.subr.bf16.mxu0 0
  %1176 = vmatpush2.bf16.msra.mxu0 0
  %1177 = vmatprep.subr.bf16.mxu0 0
  %1178 = vmatpush2.bf16.msra.mxu0 0
  %1179 = vmatprep.subr.bf16.mxu0 0
  %1180 = vmatpush2.bf16.msra.mxu0 0
  %1181 = vmatprep.subr.bf16.mxu0 0
  %1182 = vmatpush2.bf16.msra.mxu0 0
  %1183 = vmatprep.mubr.bf16.mxu0 0
  %1184 = vmatmul.mubr.bf16.gmra.mxu0 0
  %v1185 = vpop.f32.mrf.mxu0
  %v1186 = vadd.f32 0.0, %v1185
  %v1187 = vpop.f32.mrf.mxu0
  %v1188 = vadd.f32 0.0, %v1187
  %v1189 = vpop.f32.mrf.mxu0
  %v1190 = vpop.f32.mrf.mxu0
  %1191 = vdwg.mxu0
  %1192 = vmatprep.subr.bf16.mxu0 0
  %1193 = vmatpush1.bf16.msra.mxu0 %v1126
  %1194 = vmatprep.subr.bf16.mxu0 0
  %1195 = vmatpush1.bf16.msra.mxu0 %v1123
  %1196 = vmatprep.subr.bf16.mxu0 0
  %1197 = vmatpush1.bf16.msra.mxu0 %v1120
  %1198 = vmatprep.subr.bf16.mxu0 0
  %1199 = vmatpush1.bf16.msra.mxu0 %v1117
  %1200 = vmatprep.subr.bf16.mxu0 0
  %1201 = vmatpush1.bf16.msra.mxu0 %v1114
  %1202 = vmatprep.subr.bf16.mxu0 0
  %1203 = vmatpush1.bf16.msra.mxu0 %v1111
  %1204 = vmatprep.subr.bf16.mxu0 0
  %1205 = vmatpush1.bf16.msra.mxu0 %v1108
  %1206 = vmatprep.subr.bf16.mxu0 0
  %1207 = vmatpush1.bf16.msra.mxu0 %v1105
  %1208 = vmatprep.subr.bf16.mxu0 0
  %1209 = vmatpush2.bf16.msra.mxu0 0
  %1210 = vmatprep.subr.bf16.mxu0 0
  %1211 = vmatpush2.bf16.msra.mxu0 0
  %1212 = vmatprep.subr.bf16.mxu0 0
  %1213 = vmatpush2.bf16.msra.mxu0 0
  %1214 = vmatprep.subr.bf16.mxu0 0
  %1215 = vmatpush2.bf16.msra.mxu0 0
  %1216 = vmatprep.subr.bf16.mxu0 0
  %1217 = vmatpush2.bf16.msra.mxu0 0
  %1218 = vmatprep.subr.bf16.mxu0 0
  %1219 = vmatpush2.bf16.msra.mxu0 0
  %1220 = vmatprep.subr.bf16.mxu0 0
  %1221 = vmatpush2.bf16.msra.mxu0 0
  %1222 = vmatprep.subr.bf16.mxu0 0
  %1223 = vmatpush2.bf16.msra.mxu0 0
  %1224 = vmatprep.mubr.bf16.mxu0 0
  %1225 = vmatmul.mubr.bf16.gmra.mxu0 0
  %v1226 = vpop.f32.mrf.mxu0
  %v1227 = vadd.f32 0.0, %v1226
  %v1228 = vpop.f32.mrf.mxu0
  %v1229 = vpop.f32.mrf.mxu0
  %v1230 = vpop.f32.mrf.mxu0
  %1231 = vdwg.mxu0
  %v1232 = vld [vmem:[#allocation3] sm:$0xff]
  %v1233 = vld [vmem:[#allocation3 + $0x8] sm:$0xff]
  %v1234 = vld [vmem:[#allocation3 + $0x10] sm:$0xff]
  %v1235 = vadd.f32 %v1232, %v977
  %v1236 = vxor.u32 %v1235, 2147483648
  %v1237 = vmul.f32 %v1236, 1.442695
  %v1238 = vpow.pop %v1237
  %v1239 = vadd.f32 %v1238, 1.0
  %v1240 = vrcp.pop %v1239
  %v1241 = vmul.f32 1.0, %v1240
  %v1242 = vadd.f32 %v1233, %v979
  %v1243 = vxor.u32 %v1242, 2147483648
  %v1244 = vmul.f32 %v1243, 1.442695
  %v1245 = vpow.pop %v1244
  %v1246 = vadd.f32 %v1245, 1.0
  %v1247 = vrcp.pop %v1246
  %v1248 = vmul.f32 1.0, %v1247
  %v1250 = vlaneseq
  %v1251 = vshrl.u32 %v1250, 7
  %v1252 = vsub.s32 0, %v1251
  %v1253 = vrot.slane %v440, %v1252
  %v1255 = vadd.f32 %v1018, %v1253
  %v1256 = vmul.f32 %v1241, %v1255
  %v1257 = vadd.f32 %v1234, %v1256
  %v1258 = vtanh.pop %v1257
  %v1259 = vsub.f32 0.0, %v1258
  %v1260 = vmul.f32 %v1248, %v1259
  %v1261 = vadd.f32 %v1258, %v1260
  %1262 = vst [vmem:[#allocation2] sm:$0xff] %v1261
  %s1263 = scalar_lea.vmem [#allocation3], 360
  %v1264 = vld [vmem:[%s1263] sm:$0xff]
  %v1265 = vld [vmem:[%s1263 + $0x8] sm:$0xff]
  %v1266 = vld [vmem:[%s1263 + $0x10] sm:$0xff]
  %v1267 = vadd.f32 %v1264, %v1186
  %v1268 = vxor.u32 %v1267, 2147483648
  %v1269 = vmul.f32 %v1268, 1.442695
  %v1270 = vpow.pop %v1269
  %v1271 = vadd.f32 %v1270, 1.0
  %v1272 = vrcp.pop %v1271
  %v1273 = vmul.f32 1.0, %v1272
  %v1274 = vadd.f32 %v1265, %v1188
  %v1275 = vxor.u32 %v1274, 2147483648
  %v1276 = vmul.f32 %v1275, 1.442695
  %v1277 = vpow.pop %v1276
  %v1278 = vadd.f32 %v1277, 1.0
  %v1279 = vrcp.pop %v1278
  %v1280 = vmul.f32 1.0, %v1279
  %v1282 = vlaneseq
  %v1283 = vshrl.u32 %v1282, 7
  %v1284 = vsub.s32 0, %v1283
  %v1285 = vrot.slane %v813, %v1284
  %v1287 = vadd.f32 %v1227, %v1285
  %v1288 = vmul.f32 %v1273, %v1287
  %v1289 = vadd.f32 %v1266, %v1288
  %v1290 = vtanh.pop %v1289
  %v1291 = vsub.f32 0.0, %v1290
  %v1292 = vmul.f32 %v1280, %v1291
  %v1293 = vadd.f32 %v1290, %v1292
  %s1294 = scalar_lea.vmem [#allocation2], 112
  %1295 = vst [vmem:[%s1294 + $0x8] sm:$0xff] %v1293
  %v1296 = vpack.c.bf16 %v1261, %v1261
  %1297 = vmatprep.subr.bf16.mxu0 %v916
  %1298 = vmatpush1.bf16.msra.mxu0 %v915
  %1299 = vmatprep.subr.bf16.mxu0 %v913
  %1300 = vmatpush1.bf16.msra.mxu0 %v912
  %1301 = vmatprep.subr.bf16.mxu0 %v910
  %1302 = vmatpush1.bf16.msra.mxu0 %v909
  %1303 = vmatprep.subr.bf16.mxu0 %v907
  %1304 = vmatpush1.bf16.msra.mxu0 %v906
  %1305 = vmatprep.subr.bf16.mxu0 %v904
  %1306 = vmatpush1.bf16.msra.mxu0 %v903
  %1307 = vmatprep.subr.bf16.mxu0 %v901
  %1308 = vmatpush1.bf16.msra.mxu0 %v900
  %1309 = vmatprep.subr.bf16.mxu0 %v898
  %1310 = vmatpush1.bf16.msra.mxu0 %v897
  %1311 = vmatprep.subr.bf16.mxu0 %v895
  %1312 = vmatpush1.bf16.msra.mxu0 %v894
  %1313 = vmatprep.subr.bf16.mxu0 0
  %1314 = vmatpush2.bf16.msra.mxu0 0
  %1315 = vmatprep.subr.bf16.mxu0 0
  %1316 = vmatpush2.bf16.msra.mxu0 0
  %1317 = vmatprep.subr.bf16.mxu0 0
  %1318 = vmatpush2.bf16.msra.mxu0 0
  %1319 = vmatprep.subr.bf16.mxu0 0
  %1320 = vmatpush2.bf16.msra.mxu0 0
  %1321 = vmatprep.subr.bf16.mxu0 0
  %1322 = vmatpush2.bf16.msra.mxu0 0
  %1323 = vmatprep.subr.bf16.mxu0 0
  %1324 = vmatpush2.bf16.msra.mxu0 0
  %1325 = vmatprep.subr.bf16.mxu0 0
  %1326 = vmatpush2.bf16.msra.mxu0 0
  %1327 = vmatprep.subr.bf16.mxu0 0
  %1328 = vmatpush2.bf16.msra.mxu0 0
  %1329 = vmatprep.mubr.bf16.mxu0 0
  %1330 = vmatmul.mubr.bf16.gmra.mxu0 %v1296
  %v1331 = vpop.f32.mrf.mxu0
  %v1332 = vadd.f32 0.0, %v1331
  %v1333 = vpop.f32.mrf.mxu0
  %v1334 = vadd.f32 0.0, %v1333
  %v1335 = vpop.f32.mrf.mxu0
  %v1336 = vpop.f32.mrf.mxu0
  %1337 = vdwg.mxu0
  %1338 = vmatprep.subr.bf16.mxu0 0
  %1339 = vmatpush1.bf16.msra.mxu0 %v917
  %1340 = vmatprep.subr.bf16.mxu0 0
  %1341 = vmatpush1.bf16.msra.mxu0 %v914
  %1342 = vmatprep.subr.bf16.mxu0 0
  %1343 = vmatpush1.bf16.msra.mxu0 %v911
  %1344 = vmatprep.subr.bf16.mxu0 0
  %1345 = vmatpush1.bf16.msra.mxu0 %v908
  %1346 = vmatprep.subr.bf16.mxu0 0
  %1347 = vmatpush1.bf16.msra.mxu0 %v905
  %1348 = vmatprep.subr.bf16.mxu0 0
  %1349 = vmatpush1.bf16.msra.mxu0 %v902
  %1350 = vmatprep.subr.bf16.mxu0 0
  %1351 = vmatpush1.bf16.msra.mxu0 %v899
  %1352 = vmatprep.subr.bf16.mxu0 0
  %1353 = vmatpush1.bf16.msra.mxu0 %v896
  %1354 = vmatprep.subr.bf16.mxu0 0
  %1355 = vmatpush2.bf16.msra.mxu0 0
  %1356 = vmatprep.subr.bf16.mxu0 0
  %1357 = vmatpush2.bf16.msra.mxu0 0
  %1358 = vmatprep.subr.bf16.mxu0 0
  %1359 = vmatpush2.bf16.msra.mxu0 0
  %1360 = vmatprep.subr.bf16.mxu0 0
  %1361 = vmatpush2.bf16.msra.mxu0 0
  %1362 = vmatprep.subr.bf16.mxu0 0
  %1363 = vmatpush2.bf16.msra.mxu0 0
  %1364 = vmatprep.subr.bf16.mxu0 0
  %1365 = vmatpush2.bf16.msra.mxu0 0
  %1366 = vmatprep.subr.bf16.mxu0 0
  %1367 = vmatpush2.bf16.msra.mxu0 0
  %1368 = vmatprep.subr.bf16.mxu0 0
  %1369 = vmatpush2.bf16.msra.mxu0 0
  %1370 = vmatprep.mubr.bf16.mxu0 0
  %1371 = vmatmul.mubr.bf16.gmra.mxu0 %v1296
  %v1372 = vpop.f32.mrf.mxu0
  %v1373 = vadd.f32 0.0, %v1372
  %v1374 = vpop.f32.mrf.mxu0
  %v1375 = vpop.f32.mrf.mxu0
  %v1376 = vpop.f32.mrf.mxu0
  %1377 = vdwg.mxu0
  %v1378 = vpack.c.bf16 %v1293, %v1293
  %1379 = vmatprep.subr.bf16.mxu0 %v1125
  %1380 = vmatpush1.bf16.msra.mxu0 %v1124
  %1381 = vmatprep.subr.bf16.mxu0 %v1122
  %1382 = vmatpush1.bf16.msra.mxu0 %v1121
  %1383 = vmatprep.subr.bf16.mxu0 %v1119
  %1384 = vmatpush1.bf16.msra.mxu0 %v1118
  %1385 = vmatprep.subr.bf16.mxu0 %v1116
  %1386 = vmatpush1.bf16.msra.mxu0 %v1115
  %1387 = vmatprep.subr.bf16.mxu0 %v1113
  %1388 = vmatpush1.bf16.msra.mxu0 %v1112
  %1389 = vmatprep.subr.bf16.mxu0 %v1110
  %1390 = vmatpush1.bf16.msra.mxu0 %v1109
  %1391 = vmatprep.subr.bf16.mxu0 %v1107
  %1392 = vmatpush1.bf16.msra.mxu0 %v1106
  %1393 = vmatprep.subr.bf16.mxu0 %v1104
  %1394 = vmatpush1.bf16.msra.mxu0 %v1103
  %1395 = vmatprep.subr.bf16.mxu0 0
  %1396 = vmatpush2.bf16.msra.mxu0 0
  %1397 = vmatprep.subr.bf16.mxu0 0
  %1398 = vmatpush2.bf16.msra.mxu0 0
  %1399 = vmatprep.subr.bf16.mxu0 0
  %1400 = vmatpush2.bf16.msra.mxu0 0
  %1401 = vmatprep.subr.bf16.mxu0 0
  %1402 = vmatpush2.bf16.msra.mxu0 0
  %1403 = vmatprep.subr.bf16.mxu0 0
  %1404 = vmatpush2.bf16.msra.mxu0 0
  %1405 = vmatprep.subr.bf16.mxu0 0
  %1406 = vmatpush2.bf16.msra.mxu0 0
  %1407 = vmatprep.subr.bf16.mxu0 0
  %1408 = vmatpush2.bf16.msra.mxu0 0
  %1409 = vmatprep.subr.bf16.mxu0 0
  %1410 = vmatpush2.bf16.msra.mxu0 0
  %1411 = vmatprep.mubr.bf16.mxu0 0
  %1412 = vmatmul.mubr.bf16.gmra.mxu0 %v1378
  %v1413 = vpop.f32.mrf.mxu0
  %v1414 = vadd.f32 0.0, %v1413
  %v1415 = vpop.f32.mrf.mxu0
  %v1416 = vadd.f32 0.0, %v1415
  %v1417 = vpop.f32.mrf.mxu0
  %v1418 = vpop.f32.mrf.mxu0
  %1419 = vdwg.mxu0
  %1420 = vmatprep.subr.bf16.mxu0 0
  %1421 = vmatpush1.bf16.msra.mxu0 %v1126
  %1422 = vmatprep.subr.bf16.mxu0 0
  %1423 = vmatpush1.bf16.msra.mxu0 %v1123
  %1424 = vmatprep.subr.bf16.mxu0 0
  %1425 = vmatpush1.bf16.msra.mxu0 %v1120
  %1426 = vmatprep.subr.bf16.mxu0 0
  %1427 = vmatpush1.bf16.msra.mxu0 %v1117
  %1428 = vmatprep.subr.bf16.mxu0 0
  %1429 = vmatpush1.bf16.msra.mxu0 %v1114
  %1430 = vmatprep.subr.bf16.mxu0 0
  %1431 = vmatpush1.bf16.msra.mxu0 %v1111
  %1432 = vmatprep.subr.bf16.mxu0 0
  %1433 = vmatpush1.bf16.msra.mxu0 %v1108
  %1434 = vmatprep.subr.bf16.mxu0 0
  %1435 = vmatpush1.bf16.msra.mxu0 %v1105
  %1436 = vmatprep.subr.bf16.mxu0 0
  %1437 = vmatpush2.bf16.msra.mxu0 0
  %1438 = vmatprep.subr.bf16.mxu0 0
  %1439 = vmatpush2.bf16.msra.mxu0 0
  %1440 = vmatprep.subr.bf16.mxu0 0
  %1441 = vmatpush2.bf16.msra.mxu0 0
  %1442 = vmatprep.subr.bf16.mxu0 0
  %1443 = vmatpush2.bf16.msra.mxu0 0
  %1444 = vmatprep.subr.bf16.mxu0 0
  %1445 = vmatpush2.bf16.msra.mxu0 0
  %1446 = vmatprep.subr.bf16.mxu0 0
  %1447 = vmatpush2.bf16.msra.mxu0 0
  %1448 = vmatprep.subr.bf16.mxu0 0
  %1449 = vmatpush2.bf16.msra.mxu0 0
  %1450 = vmatprep.subr.bf16.mxu0 0
  %1451 = vmatpush2.bf16.msra.mxu0 0
  %1452 = vmatprep.mubr.bf16.mxu0 0
  %1453 = vmatmul.mubr.bf16.gmra.mxu0 %v1378
  %v1454 = vpop.f32.mrf.mxu0
  %v1455 = vadd.f32 0.0, %v1454
  %v1456 = vpop.f32.mrf.mxu0
  %v1457 = vpop.f32.mrf.mxu0
  %v1458 = vpop.f32.mrf.mxu0
  %1459 = vdwg.mxu0
  %s1460 = scalar_lea.vmem [#allocation3], 24
  %v1461 = vld [vmem:[%s1460] sm:$0xff]
  %v1462 = vld [vmem:[%s1460 + $0x8] sm:$0xff]
  %v1463 = vld [vmem:[%s1460 + $0x10] sm:$0xff]
  %v1464 = vadd.f32 %v1461, %v1332
  %v1465 = vxor.u32 %v1464, 2147483648
  %v1466 = vmul.f32 %v1465, 1.442695
  %v1467 = vpow.pop %v1466
  %v1468 = vadd.f32 %v1467, 1.0
  %v1469 = vrcp.pop %v1468
  %v1470 = vmul.f32 1.0, %v1469
  %v1471 = vadd.f32 %v1462, %v1334
  %v1472 = vxor.u32 %v1471, 2147483648
  %v1473 = vmul.f32 %v1472, 1.442695
  %v1474 = vpow.pop %v1473
  %v1475 = vadd.f32 %v1474, 1.0
  %v1476 = vrcp.pop %v1475
  %v1477 = vmul.f32 1.0, %v1476
  %v1478 = vadd.f32 %v1373, %v1253
  %v1479 = vmul.f32 %v1470, %v1478
  %v1480 = vadd.f32 %v1463, %v1479
  %v1481 = vtanh.pop %v1480
  %v1482 = vsub.f32 %v1261, %v1481
  %v1483 = vmul.f32 %v1477, %v1482
  %v1484 = vadd.f32 %v1481, %v1483
  %s1485 = scalar_lea.vmem [#allocation2], 16
  %1486 = vst [vmem:[%s1485] sm:$0xff] %v1484
  %s1487 = scalar_lea.vmem [#allocation3], 336
  %v1488 = vld [vmem:[%s1487] sm:$0xff]
  %v1489 = vld [vmem:[%s1487 + $0x8] sm:$0xff]
  %v1490 = vld [vmem:[%s1487 + $0x10] sm:$0xff]
  %v1491 = vadd.f32 %v1488, %v1414
  %v1492 = vxor.u32 %v1491, 2147483648
  %v1493 = vmul.f32 %v1492, 1.442695
  %v1494 = vpow.pop %v1493
  %v1495 = vadd.f32 %v1494, 1.0
  %v1496 = vrcp.pop %v1495
  %v1497 = vmul.f32 1.0, %v1496
  %v1498 = vadd.f32 %v1489, %v1416
  %v1499 = vxor.u32 %v1498, 2147483648
  %v1500 = vmul.f32 %v1499, 1.442695
  %v1501 = vpow.pop %v1500
  %v1502 = vadd.f32 %v1501, 1.0
  %v1503 = vrcp.pop %v1502
  %v1504 = vmul.f32 1.0, %v1503
  %v1505 = vadd.f32 %v1455, %v1285
  %v1506 = vmul.f32 %v1497, %v1505
  %v1507 = vadd.f32 %v1490, %v1506
  %v1508 = vtanh.pop %v1507
  %v1509 = vsub.f32 %v1293, %v1508
  %v1510 = vmul.f32 %v1504, %v1509
  %v1511 = vadd.f32 %v1508, %v1510
  %s1512 = scalar_lea.vmem [#allocation2], 96
  %1513 = vst [vmem:[%s1512 + $0x8] sm:$0xff] %v1511
  %v1514 = vpack.c.bf16 %v1484, %v1484
  %1515 = vmatprep.subr.bf16.mxu0 %v916
  %1516 = vmatpush1.bf16.msra.mxu0 %v915
  %1517 = vmatprep.subr.bf16.mxu0 %v913
  %1518 = vmatpush1.bf16.msra.mxu0 %v912
  %1519 = vmatprep.subr.bf16.mxu0 %v910
  %1520 = vmatpush1.bf16.msra.mxu0 %v909
  %1521 = vmatprep.subr.bf16.mxu0 %v907
  %1522 = vmatpush1.bf16.msra.mxu0 %v906
  %1523 = vmatprep.subr.bf16.mxu0 %v904
  %1524 = vmatpush1.bf16.msra.mxu0 %v903
  %1525 = vmatprep.subr.bf16.mxu0 %v901
  %1526 = vmatpush1.bf16.msra.mxu0 %v900
  %1527 = vmatprep.subr.bf16.mxu0 %v898
  %1528 = vmatpush1.bf16.msra.mxu0 %v897
  %1529 = vmatprep.subr.bf16.mxu0 %v895
  %1530 = vmatpush1.bf16.msra.mxu0 %v894
  %1531 = vmatprep.subr.bf16.mxu0 0
  %1532 = vmatpush2.bf16.msra.mxu0 0
  %1533 = vmatprep.subr.bf16.mxu0 0
  %1534 = vmatpush2.bf16.msra.mxu0 0
  %1535 = vmatprep.subr.bf16.mxu0 0
  %1536 = vmatpush2.bf16.msra.mxu0 0
  %1537 = vmatprep.subr.bf16.mxu0 0
  %1538 = vmatpush2.bf16.msra.mxu0 0
  %1539 = vmatprep.subr.bf16.mxu0 0
  %1540 = vmatpush2.bf16.msra.mxu0 0
  %1541 = vmatprep.subr.bf16.mxu0 0
  %1542 = vmatpush2.bf16.msra.mxu0 0
  %1543 = vmatprep.subr.bf16.mxu0 0
  %1544 = vmatpush2.bf16.msra.mxu0 0
  %1545 = vmatprep.subr.bf16.mxu0 0
  %1546 = vmatpush2.bf16.msra.mxu0 0
  %1547 = vmatprep.mubr.bf16.mxu0 0
  %1548 = vmatmul.mubr.bf16.gmra.mxu0 %v1514
  %v1549 = vpop.f32.mrf.mxu0
  %v1550 = vadd.f32 0.0, %v1549
  %v1551 = vpop.f32.mrf.mxu0
  %v1552 = vadd.f32 0.0, %v1551
  %v1553 = vpop.f32.mrf.mxu0
  %v1554 = vpop.f32.mrf.mxu0
  %1555 = vdwg.mxu0
  %1556 = vmatprep.subr.bf16.mxu0 0
  %1557 = vmatpush1.bf16.msra.mxu0 %v917
  %1558 = vmatprep.subr.bf16.mxu0 0
  %1559 = vmatpush1.bf16.msra.mxu0 %v914
  %1560 = vmatprep.subr.bf16.mxu0 0
  %1561 = vmatpush1.bf16.msra.mxu0 %v911
  %1562 = vmatprep.subr.bf16.mxu0 0
  %1563 = vmatpush1.bf16.msra.mxu0 %v908
  %1564 = vmatprep.subr.bf16.mxu0 0
  %1565 = vmatpush1.bf16.msra.mxu0 %v905
  %1566 = vmatprep.subr.bf16.mxu0 0
  %1567 = vmatpush1.bf16.msra.mxu0 %v902
  %1568 = vmatprep.subr.bf16.mxu0 0
  %1569 = vmatpush1.bf16.msra.mxu0 %v899
  %1570 = vmatprep.subr.bf16.mxu0 0
  %1571 = vmatpush1.bf16.msra.mxu0 %v896
  %1572 = vmatprep.subr.bf16.mxu0 0
  %1573 = vmatpush2.bf16.msra.mxu0 0
  %1574 = vmatprep.subr.bf16.mxu0 0
  %1575 = vmatpush2.bf16.msra.mxu0 0
  %1576 = vmatprep.subr.bf16.mxu0 0
  %1577 = vmatpush2.bf16.msra.mxu0 0
  %1578 = vmatprep.subr.bf16.mxu0 0
  %1579 = vmatpush2.bf16.msra.mxu0 0
  %1580 = vmatprep.subr.bf16.mxu0 0
  %1581 = vmatpush2.bf16.msra.mxu0 0
  %1582 = vmatprep.subr.bf16.mxu0 0
  %1583 = vmatpush2.bf16.msra.mxu0 0
  %1584 = vmatprep.subr.bf16.mxu0 0
  %1585 = vmatpush2.bf16.msra.mxu0 0
  %1586 = vmatprep.subr.bf16.mxu0 0
  %1587 = vmatpush2.bf16.msra.mxu0 0
  %1588 = vmatprep.mubr.bf16.mxu0 0
  %1589 = vmatmul.mubr.bf16.gmra.mxu0 %v1514
  %v1590 = vpop.f32.mrf.mxu0
  %v1591 = vadd.f32 0.0, %v1590
  %v1592 = vpop.f32.mrf.mxu0
  %v1593 = vpop.f32.mrf.mxu0
  %v1594 = vpop.f32.mrf.mxu0
  %1595 = vdwg.mxu0
  %v1596 = vpack.c.bf16 %v1511, %v1511
  %1597 = vmatprep.subr.bf16.mxu0 %v1125
  %1598 = vmatpush1.bf16.msra.mxu0 %v1124
  %1599 = vmatprep.subr.bf16.mxu0 %v1122
  %1600 = vmatpush1.bf16.msra.mxu0 %v1121
  %1601 = vmatprep.subr.bf16.mxu0 %v1119
  %1602 = vmatpush1.bf16.msra.mxu0 %v1118
  %1603 = vmatprep.subr.bf16.mxu0 %v1116
  %1604 = vmatpush1.bf16.msra.mxu0 %v1115
  %1605 = vmatprep.subr.bf16.mxu0 %v1113
  %1606 = vmatpush1.bf16.msra.mxu0 %v1112
  %1607 = vmatprep.subr.bf16.mxu0 %v1110
  %1608 = vmatpush1.bf16.msra.mxu0 %v1109
  %1609 = vmatprep.subr.bf16.mxu0 %v1107
  %1610 = vmatpush1.bf16.msra.mxu0 %v1106
  %1611 = vmatprep.subr.bf16.mxu0 %v1104
  %1612 = vmatpush1.bf16.msra.mxu0 %v1103
  %1613 = vmatprep.subr.bf16.mxu0 0
  %1614 = vmatpush2.bf16.msra.mxu0 0
  %1615 = vmatprep.subr.bf16.mxu0 0
  %1616 = vmatpush2.bf16.msra.mxu0 0
  %1617 = vmatprep.subr.bf16.mxu0 0
  %1618 = vmatpush2.bf16.msra.mxu0 0
  %1619 = vmatprep.subr.bf16.mxu0 0
  %1620 = vmatpush2.bf16.msra.mxu0 0
  %1621 = vmatprep.subr.bf16.mxu0 0
  %1622 = vmatpush2.bf16.msra.mxu0 0
  %1623 = vmatprep.subr.bf16.mxu0 0
  %1624 = vmatpush2.bf16.msra.mxu0 0
  %1625 = vmatprep.subr.bf16.mxu0 0
  %1626 = vmatpush2.bf16.msra.mxu0 0
  %1627 = vmatprep.subr.bf16.mxu0 0
  %1628 = vmatpush2.bf16.msra.mxu0 0
  %1629 = vmatprep.mubr.bf16.mxu0 0
  %1630 = vmatmul.mubr.bf16.gmra.mxu0 %v1596
  %v1631 = vpop.f32.mrf.mxu0
  %v1632 = vadd.f32 0.0, %v1631
  %v1633 = vpop.f32.mrf.mxu0
  %v1634 = vadd.f32 0.0, %v1633
  %v1635 = vpop.f32.mrf.mxu0
  %v1636 = vpop.f32.mrf.mxu0
  %1637 = vdwg.mxu0
  %1638 = vmatprep.subr.bf16.mxu0 0
  %1639 = vmatpush1.bf16.msra.mxu0 %v1126
  %1640 = vmatprep.subr.bf16.mxu0 0
  %1641 = vmatpush1.bf16.msra.mxu0 %v1123
  %1642 = vmatprep.subr.bf16.mxu0 0
  %1643 = vmatpush1.bf16.msra.mxu0 %v1120
  %1644 = vmatprep.subr.bf16.mxu0 0
  %1645 = vmatpush1.bf16.msra.mxu0 %v1117
  %1646 = vmatprep.subr.bf16.mxu0 0
  %1647 = vmatpush1.bf16.msra.mxu0 %v1114
  %1648 = vmatprep.subr.bf16.mxu0 0
  %1649 = vmatpush1.bf16.msra.mxu0 %v1111
  %1650 = vmatprep.subr.bf16.mxu0 0
  %1651 = vmatpush1.bf16.msra.mxu0 %v1108
  %1652 = vmatprep.subr.bf16.mxu0 0
  %1653 = vmatpush1.bf16.msra.mxu0 %v1105
  %1654 = vmatprep.subr.bf16.mxu0 0
  %1655 = vmatpush2.bf16.msra.mxu0 0
  %1656 = vmatprep.subr.bf16.mxu0 0
  %1657 = vmatpush2.bf16.msra.mxu0 0
  %1658 = vmatprep.subr.bf16.mxu0 0
  %1659 = vmatpush2.bf16.msra.mxu0 0
  %1660 = vmatprep.subr.bf16.mxu0 0
  %1661 = vmatpush2.bf16.msra.mxu0 0
  %1662 = vmatprep.subr.bf16.mxu0 0
  %1663 = vmatpush2.bf16.msra.mxu0 0
  %1664 = vmatprep.subr.bf16.mxu0 0
  %1665 = vmatpush2.bf16.msra.mxu0 0
  %1666 = vmatprep.subr.bf16.mxu0 0
  %1667 = vmatpush2.bf16.msra.mxu0 0
  %1668 = vmatprep.subr.bf16.mxu0 0
  %1669 = vmatpush2.bf16.msra.mxu0 0
  %1670 = vmatprep.mubr.bf16.mxu0 0
  %1671 = vmatmul.mubr.bf16.gmra.mxu0 %v1596
  %v1672 = vpop.f32.mrf.mxu0
  %v1673 = vadd.f32 0.0, %v1672
  %v1674 = vpop.f32.mrf.mxu0
  %v1675 = vpop.f32.mrf.mxu0
  %v1676 = vpop.f32.mrf.mxu0
  %1677 = vdwg.mxu0
  %s1678 = scalar_lea.vmem [#allocation3], 48
  %v1679 = vld [vmem:[%s1678] sm:$0xff]
  %v1680 = vld [vmem:[%s1678 + $0x8] sm:$0xff]
  %v1681 = vld [vmem:[%s1678 + $0x10] sm:$0xff]
  %v1682 = vadd.f32 %v1679, %v1550
  %v1683 = vxor.u32 %v1682, 2147483648
  %v1684 = vmul.f32 %v1683, 1.442695
  %v1685 = vpow.pop %v1684
  %v1686 = vadd.f32 %v1685, 1.0
  %v1687 = vrcp.pop %v1686
  %v1688 = vmul.f32 1.0, %v1687
  %v1689 = vadd.f32 %v1680, %v1552
  %v1690 = vxor.u32 %v1689, 2147483648
  %v1691 = vmul.f32 %v1690, 1.442695
  %v1692 = vpow.pop %v1691
  %v1693 = vadd.f32 %v1692, 1.0
  %v1694 = vrcp.pop %v1693
  %v1695 = vmul.f32 1.0, %v1694
  %v1696 = vadd.f32 %v1591, %v1253
  %v1697 = vmul.f32 %v1688, %v1696
  %v1698 = vadd.f32 %v1681, %v1697
  %v1699 = vtanh.pop %v1698
  %v1700 = vsub.f32 %v1484, %v1699
  %v1701 = vmul.f32 %v1695, %v1700
  %v1702 = vadd.f32 %v1699, %v1701
  %s1703 = scalar_lea.vmem [#allocation2], 32
  %1704 = vst [vmem:[%s1703] sm:$0xff] %v1702
  %s1705 = scalar_lea.vmem [#allocation3], 312
  %v1706 = vld [vmem:[%s1705] sm:$0xff]
  %v1707 = vld [vmem:[%s1705 + $0x8] sm:$0xff]
  %v1708 = vld [vmem:[%s1705 + $0x10] sm:$0xff]
  %v1709 = vadd.f32 %v1706, %v1632
  %v1710 = vxor.u32 %v1709, 2147483648
  %v1711 = vmul.f32 %v1710, 1.442695
  %v1712 = vpow.pop %v1711
  %v1713 = vadd.f32 %v1712, 1.0
  %v1714 = vrcp.pop %v1713
  %v1715 = vmul.f32 1.0, %v1714
  %v1716 = vadd.f32 %v1707, %v1634
  %v1717 = vxor.u32 %v1716, 2147483648
  %v1718 = vmul.f32 %v1717, 1.442695
  %v1719 = vpow.pop %v1718
  %v1720 = vadd.f32 %v1719, 1.0
  %v1721 = vrcp.pop %v1720
  %v1722 = vmul.f32 1.0, %v1721
  %v1723 = vadd.f32 %v1673, %v1285
  %v1724 = vmul.f32 %v1715, %v1723
  %v1725 = vadd.f32 %v1708, %v1724
  %v1726 = vtanh.pop %v1725
  %v1727 = vsub.f32 %v1511, %v1726
  %v1728 = vmul.f32 %v1722, %v1727
  %v1729 = vadd.f32 %v1726, %v1728
  %s1730 = scalar_lea.vmem [#allocation2], 80
  %1731 = vst [vmem:[%s1730 + $0x8] sm:$0xff] %v1729
  %v1732 = vpack.c.bf16 %v1702, %v1702
  %1733 = vmatprep.subr.bf16.mxu0 %v916
  %1734 = vmatpush1.bf16.msra.mxu0 %v915
  %1735 = vmatprep.subr.bf16.mxu0 %v913
  %1736 = vmatpush1.bf16.msra.mxu0 %v912
  %1737 = vmatprep.subr.bf16.mxu0 %v910
  %1738 = vmatpush1.bf16.msra.mxu0 %v909
  %1739 = vmatprep.subr.bf16.mxu0 %v907
  %1740 = vmatpush1.bf16.msra.mxu0 %v906
  %1741 = vmatprep.subr.bf16.mxu0 %v904
  %1742 = vmatpush1.bf16.msra.mxu0 %v903
  %1743 = vmatprep.subr.bf16.mxu0 %v901
  %1744 = vmatpush1.bf16.msra.mxu0 %v900
  %1745 = vmatprep.subr.bf16.mxu0 %v898
  %1746 = vmatpush1.bf16.msra.mxu0 %v897
  %1747 = vmatprep.subr.bf16.mxu0 %v895
  %1748 = vmatpush1.bf16.msra.mxu0 %v894
  %1749 = vmatprep.subr.bf16.mxu0 0
  %1750 = vmatpush2.bf16.msra.mxu0 0
  %1751 = vmatprep.subr.bf16.mxu0 0
  %1752 = vmatpush2.bf16.msra.mxu0 0
  %1753 = vmatprep.subr.bf16.mxu0 0
  %1754 = vmatpush2.bf16.msra.mxu0 0
  %1755 = vmatprep.subr.bf16.mxu0 0
  %1756 = vmatpush2.bf16.msra.mxu0 0
  %1757 = vmatprep.subr.bf16.mxu0 0
  %1758 = vmatpush2.bf16.msra.mxu0 0
  %1759 = vmatprep.subr.bf16.mxu0 0
  %1760 = vmatpush2.bf16.msra.mxu0 0
  %1761 = vmatprep.subr.bf16.mxu0 0
  %1762 = vmatpush2.bf16.msra.mxu0 0
  %1763 = vmatprep.subr.bf16.mxu0 0
  %1764 = vmatpush2.bf16.msra.mxu0 0
  %1765 = vmatprep.mubr.bf16.mxu0 0
  %1766 = vmatmul.mubr.bf16.gmra.mxu0 %v1732
  %v1767 = vpop.f32.mrf.mxu0
  %v1768 = vadd.f32 0.0, %v1767
  %v1769 = vpop.f32.mrf.mxu0
  %v1770 = vadd.f32 0.0, %v1769
  %v1771 = vpop.f32.mrf.mxu0
  %v1772 = vpop.f32.mrf.mxu0
  %1773 = vdwg.mxu0
  %1774 = vmatprep.subr.bf16.mxu0 0
  %1775 = vmatpush1.bf16.msra.mxu0 %v917
  %1776 = vmatprep.subr.bf16.mxu0 0
  %1777 = vmatpush1.bf16.msra.mxu0 %v914
  %1778 = vmatprep.subr.bf16.mxu0 0
  %1779 = vmatpush1.bf16.msra.mxu0 %v911
  %1780 = vmatprep.subr.bf16.mxu0 0
  %1781 = vmatpush1.bf16.msra.mxu0 %v908
  %1782 = vmatprep.subr.bf16.mxu0 0
  %1783 = vmatpush1.bf16.msra.mxu0 %v905
  %1784 = vmatprep.subr.bf16.mxu0 0
  %1785 = vmatpush1.bf16.msra.mxu0 %v902
  %1786 = vmatprep.subr.bf16.mxu0 0
  %1787 = vmatpush1.bf16.msra.mxu0 %v899
  %1788 = vmatprep.subr.bf16.mxu0 0
  %1789 = vmatpush1.bf16.msra.mxu0 %v896
  %1790 = vmatprep.subr.bf16.mxu0 0
  %1791 = vmatpush2.bf16.msra.mxu0 0
  %1792 = vmatprep.subr.bf16.mxu0 0
  %1793 = vmatpush2.bf16.msra.mxu0 0
  %1794 = vmatprep.subr.bf16.mxu0 0
  %1795 = vmatpush2.bf16.msra.mxu0 0
  %1796 = vmatprep.subr.bf16.mxu0 0
  %1797 = vmatpush2.bf16.msra.mxu0 0
  %1798 = vmatprep.subr.bf16.mxu0 0
  %1799 = vmatpush2.bf16.msra.mxu0 0
  %1800 = vmatprep.subr.bf16.mxu0 0
  %1801 = vmatpush2.bf16.msra.mxu0 0
  %1802 = vmatprep.subr.bf16.mxu0 0
  %1803 = vmatpush2.bf16.msra.mxu0 0
  %1804 = vmatprep.subr.bf16.mxu0 0
  %1805 = vmatpush2.bf16.msra.mxu0 0
  %1806 = vmatprep.mubr.bf16.mxu0 0
  %1807 = vmatmul.mubr.bf16.gmra.mxu0 %v1732
  %v1808 = vpop.f32.mrf.mxu0
  %v1809 = vadd.f32 0.0, %v1808
  %v1810 = vpop.f32.mrf.mxu0
  %v1811 = vpop.f32.mrf.mxu0
  %v1812 = vpop.f32.mrf.mxu0
  %1813 = vdwg.mxu0
  %v1814 = vpack.c.bf16 %v1729, %v1729
  %1815 = vmatprep.subr.bf16.mxu0 %v1125
  %1816 = vmatpush1.bf16.msra.mxu0 %v1124
  %1817 = vmatprep.subr.bf16.mxu0 %v1122
  %1818 = vmatpush1.bf16.msra.mxu0 %v1121
  %1819 = vmatprep.subr.bf16.mxu0 %v1119
  %1820 = vmatpush1.bf16.msra.mxu0 %v1118
  %1821 = vmatprep.subr.bf16.mxu0 %v1116
  %1822 = vmatpush1.bf16.msra.mxu0 %v1115
  %1823 = vmatprep.subr.bf16.mxu0 %v1113
  %1824 = vmatpush1.bf16.msra.mxu0 %v1112
  %1825 = vmatprep.subr.bf16.mxu0 %v1110
  %1826 = vmatpush1.bf16.msra.mxu0 %v1109
  %1827 = vmatprep.subr.bf16.mxu0 %v1107
  %1828 = vmatpush1.bf16.msra.mxu0 %v1106
  %1829 = vmatprep.subr.bf16.mxu0 %v1104
  %1830 = vmatpush1.bf16.msra.mxu0 %v1103
  %1831 = vmatprep.subr.bf16.mxu0 0
  %1832 = vmatpush2.bf16.msra.mxu0 0
  %1833 = vmatprep.subr.bf16.mxu0 0
  %1834 = vmatpush2.bf16.msra.mxu0 0
  %1835 = vmatprep.subr.bf16.mxu0 0
  %1836 = vmatpush2.bf16.msra.mxu0 0
  %1837 = vmatprep.subr.bf16.mxu0 0
  %1838 = vmatpush2.bf16.msra.mxu0 0
  %1839 = vmatprep.subr.bf16.mxu0 0
  %1840 = vmatpush2.bf16.msra.mxu0 0
  %1841 = vmatprep.subr.bf16.mxu0 0
  %1842 = vmatpush2.bf16.msra.mxu0 0
  %1843 = vmatprep.subr.bf16.mxu0 0
  %1844 = vmatpush2.bf16.msra.mxu0 0
  %1845 = vmatprep.subr.bf16.mxu0 0
  %1846 = vmatpush2.bf16.msra.mxu0 0
  %1847 = vmatprep.mubr.bf16.mxu0 0
  %1848 = vmatmul.mubr.bf16.gmra.mxu0 %v1814
  %v1849 = vpop.f32.mrf.mxu0
  %v1850 = vadd.f32 0.0, %v1849
  %v1851 = vpop.f32.mrf.mxu0
  %v1852 = vadd.f32 0.0, %v1851
  %v1853 = vpop.f32.mrf.mxu0
  %v1854 = vpop.f32.mrf.mxu0
  %1855 = vdwg.mxu0
  %1856 = vmatprep.subr.bf16.mxu0 0
  %1857 = vmatpush1.bf16.msra.mxu0 %v1126
  %1858 = vmatprep.subr.bf16.mxu0 0
  %1859 = vmatpush1.bf16.msra.mxu0 %v1123
  %1860 = vmatprep.subr.bf16.mxu0 0
  %1861 = vmatpush1.bf16.msra.mxu0 %v1120
  %1862 = vmatprep.subr.bf16.mxu0 0
  %1863 = vmatpush1.bf16.msra.mxu0 %v1117
  %1864 = vmatprep.subr.bf16.mxu0 0
  %1865 = vmatpush1.bf16.msra.mxu0 %v1114
  %1866 = vmatprep.subr.bf16.mxu0 0
  %1867 = vmatpush1.bf16.msra.mxu0 %v1111
  %1868 = vmatprep.subr.bf16.mxu0 0
  %1869 = vmatpush1.bf16.msra.mxu0 %v1108
  %1870 = vmatprep.subr.bf16.mxu0 0
  %1871 = vmatpush1.bf16.msra.mxu0 %v1105
  %1872 = vmatprep.subr.bf16.mxu0 0
  %1873 = vmatpush2.bf16.msra.mxu0 0
  %1874 = vmatprep.subr.bf16.mxu0 0
  %1875 = vmatpush2.bf16.msra.mxu0 0
  %1876 = vmatprep.subr.bf16.mxu0 0
  %1877 = vmatpush2.bf16.msra.mxu0 0
  %1878 = vmatprep.subr.bf16.mxu0 0
  %1879 = vmatpush2.bf16.msra.mxu0 0
  %1880 = vmatprep.subr.bf16.mxu0 0
  %1881 = vmatpush2.bf16.msra.mxu0 0
  %1882 = vmatprep.subr.bf16.mxu0 0
  %1883 = vmatpush2.bf16.msra.mxu0 0
  %1884 = vmatprep.subr.bf16.mxu0 0
  %1885 = vmatpush2.bf16.msra.mxu0 0
  %1886 = vmatprep.subr.bf16.mxu0 0
  %1887 = vmatpush2.bf16.msra.mxu0 0
  %1888 = vmatprep.mubr.bf16.mxu0 0
  %1889 = vmatmul.mubr.bf16.gmra.mxu0 %v1814
  %v1890 = vpop.f32.mrf.mxu0
  %v1891 = vadd.f32 0.0, %v1890
  %v1892 = vpop.f32.mrf.mxu0
  %v1893 = vpop.f32.mrf.mxu0
  %v1894 = vpop.f32.mrf.mxu0
  %1895 = vdwg.mxu0
  %s1896 = scalar_lea.vmem [#allocation3], 72
  %v1897 = vld [vmem:[%s1896] sm:$0xff]
  %v1898 = vld [vmem:[%s1896 + $0x8] sm:$0xff]
  %v1899 = vld [vmem:[%s1896 + $0x10] sm:$0xff]
  %v1900 = vadd.f32 %v1897, %v1768
  %v1901 = vxor.u32 %v1900, 2147483648
  %v1902 = vmul.f32 %v1901, 1.442695
  %v1903 = vpow.pop %v1902
  %v1904 = vadd.f32 %v1903, 1.0
  %v1905 = vrcp.pop %v1904
  %v1906 = vmul.f32 1.0, %v1905
  %v1907 = vadd.f32 %v1898, %v1770
  %v1908 = vxor.u32 %v1907, 2147483648
  %v1909 = vmul.f32 %v1908, 1.442695
  %v1910 = vpow.pop %v1909
  %v1911 = vadd.f32 %v1910, 1.0
  %v1912 = vrcp.pop %v1911
  %v1913 = vmul.f32 1.0, %v1912
  %v1914 = vadd.f32 %v1809, %v1253
  %v1915 = vmul.f32 %v1906, %v1914
  %v1916 = vadd.f32 %v1899, %v1915
  %v1917 = vtanh.pop %v1916
  %v1918 = vsub.f32 %v1702, %v1917
  %v1919 = vmul.f32 %v1913, %v1918
  %v1920 = vadd.f32 %v1917, %v1919
  %s1921 = scalar_lea.vmem [#allocation2], 48
  %1922 = vst [vmem:[%s1921] sm:$0xff] %v1920
  %s1923 = scalar_lea.vmem [#allocation3], 288
  %v1924 = vld [vmem:[%s1923] sm:$0xff]
  %v1925 = vld [vmem:[%s1923 + $0x8] sm:$0xff]
  %v1926 = vld [vmem:[%s1923 + $0x10] sm:$0xff]
  %v1927 = vadd.f32 %v1924, %v1850
  %v1928 = vxor.u32 %v1927, 2147483648
  %v1929 = vmul.f32 %v1928, 1.442695
  %v1930 = vpow.pop %v1929
  %v1931 = vadd.f32 %v1930, 1.0
  %v1932 = vrcp.pop %v1931
  %v1933 = vmul.f32 1.0, %v1932
  %v1934 = vadd.f32 %v1925, %v1852
  %v1935 = vxor.u32 %v1934, 2147483648
  %v1936 = vmul.f32 %v1935, 1.442695
  %v1937 = vpow.pop %v1936
  %v1938 = vadd.f32 %v1937, 1.0
  %v1939 = vrcp.pop %v1938
  %v1940 = vmul.f32 1.0, %v1939
  %v1941 = vadd.f32 %v1891, %v1285
  %v1942 = vmul.f32 %v1933, %v1941
  %v1943 = vadd.f32 %v1926, %v1942
  %v1944 = vtanh.pop %v1943
  %v1945 = vsub.f32 %v1729, %v1944
  %v1946 = vmul.f32 %v1940, %v1945
  %v1947 = vadd.f32 %v1944, %v1946
  %s1948 = scalar_lea.vmem [#allocation2], 64
  %1949 = vst [vmem:[%s1948 + $0x8] sm:$0xff] %v1947
  %v1950 = vpack.c.bf16 %v1920, %v1920
  %1951 = vmatprep.subr.bf16.mxu0 %v916
  %1952 = vmatpush1.bf16.msra.mxu0 %v915
  %1953 = vmatprep.subr.bf16.mxu0 %v913
  %1954 = vmatpush1.bf16.msra.mxu0 %v912
  %1955 = vmatprep.subr.bf16.mxu0 %v910
  %1956 = vmatpush1.bf16.msra.mxu0 %v909
  %1957 = vmatprep.subr.bf16.mxu0 %v907
  %1958 = vmatpush1.bf16.msra.mxu0 %v906
  %1959 = vmatprep.subr.bf16.mxu0 %v904
  %1960 = vmatpush1.bf16.msra.mxu0 %v903
  %1961 = vmatprep.subr.bf16.mxu0 %v901
  %1962 = vmatpush1.bf16.msra.mxu0 %v900
  %1963 = vmatprep.subr.bf16.mxu0 %v898
  %1964 = vmatpush1.bf16.msra.mxu0 %v897
  %1965 = vmatprep.subr.bf16.mxu0 %v895
  %1966 = vmatpush1.bf16.msra.mxu0 %v894
  %1967 = vmatprep.subr.bf16.mxu0 0
  %1968 = vmatpush2.bf16.msra.mxu0 0
  %1969 = vmatprep.subr.bf16.mxu0 0
  %1970 = vmatpush2.bf16.msra.mxu0 0
  %1971 = vmatprep.subr.bf16.mxu0 0
  %1972 = vmatpush2.bf16.msra.mxu0 0
  %1973 = vmatprep.subr.bf16.mxu0 0
  %1974 = vmatpush2.bf16.msra.mxu0 0
  %1975 = vmatprep.subr.bf16.mxu0 0
  %1976 = vmatpush2.bf16.msra.mxu0 0
  %1977 = vmatprep.subr.bf16.mxu0 0
  %1978 = vmatpush2.bf16.msra.mxu0 0
  %1979 = vmatprep.subr.bf16.mxu0 0
  %1980 = vmatpush2.bf16.msra.mxu0 0
  %1981 = vmatprep.subr.bf16.mxu0 0
  %1982 = vmatpush2.bf16.msra.mxu0 0
  %1983 = vmatprep.mubr.bf16.mxu0 0
  %1984 = vmatmul.mubr.bf16.gmra.mxu0 %v1950
  %v1985 = vpop.f32.mrf.mxu0
  %v1986 = vadd.f32 0.0, %v1985
  %v1987 = vpop.f32.mrf.mxu0
  %v1988 = vadd.f32 0.0, %v1987
  %v1989 = vpop.f32.mrf.mxu0
  %v1990 = vpop.f32.mrf.mxu0
  %1991 = vdwg.mxu0
  %1992 = vmatprep.subr.bf16.mxu0 0
  %1993 = vmatpush1.bf16.msra.mxu0 %v917
  %1994 = vmatprep.subr.bf16.mxu0 0
  %1995 = vmatpush1.bf16.msra.mxu0 %v914
  %1996 = vmatprep.subr.bf16.mxu0 0
  %1997 = vmatpush1.bf16.msra.mxu0 %v911
  %1998 = vmatprep.subr.bf16.mxu0 0
  %1999 = vmatpush1.bf16.msra.mxu0 %v908
  %2000 = vmatprep.subr.bf16.mxu0 0
  %2001 = vmatpush1.bf16.msra.mxu0 %v905
  %2002 = vmatprep.subr.bf16.mxu0 0
  %2003 = vmatpush1.bf16.msra.mxu0 %v902
  %2004 = vmatprep.subr.bf16.mxu0 0
  %2005 = vmatpush1.bf16.msra.mxu0 %v899
  %2006 = vmatprep.subr.bf16.mxu0 0
  %2007 = vmatpush1.bf16.msra.mxu0 %v896
  %2008 = vmatprep.subr.bf16.mxu0 0
  %2009 = vmatpush2.bf16.msra.mxu0 0
  %2010 = vmatprep.subr.bf16.mxu0 0
  %2011 = vmatpush2.bf16.msra.mxu0 0
  %2012 = vmatprep.subr.bf16.mxu0 0
  %2013 = vmatpush2.bf16.msra.mxu0 0
  %2014 = vmatprep.subr.bf16.mxu0 0
  %2015 = vmatpush2.bf16.msra.mxu0 0
  %2016 = vmatprep.subr.bf16.mxu0 0
  %2017 = vmatpush2.bf16.msra.mxu0 0
  %2018 = vmatprep.subr.bf16.mxu0 0
  %2019 = vmatpush2.bf16.msra.mxu0 0
  %2020 = vmatprep.subr.bf16.mxu0 0
  %2021 = vmatpush2.bf16.msra.mxu0 0
  %2022 = vmatprep.subr.bf16.mxu0 0
  %2023 = vmatpush2.bf16.msra.mxu0 0
  %2024 = vmatprep.mubr.bf16.mxu0 0
  %2025 = vmatmul.mubr.bf16.gmra.mxu0 %v1950
  %v2026 = vpop.f32.mrf.mxu0
  %v2027 = vadd.f32 0.0, %v2026
  %v2028 = vpop.f32.mrf.mxu0
  %v2029 = vpop.f32.mrf.mxu0
  %v2030 = vpop.f32.mrf.mxu0
  %2031 = vdwg.mxu0
  %v2032 = vpack.c.bf16 %v1947, %v1947
  %2033 = vmatprep.subr.bf16.mxu0 %v1125
  %2034 = vmatpush1.bf16.msra.mxu0 %v1124
  %2035 = vmatprep.subr.bf16.mxu0 %v1122
  %2036 = vmatpush1.bf16.msra.mxu0 %v1121
  %2037 = vmatprep.subr.bf16.mxu0 %v1119
  %2038 = vmatpush1.bf16.msra.mxu0 %v1118
  %2039 = vmatprep.subr.bf16.mxu0 %v1116
  %2040 = vmatpush1.bf16.msra.mxu0 %v1115
  %2041 = vmatprep.subr.bf16.mxu0 %v1113
  %2042 = vmatpush1.bf16.msra.mxu0 %v1112
  %2043 = vmatprep.subr.bf16.mxu0 %v1110
  %2044 = vmatpush1.bf16.msra.mxu0 %v1109
  %2045 = vmatprep.subr.bf16.mxu0 %v1107
  %2046 = vmatpush1.bf16.msra.mxu0 %v1106
  %2047 = vmatprep.subr.bf16.mxu0 %v1104
  %2048 = vmatpush1.bf16.msra.mxu0 %v1103
  %2049 = vmatprep.subr.bf16.mxu0 0
  %2050 = vmatpush2.bf16.msra.mxu0 0
  %2051 = vmatprep.subr.bf16.mxu0 0
  %2052 = vmatpush2.bf16.msra.mxu0 0
  %2053 = vmatprep.subr.bf16.mxu0 0
  %2054 = vmatpush2.bf16.msra.mxu0 0
  %2055 = vmatprep.subr.bf16.mxu0 0
  %2056 = vmatpush2.bf16.msra.mxu0 0
  %2057 = vmatprep.subr.bf16.mxu0 0
  %2058 = vmatpush2.bf16.msra.mxu0 0
  %2059 = vmatprep.subr.bf16.mxu0 0
  %2060 = vmatpush2.bf16.msra.mxu0 0
  %2061 = vmatprep.subr.bf16.mxu0 0
  %2062 = vmatpush2.bf16.msra.mxu0 0
  %2063 = vmatprep.subr.bf16.mxu0 0
  %2064 = vmatpush2.bf16.msra.mxu0 0
  %2065 = vmatprep.mubr.bf16.mxu0 0
  %2066 = vmatmul.mubr.bf16.gmra.mxu0 %v2032
  %v2067 = vpop.f32.mrf.mxu0
  %v2068 = vadd.f32 0.0, %v2067
  %v2069 = vpop.f32.mrf.mxu0
  %v2070 = vadd.f32 0.0, %v2069
  %v2071 = vpop.f32.mrf.mxu0
  %v2072 = vpop.f32.mrf.mxu0
  %2073 = vdwg.mxu0
  %2074 = vmatprep.subr.bf16.mxu0 0
  %2075 = vmatpush1.bf16.msra.mxu0 %v1126
  %2076 = vmatprep.subr.bf16.mxu0 0
  %2077 = vmatpush1.bf16.msra.mxu0 %v1123
  %2078 = vmatprep.subr.bf16.mxu0 0
  %2079 = vmatpush1.bf16.msra.mxu0 %v1120
  %2080 = vmatprep.subr.bf16.mxu0 0
  %2081 = vmatpush1.bf16.msra.mxu0 %v1117
  %2082 = vmatprep.subr.bf16.mxu0 0
  %2083 = vmatpush1.bf16.msra.mxu0 %v1114
  %2084 = vmatprep.subr.bf16.mxu0 0
  %2085 = vmatpush1.bf16.msra.mxu0 %v1111
  %2086 = vmatprep.subr.bf16.mxu0 0
  %2087 = vmatpush1.bf16.msra.mxu0 %v1108
  %2088 = vmatprep.subr.bf16.mxu0 0
  %2089 = vmatpush1.bf16.msra.mxu0 %v1105
  %2090 = vmatprep.subr.bf16.mxu0 0
  %2091 = vmatpush2.bf16.msra.mxu0 0
  %2092 = vmatprep.subr.bf16.mxu0 0
  %2093 = vmatpush2.bf16.msra.mxu0 0
  %2094 = vmatprep.subr.bf16.mxu0 0
  %2095 = vmatpush2.bf16.msra.mxu0 0
  %2096 = vmatprep.subr.bf16.mxu0 0
  %2097 = vmatpush2.bf16.msra.mxu0 0
  %2098 = vmatprep.subr.bf16.mxu0 0
  %2099 = vmatpush2.bf16.msra.mxu0 0
  %2100 = vmatprep.subr.bf16.mxu0 0
  %2101 = vmatpush2.bf16.msra.mxu0 0
  %2102 = vmatprep.subr.bf16.mxu0 0
  %2103 = vmatpush2.bf16.msra.mxu0 0
  %2104 = vmatprep.subr.bf16.mxu0 0
  %2105 = vmatpush2.bf16.msra.mxu0 0
  %2106 = vmatprep.mubr.bf16.mxu0 0
  %2107 = vmatmul.mubr.bf16.gmra.mxu0 %v2032
  %v2108 = vpop.f32.mrf.mxu0
  %v2109 = vadd.f32 0.0, %v2108
  %v2110 = vpop.f32.mrf.mxu0
  %v2111 = vpop.f32.mrf.mxu0
  %v2112 = vpop.f32.mrf.mxu0
  %2113 = vdwg.mxu0
  %s2114 = scalar_lea.vmem [#allocation3], 96
  %v2115 = vld [vmem:[%s2114] sm:$0xff]
  %v2116 = vld [vmem:[%s2114 + $0x8] sm:$0xff]
  %v2117 = vld [vmem:[%s2114 + $0x10] sm:$0xff]
  %v2118 = vadd.f32 %v2115, %v1986
  %v2119 = vxor.u32 %v2118, 2147483648
  %v2120 = vmul.f32 %v2119, 1.442695
  %v2121 = vpow.pop %v2120
  %v2122 = vadd.f32 %v2121, 1.0
  %v2123 = vrcp.pop %v2122
  %v2124 = vmul.f32 1.0, %v2123
  %v2125 = vadd.f32 %v2116, %v1988
  %v2126 = vxor.u32 %v2125, 2147483648
  %v2127 = vmul.f32 %v2126, 1.442695
  %v2128 = vpow.pop %v2127
  %v2129 = vadd.f32 %v2128, 1.0
  %v2130 = vrcp.pop %v2129
  %v2131 = vmul.f32 1.0, %v2130
  %v2132 = vadd.f32 %v2027, %v1253
  %v2133 = vmul.f32 %v2124, %v2132
  %v2134 = vadd.f32 %v2117, %v2133
  %v2135 = vtanh.pop %v2134
  %v2136 = vsub.f32 %v1920, %v2135
  %v2137 = vmul.f32 %v2131, %v2136
  %v2138 = vadd.f32 %v2135, %v2137
  %2139 = vst [vmem:[%s1948] sm:$0xff] %v2138
  %s2140 = scalar_lea.vmem [#allocation3], 264
  %v2141 = vld [vmem:[%s2140] sm:$0xff]
  %v2142 = vld [vmem:[%s2140 + $0x8] sm:$0xff]
  %v2143 = vld [vmem:[%s2140 + $0x10] sm:$0xff]
  %v2144 = vadd.f32 %v2141, %v2068
  %v2145 = vxor.u32 %v2144, 2147483648
  %v2146 = vmul.f32 %v2145, 1.442695
  %v2147 = vpow.pop %v2146
  %v2148 = vadd.f32 %v2147, 1.0
  %v2149 = vrcp.pop %v2148
  %v2150 = vmul.f32 1.0, %v2149
  %v2151 = vadd.f32 %v2142, %v2070
  %v2152 = vxor.u32 %v2151, 2147483648
  %v2153 = vmul.f32 %v2152, 1.442695
  %v2154 = vpow.pop %v2153
  %v2155 = vadd.f32 %v2154, 1.0
  %v2156 = vrcp.pop %v2155
  %v2157 = vmul.f32 1.0, %v2156
  %v2158 = vadd.f32 %v2109, %v1285
  %v2159 = vmul.f32 %v2150, %v2158
  %v2160 = vadd.f32 %v2143, %v2159
  %v2161 = vtanh.pop %v2160
  %v2162 = vsub.f32 %v1947, %v2161
  %v2163 = vmul.f32 %v2157, %v2162
  %v2164 = vadd.f32 %v2161, %v2163
  %2165 = vst [vmem:[%s1921 + $0x8] sm:$0xff] %v2164
  %v2166 = vpack.c.bf16 %v2138, %v2138
  %2167 = vmatprep.subr.bf16.mxu0 %v916
  %2168 = vmatpush1.bf16.msra.mxu0 %v915
  %2169 = vmatprep.subr.bf16.mxu0 %v913
  %2170 = vmatpush1.bf16.msra.mxu0 %v912
  %2171 = vmatprep.subr.bf16.mxu0 %v910
  %2172 = vmatpush1.bf16.msra.mxu0 %v909
  %2173 = vmatprep.subr.bf16.mxu0 %v907
  %2174 = vmatpush1.bf16.msra.mxu0 %v906
  %2175 = vmatprep.subr.bf16.mxu0 %v904
  %2176 = vmatpush1.bf16.msra.mxu0 %v903
  %2177 = vmatprep.subr.bf16.mxu0 %v901
  %2178 = vmatpush1.bf16.msra.mxu0 %v900
  %2179 = vmatprep.subr.bf16.mxu0 %v898
  %2180 = vmatpush1.bf16.msra.mxu0 %v897
  %2181 = vmatprep.subr.bf16.mxu0 %v895
  %2182 = vmatpush1.bf16.msra.mxu0 %v894
  %2183 = vmatprep.subr.bf16.mxu0 0
  %2184 = vmatpush2.bf16.msra.mxu0 0
  %2185 = vmatprep.subr.bf16.mxu0 0
  %2186 = vmatpush2.bf16.msra.mxu0 0
  %2187 = vmatprep.subr.bf16.mxu0 0
  %2188 = vmatpush2.bf16.msra.mxu0 0
  %2189 = vmatprep.subr.bf16.mxu0 0
  %2190 = vmatpush2.bf16.msra.mxu0 0
  %2191 = vmatprep.subr.bf16.mxu0 0
  %2192 = vmatpush2.bf16.msra.mxu0 0
  %2193 = vmatprep.subr.bf16.mxu0 0
  %2194 = vmatpush2.bf16.msra.mxu0 0
  %2195 = vmatprep.subr.bf16.mxu0 0
  %2196 = vmatpush2.bf16.msra.mxu0 0
  %2197 = vmatprep.subr.bf16.mxu0 0
  %2198 = vmatpush2.bf16.msra.mxu0 0
  %2199 = vmatprep.mubr.bf16.mxu0 0
  %2200 = vmatmul.mubr.bf16.gmra.mxu0 %v2166
  %v2201 = vpop.f32.mrf.mxu0
  %v2202 = vadd.f32 0.0, %v2201
  %v2203 = vpop.f32.mrf.mxu0
  %v2204 = vadd.f32 0.0, %v2203
  %v2205 = vpop.f32.mrf.mxu0
  %v2206 = vpop.f32.mrf.mxu0
  %2207 = vdwg.mxu0
  %2208 = vmatprep.subr.bf16.mxu0 0
  %2209 = vmatpush1.bf16.msra.mxu0 %v917
  %2210 = vmatprep.subr.bf16.mxu0 0
  %2211 = vmatpush1.bf16.msra.mxu0 %v914
  %2212 = vmatprep.subr.bf16.mxu0 0
  %2213 = vmatpush1.bf16.msra.mxu0 %v911
  %2214 = vmatprep.subr.bf16.mxu0 0
  %2215 = vmatpush1.bf16.msra.mxu0 %v908
  %2216 = vmatprep.subr.bf16.mxu0 0
  %2217 = vmatpush1.bf16.msra.mxu0 %v905
  %2218 = vmatprep.subr.bf16.mxu0 0
  %2219 = vmatpush1.bf16.msra.mxu0 %v902
  %2220 = vmatprep.subr.bf16.mxu0 0
  %2221 = vmatpush1.bf16.msra.mxu0 %v899
  %2222 = vmatprep.subr.bf16.mxu0 0
  %2223 = vmatpush1.bf16.msra.mxu0 %v896
  %2224 = vmatprep.subr.bf16.mxu0 0
  %2225 = vmatpush2.bf16.msra.mxu0 0
  %2226 = vmatprep.subr.bf16.mxu0 0
  %2227 = vmatpush2.bf16.msra.mxu0 0
  %2228 = vmatprep.subr.bf16.mxu0 0
  %2229 = vmatpush2.bf16.msra.mxu0 0
  %2230 = vmatprep.subr.bf16.mxu0 0
  %2231 = vmatpush2.bf16.msra.mxu0 0
  %2232 = vmatprep.subr.bf16.mxu0 0
  %2233 = vmatpush2.bf16.msra.mxu0 0
  %2234 = vmatprep.subr.bf16.mxu0 0
  %2235 = vmatpush2.bf16.msra.mxu0 0
  %2236 = vmatprep.subr.bf16.mxu0 0
  %2237 = vmatpush2.bf16.msra.mxu0 0
  %2238 = vmatprep.subr.bf16.mxu0 0
  %2239 = vmatpush2.bf16.msra.mxu0 0
  %2240 = vmatprep.mubr.bf16.mxu0 0
  %2241 = vmatmul.mubr.bf16.gmra.mxu0 %v2166
  %v2242 = vpop.f32.mrf.mxu0
  %v2243 = vadd.f32 0.0, %v2242
  %v2244 = vpop.f32.mrf.mxu0
  %v2245 = vpop.f32.mrf.mxu0
  %v2246 = vpop.f32.mrf.mxu0
  %2247 = vdwg.mxu0
  %v2248 = vpack.c.bf16 %v2164, %v2164
  %2249 = vmatprep.subr.bf16.mxu0 %v1125
  %2250 = vmatpush1.bf16.msra.mxu0 %v1124
  %2251 = vmatprep.subr.bf16.mxu0 %v1122
  %2252 = vmatpush1.bf16.msra.mxu0 %v1121
  %2253 = vmatprep.subr.bf16.mxu0 %v1119
  %2254 = vmatpush1.bf16.msra.mxu0 %v1118
  %2255 = vmatprep.subr.bf16.mxu0 %v1116
  %2256 = vmatpush1.bf16.msra.mxu0 %v1115
  %2257 = vmatprep.subr.bf16.mxu0 %v1113
  %2258 = vmatpush1.bf16.msra.mxu0 %v1112
  %2259 = vmatprep.subr.bf16.mxu0 %v1110
  %2260 = vmatpush1.bf16.msra.mxu0 %v1109
  %2261 = vmatprep.subr.bf16.mxu0 %v1107
  %2262 = vmatpush1.bf16.msra.mxu0 %v1106
  %2263 = vmatprep.subr.bf16.mxu0 %v1104
  %2264 = vmatpush1.bf16.msra.mxu0 %v1103
  %2265 = vmatprep.subr.bf16.mxu0 0
  %2266 = vmatpush2.bf16.msra.mxu0 0
  %2267 = vmatprep.subr.bf16.mxu0 0
  %2268 = vmatpush2.bf16.msra.mxu0 0
  %2269 = vmatprep.subr.bf16.mxu0 0
  %2270 = vmatpush2.bf16.msra.mxu0 0
  %2271 = vmatprep.subr.bf16.mxu0 0
  %2272 = vmatpush2.bf16.msra.mxu0 0
  %2273 = vmatprep.subr.bf16.mxu0 0
  %2274 = vmatpush2.bf16.msra.mxu0 0
  %2275 = vmatprep.subr.bf16.mxu0 0
  %2276 = vmatpush2.bf16.msra.mxu0 0
  %2277 = vmatprep.subr.bf16.mxu0 0
  %2278 = vmatpush2.bf16.msra.mxu0 0
  %2279 = vmatprep.subr.bf16.mxu0 0
  %2280 = vmatpush2.bf16.msra.mxu0 0
  %2281 = vmatprep.mubr.bf16.mxu0 0
  %2282 = vmatmul.mubr.bf16.gmra.mxu0 %v2248
  %v2283 = vpop.f32.mrf.mxu0
  %v2284 = vadd.f32 0.0, %v2283
  %v2285 = vpop.f32.mrf.mxu0
  %v2286 = vadd.f32 0.0, %v2285
  %v2287 = vpop.f32.mrf.mxu0
  %v2288 = vpop.f32.mrf.mxu0
  %2289 = vdwg.mxu0
  %2290 = vmatprep.subr.bf16.mxu0 0
  %2291 = vmatpush1.bf16.msra.mxu0 %v1126
  %2292 = vmatprep.subr.bf16.mxu0 0
  %2293 = vmatpush1.bf16.msra.mxu0 %v1123
  %2294 = vmatprep.subr.bf16.mxu0 0
  %2295 = vmatpush1.bf16.msra.mxu0 %v1120
  %2296 = vmatprep.subr.bf16.mxu0 0
  %2297 = vmatpush1.bf16.msra.mxu0 %v1117
  %2298 = vmatprep.subr.bf16.mxu0 0
  %2299 = vmatpush1.bf16.msra.mxu0 %v1114
  %2300 = vmatprep.subr.bf16.mxu0 0
  %2301 = vmatpush1.bf16.msra.mxu0 %v1111
  %2302 = vmatprep.subr.bf16.mxu0 0
  %2303 = vmatpush1.bf16.msra.mxu0 %v1108
  %2304 = vmatprep.subr.bf16.mxu0 0
  %2305 = vmatpush1.bf16.msra.mxu0 %v1105
  %2306 = vmatprep.subr.bf16.mxu0 0
  %2307 = vmatpush2.bf16.msra.mxu0 0
  %2308 = vmatprep.subr.bf16.mxu0 0
  %2309 = vmatpush2.bf16.msra.mxu0 0
  %2310 = vmatprep.subr.bf16.mxu0 0
  %2311 = vmatpush2.bf16.msra.mxu0 0
  %2312 = vmatprep.subr.bf16.mxu0 0
  %2313 = vmatpush2.bf16.msra.mxu0 0
  %2314 = vmatprep.subr.bf16.mxu0 0
  %2315 = vmatpush2.bf16.msra.mxu0 0
  %2316 = vmatprep.subr.bf16.mxu0 0
  %2317 = vmatpush2.bf16.msra.mxu0 0
  %2318 = vmatprep.subr.bf16.mxu0 0
  %2319 = vmatpush2.bf16.msra.mxu0 0
  %2320 = vmatprep.subr.bf16.mxu0 0
  %2321 = vmatpush2.bf16.msra.mxu0 0
  %2322 = vmatprep.mubr.bf16.mxu0 0
  %2323 = vmatmul.mubr.bf16.gmra.mxu0 %v2248
  %v2324 = vpop.f32.mrf.mxu0
  %v2325 = vadd.f32 0.0, %v2324
  %v2326 = vpop.f32.mrf.mxu0
  %v2327 = vpop.f32.mrf.mxu0
  %v2328 = vpop.f32.mrf.mxu0
  %2329 = vdwg.mxu0
  %s2330 = scalar_lea.vmem [#allocation3], 120
  %v2331 = vld [vmem:[%s2330] sm:$0xff]
  %v2332 = vld [vmem:[%s2330 + $0x8] sm:$0xff]
  %v2333 = vld [vmem:[%s2330 + $0x10] sm:$0xff]
  %v2334 = vadd.f32 %v2331, %v2202
  %v2335 = vxor.u32 %v2334, 2147483648
  %v2336 = vmul.f32 %v2335, 1.442695
  %v2337 = vpow.pop %v2336
  %v2338 = vadd.f32 %v2337, 1.0
  %v2339 = vrcp.pop %v2338
  %v2340 = vmul.f32 1.0, %v2339
  %v2341 = vadd.f32 %v2332, %v2204
  %v2342 = vxor.u32 %v2341, 2147483648
  %v2343 = vmul.f32 %v2342, 1.442695
  %v2344 = vpow.pop %v2343
  %v2345 = vadd.f32 %v2344, 1.0
  %v2346 = vrcp.pop %v2345
  %v2347 = vmul.f32 1.0, %v2346
  %v2348 = vadd.f32 %v2243, %v1253
  %v2349 = vmul.f32 %v2340, %v2348
  %v2350 = vadd.f32 %v2333, %v2349
  %v2351 = vtanh.pop %v2350
  %v2352 = vsub.f32 %v2138, %v2351
  %v2353 = vmul.f32 %v2347, %v2352
  %v2354 = vadd.f32 %v2351, %v2353
  %2355 = vst [vmem:[%s1730] sm:$0xff] %v2354
  %s2356 = scalar_lea.vmem [#allocation3], 240
  %v2357 = vld [vmem:[%s2356] sm:$0xff]
  %v2358 = vld [vmem:[%s2356 + $0x8] sm:$0xff]
  %v2359 = vld [vmem:[%s2356 + $0x10] sm:$0xff]
  %v2360 = vadd.f32 %v2357, %v2284
  %v2361 = vxor.u32 %v2360, 2147483648
  %v2362 = vmul.f32 %v2361, 1.442695
  %v2363 = vpow.pop %v2362
  %v2364 = vadd.f32 %v2363, 1.0
  %v2365 = vrcp.pop %v2364
  %v2366 = vmul.f32 1.0, %v2365
  %v2367 = vadd.f32 %v2358, %v2286
  %v2368 = vxor.u32 %v2367, 2147483648
  %v2369 = vmul.f32 %v2368, 1.442695
  %v2370 = vpow.pop %v2369
  %v2371 = vadd.f32 %v2370, 1.0
  %v2372 = vrcp.pop %v2371
  %v2373 = vmul.f32 1.0, %v2372
  %v2374 = vadd.f32 %v2325, %v1285
  %v2375 = vmul.f32 %v2366, %v2374
  %v2376 = vadd.f32 %v2359, %v2375
  %v2377 = vtanh.pop %v2376
  %v2378 = vsub.f32 %v2164, %v2377
  %v2379 = vmul.f32 %v2373, %v2378
  %v2380 = vadd.f32 %v2377, %v2379
  %2381 = vst [vmem:[%s1703 + $0x8] sm:$0xff] %v2380
  %v2382 = vpack.c.bf16 %v2354, %v2354
  %2383 = vmatprep.subr.bf16.mxu0 %v916
  %2384 = vmatpush1.bf16.msra.mxu0 %v915
  %2385 = vmatprep.subr.bf16.mxu0 %v913
  %2386 = vmatpush1.bf16.msra.mxu0 %v912
  %2387 = vmatprep.subr.bf16.mxu0 %v910
  %2388 = vmatpush1.bf16.msra.mxu0 %v909
  %2389 = vmatprep.subr.bf16.mxu0 %v907
  %2390 = vmatpush1.bf16.msra.mxu0 %v906
  %2391 = vmatprep.subr.bf16.mxu0 %v904
  %2392 = vmatpush1.bf16.msra.mxu0 %v903
  %2393 = vmatprep.subr.bf16.mxu0 %v901
  %2394 = vmatpush1.bf16.msra.mxu0 %v900
  %2395 = vmatprep.subr.bf16.mxu0 %v898
  %2396 = vmatpush1.bf16.msra.mxu0 %v897
  %2397 = vmatprep.subr.bf16.mxu0 %v895
  %2398 = vmatpush1.bf16.msra.mxu0 %v894
  %2399 = vmatprep.subr.bf16.mxu0 0
  %2400 = vmatpush2.bf16.msra.mxu0 0
  %2401 = vmatprep.subr.bf16.mxu0 0
  %2402 = vmatpush2.bf16.msra.mxu0 0
  %2403 = vmatprep.subr.bf16.mxu0 0
  %2404 = vmatpush2.bf16.msra.mxu0 0
  %2405 = vmatprep.subr.bf16.mxu0 0
  %2406 = vmatpush2.bf16.msra.mxu0 0
  %2407 = vmatprep.subr.bf16.mxu0 0
  %2408 = vmatpush2.bf16.msra.mxu0 0
  %2409 = vmatprep.subr.bf16.mxu0 0
  %2410 = vmatpush2.bf16.msra.mxu0 0
  %2411 = vmatprep.subr.bf16.mxu0 0
  %2412 = vmatpush2.bf16.msra.mxu0 0
  %2413 = vmatprep.subr.bf16.mxu0 0
  %2414 = vmatpush2.bf16.msra.mxu0 0
  %2415 = vmatprep.mubr.bf16.mxu0 0
  %2416 = vmatmul.mubr.bf16.gmra.mxu0 %v2382
  %v2417 = vpop.f32.mrf.mxu0
  %v2418 = vadd.f32 0.0, %v2417
  %v2419 = vpop.f32.mrf.mxu0
  %v2420 = vadd.f32 0.0, %v2419
  %v2421 = vpop.f32.mrf.mxu0
  %v2422 = vpop.f32.mrf.mxu0
  %2423 = vdwg.mxu0
  %2424 = vmatprep.subr.bf16.mxu0 0
  %2425 = vmatpush1.bf16.msra.mxu0 %v917
  %2426 = vmatprep.subr.bf16.mxu0 0
  %2427 = vmatpush1.bf16.msra.mxu0 %v914
  %2428 = vmatprep.subr.bf16.mxu0 0
  %2429 = vmatpush1.bf16.msra.mxu0 %v911
  %2430 = vmatprep.subr.bf16.mxu0 0
  %2431 = vmatpush1.bf16.msra.mxu0 %v908
  %2432 = vmatprep.subr.bf16.mxu0 0
  %2433 = vmatpush1.bf16.msra.mxu0 %v905
  %2434 = vmatprep.subr.bf16.mxu0 0
  %2435 = vmatpush1.bf16.msra.mxu0 %v902
  %2436 = vmatprep.subr.bf16.mxu0 0
  %2437 = vmatpush1.bf16.msra.mxu0 %v899
  %2438 = vmatprep.subr.bf16.mxu0 0
  %2439 = vmatpush1.bf16.msra.mxu0 %v896
  %2440 = vmatprep.subr.bf16.mxu0 0
  %2441 = vmatpush2.bf16.msra.mxu0 0
  %2442 = vmatprep.subr.bf16.mxu0 0
  %2443 = vmatpush2.bf16.msra.mxu0 0
  %2444 = vmatprep.subr.bf16.mxu0 0
  %2445 = vmatpush2.bf16.msra.mxu0 0
  %2446 = vmatprep.subr.bf16.mxu0 0
  %2447 = vmatpush2.bf16.msra.mxu0 0
  %2448 = vmatprep.subr.bf16.mxu0 0
  %2449 = vmatpush2.bf16.msra.mxu0 0
  %2450 = vmatprep.subr.bf16.mxu0 0
  %2451 = vmatpush2.bf16.msra.mxu0 0
  %2452 = vmatprep.subr.bf16.mxu0 0
  %2453 = vmatpush2.bf16.msra.mxu0 0
  %2454 = vmatprep.subr.bf16.mxu0 0
  %2455 = vmatpush2.bf16.msra.mxu0 0
  %2456 = vmatprep.mubr.bf16.mxu0 0
  %2457 = vmatmul.mubr.bf16.gmra.mxu0 %v2382
  %v2458 = vpop.f32.mrf.mxu0
  %v2459 = vadd.f32 0.0, %v2458
  %v2460 = vpop.f32.mrf.mxu0
  %v2461 = vpop.f32.mrf.mxu0
  %v2462 = vpop.f32.mrf.mxu0
  %2463 = vdwg.mxu0
  %v2464 = vpack.c.bf16 %v2380, %v2380
  %2465 = vmatprep.subr.bf16.mxu0 %v1125
  %2466 = vmatpush1.bf16.msra.mxu0 %v1124
  %2467 = vmatprep.subr.bf16.mxu0 %v1122
  %2468 = vmatpush1.bf16.msra.mxu0 %v1121
  %2469 = vmatprep.subr.bf16.mxu0 %v1119
  %2470 = vmatpush1.bf16.msra.mxu0 %v1118
  %2471 = vmatprep.subr.bf16.mxu0 %v1116
  %2472 = vmatpush1.bf16.msra.mxu0 %v1115
  %2473 = vmatprep.subr.bf16.mxu0 %v1113
  %2474 = vmatpush1.bf16.msra.mxu0 %v1112
  %2475 = vmatprep.subr.bf16.mxu0 %v1110
  %2476 = vmatpush1.bf16.msra.mxu0 %v1109
  %2477 = vmatprep.subr.bf16.mxu0 %v1107
  %2478 = vmatpush1.bf16.msra.mxu0 %v1106
  %2479 = vmatprep.subr.bf16.mxu0 %v1104
  %2480 = vmatpush1.bf16.msra.mxu0 %v1103
  %2481 = vmatprep.subr.bf16.mxu0 0
  %2482 = vmatpush2.bf16.msra.mxu0 0
  %2483 = vmatprep.subr.bf16.mxu0 0
  %2484 = vmatpush2.bf16.msra.mxu0 0
  %2485 = vmatprep.subr.bf16.mxu0 0
  %2486 = vmatpush2.bf16.msra.mxu0 0
  %2487 = vmatprep.subr.bf16.mxu0 0
  %2488 = vmatpush2.bf16.msra.mxu0 0
  %2489 = vmatprep.subr.bf16.mxu0 0
  %2490 = vmatpush2.bf16.msra.mxu0 0
  %2491 = vmatprep.subr.bf16.mxu0 0
  %2492 = vmatpush2.bf16.msra.mxu0 0
  %2493 = vmatprep.subr.bf16.mxu0 0
  %2494 = vmatpush2.bf16.msra.mxu0 0
  %2495 = vmatprep.subr.bf16.mxu0 0
  %2496 = vmatpush2.bf16.msra.mxu0 0
  %2497 = vmatprep.mubr.bf16.mxu0 0
  %2498 = vmatmul.mubr.bf16.gmra.mxu0 %v2464
  %v2499 = vpop.f32.mrf.mxu0
  %v2500 = vadd.f32 0.0, %v2499
  %v2501 = vpop.f32.mrf.mxu0
  %v2502 = vadd.f32 0.0, %v2501
  %v2503 = vpop.f32.mrf.mxu0
  %v2504 = vpop.f32.mrf.mxu0
  %2505 = vdwg.mxu0
  %2506 = vmatprep.subr.bf16.mxu0 0
  %2507 = vmatpush1.bf16.msra.mxu0 %v1126
  %2508 = vmatprep.subr.bf16.mxu0 0
  %2509 = vmatpush1.bf16.msra.mxu0 %v1123
  %2510 = vmatprep.subr.bf16.mxu0 0
  %2511 = vmatpush1.bf16.msra.mxu0 %v1120
  %2512 = vmatprep.subr.bf16.mxu0 0
  %2513 = vmatpush1.bf16.msra.mxu0 %v1117
  %2514 = vmatprep.subr.bf16.mxu0 0
  %2515 = vmatpush1.bf16.msra.mxu0 %v1114
  %2516 = vmatprep.subr.bf16.mxu0 0
  %2517 = vmatpush1.bf16.msra.mxu0 %v1111
  %2518 = vmatprep.subr.bf16.mxu0 0
  %2519 = vmatpush1.bf16.msra.mxu0 %v1108
  %2520 = vmatprep.subr.bf16.mxu0 0
  %2521 = vmatpush1.bf16.msra.mxu0 %v1105
  %2522 = vmatprep.subr.bf16.mxu0 0
  %2523 = vmatpush2.bf16.msra.mxu0 0
  %2524 = vmatprep.subr.bf16.mxu0 0
  %2525 = vmatpush2.bf16.msra.mxu0 0
  %2526 = vmatprep.subr.bf16.mxu0 0
  %2527 = vmatpush2.bf16.msra.mxu0 0
  %2528 = vmatprep.subr.bf16.mxu0 0
  %2529 = vmatpush2.bf16.msra.mxu0 0
  %2530 = vmatprep.subr.bf16.mxu0 0
  %2531 = vmatpush2.bf16.msra.mxu0 0
  %2532 = vmatprep.subr.bf16.mxu0 0
  %2533 = vmatpush2.bf16.msra.mxu0 0
  %2534 = vmatprep.subr.bf16.mxu0 0
  %2535 = vmatpush2.bf16.msra.mxu0 0
  %2536 = vmatprep.subr.bf16.mxu0 0
  %2537 = vmatpush2.bf16.msra.mxu0 0
  %2538 = vmatprep.mubr.bf16.mxu0 0
  %2539 = vmatmul.mubr.bf16.gmra.mxu0 %v2464
  %v2540 = vpop.f32.mrf.mxu0
  %v2541 = vadd.f32 0.0, %v2540
  %v2542 = vpop.f32.mrf.mxu0
  %v2543 = vpop.f32.mrf.mxu0
  %v2544 = vpop.f32.mrf.mxu0
  %2545 = vdwg.mxu0
  %s2546 = scalar_lea.vmem [#allocation3], 144
  %v2547 = vld [vmem:[%s2546] sm:$0xff]
  %v2548 = vld [vmem:[%s2546 + $0x8] sm:$0xff]
  %v2549 = vld [vmem:[%s2546 + $0x10] sm:$0xff]
  %v2550 = vadd.f32 %v2547, %v2418
  %v2551 = vxor.u32 %v2550, 2147483648
  %v2552 = vmul.f32 %v2551, 1.442695
  %v2553 = vpow.pop %v2552
  %v2554 = vadd.f32 %v2553, 1.0
  %v2555 = vrcp.pop %v2554
  %v2556 = vmul.f32 1.0, %v2555
  %v2557 = vadd.f32 %v2548, %v2420
  %v2558 = vxor.u32 %v2557, 2147483648
  %v2559 = vmul.f32 %v2558, 1.442695
  %v2560 = vpow.pop %v2559
  %v2561 = vadd.f32 %v2560, 1.0
  %v2562 = vrcp.pop %v2561
  %v2563 = vmul.f32 1.0, %v2562
  %v2564 = vadd.f32 %v2459, %v1253
  %v2565 = vmul.f32 %v2556, %v2564
  %v2566 = vadd.f32 %v2549, %v2565
  %v2567 = vtanh.pop %v2566
  %v2568 = vsub.f32 %v2354, %v2567
  %v2569 = vmul.f32 %v2563, %v2568
  %v2570 = vadd.f32 %v2567, %v2569
  %2571 = vst [vmem:[%s1512] sm:$0xff] %v2570
  %s2572 = scalar_lea.vmem [#allocation3], 216
  %v2573 = vld [vmem:[%s2572] sm:$0xff]
  %v2574 = vld [vmem:[%s2572 + $0x8] sm:$0xff]
  %v2575 = vld [vmem:[%s2572 + $0x10] sm:$0xff]
  %v2576 = vadd.f32 %v2573, %v2500
  %v2577 = vxor.u32 %v2576, 2147483648
  %v2578 = vmul.f32 %v2577, 1.442695
  %v2579 = vpow.pop %v2578
  %v2580 = vadd.f32 %v2579, 1.0
  %v2581 = vrcp.pop %v2580
  %v2582 = vmul.f32 1.0, %v2581
  %v2583 = vadd.f32 %v2574, %v2502
  %v2584 = vxor.u32 %v2583, 2147483648
  %v2585 = vmul.f32 %v2584, 1.442695
  %v2586 = vpow.pop %v2585
  %v2587 = vadd.f32 %v2586, 1.0
  %v2588 = vrcp.pop %v2587
  %v2589 = vmul.f32 1.0, %v2588
  %v2590 = vadd.f32 %v2541, %v1285
  %v2591 = vmul.f32 %v2582, %v2590
  %v2592 = vadd.f32 %v2575, %v2591
  %v2593 = vtanh.pop %v2592
  %v2594 = vsub.f32 %v2380, %v2593
  %v2595 = vmul.f32 %v2589, %v2594
  %v2596 = vadd.f32 %v2593, %v2595
  %2597 = vst [vmem:[%s1485 + $0x8] sm:$0xff] %v2596
  %v2598 = vpack.c.bf16 %v2570, %v2570
  %2599 = vmatprep.subr.bf16.mxu0 %v916
  %2600 = vmatpush1.bf16.msra.mxu0 %v915
  %2601 = vmatprep.subr.bf16.mxu0 %v913
  %2602 = vmatpush1.bf16.msra.mxu0 %v912
  %2603 = vmatprep.subr.bf16.mxu0 %v910
  %2604 = vmatpush1.bf16.msra.mxu0 %v909
  %2605 = vmatprep.subr.bf16.mxu0 %v907
  %2606 = vmatpush1.bf16.msra.mxu0 %v906
  %2607 = vmatprep.subr.bf16.mxu0 %v904
  %2608 = vmatpush1.bf16.msra.mxu0 %v903
  %2609 = vmatprep.subr.bf16.mxu0 %v901
  %2610 = vmatpush1.bf16.msra.mxu0 %v900
  %2611 = vmatprep.subr.bf16.mxu0 %v898
  %2612 = vmatpush1.bf16.msra.mxu0 %v897
  %2613 = vmatprep.subr.bf16.mxu0 %v895
  %2614 = vmatpush1.bf16.msra.mxu0 %v894
  %2615 = vmatprep.subr.bf16.mxu0 0
  %2616 = vmatpush2.bf16.msra.mxu0 0
  %2617 = vmatprep.subr.bf16.mxu0 0
  %2618 = vmatpush2.bf16.msra.mxu0 0
  %2619 = vmatprep.subr.bf16.mxu0 0
  %2620 = vmatpush2.bf16.msra.mxu0 0
  %2621 = vmatprep.subr.bf16.mxu0 0
  %2622 = vmatpush2.bf16.msra.mxu0 0
  %2623 = vmatprep.subr.bf16.mxu0 0
  %2624 = vmatpush2.bf16.msra.mxu0 0
  %2625 = vmatprep.subr.bf16.mxu0 0
  %2626 = vmatpush2.bf16.msra.mxu0 0
  %2627 = vmatprep.subr.bf16.mxu0 0
  %2628 = vmatpush2.bf16.msra.mxu0 0
  %2629 = vmatprep.subr.bf16.mxu0 0
  %2630 = vmatpush2.bf16.msra.mxu0 0
  %2631 = vmatprep.mubr.bf16.mxu0 0
  %2632 = vmatmul.mubr.bf16.gmra.mxu0 %v2598
  %v2633 = vpop.f32.mrf.mxu0
  %v2634 = vadd.f32 0.0, %v2633
  %v2635 = vpop.f32.mrf.mxu0
  %v2636 = vadd.f32 0.0, %v2635
  %v2637 = vpop.f32.mrf.mxu0
  %v2638 = vpop.f32.mrf.mxu0
  %2639 = vdwg.mxu0
  %2640 = vmatprep.subr.bf16.mxu0 0
  %2641 = vmatpush1.bf16.msra.mxu0 %v917
  %2642 = vmatprep.subr.bf16.mxu0 0
  %2643 = vmatpush1.bf16.msra.mxu0 %v914
  %2644 = vmatprep.subr.bf16.mxu0 0
  %2645 = vmatpush1.bf16.msra.mxu0 %v911
  %2646 = vmatprep.subr.bf16.mxu0 0
  %2647 = vmatpush1.bf16.msra.mxu0 %v908
  %2648 = vmatprep.subr.bf16.mxu0 0
  %2649 = vmatpush1.bf16.msra.mxu0 %v905
  %2650 = vmatprep.subr.bf16.mxu0 0
  %2651 = vmatpush1.bf16.msra.mxu0 %v902
  %2652 = vmatprep.subr.bf16.mxu0 0
  %2653 = vmatpush1.bf16.msra.mxu0 %v899
  %2654 = vmatprep.subr.bf16.mxu0 0
  %2655 = vmatpush1.bf16.msra.mxu0 %v896
  %2656 = vmatprep.subr.bf16.mxu0 0
  %2657 = vmatpush2.bf16.msra.mxu0 0
  %2658 = vmatprep.subr.bf16.mxu0 0
  %2659 = vmatpush2.bf16.msra.mxu0 0
  %2660 = vmatprep.subr.bf16.mxu0 0
  %2661 = vmatpush2.bf16.msra.mxu0 0
  %2662 = vmatprep.subr.bf16.mxu0 0
  %2663 = vmatpush2.bf16.msra.mxu0 0
  %2664 = vmatprep.subr.bf16.mxu0 0
  %2665 = vmatpush2.bf16.msra.mxu0 0
  %2666 = vmatprep.subr.bf16.mxu0 0
  %2667 = vmatpush2.bf16.msra.mxu0 0
  %2668 = vmatprep.subr.bf16.mxu0 0
  %2669 = vmatpush2.bf16.msra.mxu0 0
  %2670 = vmatprep.subr.bf16.mxu0 0
  %2671 = vmatpush2.bf16.msra.mxu0 0
  %2672 = vmatprep.mubr.bf16.mxu0 0
  %2673 = vmatmul.mubr.bf16.gmra.mxu0 %v2598
  %v2674 = vpop.f32.mrf.mxu0
  %v2675 = vadd.f32 0.0, %v2674
  %v2676 = vpop.f32.mrf.mxu0
  %v2677 = vpop.f32.mrf.mxu0
  %v2678 = vpop.f32.mrf.mxu0
  %2679 = vdwg.mxu0
  %v2680 = vpack.c.bf16 %v2596, %v2596
  %2681 = vmatprep.subr.bf16.mxu0 %v1125
  %2682 = vmatpush1.bf16.msra.mxu0 %v1124
  %2683 = vmatprep.subr.bf16.mxu0 %v1122
  %2684 = vmatpush1.bf16.msra.mxu0 %v1121
  %2685 = vmatprep.subr.bf16.mxu0 %v1119
  %2686 = vmatpush1.bf16.msra.mxu0 %v1118
  %2687 = vmatprep.subr.bf16.mxu0 %v1116
  %2688 = vmatpush1.bf16.msra.mxu0 %v1115
  %2689 = vmatprep.subr.bf16.mxu0 %v1113
  %2690 = vmatpush1.bf16.msra.mxu0 %v1112
  %2691 = vmatprep.subr.bf16.mxu0 %v1110
  %2692 = vmatpush1.bf16.msra.mxu0 %v1109
  %2693 = vmatprep.subr.bf16.mxu0 %v1107
  %2694 = vmatpush1.bf16.msra.mxu0 %v1106
  %2695 = vmatprep.subr.bf16.mxu0 %v1104
  %2696 = vmatpush1.bf16.msra.mxu0 %v1103
  %2697 = vmatprep.subr.bf16.mxu0 0
  %2698 = vmatpush2.bf16.msra.mxu0 0
  %2699 = vmatprep.subr.bf16.mxu0 0
  %2700 = vmatpush2.bf16.msra.mxu0 0
  %2701 = vmatprep.subr.bf16.mxu0 0
  %2702 = vmatpush2.bf16.msra.mxu0 0
  %2703 = vmatprep.subr.bf16.mxu0 0
  %2704 = vmatpush2.bf16.msra.mxu0 0
  %2705 = vmatprep.subr.bf16.mxu0 0
  %2706 = vmatpush2.bf16.msra.mxu0 0
  %2707 = vmatprep.subr.bf16.mxu0 0
  %2708 = vmatpush2.bf16.msra.mxu0 0
  %2709 = vmatprep.subr.bf16.mxu0 0
  %2710 = vmatpush2.bf16.msra.mxu0 0
  %2711 = vmatprep.subr.bf16.mxu0 0
  %2712 = vmatpush2.bf16.msra.mxu0 0
  %2713 = vmatprep.mubr.bf16.mxu0 0
  %2714 = vmatmul.mubr.bf16.gmra.mxu0 %v2680
  %v2715 = vpop.f32.mrf.mxu0
  %v2716 = vadd.f32 0.0, %v2715
  %v2717 = vpop.f32.mrf.mxu0
  %v2718 = vadd.f32 0.0, %v2717
  %v2719 = vpop.f32.mrf.mxu0
  %v2720 = vpop.f32.mrf.mxu0
  %2721 = vdwg.mxu0
  %2722 = vmatprep.subr.bf16.mxu0 0
  %2723 = vmatpush1.bf16.msra.mxu0 %v1126
  %2724 = vmatprep.subr.bf16.mxu0 0
  %2725 = vmatpush1.bf16.msra.mxu0 %v1123
  %2726 = vmatprep.subr.bf16.mxu0 0
  %2727 = vmatpush1.bf16.msra.mxu0 %v1120
  %2728 = vmatprep.subr.bf16.mxu0 0
  %2729 = vmatpush1.bf16.msra.mxu0 %v1117
  %2730 = vmatprep.subr.bf16.mxu0 0
  %2731 = vmatpush1.bf16.msra.mxu0 %v1114
  %2732 = vmatprep.subr.bf16.mxu0 0
  %2733 = vmatpush1.bf16.msra.mxu0 %v1111
  %2734 = vmatprep.subr.bf16.mxu0 0
  %2735 = vmatpush1.bf16.msra.mxu0 %v1108
  %2736 = vmatprep.subr.bf16.mxu0 0
  %2737 = vmatpush1.bf16.msra.mxu0 %v1105
  %2738 = vmatprep.subr.bf16.mxu0 0
  %2739 = vmatpush2.bf16.msra.mxu0 0
  %2740 = vmatprep.subr.bf16.mxu0 0
  %2741 = vmatpush2.bf16.msra.mxu0 0
  %2742 = vmatprep.subr.bf16.mxu0 0
  %2743 = vmatpush2.bf16.msra.mxu0 0
  %2744 = vmatprep.subr.bf16.mxu0 0
  %2745 = vmatpush2.bf16.msra.mxu0 0
  %2746 = vmatprep.subr.bf16.mxu0 0
  %2747 = vmatpush2.bf16.msra.mxu0 0
  %2748 = vmatprep.subr.bf16.mxu0 0
  %2749 = vmatpush2.bf16.msra.mxu0 0
  %2750 = vmatprep.subr.bf16.mxu0 0
  %2751 = vmatpush2.bf16.msra.mxu0 0
  %2752 = vmatprep.subr.bf16.mxu0 0
  %2753 = vmatpush2.bf16.msra.mxu0 0
  %2754 = vmatprep.mubr.bf16.mxu0 0
  %2755 = vmatmul.mubr.bf16.gmra.mxu0 %v2680
  %v2756 = vpop.f32.mrf.mxu0
  %v2757 = vadd.f32 0.0, %v2756
  %v2758 = vpop.f32.mrf.mxu0
  %v2759 = vpop.f32.mrf.mxu0
  %v2760 = vpop.f32.mrf.mxu0
  %2761 = vdwg.mxu0
  %s2762 = scalar_lea.vmem [#allocation3], 168
  %v2763 = vld [vmem:[%s2762] sm:$0xff]
  %v2764 = vld [vmem:[%s2762 + $0x8] sm:$0xff]
  %v2765 = vld [vmem:[%s2762 + $0x10] sm:$0xff]
  %v2766 = vadd.f32 %v2763, %v2634
  %v2767 = vxor.u32 %v2766, 2147483648
  %v2768 = vmul.f32 %v2767, 1.442695
  %v2769 = vpow.pop %v2768
  %v2770 = vadd.f32 %v2769, 1.0
  %v2771 = vrcp.pop %v2770
  %v2772 = vmul.f32 1.0, %v2771
  %v2773 = vadd.f32 %v2764, %v2636
  %v2774 = vxor.u32 %v2773, 2147483648
  %v2775 = vmul.f32 %v2774, 1.442695
  %v2776 = vpow.pop %v2775
  %v2777 = vadd.f32 %v2776, 1.0
  %v2778 = vrcp.pop %v2777
  %v2779 = vmul.f32 1.0, %v2778
  %v2780 = vadd.f32 %v2675, %v1253
  %v2781 = vmul.f32 %v2772, %v2780
  %v2782 = vadd.f32 %v2765, %v2781
  %v2783 = vtanh.pop %v2782
  %v2784 = vsub.f32 %v2570, %v2783
  %v2785 = vmul.f32 %v2779, %v2784
  %v2786 = vadd.f32 %v2783, %v2785
  %2787 = vst [vmem:[%s1294] sm:$0xff] %v2786
  %v2788 = vld [vmem:[%s756] sm:$0xff]
  %v2789 = vld [vmem:[%s756 + $0x8] sm:$0xff]
  %v2790 = vld [vmem:[%s756 + $0x10] sm:$0xff]
  %v2791 = vadd.f32 %v2788, %v2716
  %v2792 = vxor.u32 %v2791, 2147483648
  %v2793 = vmul.f32 %v2792, 1.442695
  %v2794 = vpow.pop %v2793
  %v2795 = vadd.f32 %v2794, 1.0
  %v2796 = vrcp.pop %v2795
  %v2797 = vmul.f32 1.0, %v2796
  %v2798 = vadd.f32 %v2789, %v2718
  %v2799 = vxor.u32 %v2798, 2147483648
  %v2800 = vmul.f32 %v2799, 1.442695
  %v2801 = vpow.pop %v2800
  %v2802 = vadd.f32 %v2801, 1.0
  %v2803 = vrcp.pop %v2802
  %v2804 = vmul.f32 1.0, %v2803
  %v2805 = vadd.f32 %v2757, %v1285
  %v2806 = vmul.f32 %v2797, %v2805
  %v2807 = vadd.f32 %v2790, %v2806
  %v2808 = vtanh.pop %v2807
  %v2809 = vsub.f32 %v2596, %v2808
  %v2810 = vmul.f32 %v2804, %v2809
  %v2811 = vadd.f32 %v2808, %v2810
  %2812 = vst [vmem:[#allocation2 + $0x8] sm:$0xff] %v2811
  %v2813 = vld [vmem:[#allocation2] sm:$0xff]
  %v2814 = vld [vmem:[#allocation2 + $0x8] sm:$0xff]
  %v2815 = vld [vmem:[#allocation2 + $0x10] sm:$0xff]
  %v2816 = vld [vmem:[#allocation2 + $0x18] sm:$0xff]
  %v2817 = vld [vmem:[#allocation2 + $0x20] sm:$0xff]
  %v2818 = vld [vmem:[#allocation2 + $0x28] sm:$0xff]
  %v2819 = vld [vmem:[#allocation2 + $0x30] sm:$0xff]
  %v2820 = vld [vmem:[#allocation2 + $0x38] sm:$0xff]
  %v2821 = vld [vmem:[#allocation2 + $0x40] sm:$0xff]
  %v2822 = vld [vmem:[#allocation2 + $0x48] sm:$0xff]
  %v2823 = vld [vmem:[#allocation2 + $0x50] sm:$0xff]
  %v2824 = vld [vmem:[#allocation2 + $0x58] sm:$0xff]
  %v2825 = vld [vmem:[#allocation2 + $0x60] sm:$0xff]
  %v2826 = vld [vmem:[#allocation2 + $0x68] sm:$0xff]
  %v2827 = vld [vmem:[#allocation2 + $0x70] sm:$0xff]
  %v2828 = vld [vmem:[#allocation2 + $0x78] sm:$0xff]
  %v2829 = vpack.c.bf16 %v2815, %v2813
  %v2830 = vpack.c.bf16 %v2816, %v2814
  %v2831 = vpack.c.bf16 %v2819, %v2817
  %v2832 = vpack.c.bf16 %v2820, %v2818
  %v2833 = vpack.c.bf16 %v2823, %v2821
  %v2834 = vpack.c.bf16 %v2824, %v2822
  %v2835 = vpack.c.bf16 %v2827, %v2825
  %v2836 = vpack.c.bf16 %v2828, %v2826
  %v2837 = vld [vmem:[%s9] sm:$0xff]
  %v2838 = vld [vmem:[%s9 + $0x8] sm:$0xf]
  %v2839 = vld [vmem:[%s9 + $0xc] sm:$0xff]
  %v2840 = vld [vmem:[%s9 + $0x14] sm:$0xf]
  %v2841 = vld [vmem:[%s9 + $0x18] sm:$0xff]
  %v2842 = vld [vmem:[%s9 + $0x20] sm:$0xf]
  %v2843 = vld [vmem:[%s9 + $0x24] sm:$0xff]
  %v2844 = vld [vmem:[%s9 + $0x2c] sm:$0xf]
  %v2845 = vld [vmem:[%s9 + $0x30] sm:$0xff]
  %v2846 = vld [vmem:[%s9 + $0x38] sm:$0xf]
  %v2847 = vld [vmem:[%s9 + $0x3c] sm:$0xff]
  %v2848 = vld [vmem:[%s9 + $0x44] sm:$0xf]
  %v2849 = vld [vmem:[%s9 + $0x48] sm:$0xff]
  %v2850 = vld [vmem:[%s9 + $0x50] sm:$0xf]
  %v2851 = vld [vmem:[%s9 + $0x54] sm:$0xff]
  %v2852 = vld [vmem:[%s9 + $0x5c] sm:$0xf]
  %v2853 = vld [vmem:[%s9 + $0x60] sm:$0xff]
  %v2854 = vld [vmem:[%s9 + $0x68] sm:$0xf]
  %v2855 = vld [vmem:[%s9 + $0x6c] sm:$0xff]
  %v2856 = vld [vmem:[%s9 + $0x74] sm:$0xf]
  %v2857 = vld [vmem:[%s9 + $0x78] sm:$0xff]
  %v2858 = vld [vmem:[%s9 + $0x80] sm:$0xf]
  %v2859 = vld [vmem:[%s9 + $0x84] sm:$0xff]
  %v2860 = vld [vmem:[%s9 + $0x8c] sm:$0xf]
  %v2861 = vld [vmem:[%s9 + $0x90] sm:$0xff]
  %v2862 = vld [vmem:[%s9 + $0x98] sm:$0xf]
  %v2863 = vld [vmem:[%s9 + $0x9c] sm:$0xff]
  %v2864 = vld [vmem:[%s9 + $0xa4] sm:$0xf]
  %v2865 = vld [vmem:[%s9 + $0xa8] sm:$0xff]
  %v2866 = vld [vmem:[%s9 + $0xb0] sm:$0xf]
  %v2867 = vld [vmem:[%s9 + $0xb4] sm:$0xff]
  %v2868 = vld [vmem:[%s9 + $0xbc] sm:$0xf]
  %v2869 = vld [vmem:[%s9 + $0xc0] sm:$0xff]
  %v2870 = vld [vmem:[%s9 + $0xc8] sm:$0xf]
  %v2871 = vld [vmem:[%s9 + $0xcc] sm:$0xff]
  %v2872 = vld [vmem:[%s9 + $0xd4] sm:$0xf]
  %v2873 = vld [vmem:[%s9 + $0xd8] sm:$0xff]
  %v2874 = vld [vmem:[%s9 + $0xe0] sm:$0xf]
  %v2875 = vld [vmem:[%s9 + $0xe4] sm:$0xff]
  %v2876 = vld [vmem:[%s9 + $0xec] sm:$0xf]
  %v2877 = vld [vmem:[%s9 + $0xf0] sm:$0xff]
  %v2878 = vld [vmem:[%s9 + $0xf8] sm:$0xf]
  %v2879 = vld [vmem:[%s9 + $0xfc] sm:$0xff]
  %v2880 = vld [vmem:[%s9 + $0x104] sm:$0xf]
  %v2881 = vld [vmem:[%s9 + $0x108] sm:$0xff]
  %v2882 = vld [vmem:[%s9 + $0x110] sm:$0xf]
  %v2883 = vld [vmem:[%s9 + $0x114] sm:$0xff]
  %v2884 = vld [vmem:[%s9 + $0x11c] sm:$0xf]
  %v2885 = vld [vmem:[%s9 + $0x120] sm:$0xff]
  %v2886 = vld [vmem:[%s9 + $0x128] sm:$0xf]
  %v2887 = vld [vmem:[%s9 + $0x12c] sm:$0xff]
  %v2888 = vld [vmem:[%s9 + $0x134] sm:$0xf]
  %v2889 = vld [vmem:[%s9 + $0x138] sm:$0xff]
  %v2890 = vld [vmem:[%s9 + $0x140] sm:$0xf]
  %v2891 = vld [vmem:[%s9 + $0x144] sm:$0xff]
  %v2892 = vld [vmem:[%s9 + $0x14c] sm:$0xf]
  %v2893 = vld [vmem:[%s9 + $0x150] sm:$0xff]
  %v2894 = vld [vmem:[%s9 + $0x158] sm:$0xf]
  %v2895 = vld [vmem:[%s9 + $0x15c] sm:$0xff]
  %v2896 = vld [vmem:[%s9 + $0x164] sm:$0xf]
  %v2897 = vld [vmem:[%s9 + $0x168] sm:$0xff]
  %v2898 = vld [vmem:[%s9 + $0x170] sm:$0xf]
  %v2899 = vld [vmem:[%s9 + $0x174] sm:$0xff]
  %v2900 = vld [vmem:[%s9 + $0x17c] sm:$0xf]
  %v2901 = vld [vmem:[%s11] sm:$0x7]
  %v2903 = vlaneseq
  %v2904 = vshrl.u32 %v2903, 7
  %v2905 = vsub.s32 0, %v2904
  %v2906 = vrot.slane %v2901, %v2905
  %v2907 = vlaneseq
  %v2908 = vshrl.u32 %v2907, 7
  %v2909 = vsub.s32 1, %v2908
  %v2910 = vrot.slane %v2901, %v2909
  %v2911 = vlaneseq
  %v2912 = vshrl.u32 %v2911, 7
  %v2913 = vsub.s32 2, %v2912
  %v2914 = vrot.slane %v2901, %v2913
  %v2982 = vunpack.c.l.b16 %v2837
  %v2983 = vunpack.c.h.b16 %v2837
  %v2984 = vunpack.c.l.b16 %v2838
  %v2985 = vunpack.c.l.b16 %v2839
  %v2986 = vunpack.c.h.b16 %v2839
  %v2987 = vunpack.c.l.b16 %v2840
  %v2988 = vunpack.c.l.b16 %v2841
  %v2989 = vunpack.c.h.b16 %v2841
  %v2990 = vunpack.c.l.b16 %v2842
  %v2991 = vunpack.c.l.b16 %v2843
  %v2992 = vunpack.c.h.b16 %v2843
  %v2993 = vunpack.c.l.b16 %v2844
  %v2994 = vunpack.c.l.b16 %v2845
  %v2995 = vunpack.c.h.b16 %v2845
  %v2996 = vunpack.c.l.b16 %v2846
  %v2997 = vunpack.c.l.b16 %v2847
  %v2998 = vunpack.c.h.b16 %v2847
  %v2999 = vunpack.c.l.b16 %v2848
  %v3000 = vunpack.c.l.b16 %v2849
  %v3001 = vunpack.c.h.b16 %v2849
  %v3002 = vunpack.c.l.b16 %v2850
  %v3003 = vunpack.c.l.b16 %v2851
  %v3004 = vunpack.c.h.b16 %v2851
  %v3005 = vunpack.c.l.b16 %v2852
  %v3006 = vunpack.c.l.b16 %v2853
  %v3007 = vunpack.c.h.b16 %v2853
  %v3008 = vunpack.c.l.b16 %v2854
  %v3009 = vunpack.c.l.b16 %v2855
  %v3010 = vunpack.c.h.b16 %v2855
  %v3011 = vunpack.c.l.b16 %v2856
  %v3012 = vunpack.c.l.b16 %v2857
  %v3013 = vunpack.c.h.b16 %v2857
  %v3014 = vunpack.c.l.b16 %v2858
  %v3015 = vunpack.c.l.b16 %v2859
  %v3016 = vunpack.c.h.b16 %v2859
  %v3017 = vunpack.c.l.b16 %v2860
  %v3018 = vunpack.c.l.b16 %v2861
  %v3019 = vunpack.c.h.b16 %v2861
  %v3020 = vunpack.c.l.b16 %v2862
  %v3021 = vunpack.c.l.b16 %v2863
  %v3022 = vunpack.c.h.b16 %v2863
  %v3023 = vunpack.c.l.b16 %v2864
  %v3024 = vunpack.c.l.b16 %v2865
  %v3025 = vunpack.c.h.b16 %v2865
  %v3026 = vunpack.c.l.b16 %v2866
  %v3027 = vunpack.c.l.b16 %v2867
  %v3028 = vunpack.c.h.b16 %v2867
  %v3029 = vunpack.c.l.b16 %v2868
  %v3030 = vunpack.c.l.b16 %v2869
  %v3031 = vunpack.c.h.b16 %v2869
  %v3032 = vunpack.c.l.b16 %v2870
  %v3033 = vunpack.c.l.b16 %v2871
  %v3034 = vunpack.c.h.b16 %v2871
  %v3035 = vunpack.c.l.b16 %v2872
  %v3036 = vunpack.c.l.b16 %v2873
  %v3037 = vunpack.c.h.b16 %v2873
  %v3038 = vunpack.c.l.b16 %v2874
  %v3039 = vunpack.c.l.b16 %v2875
  %v3040 = vunpack.c.h.b16 %v2875
  %v3041 = vunpack.c.l.b16 %v2876
  %v3042 = vunpack.c.l.b16 %v2877
  %v3043 = vunpack.c.h.b16 %v2877
  %v3044 = vunpack.c.l.b16 %v2878
  %v3045 = vunpack.c.l.b16 %v2879
  %v3046 = vunpack.c.h.b16 %v2879
  %v3047 = vunpack.c.l.b16 %v2880
  %v3048 = vunpack.c.l.b16 %v2881
  %v3049 = vunpack.c.h.b16 %v2881
  %v3050 = vunpack.c.l.b16 %v2882
  %v3051 = vunpack.c.l.b16 %v2883
  %v3052 = vunpack.c.h.b16 %v2883
  %v3053 = vunpack.c.l.b16 %v2884
  %v3054 = vunpack.c.l.b16 %v2885
  %v3055 = vunpack.c.h.b16 %v2885
  %v3056 = vunpack.c.l.b16 %v2886
  %v3057 = vunpack.c.l.b16 %v2887
  %v3058 = vunpack.c.h.b16 %v2887
  %v3059 = vunpack.c.l.b16 %v2888
  %v3060 = vunpack.c.l.b16 %v2889
  %v3061 = vunpack.c.h.b16 %v2889
  %v3062 = vunpack.c.l.b16 %v2890
  %v3063 = vunpack.c.l.b16 %v2891
  %v3064 = vunpack.c.h.b16 %v2891
  %v3065 = vunpack.c.l.b16 %v2892
  %v3066 = vunpack.c.l.b16 %v2893
  %v3067 = vunpack.c.h.b16 %v2893
  %v3068 = vunpack.c.l.b16 %v2894
  %v3069 = vunpack.c.l.b16 %v2895
  %v3070 = vunpack.c.h.b16 %v2895
  %v3071 = vunpack.c.l.b16 %v2896
  %v3072 = vunpack.c.l.b16 %v2897
  %v3073 = vunpack.c.h.b16 %v2897
  %v3074 = vunpack.c.l.b16 %v2898
  %v3075 = vunpack.c.l.b16 %v2899
  %v3076 = vunpack.c.h.b16 %v2899
  %v3077 = vunpack.c.l.b16 %v2900
  %v3078 = vpack.c.b16 %v2985, %v2982
  %v3079 = vpack.c.b16 %v2986, %v2983
  %v3080 = vpack.c.b16 %v2987, %v2984
  %v3081 = vpack.c.b16 %v2991, %v2988
  %v3082 = vpack.c.b16 %v2992, %v2989
  %v3083 = vpack.c.b16 %v2993, %v2990
  %v3084 = vpack.c.b16 %v2997, %v2994
  %v3085 = vpack.c.b16 %v2998, %v2995
  %v3086 = vpack.c.b16 %v2999, %v2996
  %v3087 = vpack.c.b16 %v3003, %v3000
  %v3088 = vpack.c.b16 %v3004, %v3001
  %v3089 = vpack.c.b16 %v3005, %v3002
  %v3090 = vpack.c.b16 %v3009, %v3006
  %v3091 = vpack.c.b16 %v3010, %v3007
  %v3092 = vpack.c.b16 %v3011, %v3008
  %v3093 = vpack.c.b16 %v3015, %v3012
  %v3094 = vpack.c.b16 %v3016, %v3013
  %v3095 = vpack.c.b16 %v3017, %v3014
  %v3096 = vpack.c.b16 %v3021, %v3018
  %v3097 = vpack.c.b16 %v3022, %v3019
  %v3098 = vpack.c.b16 %v3023, %v3020
  %v3099 = vpack.c.b16 %v3027, %v3024
  %v3100 = vpack.c.b16 %v3028, %v3025
  %v3101 = vpack.c.b16 %v3029, %v3026
  %v3102 = vpack.c.b16 %v3033, %v3030
  %v3103 = vpack.c.b16 %v3034, %v3031
  %v3104 = vpack.c.b16 %v3035, %v3032
  %v3105 = vpack.c.b16 %v3039, %v3036
  %v3106 = vpack.c.b16 %v3040, %v3037
  %v3107 = vpack.c.b16 %v3041, %v3038
  %v3108 = vpack.c.b16 %v3045, %v3042
  %v3109 = vpack.c.b16 %v3046, %v3043
  %v3110 = vpack.c.b16 %v3047, %v3044
  %v3111 = vpack.c.b16 %v3051, %v3048
  %v3112 = vpack.c.b16 %v3052, %v3049
  %v3113 = vpack.c.b16 %v3053, %v3050
  %v3114 = vpack.c.b16 %v3057, %v3054
  %v3115 = vpack.c.b16 %v3058, %v3055
  %v3116 = vpack.c.b16 %v3059, %v3056
  %v3117 = vpack.c.b16 %v3063, %v3060
  %v3118 = vpack.c.b16 %v3064, %v3061
  %v3119 = vpack.c.b16 %v3065, %v3062
  %v3120 = vpack.c.b16 %v3069, %v3066
  %v3121 = vpack.c.b16 %v3070, %v3067
  %v3122 = vpack.c.b16 %v3071, %v3068
  %v3123 = vpack.c.b16 %v3075, %v3072
  %v3124 = vpack.c.b16 %v3076, %v3073
  %v3125 = vpack.c.b16 %v3077, %v3074
  %3174 = vmatprep.subr.bf16.mxu0 %v3100
  %3175 = vmatpush1.bf16.msra.mxu0 %v3099
  %3176 = vmatprep.subr.bf16.mxu0 %v3097
  %3177 = vmatpush1.bf16.msra.mxu0 %v3096
  %3178 = vmatprep.subr.bf16.mxu0 %v3094
  %3179 = vmatpush1.bf16.msra.mxu0 %v3093
  %3180 = vmatprep.subr.bf16.mxu0 %v3091
  %3181 = vmatpush1.bf16.msra.mxu0 %v3090
  %3182 = vmatprep.subr.bf16.mxu0 %v3088
  %3183 = vmatpush1.bf16.msra.mxu0 %v3087
  %3184 = vmatprep.subr.bf16.mxu0 %v3085
  %3185 = vmatpush1.bf16.msra.mxu0 %v3084
  %3186 = vmatprep.subr.bf16.mxu0 %v3082
  %3187 = vmatpush1.bf16.msra.mxu0 %v3081
  %3188 = vmatprep.subr.bf16.mxu0 %v3079
  %3189 = vmatpush1.bf16.msra.mxu0 %v3078
  %3190 = vmatprep.subr.bf16.mxu0 %v3124
  %3191 = vmatpush2.bf16.msra.mxu0 %v3123
  %3192 = vmatprep.subr.bf16.mxu0 %v3121
  %3193 = vmatpush2.bf16.msra.mxu0 %v3120
  %3194 = vmatprep.subr.bf16.mxu0 %v3118
  %3195 = vmatpush2.bf16.msra.mxu0 %v3117
  %3196 = vmatprep.subr.bf16.mxu0 %v3115
  %3197 = vmatpush2.bf16.msra.mxu0 %v3114
  %3198 = vmatprep.subr.bf16.mxu0 %v3112
  %3199 = vmatpush2.bf16.msra.mxu0 %v3111
  %3200 = vmatprep.subr.bf16.mxu0 %v3109
  %3201 = vmatpush2.bf16.msra.mxu0 %v3108
  %3202 = vmatprep.subr.bf16.mxu0 %v3106
  %3203 = vmatpush2.bf16.msra.mxu0 %v3105
  %3204 = vmatprep.subr.bf16.mxu0 %v3103
  %3205 = vmatpush2.bf16.msra.mxu0 %v3102
  %3206 = vmatprep.mubr.bf16.mxu0 %v2830
  %3207 = vmatmul.mubr.bf16.gmra.mxu0 %v2829
  %v3208 = vpop.f32.mrf.mxu0
  %v3209 = vadd.f32 %v2906, %v3208
  %v3210 = vpop.f32.mrf.mxu0
  %v3211 = vadd.f32 %v2910, %v3210
  %v3212 = vpop.f32.mrf.mxu0
  %v3213 = vadd.f32 %v2906, %v3212
  %v3214 = vpop.f32.mrf.mxu0
  %v3215 = vadd.f32 %v2910, %v3214
  %3216 = vmatprep.mubr.bf16.mxu0 %v2832
  %3217 = vmatmul.mubr.bf16.gmra.mxu0 %v2831
  %v3218 = vpop.f32.mrf.mxu0
  %v3219 = vadd.f32 %v2906, %v3218
  %v3220 = vpop.f32.mrf.mxu0
  %v3221 = vadd.f32 %v2910, %v3220
  %v3222 = vpop.f32.mrf.mxu0
  %v3223 = vadd.f32 %v2906, %v3222
  %v3224 = vpop.f32.mrf.mxu0
  %v3225 = vadd.f32 %v2910, %v3224
  %3226 = vmatprep.mubr.bf16.mxu0 %v2834
  %3227 = vmatmul.mubr.bf16.gmra.mxu0 %v2833
  %v3228 = vpop.f32.mrf.mxu0
  %v3229 = vadd.f32 %v2906, %v3228
  %v3230 = vpop.f32.mrf.mxu0
  %v3231 = vadd.f32 %v2910, %v3230
  %v3232 = vpop.f32.mrf.mxu0
  %v3233 = vadd.f32 %v2906, %v3232
  %v3234 = vpop.f32.mrf.mxu0
  %v3235 = vadd.f32 %v2910, %v3234
  %3236 = vmatprep.mubr.bf16.mxu0 %v2836
  %3237 = vmatmul.mubr.bf16.gmra.mxu0 %v2835
  %v3238 = vpop.f32.mrf.mxu0
  %v3239 = vadd.f32 %v2906, %v3238
  %v3240 = vpop.f32.mrf.mxu0
  %v3241 = vadd.f32 %v2910, %v3240
  %v3242 = vpop.f32.mrf.mxu0
  %v3243 = vadd.f32 %v2906, %v3242
  %v3244 = vpop.f32.mrf.mxu0
  %v3245 = vadd.f32 %v2910, %v3244
  %3246 = vdwg.mxu0
  %3247 = vmatprep.subr.bf16.mxu0 0
  %3248 = vmatpush1.bf16.msra.mxu0 %v3101
  %3249 = vmatprep.subr.bf16.mxu0 0
  %3250 = vmatpush1.bf16.msra.mxu0 %v3098
  %3251 = vmatprep.subr.bf16.mxu0 0
  %3252 = vmatpush1.bf16.msra.mxu0 %v3095
  %3253 = vmatprep.subr.bf16.mxu0 0
  %3254 = vmatpush1.bf16.msra.mxu0 %v3092
  %3255 = vmatprep.subr.bf16.mxu0 0
  %3256 = vmatpush1.bf16.msra.mxu0 %v3089
  %3257 = vmatprep.subr.bf16.mxu0 0
  %3258 = vmatpush1.bf16.msra.mxu0 %v3086
  %3259 = vmatprep.subr.bf16.mxu0 0
  %3260 = vmatpush1.bf16.msra.mxu0 %v3083
  %3261 = vmatprep.subr.bf16.mxu0 0
  %3262 = vmatpush1.bf16.msra.mxu0 %v3080
  %3263 = vmatprep.subr.bf16.mxu0 0
  %3264 = vmatpush2.bf16.msra.mxu0 %v3125
  %3265 = vmatprep.subr.bf16.mxu0 0
  %3266 = vmatpush2.bf16.msra.mxu0 %v3122
  %3267 = vmatprep.subr.bf16.mxu0 0
  %3268 = vmatpush2.bf16.msra.mxu0 %v3119
  %3269 = vmatprep.subr.bf16.mxu0 0
  %3270 = vmatpush2.bf16.msra.mxu0 %v3116
  %3271 = vmatprep.subr.bf16.mxu0 0
  %3272 = vmatpush2.bf16.msra.mxu0 %v3113
  %3273 = vmatprep.subr.bf16.mxu0 0
  %3274 = vmatpush2.bf16.msra.mxu0 %v3110
  %3275 = vmatprep.subr.bf16.mxu0 0
  %3276 = vmatpush2.bf16.msra.mxu0 %v3107
  %3277 = vmatprep.subr.bf16.mxu0 0
  %3278 = vmatpush2.bf16.msra.mxu0 %v3104
  %3279 = vmatprep.mubr.bf16.mxu0 %v2830
  %3280 = vmatmul.mubr.bf16.gmra.mxu0 %v2829
  %v3281 = vpop.f32.mrf.mxu0
  %v3282 = vadd.f32 %v2914, %v3281
  %v3283 = vpop.f32.mrf.mxu0
  %v3284 = vpop.f32.mrf.mxu0
  %v3285 = vadd.f32 %v2914, %v3284
  %v3286 = vpop.f32.mrf.mxu0
  %3287 = vmatprep.mubr.bf16.mxu0 %v2832
  %3288 = vmatmul.mubr.bf16.gmra.mxu0 %v2831
  %v3289 = vpop.f32.mrf.mxu0
  %v3290 = vadd.f32 %v2914, %v3289
  %v3291 = vpop.f32.mrf.mxu0
  %v3292 = vpop.f32.mrf.mxu0
  %v3293 = vadd.f32 %v2914, %v3292
  %v3294 = vpop.f32.mrf.mxu0
  %3295 = vmatprep.mubr.bf16.mxu0 %v2834
  %3296 = vmatmul.mubr.bf16.gmra.mxu0 %v2833
  %v3297 = vpop.f32.mrf.mxu0
  %v3298 = vadd.f32 %v2914, %v3297
  %v3299 = vpop.f32.mrf.mxu0
  %v3300 = vpop.f32.mrf.mxu0
  %v3301 = vadd.f32 %v2914, %v3300
  %v3302 = vpop.f32.mrf.mxu0
  %3303 = vmatprep.mubr.bf16.mxu0 %v2836
  %3304 = vmatmul.mubr.bf16.gmra.mxu0 %v2835
  %v3305 = vpop.f32.mrf.mxu0
  %v3306 = vadd.f32 %v2914, %v3305
  %v3307 = vpop.f32.mrf.mxu0
  %v3308 = vpop.f32.mrf.mxu0
  %v3309 = vadd.f32 %v2914, %v3308
  %v3310 = vpop.f32.mrf.mxu0
  %3311 = vdwg.mxu0
  %3312 = vst [vmem:[#allocation3] sm:$0xff] %v3209
  %3313 = vst [vmem:[#allocation3 + $0x8] sm:$0xff] %v3211
  %3314 = vst [vmem:[#allocation3 + $0x10] sm:$0xff] %v3282
  %3315 = vst [vmem:[#allocation3 + $0x18] sm:$0xff] %v3213
  %3316 = vst [vmem:[#allocation3 + $0x20] sm:$0xff] %v3215
  %3317 = vst [vmem:[#allocation3 + $0x28] sm:$0xff] %v3285
  %3318 = vst [vmem:[#allocation3 + $0x30] sm:$0xff] %v3219
  %3319 = vst [vmem:[#allocation3 + $0x38] sm:$0xff] %v3221
  %3320 = vst [vmem:[#allocation3 + $0x40] sm:$0xff] %v3290
  %3321 = vst [vmem:[#allocation3 + $0x48] sm:$0xff] %v3223
  %3322 = vst [vmem:[#allocation3 + $0x50] sm:$0xff] %v3225
  %3323 = vst [vmem:[#allocation3 + $0x58] sm:$0xff] %v3293
  %3324 = vst [vmem:[#allocation3 + $0x60] sm:$0xff] %v3229
  %3325 = vst [vmem:[#allocation3 + $0x68] sm:$0xff] %v3231
  %3326 = vst [vmem:[#allocation3 + $0x70] sm:$0xff] %v3298
  %3327 = vst [vmem:[#allocation3 + $0x78] sm:$0xff] %v3233
  %3328 = vst [vmem:[#allocation3 + $0x80] sm:$0xff] %v3235
  %3329 = vst [vmem:[#allocation3 + $0x88] sm:$0xff] %v3301
  %3330 = vst [vmem:[#allocation3 + $0x90] sm:$0xff] %v3239
  %3331 = vst [vmem:[#allocation3 + $0x98] sm:$0xff] %v3241
  %3332 = vst [vmem:[#allocation3 + $0xa0] sm:$0xff] %v3306
  %3333 = vst [vmem:[#allocation3 + $0xa8] sm:$0xff] %v3243
  %3334 = vst [vmem:[#allocation3 + $0xb0] sm:$0xff] %v3245
  %3335 = vst [vmem:[#allocation3 + $0xb8] sm:$0xff] %v3309
  %v3336 = vld [vmem:[%s10] sm:$0xff]
  %v3337 = vld [vmem:[%s10 + $0x8] sm:$0xf]
  %v3338 = vld [vmem:[%s10 + $0xc] sm:$0xff]
  %v3339 = vld [vmem:[%s10 + $0x14] sm:$0xf]
  %v3340 = vld [vmem:[%s10 + $0x18] sm:$0xff]
  %v3341 = vld [vmem:[%s10 + $0x20] sm:$0xf]
  %v3342 = vld [vmem:[%s10 + $0x24] sm:$0xff]
  %v3343 = vld [vmem:[%s10 + $0x2c] sm:$0xf]
  %v3344 = vld [vmem:[%s10 + $0x30] sm:$0xff]
  %v3345 = vld [vmem:[%s10 + $0x38] sm:$0xf]
  %v3346 = vld [vmem:[%s10 + $0x3c] sm:$0xff]
  %v3347 = vld [vmem:[%s10 + $0x44] sm:$0xf]
  %v3348 = vld [vmem:[%s10 + $0x48] sm:$0xff]
  %v3349 = vld [vmem:[%s10 + $0x50] sm:$0xf]
  %v3350 = vld [vmem:[%s10 + $0x54] sm:$0xff]
  %v3351 = vld [vmem:[%s10 + $0x5c] sm:$0xf]
  %v3352 = vld [vmem:[%s10 + $0x60] sm:$0xff]
  %v3353 = vld [vmem:[%s10 + $0x68] sm:$0xf]
  %v3354 = vld [vmem:[%s10 + $0x6c] sm:$0xff]
  %v3355 = vld [vmem:[%s10 + $0x74] sm:$0xf]
  %v3356 = vld [vmem:[%s10 + $0x78] sm:$0xff]
  %v3357 = vld [vmem:[%s10 + $0x80] sm:$0xf]
  %v3358 = vld [vmem:[%s10 + $0x84] sm:$0xff]
  %v3359 = vld [vmem:[%s10 + $0x8c] sm:$0xf]
  %v3360 = vld [vmem:[%s10 + $0x90] sm:$0xff]
  %v3361 = vld [vmem:[%s10 + $0x98] sm:$0xf]
  %v3362 = vld [vmem:[%s10 + $0x9c] sm:$0xff]
  %v3363 = vld [vmem:[%s10 + $0xa4] sm:$0xf]
  %v3364 = vld [vmem:[%s10 + $0xa8] sm:$0xff]
  %v3365 = vld [vmem:[%s10 + $0xb0] sm:$0xf]
  %v3366 = vld [vmem:[%s10 + $0xb4] sm:$0xff]
  %v3367 = vld [vmem:[%s10 + $0xbc] sm:$0xf]
  %v3368 = vld [vmem:[%s12] sm:$0x1]
  %v3369 = vld [vmem:[%s13] sm:$0xff]
  %v3370 = vld [vmem:[%s13 + $0x8] sm:$0xf]
  %v3371 = vld [vmem:[%s13 + $0xc] sm:$0xff]
  %v3372 = vld [vmem:[%s13 + $0x14] sm:$0xf]
  %v3373 = vld [vmem:[%s13 + $0x18] sm:$0xff]
  %v3374 = vld [vmem:[%s13 + $0x20] sm:$0xf]
  %v3375 = vld [vmem:[%s13 + $0x24] sm:$0xff]
  %v3376 = vld [vmem:[%s13 + $0x2c] sm:$0xf]
  %v3377 = vld [vmem:[%s13 + $0x30] sm:$0xff]
  %v3378 = vld [vmem:[%s13 + $0x38] sm:$0xf]
  %v3379 = vld [vmem:[%s13 + $0x3c] sm:$0xff]
  %v3380 = vld [vmem:[%s13 + $0x44] sm:$0xf]
  %v3381 = vld [vmem:[%s13 + $0x48] sm:$0xff]
  %v3382 = vld [vmem:[%s13 + $0x50] sm:$0xf]
  %v3383 = vld [vmem:[%s13 + $0x54] sm:$0xff]
  %v3384 = vld [vmem:[%s13 + $0x5c] sm:$0xf]
  %v3385 = vld [vmem:[%s13 + $0x60] sm:$0xff]
  %v3386 = vld [vmem:[%s13 + $0x68] sm:$0xf]
  %v3387 = vld [vmem:[%s13 + $0x6c] sm:$0xff]
  %v3388 = vld [vmem:[%s13 + $0x74] sm:$0xf]
  %v3389 = vld [vmem:[%s13 + $0x78] sm:$0xff]
  %v3390 = vld [vmem:[%s13 + $0x80] sm:$0xf]
  %v3391 = vld [vmem:[%s13 + $0x84] sm:$0xff]
  %v3392 = vld [vmem:[%s13 + $0x8c] sm:$0xf]
  %v3393 = vld [vmem:[%s13 + $0x90] sm:$0xff]
  %v3394 = vld [vmem:[%s13 + $0x98] sm:$0xf]
  %v3395 = vld [vmem:[%s13 + $0x9c] sm:$0xff]
  %v3396 = vld [vmem:[%s13 + $0xa4] sm:$0xf]
  %v3397 = vld [vmem:[%s13 + $0xa8] sm:$0xff]
  %v3398 = vld [vmem:[%s13 + $0xb0] sm:$0xf]
  %v3399 = vld [vmem:[%s13 + $0xb4] sm:$0xff]
  %v3400 = vld [vmem:[%s13 + $0xbc] sm:$0xf]
  %v3401 = vld [vmem:[%s13 + $0xc0] sm:$0xff]
  %v3402 = vld [vmem:[%s13 + $0xc8] sm:$0xf]
  %v3403 = vld [vmem:[%s13 + $0xcc] sm:$0xff]
  %v3404 = vld [vmem:[%s13 + $0xd4] sm:$0xf]
  %v3405 = vld [vmem:[%s13 + $0xd8] sm:$0xff]
  %v3406 = vld [vmem:[%s13 + $0xe0] sm:$0xf]
  %v3407 = vld [vmem:[%s13 + $0xe4] sm:$0xff]
  %v3408 = vld [vmem:[%s13 + $0xec] sm:$0xf]
  %v3409 = vld [vmem:[%s13 + $0xf0] sm:$0xff]
  %v3410 = vld [vmem:[%s13 + $0xf8] sm:$0xf]
  %v3411 = vld [vmem:[%s13 + $0xfc] sm:$0xff]
  %v3412 = vld [vmem:[%s13 + $0x104] sm:$0xf]
  %v3413 = vld [vmem:[%s13 + $0x108] sm:$0xff]
  %v3414 = vld [vmem:[%s13 + $0x110] sm:$0xf]
  %v3415 = vld [vmem:[%s13 + $0x114] sm:$0xff]
  %v3416 = vld [vmem:[%s13 + $0x11c] sm:$0xf]
  %v3417 = vld [vmem:[%s13 + $0x120] sm:$0xff]
  %v3418 = vld [vmem:[%s13 + $0x128] sm:$0xf]
  %v3419 = vld [vmem:[%s13 + $0x12c] sm:$0xff]
  %v3420 = vld [vmem:[%s13 + $0x134] sm:$0xf]
  %v3421 = vld [vmem:[%s13 + $0x138] sm:$0xff]
  %v3422 = vld [vmem:[%s13 + $0x140] sm:$0xf]
  %v3423 = vld [vmem:[%s13 + $0x144] sm:$0xff]
  %v3424 = vld [vmem:[%s13 + $0x14c] sm:$0xf]
  %v3425 = vld [vmem:[%s13 + $0x150] sm:$0xff]
  %v3426 = vld [vmem:[%s13 + $0x158] sm:$0xf]
  %v3427 = vld [vmem:[%s13 + $0x15c] sm:$0xff]
  %v3428 = vld [vmem:[%s13 + $0x164] sm:$0xf]
  %v3429 = vld [vmem:[%s13 + $0x168] sm:$0xff]
  %v3430 = vld [vmem:[%s13 + $0x170] sm:$0xf]
  %v3431 = vld [vmem:[%s13 + $0x174] sm:$0xff]
  %v3432 = vld [vmem:[%s13 + $0x17c] sm:$0xf]
  %v3433 = vld [vmem:[%s15] sm:$0x7]
  %v3435 = vlaneseq
  %v3436 = vshrl.u32 %v3435, 7
  %v3437 = vsub.s32 0, %v3436
  %v3438 = vrot.slane %v3433, %v3437
  %v3439 = vlaneseq
  %v3440 = vshrl.u32 %v3439, 7
  %v3441 = vsub.s32 1, %v3440
  %v3442 = vrot.slane %v3433, %v3441
  %v3443 = vlaneseq
  %v3444 = vshrl.u32 %v3443, 7
  %v3445 = vsub.s32 2, %v3444
  %v3446 = vrot.slane %v3433, %v3445
  %v3514 = vunpack.c.l.b16 %v3369
  %v3515 = vunpack.c.h.b16 %v3369
  %v3516 = vunpack.c.l.b16 %v3370
  %v3517 = vunpack.c.l.b16 %v3371
  %v3518 = vunpack.c.h.b16 %v3371
  %v3519 = vunpack.c.l.b16 %v3372
  %v3520 = vunpack.c.l.b16 %v3373
  %v3521 = vunpack.c.h.b16 %v3373
  %v3522 = vunpack.c.l.b16 %v3374
  %v3523 = vunpack.c.l.b16 %v3375
  %v3524 = vunpack.c.h.b16 %v3375
  %v3525 = vunpack.c.l.b16 %v3376
  %v3526 = vunpack.c.l.b16 %v3377
  %v3527 = vunpack.c.h.b16 %v3377
  %v3528 = vunpack.c.l.b16 %v3378
  %v3529 = vunpack.c.l.b16 %v3379
  %v3530 = vunpack.c.h.b16 %v3379
  %v3531 = vunpack.c.l.b16 %v3380
  %v3532 = vunpack.c.l.b16 %v3381
  %v3533 = vunpack.c.h.b16 %v3381
  %v3534 = vunpack.c.l.b16 %v3382
  %v3535 = vunpack.c.l.b16 %v3383
  %v3536 = vunpack.c.h.b16 %v3383
  %v3537 = vunpack.c.l.b16 %v3384
  %v3538 = vunpack.c.l.b16 %v3385
  %v3539 = vunpack.c.h.b16 %v3385
  %v3540 = vunpack.c.l.b16 %v3386
  %v3541 = vunpack.c.l.b16 %v3387
  %v3542 = vunpack.c.h.b16 %v3387
  %v3543 = vunpack.c.l.b16 %v3388
  %v3544 = vunpack.c.l.b16 %v3389
  %v3545 = vunpack.c.h.b16 %v3389
  %v3546 = vunpack.c.l.b16 %v3390
  %v3547 = vunpack.c.l.b16 %v3391
  %v3548 = vunpack.c.h.b16 %v3391
  %v3549 = vunpack.c.l.b16 %v3392
  %v3550 = vunpack.c.l.b16 %v3393
  %v3551 = vunpack.c.h.b16 %v3393
  %v3552 = vunpack.c.l.b16 %v3394
  %v3553 = vunpack.c.l.b16 %v3395
  %v3554 = vunpack.c.h.b16 %v3395
  %v3555 = vunpack.c.l.b16 %v3396
  %v3556 = vunpack.c.l.b16 %v3397
  %v3557 = vunpack.c.h.b16 %v3397
  %v3558 = vunpack.c.l.b16 %v3398
  %v3559 = vunpack.c.l.b16 %v3399
  %v3560 = vunpack.c.h.b16 %v3399
  %v3561 = vunpack.c.l.b16 %v3400
  %v3562 = vunpack.c.l.b16 %v3401
  %v3563 = vunpack.c.h.b16 %v3401
  %v3564 = vunpack.c.l.b16 %v3402
  %v3565 = vunpack.c.l.b16 %v3403
  %v3566 = vunpack.c.h.b16 %v3403
  %v3567 = vunpack.c.l.b16 %v3404
  %v3568 = vunpack.c.l.b16 %v3405
  %v3569 = vunpack.c.h.b16 %v3405
  %v3570 = vunpack.c.l.b16 %v3406
  %v3571 = vunpack.c.l.b16 %v3407
  %v3572 = vunpack.c.h.b16 %v3407
  %v3573 = vunpack.c.l.b16 %v3408
  %v3574 = vunpack.c.l.b16 %v3409
  %v3575 = vunpack.c.h.b16 %v3409
  %v3576 = vunpack.c.l.b16 %v3410
  %v3577 = vunpack.c.l.b16 %v3411
  %v3578 = vunpack.c.h.b16 %v3411
  %v3579 = vunpack.c.l.b16 %v3412
  %v3580 = vunpack.c.l.b16 %v3413
  %v3581 = vunpack.c.h.b16 %v3413
  %v3582 = vunpack.c.l.b16 %v3414
  %v3583 = vunpack.c.l.b16 %v3415
  %v3584 = vunpack.c.h.b16 %v3415
  %v3585 = vunpack.c.l.b16 %v3416
  %v3586 = vunpack.c.l.b16 %v3417
  %v3587 = vunpack.c.h.b16 %v3417
  %v3588 = vunpack.c.l.b16 %v3418
  %v3589 = vunpack.c.l.b16 %v3419
  %v3590 = vunpack.c.h.b16 %v3419
  %v3591 = vunpack.c.l.b16 %v3420
  %v3592 = vunpack.c.l.b16 %v3421
  %v3593 = vunpack.c.h.b16 %v3421
  %v3594 = vunpack.c.l.b16 %v3422
  %v3595 = vunpack.c.l.b16 %v3423
  %v3596 = vunpack.c.h.b16 %v3423
  %v3597 = vunpack.c.l.b16 %v3424
  %v3598 = vunpack.c.l.b16 %v3425
  %v3599 = vunpack.c.h.b16 %v3425
  %v3600 = vunpack.c.l.b16 %v3426
  %v3601 = vunpack.c.l.b16 %v3427
  %v3602 = vunpack.c.h.b16 %v3427
  %v3603 = vunpack.c.l.b16 %v3428
  %v3604 = vunpack.c.l.b16 %v3429
  %v3605 = vunpack.c.h.b16 %v3429
  %v3606 = vunpack.c.l.b16 %v3430
  %v3607 = vunpack.c.l.b16 %v3431
  %v3608 = vunpack.c.h.b16 %v3431
  %v3609 = vunpack.c.l.b16 %v3432
  %v3610 = vpack.c.b16 %v3517, %v3514
  %v3611 = vpack.c.b16 %v3518, %v3515
  %v3612 = vpack.c.b16 %v3519, %v3516
  %v3613 = vpack.c.b16 %v3523, %v3520
  %v3614 = vpack.c.b16 %v3524, %v3521
  %v3615 = vpack.c.b16 %v3525, %v3522
  %v3616 = vpack.c.b16 %v3529, %v3526
  %v3617 = vpack.c.b16 %v3530, %v3527
  %v3618 = vpack.c.b16 %v3531, %v3528
  %v3619 = vpack.c.b16 %v3535, %v3532
  %v3620 = vpack.c.b16 %v3536, %v3533
  %v3621 = vpack.c.b16 %v3537, %v3534
  %v3622 = vpack.c.b16 %v3541, %v3538
  %v3623 = vpack.c.b16 %v3542, %v3539
  %v3624 = vpack.c.b16 %v3543, %v3540
  %v3625 = vpack.c.b16 %v3547, %v3544
  %v3626 = vpack.c.b16 %v3548, %v3545
  %v3627 = vpack.c.b16 %v3549, %v3546
  %v3628 = vpack.c.b16 %v3553, %v3550
  %v3629 = vpack.c.b16 %v3554, %v3551
  %v3630 = vpack.c.b16 %v3555, %v3552
  %v3631 = vpack.c.b16 %v3559, %v3556
  %v3632 = vpack.c.b16 %v3560, %v3557
  %v3633 = vpack.c.b16 %v3561, %v3558
  %v3634 = vpack.c.b16 %v3565, %v3562
  %v3635 = vpack.c.b16 %v3566, %v3563
  %v3636 = vpack.c.b16 %v3567, %v3564
  %v3637 = vpack.c.b16 %v3571, %v3568
  %v3638 = vpack.c.b16 %v3572, %v3569
  %v3639 = vpack.c.b16 %v3573, %v3570
  %v3640 = vpack.c.b16 %v3577, %v3574
  %v3641 = vpack.c.b16 %v3578, %v3575
  %v3642 = vpack.c.b16 %v3579, %v3576
  %v3643 = vpack.c.b16 %v3583, %v3580
  %v3644 = vpack.c.b16 %v3584, %v3581
  %v3645 = vpack.c.b16 %v3585, %v3582
  %v3646 = vpack.c.b16 %v3589, %v3586
  %v3647 = vpack.c.b16 %v3590, %v3587
  %v3648 = vpack.c.b16 %v3591, %v3588
  %v3649 = vpack.c.b16 %v3595, %v3592
  %v3650 = vpack.c.b16 %v3596, %v3593
  %v3651 = vpack.c.b16 %v3597, %v3594
  %v3652 = vpack.c.b16 %v3601, %v3598
  %v3653 = vpack.c.b16 %v3602, %v3599
  %v3654 = vpack.c.b16 %v3603, %v3600
  %v3655 = vpack.c.b16 %v3607, %v3604
  %v3656 = vpack.c.b16 %v3608, %v3605
  %v3657 = vpack.c.b16 %v3609, %v3606
  %3706 = vmatprep.subr.bf16.mxu0 %v3632
  %3707 = vmatpush1.bf16.msra.mxu0 %v3631
  %3708 = vmatprep.subr.bf16.mxu0 %v3629
  %3709 = vmatpush1.bf16.msra.mxu0 %v3628
  %3710 = vmatprep.subr.bf16.mxu0 %v3626
  %3711 = vmatpush1.bf16.msra.mxu0 %v3625
  %3712 = vmatprep.subr.bf16.mxu0 %v3623
  %3713 = vmatpush1.bf16.msra.mxu0 %v3622
  %3714 = vmatprep.subr.bf16.mxu0 %v3620
  %3715 = vmatpush1.bf16.msra.mxu0 %v3619
  %3716 = vmatprep.subr.bf16.mxu0 %v3617
  %3717 = vmatpush1.bf16.msra.mxu0 %v3616
  %3718 = vmatprep.subr.bf16.mxu0 %v3614
  %3719 = vmatpush1.bf16.msra.mxu0 %v3613
  %3720 = vmatprep.subr.bf16.mxu0 %v3611
  %3721 = vmatpush1.bf16.msra.mxu0 %v3610
  %3722 = vmatprep.subr.bf16.mxu0 %v3656
  %3723 = vmatpush2.bf16.msra.mxu0 %v3655
  %3724 = vmatprep.subr.bf16.mxu0 %v3653
  %3725 = vmatpush2.bf16.msra.mxu0 %v3652
  %3726 = vmatprep.subr.bf16.mxu0 %v3650
  %3727 = vmatpush2.bf16.msra.mxu0 %v3649
  %3728 = vmatprep.subr.bf16.mxu0 %v3647
  %3729 = vmatpush2.bf16.msra.mxu0 %v3646
  %3730 = vmatprep.subr.bf16.mxu0 %v3644
  %3731 = vmatpush2.bf16.msra.mxu0 %v3643
  %3732 = vmatprep.subr.bf16.mxu0 %v3641
  %3733 = vmatpush2.bf16.msra.mxu0 %v3640
  %3734 = vmatprep.subr.bf16.mxu0 %v3638
  %3735 = vmatpush2.bf16.msra.mxu0 %v3637
  %3736 = vmatprep.subr.bf16.mxu0 %v3635
  %3737 = vmatpush2.bf16.msra.mxu0 %v3634
  %3738 = vmatprep.mubr.bf16.mxu0 %v2830
  %3739 = vmatmul.mubr.bf16.gmra.mxu0 %v2829
  %v3740 = vpop.f32.mrf.mxu0
  %v3741 = vadd.f32 %v3438, %v3740
  %v3742 = vpop.f32.mrf.mxu0
  %v3743 = vadd.f32 %v3442, %v3742
  %v3744 = vpop.f32.mrf.mxu0
  %v3745 = vadd.f32 %v3438, %v3744
  %v3746 = vpop.f32.mrf.mxu0
  %v3747 = vadd.f32 %v3442, %v3746
  %3748 = vmatprep.mubr.bf16.mxu0 %v2832
  %3749 = vmatmul.mubr.bf16.gmra.mxu0 %v2831
  %v3750 = vpop.f32.mrf.mxu0
  %v3751 = vadd.f32 %v3438, %v3750
  %v3752 = vpop.f32.mrf.mxu0
  %v3753 = vadd.f32 %v3442, %v3752
  %v3754 = vpop.f32.mrf.mxu0
  %v3755 = vadd.f32 %v3438, %v3754
  %v3756 = vpop.f32.mrf.mxu0
  %v3757 = vadd.f32 %v3442, %v3756
  %3758 = vmatprep.mubr.bf16.mxu0 %v2834
  %3759 = vmatmul.mubr.bf16.gmra.mxu0 %v2833
  %v3760 = vpop.f32.mrf.mxu0
  %v3761 = vadd.f32 %v3438, %v3760
  %v3762 = vpop.f32.mrf.mxu0
  %v3763 = vadd.f32 %v3442, %v3762
  %v3764 = vpop.f32.mrf.mxu0
  %v3765 = vadd.f32 %v3438, %v3764
  %v3766 = vpop.f32.mrf.mxu0
  %v3767 = vadd.f32 %v3442, %v3766
  %3768 = vmatprep.mubr.bf16.mxu0 %v2836
  %3769 = vmatmul.mubr.bf16.gmra.mxu0 %v2835
  %v3770 = vpop.f32.mrf.mxu0
  %v3771 = vadd.f32 %v3438, %v3770
  %v3772 = vpop.f32.mrf.mxu0
  %v3773 = vadd.f32 %v3442, %v3772
  %v3774 = vpop.f32.mrf.mxu0
  %v3775 = vadd.f32 %v3438, %v3774
  %v3776 = vpop.f32.mrf.mxu0
  %v3777 = vadd.f32 %v3442, %v3776
  %3778 = vdwg.mxu0
  %3779 = vmatprep.subr.bf16.mxu0 0
  %3780 = vmatpush1.bf16.msra.mxu0 %v3633
  %3781 = vmatprep.subr.bf16.mxu0 0
  %3782 = vmatpush1.bf16.msra.mxu0 %v3630
  %3783 = vmatprep.subr.bf16.mxu0 0
  %3784 = vmatpush1.bf16.msra.mxu0 %v3627
  %3785 = vmatprep.subr.bf16.mxu0 0
  %3786 = vmatpush1.bf16.msra.mxu0 %v3624
  %3787 = vmatprep.subr.bf16.mxu0 0
  %3788 = vmatpush1.bf16.msra.mxu0 %v3621
  %3789 = vmatprep.subr.bf16.mxu0 0
  %3790 = vmatpush1.bf16.msra.mxu0 %v3618
  %3791 = vmatprep.subr.bf16.mxu0 0
  %3792 = vmatpush1.bf16.msra.mxu0 %v3615
  %3793 = vmatprep.subr.bf16.mxu0 0
  %3794 = vmatpush1.bf16.msra.mxu0 %v3612
  %3795 = vmatprep.subr.bf16.mxu0 0
  %3796 = vmatpush2.bf16.msra.mxu0 %v3657
  %3797 = vmatprep.subr.bf16.mxu0 0
  %3798 = vmatpush2.bf16.msra.mxu0 %v3654
  %3799 = vmatprep.subr.bf16.mxu0 0
  %3800 = vmatpush2.bf16.msra.mxu0 %v3651
  %3801 = vmatprep.subr.bf16.mxu0 0
  %3802 = vmatpush2.bf16.msra.mxu0 %v3648
  %3803 = vmatprep.subr.bf16.mxu0 0
  %3804 = vmatpush2.bf16.msra.mxu0 %v3645
  %3805 = vmatprep.subr.bf16.mxu0 0
  %3806 = vmatpush2.bf16.msra.mxu0 %v3642
  %3807 = vmatprep.subr.bf16.mxu0 0
  %3808 = vmatpush2.bf16.msra.mxu0 %v3639
  %3809 = vmatprep.subr.bf16.mxu0 0
  %3810 = vmatpush2.bf16.msra.mxu0 %v3636
  %3811 = vmatprep.mubr.bf16.mxu0 %v2830
  %3812 = vmatmul.mubr.bf16.gmra.mxu0 %v2829
  %v3813 = vpop.f32.mrf.mxu0
  %v3814 = vadd.f32 %v3446, %v3813
  %v3815 = vpop.f32.mrf.mxu0
  %v3816 = vpop.f32.mrf.mxu0
  %v3817 = vadd.f32 %v3446, %v3816
  %v3818 = vpop.f32.mrf.mxu0
  %3819 = vmatprep.mubr.bf16.mxu0 %v2832
  %3820 = vmatmul.mubr.bf16.gmra.mxu0 %v2831
  %v3821 = vpop.f32.mrf.mxu0
  %v3822 = vadd.f32 %v3446, %v3821
  %v3823 = vpop.f32.mrf.mxu0
  %v3824 = vpop.f32.mrf.mxu0
  %v3825 = vadd.f32 %v3446, %v3824
  %v3826 = vpop.f32.mrf.mxu0
  %3827 = vmatprep.mubr.bf16.mxu0 %v2834
  %3828 = vmatmul.mubr.bf16.gmra.mxu0 %v2833
  %v3829 = vpop.f32.mrf.mxu0
  %v3830 = vadd.f32 %v3446, %v3829
  %v3831 = vpop.f32.mrf.mxu0
  %v3832 = vpop.f32.mrf.mxu0
  %v3833 = vadd.f32 %v3446, %v3832
  %v3834 = vpop.f32.mrf.mxu0
  %3835 = vmatprep.mubr.bf16.mxu0 %v2836
  %3836 = vmatmul.mubr.bf16.gmra.mxu0 %v2835
  %v3837 = vpop.f32.mrf.mxu0
  %v3838 = vadd.f32 %v3446, %v3837
  %v3839 = vpop.f32.mrf.mxu0
  %v3840 = vpop.f32.mrf.mxu0
  %v3841 = vadd.f32 %v3446, %v3840
  %v3842 = vpop.f32.mrf.mxu0
  %3843 = vdwg.mxu0
  %3844 = vst [vmem:[%s756] sm:$0xff] %v3741
  %3845 = vst [vmem:[%s756 + $0x8] sm:$0xff] %v3743
  %3846 = vst [vmem:[%s756 + $0x10] sm:$0xff] %v3814
  %3847 = vst [vmem:[%s756 + $0x18] sm:$0xff] %v3745
  %3848 = vst [vmem:[%s756 + $0x20] sm:$0xff] %v3747
  %3849 = vst [vmem:[%s756 + $0x28] sm:$0xff] %v3817
  %3850 = vst [vmem:[%s756 + $0x30] sm:$0xff] %v3751
  %3851 = vst [vmem:[%s756 + $0x38] sm:$0xff] %v3753
  %3852 = vst [vmem:[%s756 + $0x40] sm:$0xff] %v3822
  %3853 = vst [vmem:[%s756 + $0x48] sm:$0xff] %v3755
  %3854 = vst [vmem:[%s756 + $0x50] sm:$0xff] %v3757
  %3855 = vst [vmem:[%s756 + $0x58] sm:$0xff] %v3825
  %3856 = vst [vmem:[%s756 + $0x60] sm:$0xff] %v3761
  %3857 = vst [vmem:[%s756 + $0x68] sm:$0xff] %v3763
  %3858 = vst [vmem:[%s756 + $0x70] sm:$0xff] %v3830
  %3859 = vst [vmem:[%s756 + $0x78] sm:$0xff] %v3765
  %3860 = vst [vmem:[%s756 + $0x80] sm:$0xff] %v3767
  %3861 = vst [vmem:[%s756 + $0x88] sm:$0xff] %v3833
  %3862 = vst [vmem:[%s756 + $0x90] sm:$0xff] %v3771
  %3863 = vst [vmem:[%s756 + $0x98] sm:$0xff] %v3773
  %3864 = vst [vmem:[%s756 + $0xa0] sm:$0xff] %v3838
  %3865 = vst [vmem:[%s756 + $0xa8] sm:$0xff] %v3775
  %3866 = vst [vmem:[%s756 + $0xb0] sm:$0xff] %v3777
  %3867 = vst [vmem:[%s756 + $0xb8] sm:$0xff] %v3841
  %v3868 = vld [vmem:[%s14] sm:$0xff]
  %v3869 = vld [vmem:[%s14 + $0x8] sm:$0xf]
  %v3870 = vld [vmem:[%s14 + $0xc] sm:$0xff]
  %v3871 = vld [vmem:[%s14 + $0x14] sm:$0xf]
  %v3872 = vld [vmem:[%s14 + $0x18] sm:$0xff]
  %v3873 = vld [vmem:[%s14 + $0x20] sm:$0xf]
  %v3874 = vld [vmem:[%s14 + $0x24] sm:$0xff]
  %v3875 = vld [vmem:[%s14 + $0x2c] sm:$0xf]
  %v3876 = vld [vmem:[%s14 + $0x30] sm:$0xff]
  %v3877 = vld [vmem:[%s14 + $0x38] sm:$0xf]
  %v3878 = vld [vmem:[%s14 + $0x3c] sm:$0xff]
  %v3879 = vld [vmem:[%s14 + $0x44] sm:$0xf]
  %v3880 = vld [vmem:[%s14 + $0x48] sm:$0xff]
  %v3881 = vld [vmem:[%s14 + $0x50] sm:$0xf]
  %v3882 = vld [vmem:[%s14 + $0x54] sm:$0xff]
  %v3883 = vld [vmem:[%s14 + $0x5c] sm:$0xf]
  %v3884 = vld [vmem:[%s14 + $0x60] sm:$0xff]
  %v3885 = vld [vmem:[%s14 + $0x68] sm:$0xf]
  %v3886 = vld [vmem:[%s14 + $0x6c] sm:$0xff]
  %v3887 = vld [vmem:[%s14 + $0x74] sm:$0xf]
  %v3888 = vld [vmem:[%s14 + $0x78] sm:$0xff]
  %v3889 = vld [vmem:[%s14 + $0x80] sm:$0xf]
  %v3890 = vld [vmem:[%s14 + $0x84] sm:$0xff]
  %v3891 = vld [vmem:[%s14 + $0x8c] sm:$0xf]
  %v3892 = vld [vmem:[%s14 + $0x90] sm:$0xff]
  %v3893 = vld [vmem:[%s14 + $0x98] sm:$0xf]
  %v3894 = vld [vmem:[%s14 + $0x9c] sm:$0xff]
  %v3895 = vld [vmem:[%s14 + $0xa4] sm:$0xf]
  %v3896 = vld [vmem:[%s14 + $0xa8] sm:$0xff]
  %v3897 = vld [vmem:[%s14 + $0xb0] sm:$0xf]
  %v3898 = vld [vmem:[%s14 + $0xb4] sm:$0xff]
  %v3899 = vld [vmem:[%s14 + $0xbc] sm:$0xf]
  %v3900 = vld [vmem:[%s16] sm:$0x1]
  %v3933 = vunpack.c.l.b16 %v3336
  %v3934 = vunpack.c.h.b16 %v3336
  %v3935 = vunpack.c.l.b16 %v3337
  %v3936 = vunpack.c.l.b16 %v3338
  %v3937 = vunpack.c.h.b16 %v3338
  %v3938 = vunpack.c.l.b16 %v3339
  %v3939 = vunpack.c.l.b16 %v3340
  %v3940 = vunpack.c.h.b16 %v3340
  %v3941 = vunpack.c.l.b16 %v3341
  %v3942 = vunpack.c.l.b16 %v3342
  %v3943 = vunpack.c.h.b16 %v3342
  %v3944 = vunpack.c.l.b16 %v3343
  %v3945 = vunpack.c.l.b16 %v3344
  %v3946 = vunpack.c.h.b16 %v3344
  %v3947 = vunpack.c.l.b16 %v3345
  %v3948 = vunpack.c.l.b16 %v3346
  %v3949 = vunpack.c.h.b16 %v3346
  %v3950 = vunpack.c.l.b16 %v3347
  %v3951 = vunpack.c.l.b16 %v3348
  %v3952 = vunpack.c.h.b16 %v3348
  %v3953 = vunpack.c.l.b16 %v3349
  %v3954 = vunpack.c.l.b16 %v3350
  %v3955 = vunpack.c.h.b16 %v3350
  %v3956 = vunpack.c.l.b16 %v3351
  %v3957 = vunpack.c.l.b16 %v3352
  %v3958 = vunpack.c.h.b16 %v3352
  %v3959 = vunpack.c.l.b16 %v3353
  %v3960 = vunpack.c.l.b16 %v3354
  %v3961 = vunpack.c.h.b16 %v3354
  %v3962 = vunpack.c.l.b16 %v3355
  %v3963 = vunpack.c.l.b16 %v3356
  %v3964 = vunpack.c.h.b16 %v3356
  %v3965 = vunpack.c.l.b16 %v3357
  %v3966 = vunpack.c.l.b16 %v3358
  %v3967 = vunpack.c.h.b16 %v3358
  %v3968 = vunpack.c.l.b16 %v3359
  %v3969 = vunpack.c.l.b16 %v3360
  %v3970 = vunpack.c.h.b16 %v3360
  %v3971 = vunpack.c.l.b16 %v3361
  %v3972 = vunpack.c.l.b16 %v3362
  %v3973 = vunpack.c.h.b16 %v3362
  %v3974 = vunpack.c.l.b16 %v3363
  %v3975 = vunpack.c.l.b16 %v3364
  %v3976 = vunpack.c.h.b16 %v3364
  %v3977 = vunpack.c.l.b16 %v3365
  %v3978 = vunpack.c.l.b16 %v3366
  %v3979 = vunpack.c.h.b16 %v3366
  %v3980 = vunpack.c.l.b16 %v3367
  %v3981 = vpack.c.b16 %v3936, %v3933
  %v3982 = vpack.c.b16 %v3937, %v3934
  %v3983 = vpack.c.b16 %v3938, %v3935
  %v3984 = vpack.c.b16 %v3942, %v3939
  %v3985 = vpack.c.b16 %v3943, %v3940
  %v3986 = vpack.c.b16 %v3944, %v3941
  %v3987 = vpack.c.b16 %v3948, %v3945
  %v3988 = vpack.c.b16 %v3949, %v3946
  %v3989 = vpack.c.b16 %v3950, %v3947
  %v3990 = vpack.c.b16 %v3954, %v3951
  %v3991 = vpack.c.b16 %v3955, %v3952
  %v3992 = vpack.c.b16 %v3956, %v3953
  %v3993 = vpack.c.b16 %v3960, %v3957
  %v3994 = vpack.c.b16 %v3961, %v3958
  %v3995 = vpack.c.b16 %v3962, %v3959
  %v3996 = vpack.c.b16 %v3966, %v3963
  %v3997 = vpack.c.b16 %v3967, %v3964
  %v3998 = vpack.c.b16 %v3968, %v3965
  %v3999 = vpack.c.b16 %v3972, %v3969
  %v4000 = vpack.c.b16 %v3973, %v3970
  %v4001 = vpack.c.b16 %v3974, %v3971
  %v4002 = vpack.c.b16 %v3978, %v3975
  %v4003 = vpack.c.b16 %v3979, %v3976
  %v4004 = vpack.c.b16 %v3980, %v3977
  %4029 = vmatprep.subr.bf16.mxu0 %v4003
  %4030 = vmatpush1.bf16.msra.mxu0 %v4002
  %4031 = vmatprep.subr.bf16.mxu0 %v4000
  %4032 = vmatpush1.bf16.msra.mxu0 %v3999
  %4033 = vmatprep.subr.bf16.mxu0 %v3997
  %4034 = vmatpush1.bf16.msra.mxu0 %v3996
  %4035 = vmatprep.subr.bf16.mxu0 %v3994
  %4036 = vmatpush1.bf16.msra.mxu0 %v3993
  %4037 = vmatprep.subr.bf16.mxu0 %v3991
  %4038 = vmatpush1.bf16.msra.mxu0 %v3990
  %4039 = vmatprep.subr.bf16.mxu0 %v3988
  %4040 = vmatpush1.bf16.msra.mxu0 %v3987
  %4041 = vmatprep.subr.bf16.mxu0 %v3985
  %4042 = vmatpush1.bf16.msra.mxu0 %v3984
  %4043 = vmatprep.subr.bf16.mxu0 %v3982
  %4044 = vmatpush1.bf16.msra.mxu0 %v3981
  %4045 = vmatprep.subr.bf16.mxu0 0
  %4046 = vmatpush2.bf16.msra.mxu0 0
  %4047 = vmatprep.subr.bf16.mxu0 0
  %4048 = vmatpush2.bf16.msra.mxu0 0
  %4049 = vmatprep.subr.bf16.mxu0 0
  %4050 = vmatpush2.bf16.msra.mxu0 0
  %4051 = vmatprep.subr.bf16.mxu0 0
  %4052 = vmatpush2.bf16.msra.mxu0 0
  %4053 = vmatprep.subr.bf16.mxu0 0
  %4054 = vmatpush2.bf16.msra.mxu0 0
  %4055 = vmatprep.subr.bf16.mxu0 0
  %4056 = vmatpush2.bf16.msra.mxu0 0
  %4057 = vmatprep.subr.bf16.mxu0 0
  %4058 = vmatpush2.bf16.msra.mxu0 0
  %4059 = vmatprep.subr.bf16.mxu0 0
  %4060 = vmatpush2.bf16.msra.mxu0 0
  %4061 = vmatprep.mubr.bf16.mxu0 0
  %4062 = vmatmul.mubr.bf16.gmra.mxu0 0
  %v4063 = vpop.f32.mrf.mxu0
  %v4064 = vadd.f32 0.0, %v4063
  %v4065 = vpop.f32.mrf.mxu0
  %v4066 = vadd.f32 0.0, %v4065
  %v4067 = vpop.f32.mrf.mxu0
  %v4068 = vpop.f32.mrf.mxu0
  %4069 = vdwg.mxu0
  %4070 = vmatprep.subr.bf16.mxu0 0
  %4071 = vmatpush1.bf16.msra.mxu0 %v4004
  %4072 = vmatprep.subr.bf16.mxu0 0
  %4073 = vmatpush1.bf16.msra.mxu0 %v4001
  %4074 = vmatprep.subr.bf16.mxu0 0
  %4075 = vmatpush1.bf16.msra.mxu0 %v3998
  %4076 = vmatprep.subr.bf16.mxu0 0
  %4077 = vmatpush1.bf16.msra.mxu0 %v3995
  %4078 = vmatprep.subr.bf16.mxu0 0
  %4079 = vmatpush1.bf16.msra.mxu0 %v3992
  %4080 = vmatprep.subr.bf16.mxu0 0
  %4081 = vmatpush1.bf16.msra.mxu0 %v3989
  %4082 = vmatprep.subr.bf16.mxu0 0
  %4083 = vmatpush1.bf16.msra.mxu0 %v3986
  %4084 = vmatprep.subr.bf16.mxu0 0
  %4085 = vmatpush1.bf16.msra.mxu0 %v3983
  %4086 = vmatprep.subr.bf16.mxu0 0
  %4087 = vmatpush2.bf16.msra.mxu0 0
  %4088 = vmatprep.subr.bf16.mxu0 0
  %4089 = vmatpush2.bf16.msra.mxu0 0
  %4090 = vmatprep.subr.bf16.mxu0 0
  %4091 = vmatpush2.bf16.msra.mxu0 0
  %4092 = vmatprep.subr.bf16.mxu0 0
  %4093 = vmatpush2.bf16.msra.mxu0 0
  %4094 = vmatprep.subr.bf16.mxu0 0
  %4095 = vmatpush2.bf16.msra.mxu0 0
  %4096 = vmatprep.subr.bf16.mxu0 0
  %4097 = vmatpush2.bf16.msra.mxu0 0
  %4098 = vmatprep.subr.bf16.mxu0 0
  %4099 = vmatpush2.bf16.msra.mxu0 0
  %4100 = vmatprep.subr.bf16.mxu0 0
  %4101 = vmatpush2.bf16.msra.mxu0 0
  %4102 = vmatprep.mubr.bf16.mxu0 0
  %4103 = vmatmul.mubr.bf16.gmra.mxu0 0
  %v4104 = vpop.f32.mrf.mxu0
  %v4105 = vadd.f32 0.0, %v4104
  %v4106 = vpop.f32.mrf.mxu0
  %v4107 = vpop.f32.mrf.mxu0
  %v4108 = vpop.f32.mrf.mxu0
  %4109 = vdwg.mxu0
  %v4142 = vunpack.c.l.b16 %v3868
  %v4143 = vunpack.c.h.b16 %v3868
  %v4144 = vunpack.c.l.b16 %v3869
  %v4145 = vunpack.c.l.b16 %v3870
  %v4146 = vunpack.c.h.b16 %v3870
  %v4147 = vunpack.c.l.b16 %v3871
  %v4148 = vunpack.c.l.b16 %v3872
  %v4149 = vunpack.c.h.b16 %v3872
  %v4150 = vunpack.c.l.b16 %v3873
  %v4151 = vunpack.c.l.b16 %v3874
  %v4152 = vunpack.c.h.b16 %v3874
  %v4153 = vunpack.c.l.b16 %v3875
  %v4154 = vunpack.c.l.b16 %v3876
  %v4155 = vunpack.c.h.b16 %v3876
  %v4156 = vunpack.c.l.b16 %v3877
  %v4157 = vunpack.c.l.b16 %v3878
  %v4158 = vunpack.c.h.b16 %v3878
  %v4159 = vunpack.c.l.b16 %v3879
  %v4160 = vunpack.c.l.b16 %v3880
  %v4161 = vunpack.c.h.b16 %v3880
  %v4162 = vunpack.c.l.b16 %v3881
  %v4163 = vunpack.c.l.b16 %v3882
  %v4164 = vunpack.c.h.b16 %v3882
  %v4165 = vunpack.c.l.b16 %v3883
  %v4166 = vunpack.c.l.b16 %v3884
  %v4167 = vunpack.c.h.b16 %v3884
  %v4168 = vunpack.c.l.b16 %v3885
  %v4169 = vunpack.c.l.b16 %v3886
  %v4170 = vunpack.c.h.b16 %v3886
  %v4171 = vunpack.c.l.b16 %v3887
  %v4172 = vunpack.c.l.b16 %v3888
  %v4173 = vunpack.c.h.b16 %v3888
  %v4174 = vunpack.c.l.b16 %v3889
  %v4175 = vunpack.c.l.b16 %v3890
  %v4176 = vunpack.c.h.b16 %v3890
  %v4177 = vunpack.c.l.b16 %v3891
  %v4178 = vunpack.c.l.b16 %v3892
  %v4179 = vunpack.c.h.b16 %v3892
  %v4180 = vunpack.c.l.b16 %v3893
  %v4181 = vunpack.c.l.b16 %v3894
  %v4182 = vunpack.c.h.b16 %v3894
  %v4183 = vunpack.c.l.b16 %v3895
  %v4184 = vunpack.c.l.b16 %v3896
  %v4185 = vunpack.c.h.b16 %v3896
  %v4186 = vunpack.c.l.b16 %v3897
  %v4187 = vunpack.c.l.b16 %v3898
  %v4188 = vunpack.c.h.b16 %v3898
  %v4189 = vunpack.c.l.b16 %v3899
  %v4190 = vpack.c.b16 %v4145, %v4142
  %v4191 = vpack.c.b16 %v4146, %v4143
  %v4192 = vpack.c.b16 %v4147, %v4144
  %v4193 = vpack.c.b16 %v4151, %v4148
  %v4194 = vpack.c.b16 %v4152, %v4149
  %v4195 = vpack.c.b16 %v4153, %v4150
  %v4196 = vpack.c.b16 %v4157, %v4154
  %v4197 = vpack.c.b16 %v4158, %v4155
  %v4198 = vpack.c.b16 %v4159, %v4156
  %v4199 = vpack.c.b16 %v4163, %v4160
  %v4200 = vpack.c.b16 %v4164, %v4161
  %v4201 = vpack.c.b16 %v4165, %v4162
  %v4202 = vpack.c.b16 %v4169, %v4166
  %v4203 = vpack.c.b16 %v4170, %v4167
  %v4204 = vpack.c.b16 %v4171, %v4168
  %v4205 = vpack.c.b16 %v4175, %v4172
  %v4206 = vpack.c.b16 %v4176, %v4173
  %v4207 = vpack.c.b16 %v4177, %v4174
  %v4208 = vpack.c.b16 %v4181, %v4178
  %v4209 = vpack.c.b16 %v4182, %v4179
  %v4210 = vpack.c.b16 %v4183, %v4180
  %v4211 = vpack.c.b16 %v4187, %v4184
  %v4212 = vpack.c.b16 %v4188, %v4185
  %v4213 = vpack.c.b16 %v4189, %v4186
  %4238 = vmatprep.subr.bf16.mxu0 %v4212
  %4239 = vmatpush1.bf16.msra.mxu0 %v4211
  %4240 = vmatprep.subr.bf16.mxu0 %v4209
  %4241 = vmatpush1.bf16.msra.mxu0 %v4208
  %4242 = vmatprep.subr.bf16.mxu0 %v4206
  %4243 = vmatpush1.bf16.msra.mxu0 %v4205
  %4244 = vmatprep.subr.bf16.mxu0 %v4203
  %4245 = vmatpush1.bf16.msra.mxu0 %v4202
  %4246 = vmatprep.subr.bf16.mxu0 %v4200
  %4247 = vmatpush1.bf16.msra.mxu0 %v4199
  %4248 = vmatprep.subr.bf16.mxu0 %v4197
  %4249 = vmatpush1.bf16.msra.mxu0 %v4196
  %4250 = vmatprep.subr.bf16.mxu0 %v4194
  %4251 = vmatpush1.bf16.msra.mxu0 %v4193
  %4252 = vmatprep.subr.bf16.mxu0 %v4191
  %4253 = vmatpush1.bf16.msra.mxu0 %v4190
  %4254 = vmatprep.subr.bf16.mxu0 0
  %4255 = vmatpush2.bf16.msra.mxu0 0
  %4256 = vmatprep.subr.bf16.mxu0 0
  %4257 = vmatpush2.bf16.msra.mxu0 0
  %4258 = vmatprep.subr.bf16.mxu0 0
  %4259 = vmatpush2.bf16.msra.mxu0 0
  %4260 = vmatprep.subr.bf16.mxu0 0
  %4261 = vmatpush2.bf16.msra.mxu0 0
  %4262 = vmatprep.subr.bf16.mxu0 0
  %4263 = vmatpush2.bf16.msra.mxu0 0
  %4264 = vmatprep.subr.bf16.mxu0 0
  %4265 = vmatpush2.bf16.msra.mxu0 0
  %4266 = vmatprep.subr.bf16.mxu0 0
  %4267 = vmatpush2.bf16.msra.mxu0 0
  %4268 = vmatprep.subr.bf16.mxu0 0
  %4269 = vmatpush2.bf16.msra.mxu0 0
  %4270 = vmatprep.mubr.bf16.mxu0 0
  %4271 = vmatmul.mubr.bf16.gmra.mxu0 0
  %v4272 = vpop.f32.mrf.mxu0
  %v4273 = vadd.f32 0.0, %v4272
  %v4274 = vpop.f32.mrf.mxu0
  %v4275 = vadd.f32 0.0, %v4274
  %v4276 = vpop.f32.mrf.mxu0
  %v4277 = vpop.f32.mrf.mxu0
  %4278 = vdwg.mxu0
  %4279 = vmatprep.subr.bf16.mxu0 0
  %4280 = vmatpush1.bf16.msra.mxu0 %v4213
  %4281 = vmatprep.subr.bf16.mxu0 0
  %4282 = vmatpush1.bf16.msra.mxu0 %v4210
  %4283 = vmatprep.subr.bf16.mxu0 0
  %4284 = vmatpush1.bf16.msra.mxu0 %v4207
  %4285 = vmatprep.subr.bf16.mxu0 0
  %4286 = vmatpush1.bf16.msra.mxu0 %v4204
  %4287 = vmatprep.subr.bf16.mxu0 0
  %4288 = vmatpush1.bf16.msra.mxu0 %v4201
  %4289 = vmatprep.subr.bf16.mxu0 0
  %4290 = vmatpush1.bf16.msra.mxu0 %v4198
  %4291 = vmatprep.subr.bf16.mxu0 0
  %4292 = vmatpush1.bf16.msra.mxu0 %v4195
  %4293 = vmatprep.subr.bf16.mxu0 0
  %4294 = vmatpush1.bf16.msra.mxu0 %v4192
  %4295 = vmatprep.subr.bf16.mxu0 0
  %4296 = vmatpush2.bf16.msra.mxu0 0
  %4297 = vmatprep.subr.bf16.mxu0 0
  %4298 = vmatpush2.bf16.msra.mxu0 0
  %4299 = vmatprep.subr.bf16.mxu0 0
  %4300 = vmatpush2.bf16.msra.mxu0 0
  %4301 = vmatprep.subr.bf16.mxu0 0
  %4302 = vmatpush2.bf16.msra.mxu0 0
  %4303 = vmatprep.subr.bf16.mxu0 0
  %4304 = vmatpush2.bf16.msra.mxu0 0
  %4305 = vmatprep.subr.bf16.mxu0 0
  %4306 = vmatpush2.bf16.msra.mxu0 0
  %4307 = vmatprep.subr.bf16.mxu0 0
  %4308 = vmatpush2.bf16.msra.mxu0 0
  %4309 = vmatprep.subr.bf16.mxu0 0
  %4310 = vmatpush2.bf16.msra.mxu0 0
  %4311 = vmatprep.mubr.bf16.mxu0 0
  %4312 = vmatmul.mubr.bf16.gmra.mxu0 0
  %v4313 = vpop.f32.mrf.mxu0
  %v4314 = vadd.f32 0.0, %v4313
  %v4315 = vpop.f32.mrf.mxu0
  %v4316 = vpop.f32.mrf.mxu0
  %v4317 = vpop.f32.mrf.mxu0
  %4318 = vdwg.mxu0
  %v4319 = vld [vmem:[#allocation3] sm:$0xff]
  %v4320 = vld [vmem:[#allocation3 + $0x8] sm:$0xff]
  %v4321 = vld [vmem:[#allocation3 + $0x10] sm:$0xff]
  %v4322 = vadd.f32 %v4319, %v4064
  %v4323 = vxor.u32 %v4322, 2147483648
  %v4324 = vmul.f32 %v4323, 1.442695
  %v4325 = vpow.pop %v4324
  %v4326 = vadd.f32 %v4325, 1.0
  %v4327 = vrcp.pop %v4326
  %v4328 = vmul.f32 1.0, %v4327
  %v4329 = vadd.f32 %v4320, %v4066
  %v4330 = vxor.u32 %v4329, 2147483648
  %v4331 = vmul.f32 %v4330, 1.442695
  %v4332 = vpow.pop %v4331
  %v4333 = vadd.f32 %v4332, 1.0
  %v4334 = vrcp.pop %v4333
  %v4335 = vmul.f32 1.0, %v4334
  %v4337 = vlaneseq
  %v4338 = vshrl.u32 %v4337, 7
  %v4339 = vsub.s32 0, %v4338
  %v4340 = vrot.slane %v3368, %v4339
  %v4342 = vadd.f32 %v4105, %v4340
  %v4343 = vmul.f32 %v4328, %v4342
  %v4344 = vadd.f32 %v4321, %v4343
  %v4345 = vtanh.pop %v4344
  %v4346 = vsub.f32 0.0, %v4345
  %v4347 = vmul.f32 %v4335, %v4346
  %v4348 = vadd.f32 %v4345, %v4347
  %v4349 = vld [vmem:[%s1263] sm:$0xff]
  %v4350 = vld [vmem:[%s1263 + $0x8] sm:$0xff]
  %v4351 = vld [vmem:[%s1263 + $0x10] sm:$0xff]
  %v4352 = vadd.f32 %v4349, %v4273
  %v4353 = vxor.u32 %v4352, 2147483648
  %v4354 = vmul.f32 %v4353, 1.442695
  %v4355 = vpow.pop %v4354
  %v4356 = vadd.f32 %v4355, 1.0
  %v4357 = vrcp.pop %v4356
  %v4358 = vmul.f32 1.0, %v4357
  %v4359 = vadd.f32 %v4350, %v4275
  %v4360 = vxor.u32 %v4359, 2147483648
  %v4361 = vmul.f32 %v4360, 1.442695
  %v4362 = vpow.pop %v4361
  %v4363 = vadd.f32 %v4362, 1.0
  %v4364 = vrcp.pop %v4363
  %v4365 = vmul.f32 1.0, %v4364
  %v4367 = vlaneseq
  %v4368 = vshrl.u32 %v4367, 7
  %v4369 = vsub.s32 0, %v4368
  %v4370 = vrot.slane %v3900, %v4369
  %v4372 = vadd.f32 %v4314, %v4370
  %v4373 = vmul.f32 %v4358, %v4372
  %v4374 = vadd.f32 %v4351, %v4373
  %v4375 = vtanh.pop %v4374
  %v4376 = vsub.f32 0.0, %v4375
  %v4377 = vmul.f32 %v4365, %v4376
  %v4378 = vadd.f32 %v4375, %v4377
  %v4379 = vpack.c.bf16 %v4348, %v4348
  %4380 = vmatprep.subr.bf16.mxu0 %v4003
  %4381 = vmatpush1.bf16.msra.mxu0 %v4002
  %4382 = vmatprep.subr.bf16.mxu0 %v4000
  %4383 = vmatpush1.bf16.msra.mxu0 %v3999
  %4384 = vmatprep.subr.bf16.mxu0 %v3997
  %4385 = vmatpush1.bf16.msra.mxu0 %v3996
  %4386 = vmatprep.subr.bf16.mxu0 %v3994
  %4387 = vmatpush1.bf16.msra.mxu0 %v3993
  %4388 = vmatprep.subr.bf16.mxu0 %v3991
  %4389 = vmatpush1.bf16.msra.mxu0 %v3990
  %4390 = vmatprep.subr.bf16.mxu0 %v3988
  %4391 = vmatpush1.bf16.msra.mxu0 %v3987
  %4392 = vmatprep.subr.bf16.mxu0 %v3985
  %4393 = vmatpush1.bf16.msra.mxu0 %v3984
  %4394 = vmatprep.subr.bf16.mxu0 %v3982
  %4395 = vmatpush1.bf16.msra.mxu0 %v3981
  %4396 = vmatprep.subr.bf16.mxu0 0
  %4397 = vmatpush2.bf16.msra.mxu0 0
  %4398 = vmatprep.subr.bf16.mxu0 0
  %4399 = vmatpush2.bf16.msra.mxu0 0
  %4400 = vmatprep.subr.bf16.mxu0 0
  %4401 = vmatpush2.bf16.msra.mxu0 0
  %4402 = vmatprep.subr.bf16.mxu0 0
  %4403 = vmatpush2.bf16.msra.mxu0 0
  %4404 = vmatprep.subr.bf16.mxu0 0
  %4405 = vmatpush2.bf16.msra.mxu0 0
  %4406 = vmatprep.subr.bf16.mxu0 0
  %4407 = vmatpush2.bf16.msra.mxu0 0
  %4408 = vmatprep.subr.bf16.mxu0 0
  %4409 = vmatpush2.bf16.msra.mxu0 0
  %4410 = vmatprep.subr.bf16.mxu0 0
  %4411 = vmatpush2.bf16.msra.mxu0 0
  %4412 = vmatprep.mubr.bf16.mxu0 0
  %4413 = vmatmul.mubr.bf16.gmra.mxu0 %v4379
  %v4414 = vpop.f32.mrf.mxu0
  %v4415 = vadd.f32 0.0, %v4414
  %v4416 = vpop.f32.mrf.mxu0
  %v4417 = vadd.f32 0.0, %v4416
  %v4418 = vpop.f32.mrf.mxu0
  %v4419 = vpop.f32.mrf.mxu0
  %4420 = vdwg.mxu0
  %4421 = vmatprep.subr.bf16.mxu0 0
  %4422 = vmatpush1.bf16.msra.mxu0 %v4004
  %4423 = vmatprep.subr.bf16.mxu0 0
  %4424 = vmatpush1.bf16.msra.mxu0 %v4001
  %4425 = vmatprep.subr.bf16.mxu0 0
  %4426 = vmatpush1.bf16.msra.mxu0 %v3998
  %4427 = vmatprep.subr.bf16.mxu0 0
  %4428 = vmatpush1.bf16.msra.mxu0 %v3995
  %4429 = vmatprep.subr.bf16.mxu0 0
  %4430 = vmatpush1.bf16.msra.mxu0 %v3992
  %4431 = vmatprep.subr.bf16.mxu0 0
  %4432 = vmatpush1.bf16.msra.mxu0 %v3989
  %4433 = vmatprep.subr.bf16.mxu0 0
  %4434 = vmatpush1.bf16.msra.mxu0 %v3986
  %4435 = vmatprep.subr.bf16.mxu0 0
  %4436 = vmatpush1.bf16.msra.mxu0 %v3983
  %4437 = vmatprep.subr.bf16.mxu0 0
  %4438 = vmatpush2.bf16.msra.mxu0 0
  %4439 = vmatprep.subr.bf16.mxu0 0
  %4440 = vmatpush2.bf16.msra.mxu0 0
  %4441 = vmatprep.subr.bf16.mxu0 0
  %4442 = vmatpush2.bf16.msra.mxu0 0
  %4443 = vmatprep.subr.bf16.mxu0 0
  %4444 = vmatpush2.bf16.msra.mxu0 0
  %4445 = vmatprep.subr.bf16.mxu0 0
  %4446 = vmatpush2.bf16.msra.mxu0 0
  %4447 = vmatprep.subr.bf16.mxu0 0
  %4448 = vmatpush2.bf16.msra.mxu0 0
  %4449 = vmatprep.subr.bf16.mxu0 0
  %4450 = vmatpush2.bf16.msra.mxu0 0
  %4451 = vmatprep.subr.bf16.mxu0 0
  %4452 = vmatpush2.bf16.msra.mxu0 0
  %4453 = vmatprep.mubr.bf16.mxu0 0
  %4454 = vmatmul.mubr.bf16.gmra.mxu0 %v4379
  %v4455 = vpop.f32.mrf.mxu0
  %v4456 = vadd.f32 0.0, %v4455
  %v4457 = vpop.f32.mrf.mxu0
  %v4458 = vpop.f32.mrf.mxu0
  %v4459 = vpop.f32.mrf.mxu0
  %4460 = vdwg.mxu0
  %v4461 = vpack.c.bf16 %v4378, %v4378
  %4462 = vmatprep.subr.bf16.mxu0 %v4212
  %4463 = vmatpush1.bf16.msra.mxu0 %v4211
  %4464 = vmatprep.subr.bf16.mxu0 %v4209
  %4465 = vmatpush1.bf16.msra.mxu0 %v4208
  %4466 = vmatprep.subr.bf16.mxu0 %v4206
  %4467 = vmatpush1.bf16.msra.mxu0 %v4205
  %4468 = vmatprep.subr.bf16.mxu0 %v4203
  %4469 = vmatpush1.bf16.msra.mxu0 %v4202
  %4470 = vmatprep.subr.bf16.mxu0 %v4200
  %4471 = vmatpush1.bf16.msra.mxu0 %v4199
  %4472 = vmatprep.subr.bf16.mxu0 %v4197
  %4473 = vmatpush1.bf16.msra.mxu0 %v4196
  %4474 = vmatprep.subr.bf16.mxu0 %v4194
  %4475 = vmatpush1.bf16.msra.mxu0 %v4193
  %4476 = vmatprep.subr.bf16.mxu0 %v4191
  %4477 = vmatpush1.bf16.msra.mxu0 %v4190
  %4478 = vmatprep.subr.bf16.mxu0 0
  %4479 = vmatpush2.bf16.msra.mxu0 0
  %4480 = vmatprep.subr.bf16.mxu0 0
  %4481 = vmatpush2.bf16.msra.mxu0 0
  %4482 = vmatprep.subr.bf16.mxu0 0
  %4483 = vmatpush2.bf16.msra.mxu0 0
  %4484 = vmatprep.subr.bf16.mxu0 0
  %4485 = vmatpush2.bf16.msra.mxu0 0
  %4486 = vmatprep.subr.bf16.mxu0 0
  %4487 = vmatpush2.bf16.msra.mxu0 0
  %4488 = vmatprep.subr.bf16.mxu0 0
  %4489 = vmatpush2.bf16.msra.mxu0 0
  %4490 = vmatprep.subr.bf16.mxu0 0
  %4491 = vmatpush2.bf16.msra.mxu0 0
  %4492 = vmatprep.subr.bf16.mxu0 0
  %4493 = vmatpush2.bf16.msra.mxu0 0
  %4494 = vmatprep.mubr.bf16.mxu0 0
  %4495 = vmatmul.mubr.bf16.gmra.mxu0 %v4461
  %v4496 = vpop.f32.mrf.mxu0
  %v4497 = vadd.f32 0.0, %v4496
  %v4498 = vpop.f32.mrf.mxu0
  %v4499 = vadd.f32 0.0, %v4498
  %v4500 = vpop.f32.mrf.mxu0
  %v4501 = vpop.f32.mrf.mxu0
  %4502 = vdwg.mxu0
  %4503 = vmatprep.subr.bf16.mxu0 0
  %4504 = vmatpush1.bf16.msra.mxu0 %v4213
  %4505 = vmatprep.subr.bf16.mxu0 0
  %4506 = vmatpush1.bf16.msra.mxu0 %v4210
  %4507 = vmatprep.subr.bf16.mxu0 0
  %4508 = vmatpush1.bf16.msra.mxu0 %v4207
  %4509 = vmatprep.subr.bf16.mxu0 0
  %4510 = vmatpush1.bf16.msra.mxu0 %v4204
  %4511 = vmatprep.subr.bf16.mxu0 0
  %4512 = vmatpush1.bf16.msra.mxu0 %v4201
  %4513 = vmatprep.subr.bf16.mxu0 0
  %4514 = vmatpush1.bf16.msra.mxu0 %v4198
  %4515 = vmatprep.subr.bf16.mxu0 0
  %4516 = vmatpush1.bf16.msra.mxu0 %v4195
  %4517 = vmatprep.subr.bf16.mxu0 0
  %4518 = vmatpush1.bf16.msra.mxu0 %v4192
  %4519 = vmatprep.subr.bf16.mxu0 0
  %4520 = vmatpush2.bf16.msra.mxu0 0
  %4521 = vmatprep.subr.bf16.mxu0 0
  %4522 = vmatpush2.bf16.msra.mxu0 0
  %4523 = vmatprep.subr.bf16.mxu0 0
  %4524 = vmatpush2.bf16.msra.mxu0 0
  %4525 = vmatprep.subr.bf16.mxu0 0
  %4526 = vmatpush2.bf16.msra.mxu0 0
  %4527 = vmatprep.subr.bf16.mxu0 0
  %4528 = vmatpush2.bf16.msra.mxu0 0
  %4529 = vmatprep.subr.bf16.mxu0 0
  %4530 = vmatpush2.bf16.msra.mxu0 0
  %4531 = vmatprep.subr.bf16.mxu0 0
  %4532 = vmatpush2.bf16.msra.mxu0 0
  %4533 = vmatprep.subr.bf16.mxu0 0
  %4534 = vmatpush2.bf16.msra.mxu0 0
  %4535 = vmatprep.mubr.bf16.mxu0 0
  %4536 = vmatmul.mubr.bf16.gmra.mxu0 %v4461
  %v4537 = vpop.f32.mrf.mxu0
  %v4538 = vadd.f32 0.0, %v4537
  %v4539 = vpop.f32.mrf.mxu0
  %v4540 = vpop.f32.mrf.mxu0
  %v4541 = vpop.f32.mrf.mxu0
  %4542 = vdwg.mxu0
  %v4543 = vld [vmem:[%s1460] sm:$0xff]
  %v4544 = vld [vmem:[%s1460 + $0x8] sm:$0xff]
  %v4545 = vld [vmem:[%s1460 + $0x10] sm:$0xff]
  %v4546 = vadd.f32 %v4543, %v4415
  %v4547 = vxor.u32 %v4546, 2147483648
  %v4548 = vmul.f32 %v4547, 1.442695
  %v4549 = vpow.pop %v4548
  %v4550 = vadd.f32 %v4549, 1.0
  %v4551 = vrcp.pop %v4550
  %v4552 = vmul.f32 1.0, %v4551
  %v4553 = vadd.f32 %v4544, %v4417
  %v4554 = vxor.u32 %v4553, 2147483648
  %v4555 = vmul.f32 %v4554, 1.442695
  %v4556 = vpow.pop %v4555
  %v4557 = vadd.f32 %v4556, 1.0
  %v4558 = vrcp.pop %v4557
  %v4559 = vmul.f32 1.0, %v4558
  %v4560 = vadd.f32 %v4456, %v4340
  %v4561 = vmul.f32 %v4552, %v4560
  %v4562 = vadd.f32 %v4545, %v4561
  %v4563 = vtanh.pop %v4562
  %v4564 = vsub.f32 %v4348, %v4563
  %v4565 = vmul.f32 %v4559, %v4564
  %v4566 = vadd.f32 %v4563, %v4565
  %v4567 = vld [vmem:[%s1487] sm:$0xff]
  %v4568 = vld [vmem:[%s1487 + $0x8] sm:$0xff]
  %v4569 = vld [vmem:[%s1487 + $0x10] sm:$0xff]
  %v4570 = vadd.f32 %v4567, %v4497
  %v4571 = vxor.u32 %v4570, 2147483648
  %v4572 = vmul.f32 %v4571, 1.442695
  %v4573 = vpow.pop %v4572
  %v4574 = vadd.f32 %v4573, 1.0
  %v4575 = vrcp.pop %v4574
  %v4576 = vmul.f32 1.0, %v4575
  %v4577 = vadd.f32 %v4568, %v4499
  %v4578 = vxor.u32 %v4577, 2147483648
  %v4579 = vmul.f32 %v4578, 1.442695
  %v4580 = vpow.pop %v4579
  %v4581 = vadd.f32 %v4580, 1.0
  %v4582 = vrcp.pop %v4581
  %v4583 = vmul.f32 1.0, %v4582
  %v4584 = vadd.f32 %v4538, %v4370
  %v4585 = vmul.f32 %v4576, %v4584
  %v4586 = vadd.f32 %v4569, %v4585
  %v4587 = vtanh.pop %v4586
  %v4588 = vsub.f32 %v4378, %v4587
  %v4589 = vmul.f32 %v4583, %v4588
  %v4590 = vadd.f32 %v4587, %v4589
  %v4591 = vpack.c.bf16 %v4566, %v4566
  %4592 = vmatprep.subr.bf16.mxu0 %v4003
  %4593 = vmatpush1.bf16.msra.mxu0 %v4002
  %4594 = vmatprep.subr.bf16.mxu0 %v4000
  %4595 = vmatpush1.bf16.msra.mxu0 %v3999
  %4596 = vmatprep.subr.bf16.mxu0 %v3997
  %4597 = vmatpush1.bf16.msra.mxu0 %v3996
  %4598 = vmatprep.subr.bf16.mxu0 %v3994
  %4599 = vmatpush1.bf16.msra.mxu0 %v3993
  %4600 = vmatprep.subr.bf16.mxu0 %v3991
  %4601 = vmatpush1.bf16.msra.mxu0 %v3990
  %4602 = vmatprep.subr.bf16.mxu0 %v3988
  %4603 = vmatpush1.bf16.msra.mxu0 %v3987
  %4604 = vmatprep.subr.bf16.mxu0 %v3985
  %4605 = vmatpush1.bf16.msra.mxu0 %v3984
  %4606 = vmatprep.subr.bf16.mxu0 %v3982
  %4607 = vmatpush1.bf16.msra.mxu0 %v3981
  %4608 = vmatprep.subr.bf16.mxu0 0
  %4609 = vmatpush2.bf16.msra.mxu0 0
  %4610 = vmatprep.subr.bf16.mxu0 0
  %4611 = vmatpush2.bf16.msra.mxu0 0
  %4612 = vmatprep.subr.bf16.mxu0 0
  %4613 = vmatpush2.bf16.msra.mxu0 0
  %4614 = vmatprep.subr.bf16.mxu0 0
  %4615 = vmatpush2.bf16.msra.mxu0 0
  %4616 = vmatprep.subr.bf16.mxu0 0
  %4617 = vmatpush2.bf16.msra.mxu0 0
  %4618 = vmatprep.subr.bf16.mxu0 0
  %4619 = vmatpush2.bf16.msra.mxu0 0
  %4620 = vmatprep.subr.bf16.mxu0 0
  %4621 = vmatpush2.bf16.msra.mxu0 0
  %4622 = vmatprep.subr.bf16.mxu0 0
  %4623 = vmatpush2.bf16.msra.mxu0 0
  %4624 = vmatprep.mubr.bf16.mxu0 0
  %4625 = vmatmul.mubr.bf16.gmra.mxu0 %v4591
  %v4626 = vpop.f32.mrf.mxu0
  %v4627 = vadd.f32 0.0, %v4626
  %v4628 = vpop.f32.mrf.mxu0
  %v4629 = vadd.f32 0.0, %v4628
  %v4630 = vpop.f32.mrf.mxu0
  %v4631 = vpop.f32.mrf.mxu0
  %4632 = vdwg.mxu0
  %4633 = vmatprep.subr.bf16.mxu0 0
  %4634 = vmatpush1.bf16.msra.mxu0 %v4004
  %4635 = vmatprep.subr.bf16.mxu0 0
  %4636 = vmatpush1.bf16.msra.mxu0 %v4001
  %4637 = vmatprep.subr.bf16.mxu0 0
  %4638 = vmatpush1.bf16.msra.mxu0 %v3998
  %4639 = vmatprep.subr.bf16.mxu0 0
  %4640 = vmatpush1.bf16.msra.mxu0 %v3995
  %4641 = vmatprep.subr.bf16.mxu0 0
  %4642 = vmatpush1.bf16.msra.mxu0 %v3992
  %4643 = vmatprep.subr.bf16.mxu0 0
  %4644 = vmatpush1.bf16.msra.mxu0 %v3989
  %4645 = vmatprep.subr.bf16.mxu0 0
  %4646 = vmatpush1.bf16.msra.mxu0 %v3986
  %4647 = vmatprep.subr.bf16.mxu0 0
  %4648 = vmatpush1.bf16.msra.mxu0 %v3983
  %4649 = vmatprep.subr.bf16.mxu0 0
  %4650 = vmatpush2.bf16.msra.mxu0 0
  %4651 = vmatprep.subr.bf16.mxu0 0
  %4652 = vmatpush2.bf16.msra.mxu0 0
  %4653 = vmatprep.subr.bf16.mxu0 0
  %4654 = vmatpush2.bf16.msra.mxu0 0
  %4655 = vmatprep.subr.bf16.mxu0 0
  %4656 = vmatpush2.bf16.msra.mxu0 0
  %4657 = vmatprep.subr.bf16.mxu0 0
  %4658 = vmatpush2.bf16.msra.mxu0 0
  %4659 = vmatprep.subr.bf16.mxu0 0
  %4660 = vmatpush2.bf16.msra.mxu0 0
  %4661 = vmatprep.subr.bf16.mxu0 0
  %4662 = vmatpush2.bf16.msra.mxu0 0
  %4663 = vmatprep.subr.bf16.mxu0 0
  %4664 = vmatpush2.bf16.msra.mxu0 0
  %4665 = vmatprep.mubr.bf16.mxu0 0
  %4666 = vmatmul.mubr.bf16.gmra.mxu0 %v4591
  %v4667 = vpop.f32.mrf.mxu0
  %v4668 = vadd.f32 0.0, %v4667
  %v4669 = vpop.f32.mrf.mxu0
  %v4670 = vpop.f32.mrf.mxu0
  %v4671 = vpop.f32.mrf.mxu0
  %4672 = vdwg.mxu0
  %v4673 = vpack.c.bf16 %v4590, %v4590
  %4674 = vmatprep.subr.bf16.mxu0 %v4212
  %4675 = vmatpush1.bf16.msra.mxu0 %v4211
  %4676 = vmatprep.subr.bf16.mxu0 %v4209
  %4677 = vmatpush1.bf16.msra.mxu0 %v4208
  %4678 = vmatprep.subr.bf16.mxu0 %v4206
  %4679 = vmatpush1.bf16.msra.mxu0 %v4205
  %4680 = vmatprep.subr.bf16.mxu0 %v4203
  %4681 = vmatpush1.bf16.msra.mxu0 %v4202
  %4682 = vmatprep.subr.bf16.mxu0 %v4200
  %4683 = vmatpush1.bf16.msra.mxu0 %v4199
  %4684 = vmatprep.subr.bf16.mxu0 %v4197
  %4685 = vmatpush1.bf16.msra.mxu0 %v4196
  %4686 = vmatprep.subr.bf16.mxu0 %v4194
  %4687 = vmatpush1.bf16.msra.mxu0 %v4193
  %4688 = vmatprep.subr.bf16.mxu0 %v4191
  %4689 = vmatpush1.bf16.msra.mxu0 %v4190
  %4690 = vmatprep.subr.bf16.mxu0 0
  %4691 = vmatpush2.bf16.msra.mxu0 0
  %4692 = vmatprep.subr.bf16.mxu0 0
  %4693 = vmatpush2.bf16.msra.mxu0 0
  %4694 = vmatprep.subr.bf16.mxu0 0
  %4695 = vmatpush2.bf16.msra.mxu0 0
  %4696 = vmatprep.subr.bf16.mxu0 0
  %4697 = vmatpush2.bf16.msra.mxu0 0
  %4698 = vmatprep.subr.bf16.mxu0 0
  %4699 = vmatpush2.bf16.msra.mxu0 0
  %4700 = vmatprep.subr.bf16.mxu0 0
  %4701 = vmatpush2.bf16.msra.mxu0 0
  %4702 = vmatprep.subr.bf16.mxu0 0
  %4703 = vmatpush2.bf16.msra.mxu0 0
  %4704 = vmatprep.subr.bf16.mxu0 0
  %4705 = vmatpush2.bf16.msra.mxu0 0
  %4706 = vmatprep.mubr.bf16.mxu0 0
  %4707 = vmatmul.mubr.bf16.gmra.mxu0 %v4673
  %v4708 = vpop.f32.mrf.mxu0
  %v4709 = vadd.f32 0.0, %v4708
  %v4710 = vpop.f32.mrf.mxu0
  %v4711 = vadd.f32 0.0, %v4710
  %v4712 = vpop.f32.mrf.mxu0
  %v4713 = vpop.f32.mrf.mxu0
  %4714 = vdwg.mxu0
  %4715 = vmatprep.subr.bf16.mxu0 0
  %4716 = vmatpush1.bf16.msra.mxu0 %v4213
  %4717 = vmatprep.subr.bf16.mxu0 0
  %4718 = vmatpush1.bf16.msra.mxu0 %v4210
  %4719 = vmatprep.subr.bf16.mxu0 0
  %4720 = vmatpush1.bf16.msra.mxu0 %v4207
  %4721 = vmatprep.subr.bf16.mxu0 0
  %4722 = vmatpush1.bf16.msra.mxu0 %v4204
  %4723 = vmatprep.subr.bf16.mxu0 0
  %4724 = vmatpush1.bf16.msra.mxu0 %v4201
  %4725 = vmatprep.subr.bf16.mxu0 0
  %4726 = vmatpush1.bf16.msra.mxu0 %v4198
  %4727 = vmatprep.subr.bf16.mxu0 0
  %4728 = vmatpush1.bf16.msra.mxu0 %v4195
  %4729 = vmatprep.subr.bf16.mxu0 0
  %4730 = vmatpush1.bf16.msra.mxu0 %v4192
  %4731 = vmatprep.subr.bf16.mxu0 0
  %4732 = vmatpush2.bf16.msra.mxu0 0
  %4733 = vmatprep.subr.bf16.mxu0 0
  %4734 = vmatpush2.bf16.msra.mxu0 0
  %4735 = vmatprep.subr.bf16.mxu0 0
  %4736 = vmatpush2.bf16.msra.mxu0 0
  %4737 = vmatprep.subr.bf16.mxu0 0
  %4738 = vmatpush2.bf16.msra.mxu0 0
  %4739 = vmatprep.subr.bf16.mxu0 0
  %4740 = vmatpush2.bf16.msra.mxu0 0
  %4741 = vmatprep.subr.bf16.mxu0 0
  %4742 = vmatpush2.bf16.msra.mxu0 0
  %4743 = vmatprep.subr.bf16.mxu0 0
  %4744 = vmatpush2.bf16.msra.mxu0 0
  %4745 = vmatprep.subr.bf16.mxu0 0
  %4746 = vmatpush2.bf16.msra.mxu0 0
  %4747 = vmatprep.mubr.bf16.mxu0 0
  %4748 = vmatmul.mubr.bf16.gmra.mxu0 %v4673
  %v4749 = vpop.f32.mrf.mxu0
  %v4750 = vadd.f32 0.0, %v4749
  %v4751 = vpop.f32.mrf.mxu0
  %v4752 = vpop.f32.mrf.mxu0
  %v4753 = vpop.f32.mrf.mxu0
  %4754 = vdwg.mxu0
  %v4755 = vld [vmem:[%s1678] sm:$0xff]
  %v4756 = vld [vmem:[%s1678 + $0x8] sm:$0xff]
  %v4757 = vld [vmem:[%s1678 + $0x10] sm:$0xff]
  %v4758 = vadd.f32 %v4755, %v4627
  %v4759 = vxor.u32 %v4758, 2147483648
  %v4760 = vmul.f32 %v4759, 1.442695
  %v4761 = vpow.pop %v4760
  %v4762 = vadd.f32 %v4761, 1.0
  %v4763 = vrcp.pop %v4762
  %v4764 = vmul.f32 1.0, %v4763
  %v4765 = vadd.f32 %v4756, %v4629
  %v4766 = vxor.u32 %v4765, 2147483648
  %v4767 = vmul.f32 %v4766, 1.442695
  %v4768 = vpow.pop %v4767
  %v4769 = vadd.f32 %v4768, 1.0
  %v4770 = vrcp.pop %v4769
  %v4771 = vmul.f32 1.0, %v4770
  %v4772 = vadd.f32 %v4668, %v4340
  %v4773 = vmul.f32 %v4764, %v4772
  %v4774 = vadd.f32 %v4757, %v4773
  %v4775 = vtanh.pop %v4774
  %v4776 = vsub.f32 %v4566, %v4775
  %v4777 = vmul.f32 %v4771, %v4776
  %v4778 = vadd.f32 %v4775, %v4777
  %v4779 = vld [vmem:[%s1705] sm:$0xff]
  %v4780 = vld [vmem:[%s1705 + $0x8] sm:$0xff]
  %v4781 = vld [vmem:[%s1705 + $0x10] sm:$0xff]
  %v4782 = vadd.f32 %v4779, %v4709
  %v4783 = vxor.u32 %v4782, 2147483648
  %v4784 = vmul.f32 %v4783, 1.442695
  %v4785 = vpow.pop %v4784
  %v4786 = vadd.f32 %v4785, 1.0
  %v4787 = vrcp.pop %v4786
  %v4788 = vmul.f32 1.0, %v4787
  %v4789 = vadd.f32 %v4780, %v4711
  %v4790 = vxor.u32 %v4789, 2147483648
  %v4791 = vmul.f32 %v4790, 1.442695
  %v4792 = vpow.pop %v4791
  %v4793 = vadd.f32 %v4792, 1.0
  %v4794 = vrcp.pop %v4793
  %v4795 = vmul.f32 1.0, %v4794
  %v4796 = vadd.f32 %v4750, %v4370
  %v4797 = vmul.f32 %v4788, %v4796
  %v4798 = vadd.f32 %v4781, %v4797
  %v4799 = vtanh.pop %v4798
  %v4800 = vsub.f32 %v4590, %v4799
  %v4801 = vmul.f32 %v4795, %v4800
  %v4802 = vadd.f32 %v4799, %v4801
  %v4803 = vpack.c.bf16 %v4778, %v4778
  %4804 = vmatprep.subr.bf16.mxu0 %v4003
  %4805 = vmatpush1.bf16.msra.mxu0 %v4002
  %4806 = vmatprep.subr.bf16.mxu0 %v4000
  %4807 = vmatpush1.bf16.msra.mxu0 %v3999
  %4808 = vmatprep.subr.bf16.mxu0 %v3997
  %4809 = vmatpush1.bf16.msra.mxu0 %v3996
  %4810 = vmatprep.subr.bf16.mxu0 %v3994
  %4811 = vmatpush1.bf16.msra.mxu0 %v3993
  %4812 = vmatprep.subr.bf16.mxu0 %v3991
  %4813 = vmatpush1.bf16.msra.mxu0 %v3990
  %4814 = vmatprep.subr.bf16.mxu0 %v3988
  %4815 = vmatpush1.bf16.msra.mxu0 %v3987
  %4816 = vmatprep.subr.bf16.mxu0 %v3985
  %4817 = vmatpush1.bf16.msra.mxu0 %v3984
  %4818 = vmatprep.subr.bf16.mxu0 %v3982
  %4819 = vmatpush1.bf16.msra.mxu0 %v3981
  %4820 = vmatprep.subr.bf16.mxu0 0
  %4821 = vmatpush2.bf16.msra.mxu0 0
  %4822 = vmatprep.subr.bf16.mxu0 0
  %4823 = vmatpush2.bf16.msra.mxu0 0
  %4824 = vmatprep.subr.bf16.mxu0 0
  %4825 = vmatpush2.bf16.msra.mxu0 0
  %4826 = vmatprep.subr.bf16.mxu0 0
  %4827 = vmatpush2.bf16.msra.mxu0 0
  %4828 = vmatprep.subr.bf16.mxu0 0
  %4829 = vmatpush2.bf16.msra.mxu0 0
  %4830 = vmatprep.subr.bf16.mxu0 0
  %4831 = vmatpush2.bf16.msra.mxu0 0
  %4832 = vmatprep.subr.bf16.mxu0 0
  %4833 = vmatpush2.bf16.msra.mxu0 0
  %4834 = vmatprep.subr.bf16.mxu0 0
  %4835 = vmatpush2.bf16.msra.mxu0 0
  %4836 = vmatprep.mubr.bf16.mxu0 0
  %4837 = vmatmul.mubr.bf16.gmra.mxu0 %v4803
  %v4838 = vpop.f32.mrf.mxu0
  %v4839 = vadd.f32 0.0, %v4838
  %v4840 = vpop.f32.mrf.mxu0
  %v4841 = vadd.f32 0.0, %v4840
  %v4842 = vpop.f32.mrf.mxu0
  %v4843 = vpop.f32.mrf.mxu0
  %4844 = vdwg.mxu0
  %4845 = vmatprep.subr.bf16.mxu0 0
  %4846 = vmatpush1.bf16.msra.mxu0 %v4004
  %4847 = vmatprep.subr.bf16.mxu0 0
  %4848 = vmatpush1.bf16.msra.mxu0 %v4001
  %4849 = vmatprep.subr.bf16.mxu0 0
  %4850 = vmatpush1.bf16.msra.mxu0 %v3998
  %4851 = vmatprep.subr.bf16.mxu0 0
  %4852 = vmatpush1.bf16.msra.mxu0 %v3995
  %4853 = vmatprep.subr.bf16.mxu0 0
  %4854 = vmatpush1.bf16.msra.mxu0 %v3992
  %4855 = vmatprep.subr.bf16.mxu0 0
  %4856 = vmatpush1.bf16.msra.mxu0 %v3989
  %4857 = vmatprep.subr.bf16.mxu0 0
  %4858 = vmatpush1.bf16.msra.mxu0 %v3986
  %4859 = vmatprep.subr.bf16.mxu0 0
  %4860 = vmatpush1.bf16.msra.mxu0 %v3983
  %4861 = vmatprep.subr.bf16.mxu0 0
  %4862 = vmatpush2.bf16.msra.mxu0 0
  %4863 = vmatprep.subr.bf16.mxu0 0
  %4864 = vmatpush2.bf16.msra.mxu0 0
  %4865 = vmatprep.subr.bf16.mxu0 0
  %4866 = vmatpush2.bf16.msra.mxu0 0
  %4867 = vmatprep.subr.bf16.mxu0 0
  %4868 = vmatpush2.bf16.msra.mxu0 0
  %4869 = vmatprep.subr.bf16.mxu0 0
  %4870 = vmatpush2.bf16.msra.mxu0 0
  %4871 = vmatprep.subr.bf16.mxu0 0
  %4872 = vmatpush2.bf16.msra.mxu0 0
  %4873 = vmatprep.subr.bf16.mxu0 0
  %4874 = vmatpush2.bf16.msra.mxu0 0
  %4875 = vmatprep.subr.bf16.mxu0 0
  %4876 = vmatpush2.bf16.msra.mxu0 0
  %4877 = vmatprep.mubr.bf16.mxu0 0
  %4878 = vmatmul.mubr.bf16.gmra.mxu0 %v4803
  %v4879 = vpop.f32.mrf.mxu0
  %v4880 = vadd.f32 0.0, %v4879
  %v4881 = vpop.f32.mrf.mxu0
  %v4882 = vpop.f32.mrf.mxu0
  %v4883 = vpop.f32.mrf.mxu0
  %4884 = vdwg.mxu0
  %v4885 = vpack.c.bf16 %v4802, %v4802
  %4886 = vmatprep.subr.bf16.mxu0 %v4212
  %4887 = vmatpush1.bf16.msra.mxu0 %v4211
  %4888 = vmatprep.subr.bf16.mxu0 %v4209
  %4889 = vmatpush1.bf16.msra.mxu0 %v4208
  %4890 = vmatprep.subr.bf16.mxu0 %v4206
  %4891 = vmatpush1.bf16.msra.mxu0 %v4205
  %4892 = vmatprep.subr.bf16.mxu0 %v4203
  %4893 = vmatpush1.bf16.msra.mxu0 %v4202
  %4894 = vmatprep.subr.bf16.mxu0 %v4200
  %4895 = vmatpush1.bf16.msra.mxu0 %v4199
  %4896 = vmatprep.subr.bf16.mxu0 %v4197
  %4897 = vmatpush1.bf16.msra.mxu0 %v4196
  %4898 = vmatprep.subr.bf16.mxu0 %v4194
  %4899 = vmatpush1.bf16.msra.mxu0 %v4193
  %4900 = vmatprep.subr.bf16.mxu0 %v4191
  %4901 = vmatpush1.bf16.msra.mxu0 %v4190
  %4902 = vmatprep.subr.bf16.mxu0 0
  %4903 = vmatpush2.bf16.msra.mxu0 0
  %4904 = vmatprep.subr.bf16.mxu0 0
  %4905 = vmatpush2.bf16.msra.mxu0 0
  %4906 = vmatprep.subr.bf16.mxu0 0
  %4907 = vmatpush2.bf16.msra.mxu0 0
  %4908 = vmatprep.subr.bf16.mxu0 0
  %4909 = vmatpush2.bf16.msra.mxu0 0
  %4910 = vmatprep.subr.bf16.mxu0 0
  %4911 = vmatpush2.bf16.msra.mxu0 0
  %4912 = vmatprep.subr.bf16.mxu0 0
  %4913 = vmatpush2.bf16.msra.mxu0 0
  %4914 = vmatprep.subr.bf16.mxu0 0
  %4915 = vmatpush2.bf16.msra.mxu0 0
  %4916 = vmatprep.subr.bf16.mxu0 0
  %4917 = vmatpush2.bf16.msra.mxu0 0
  %4918 = vmatprep.mubr.bf16.mxu0 0
  %4919 = vmatmul.mubr.bf16.gmra.mxu0 %v4885
  %v4920 = vpop.f32.mrf.mxu0
  %v4921 = vadd.f32 0.0, %v4920
  %v4922 = vpop.f32.mrf.mxu0
  %v4923 = vadd.f32 0.0, %v4922
  %v4924 = vpop.f32.mrf.mxu0
  %v4925 = vpop.f32.mrf.mxu0
  %4926 = vdwg.mxu0
  %4927 = vmatprep.subr.bf16.mxu0 0
  %4928 = vmatpush1.bf16.msra.mxu0 %v4213
  %4929 = vmatprep.subr.bf16.mxu0 0
  %4930 = vmatpush1.bf16.msra.mxu0 %v4210
  %4931 = vmatprep.subr.bf16.mxu0 0
  %4932 = vmatpush1.bf16.msra.mxu0 %v4207
  %4933 = vmatprep.subr.bf16.mxu0 0
  %4934 = vmatpush1.bf16.msra.mxu0 %v4204
  %4935 = vmatprep.subr.bf16.mxu0 0
  %4936 = vmatpush1.bf16.msra.mxu0 %v4201
  %4937 = vmatprep.subr.bf16.mxu0 0
  %4938 = vmatpush1.bf16.msra.mxu0 %v4198
  %4939 = vmatprep.subr.bf16.mxu0 0
  %4940 = vmatpush1.bf16.msra.mxu0 %v4195
  %4941 = vmatprep.subr.bf16.mxu0 0
  %4942 = vmatpush1.bf16.msra.mxu0 %v4192
  %4943 = vmatprep.subr.bf16.mxu0 0
  %4944 = vmatpush2.bf16.msra.mxu0 0
  %4945 = vmatprep.subr.bf16.mxu0 0
  %4946 = vmatpush2.bf16.msra.mxu0 0
  %4947 = vmatprep.subr.bf16.mxu0 0
  %4948 = vmatpush2.bf16.msra.mxu0 0
  %4949 = vmatprep.subr.bf16.mxu0 0
  %4950 = vmatpush2.bf16.msra.mxu0 0
  %4951 = vmatprep.subr.bf16.mxu0 0
  %4952 = vmatpush2.bf16.msra.mxu0 0
  %4953 = vmatprep.subr.bf16.mxu0 0
  %4954 = vmatpush2.bf16.msra.mxu0 0
  %4955 = vmatprep.subr.bf16.mxu0 0
  %4956 = vmatpush2.bf16.msra.mxu0 0
  %4957 = vmatprep.subr.bf16.mxu0 0
  %4958 = vmatpush2.bf16.msra.mxu0 0
  %4959 = vmatprep.mubr.bf16.mxu0 0
  %4960 = vmatmul.mubr.bf16.gmra.mxu0 %v4885
  %v4961 = vpop.f32.mrf.mxu0
  %v4962 = vadd.f32 0.0, %v4961
  %v4963 = vpop.f32.mrf.mxu0
  %v4964 = vpop.f32.mrf.mxu0
  %v4965 = vpop.f32.mrf.mxu0
  %4966 = vdwg.mxu0
  %v4967 = vld [vmem:[%s1896] sm:$0xff]
  %v4968 = vld [vmem:[%s1896 + $0x8] sm:$0xff]
  %v4969 = vld [vmem:[%s1896 + $0x10] sm:$0xff]
  %v4970 = vadd.f32 %v4967, %v4839
  %v4971 = vxor.u32 %v4970, 2147483648
  %v4972 = vmul.f32 %v4971, 1.442695
  %v4973 = vpow.pop %v4972
  %v4974 = vadd.f32 %v4973, 1.0
  %v4975 = vrcp.pop %v4974
  %v4976 = vmul.f32 1.0, %v4975
  %v4977 = vadd.f32 %v4968, %v4841
  %v4978 = vxor.u32 %v4977, 2147483648
  %v4979 = vmul.f32 %v4978, 1.442695
  %v4980 = vpow.pop %v4979
  %v4981 = vadd.f32 %v4980, 1.0
  %v4982 = vrcp.pop %v4981
  %v4983 = vmul.f32 1.0, %v4982
  %v4984 = vadd.f32 %v4880, %v4340
  %v4985 = vmul.f32 %v4976, %v4984
  %v4986 = vadd.f32 %v4969, %v4985
  %v4987 = vtanh.pop %v4986
  %v4988 = vsub.f32 %v4778, %v4987
  %v4989 = vmul.f32 %v4983, %v4988
  %v4990 = vadd.f32 %v4987, %v4989
  %v4991 = vld [vmem:[%s1923] sm:$0xff]
  %v4992 = vld [vmem:[%s1923 + $0x8] sm:$0xff]
  %v4993 = vld [vmem:[%s1923 + $0x10] sm:$0xff]
  %v4994 = vadd.f32 %v4991, %v4921
  %v4995 = vxor.u32 %v4994, 2147483648
  %v4996 = vmul.f32 %v4995, 1.442695
  %v4997 = vpow.pop %v4996
  %v4998 = vadd.f32 %v4997, 1.0
  %v4999 = vrcp.pop %v4998
  %v5000 = vmul.f32 1.0, %v4999
  %v5001 = vadd.f32 %v4992, %v4923
  %v5002 = vxor.u32 %v5001, 2147483648
  %v5003 = vmul.f32 %v5002, 1.442695
  %v5004 = vpow.pop %v5003
  %v5005 = vadd.f32 %v5004, 1.0
  %v5006 = vrcp.pop %v5005
  %v5007 = vmul.f32 1.0, %v5006
  %v5008 = vadd.f32 %v4962, %v4370
  %v5009 = vmul.f32 %v5000, %v5008
  %v5010 = vadd.f32 %v4993, %v5009
  %v5011 = vtanh.pop %v5010
  %v5012 = vsub.f32 %v4802, %v5011
  %v5013 = vmul.f32 %v5007, %v5012
  %v5014 = vadd.f32 %v5011, %v5013
  %v5015 = vpack.c.bf16 %v4990, %v4990
  %5016 = vmatprep.subr.bf16.mxu0 %v4003
  %5017 = vmatpush1.bf16.msra.mxu0 %v4002
  %5018 = vmatprep.subr.bf16.mxu0 %v4000
  %5019 = vmatpush1.bf16.msra.mxu0 %v3999
  %5020 = vmatprep.subr.bf16.mxu0 %v3997
  %5021 = vmatpush1.bf16.msra.mxu0 %v3996
  %5022 = vmatprep.subr.bf16.mxu0 %v3994
  %5023 = vmatpush1.bf16.msra.mxu0 %v3993
  %5024 = vmatprep.subr.bf16.mxu0 %v3991
  %5025 = vmatpush1.bf16.msra.mxu0 %v3990
  %5026 = vmatprep.subr.bf16.mxu0 %v3988
  %5027 = vmatpush1.bf16.msra.mxu0 %v3987
  %5028 = vmatprep.subr.bf16.mxu0 %v3985
  %5029 = vmatpush1.bf16.msra.mxu0 %v3984
  %5030 = vmatprep.subr.bf16.mxu0 %v3982
  %5031 = vmatpush1.bf16.msra.mxu0 %v3981
  %5032 = vmatprep.subr.bf16.mxu0 0
  %5033 = vmatpush2.bf16.msra.mxu0 0
  %5034 = vmatprep.subr.bf16.mxu0 0
  %5035 = vmatpush2.bf16.msra.mxu0 0
  %5036 = vmatprep.subr.bf16.mxu0 0
  %5037 = vmatpush2.bf16.msra.mxu0 0
  %5038 = vmatprep.subr.bf16.mxu0 0
  %5039 = vmatpush2.bf16.msra.mxu0 0
  %5040 = vmatprep.subr.bf16.mxu0 0
  %5041 = vmatpush2.bf16.msra.mxu0 0
  %5042 = vmatprep.subr.bf16.mxu0 0
  %5043 = vmatpush2.bf16.msra.mxu0 0
  %5044 = vmatprep.subr.bf16.mxu0 0
  %5045 = vmatpush2.bf16.msra.mxu0 0
  %5046 = vmatprep.subr.bf16.mxu0 0
  %5047 = vmatpush2.bf16.msra.mxu0 0
  %5048 = vmatprep.mubr.bf16.mxu0 0
  %5049 = vmatmul.mubr.bf16.gmra.mxu0 %v5015
  %v5050 = vpop.f32.mrf.mxu0
  %v5051 = vadd.f32 0.0, %v5050
  %v5052 = vpop.f32.mrf.mxu0
  %v5053 = vadd.f32 0.0, %v5052
  %v5054 = vpop.f32.mrf.mxu0
  %v5055 = vpop.f32.mrf.mxu0
  %5056 = vdwg.mxu0
  %5057 = vmatprep.subr.bf16.mxu0 0
  %5058 = vmatpush1.bf16.msra.mxu0 %v4004
  %5059 = vmatprep.subr.bf16.mxu0 0
  %5060 = vmatpush1.bf16.msra.mxu0 %v4001
  %5061 = vmatprep.subr.bf16.mxu0 0
  %5062 = vmatpush1.bf16.msra.mxu0 %v3998
  %5063 = vmatprep.subr.bf16.mxu0 0
  %5064 = vmatpush1.bf16.msra.mxu0 %v3995
  %5065 = vmatprep.subr.bf16.mxu0 0
  %5066 = vmatpush1.bf16.msra.mxu0 %v3992
  %5067 = vmatprep.subr.bf16.mxu0 0
  %5068 = vmatpush1.bf16.msra.mxu0 %v3989
  %5069 = vmatprep.subr.bf16.mxu0 0
  %5070 = vmatpush1.bf16.msra.mxu0 %v3986
  %5071 = vmatprep.subr.bf16.mxu0 0
  %5072 = vmatpush1.bf16.msra.mxu0 %v3983
  %5073 = vmatprep.subr.bf16.mxu0 0
  %5074 = vmatpush2.bf16.msra.mxu0 0
  %5075 = vmatprep.subr.bf16.mxu0 0
  %5076 = vmatpush2.bf16.msra.mxu0 0
  %5077 = vmatprep.subr.bf16.mxu0 0
  %5078 = vmatpush2.bf16.msra.mxu0 0
  %5079 = vmatprep.subr.bf16.mxu0 0
  %5080 = vmatpush2.bf16.msra.mxu0 0
  %5081 = vmatprep.subr.bf16.mxu0 0
  %5082 = vmatpush2.bf16.msra.mxu0 0
  %5083 = vmatprep.subr.bf16.mxu0 0
  %5084 = vmatpush2.bf16.msra.mxu0 0
  %5085 = vmatprep.subr.bf16.mxu0 0
  %5086 = vmatpush2.bf16.msra.mxu0 0
  %5087 = vmatprep.subr.bf16.mxu0 0
  %5088 = vmatpush2.bf16.msra.mxu0 0
  %5089 = vmatprep.mubr.bf16.mxu0 0
  %5090 = vmatmul.mubr.bf16.gmra.mxu0 %v5015
  %v5091 = vpop.f32.mrf.mxu0
  %v5092 = vadd.f32 0.0, %v5091
  %v5093 = vpop.f32.mrf.mxu0
  %v5094 = vpop.f32.mrf.mxu0
  %v5095 = vpop.f32.mrf.mxu0
  %5096 = vdwg.mxu0
  %v5097 = vpack.c.bf16 %v5014, %v5014
  %5098 = vmatprep.subr.bf16.mxu0 %v4212
  %5099 = vmatpush1.bf16.msra.mxu0 %v4211
  %5100 = vmatprep.subr.bf16.mxu0 %v4209
  %5101 = vmatpush1.bf16.msra.mxu0 %v4208
  %5102 = vmatprep.subr.bf16.mxu0 %v4206
  %5103 = vmatpush1.bf16.msra.mxu0 %v4205
  %5104 = vmatprep.subr.bf16.mxu0 %v4203
  %5105 = vmatpush1.bf16.msra.mxu0 %v4202
  %5106 = vmatprep.subr.bf16.mxu0 %v4200
  %5107 = vmatpush1.bf16.msra.mxu0 %v4199
  %5108 = vmatprep.subr.bf16.mxu0 %v4197
  %5109 = vmatpush1.bf16.msra.mxu0 %v4196
  %5110 = vmatprep.subr.bf16.mxu0 %v4194
  %5111 = vmatpush1.bf16.msra.mxu0 %v4193
  %5112 = vmatprep.subr.bf16.mxu0 %v4191
  %5113 = vmatpush1.bf16.msra.mxu0 %v4190
  %5114 = vmatprep.subr.bf16.mxu0 0
  %5115 = vmatpush2.bf16.msra.mxu0 0
  %5116 = vmatprep.subr.bf16.mxu0 0
  %5117 = vmatpush2.bf16.msra.mxu0 0
  %5118 = vmatprep.subr.bf16.mxu0 0
  %5119 = vmatpush2.bf16.msra.mxu0 0
  %5120 = vmatprep.subr.bf16.mxu0 0
  %5121 = vmatpush2.bf16.msra.mxu0 0
  %5122 = vmatprep.subr.bf16.mxu0 0
  %5123 = vmatpush2.bf16.msra.mxu0 0
  %5124 = vmatprep.subr.bf16.mxu0 0
  %5125 = vmatpush2.bf16.msra.mxu0 0
  %5126 = vmatprep.subr.bf16.mxu0 0
  %5127 = vmatpush2.bf16.msra.mxu0 0
  %5128 = vmatprep.subr.bf16.mxu0 0
  %5129 = vmatpush2.bf16.msra.mxu0 0
  %5130 = vmatprep.mubr.bf16.mxu0 0
  %5131 = vmatmul.mubr.bf16.gmra.mxu0 %v5097
  %v5132 = vpop.f32.mrf.mxu0
  %v5133 = vadd.f32 0.0, %v5132
  %v5134 = vpop.f32.mrf.mxu0
  %v5135 = vadd.f32 0.0, %v5134
  %v5136 = vpop.f32.mrf.mxu0
  %v5137 = vpop.f32.mrf.mxu0
  %5138 = vdwg.mxu0
  %5139 = vmatprep.subr.bf16.mxu0 0
  %5140 = vmatpush1.bf16.msra.mxu0 %v4213
  %5141 = vmatprep.subr.bf16.mxu0 0
  %5142 = vmatpush1.bf16.msra.mxu0 %v4210
  %5143 = vmatprep.subr.bf16.mxu0 0
  %5144 = vmatpush1.bf16.msra.mxu0 %v4207
  %5145 = vmatprep.subr.bf16.mxu0 0
  %5146 = vmatpush1.bf16.msra.mxu0 %v4204
  %5147 = vmatprep.subr.bf16.mxu0 0
  %5148 = vmatpush1.bf16.msra.mxu0 %v4201
  %5149 = vmatprep.subr.bf16.mxu0 0
  %5150 = vmatpush1.bf16.msra.mxu0 %v4198
  %5151 = vmatprep.subr.bf16.mxu0 0
  %5152 = vmatpush1.bf16.msra.mxu0 %v4195
  %5153 = vmatprep.subr.bf16.mxu0 0
  %5154 = vmatpush1.bf16.msra.mxu0 %v4192
  %5155 = vmatprep.subr.bf16.mxu0 0
  %5156 = vmatpush2.bf16.msra.mxu0 0
  %5157 = vmatprep.subr.bf16.mxu0 0
  %5158 = vmatpush2.bf16.msra.mxu0 0
  %5159 = vmatprep.subr.bf16.mxu0 0
  %5160 = vmatpush2.bf16.msra.mxu0 0
  %5161 = vmatprep.subr.bf16.mxu0 0
  %5162 = vmatpush2.bf16.msra.mxu0 0
  %5163 = vmatprep.subr.bf16.mxu0 0
  %5164 = vmatpush2.bf16.msra.mxu0 0
  %5165 = vmatprep.subr.bf16.mxu0 0
  %5166 = vmatpush2.bf16.msra.mxu0 0
  %5167 = vmatprep.subr.bf16.mxu0 0
  %5168 = vmatpush2.bf16.msra.mxu0 0
  %5169 = vmatprep.subr.bf16.mxu0 0
  %5170 = vmatpush2.bf16.msra.mxu0 0
  %5171 = vmatprep.mubr.bf16.mxu0 0
  %5172 = vmatmul.mubr.bf16.gmra.mxu0 %v5097
  %v5173 = vpop.f32.mrf.mxu0
  %v5174 = vadd.f32 0.0, %v5173
  %v5175 = vpop.f32.mrf.mxu0
  %v5176 = vpop.f32.mrf.mxu0
  %v5177 = vpop.f32.mrf.mxu0
  %5178 = vdwg.mxu0
  %v5179 = vld [vmem:[%s2114] sm:$0xff]
  %v5180 = vld [vmem:[%s2114 + $0x8] sm:$0xff]
  %v5181 = vld [vmem:[%s2114 + $0x10] sm:$0xff]
  %v5182 = vadd.f32 %v5179, %v5051
  %v5183 = vxor.u32 %v5182, 2147483648
  %v5184 = vmul.f32 %v5183, 1.442695
  %v5185 = vpow.pop %v5184
  %v5186 = vadd.f32 %v5185, 1.0
  %v5187 = vrcp.pop %v5186
  %v5188 = vmul.f32 1.0, %v5187
  %v5189 = vadd.f32 %v5180, %v5053
  %v5190 = vxor.u32 %v5189, 2147483648
  %v5191 = vmul.f32 %v5190, 1.442695
  %v5192 = vpow.pop %v5191
  %v5193 = vadd.f32 %v5192, 1.0
  %v5194 = vrcp.pop %v5193
  %v5195 = vmul.f32 1.0, %v5194
  %v5196 = vadd.f32 %v5092, %v4340
  %v5197 = vmul.f32 %v5188, %v5196
  %v5198 = vadd.f32 %v5181, %v5197
  %v5199 = vtanh.pop %v5198
  %v5200 = vsub.f32 %v4990, %v5199
  %v5201 = vmul.f32 %v5195, %v5200
  %v5202 = vadd.f32 %v5199, %v5201
  %v5203 = vld [vmem:[%s2140] sm:$0xff]
  %v5204 = vld [vmem:[%s2140 + $0x8] sm:$0xff]
  %v5205 = vld [vmem:[%s2140 + $0x10] sm:$0xff]
  %v5206 = vadd.f32 %v5203, %v5133
  %v5207 = vxor.u32 %v5206, 2147483648
  %v5208 = vmul.f32 %v5207, 1.442695
  %v5209 = vpow.pop %v5208
  %v5210 = vadd.f32 %v5209, 1.0
  %v5211 = vrcp.pop %v5210
  %v5212 = vmul.f32 1.0, %v5211
  %v5213 = vadd.f32 %v5204, %v5135
  %v5214 = vxor.u32 %v5213, 2147483648
  %v5215 = vmul.f32 %v5214, 1.442695
  %v5216 = vpow.pop %v5215
  %v5217 = vadd.f32 %v5216, 1.0
  %v5218 = vrcp.pop %v5217
  %v5219 = vmul.f32 1.0, %v5218
  %v5220 = vadd.f32 %v5174, %v4370
  %v5221 = vmul.f32 %v5212, %v5220
  %v5222 = vadd.f32 %v5205, %v5221
  %v5223 = vtanh.pop %v5222
  %v5224 = vsub.f32 %v5014, %v5223
  %v5225 = vmul.f32 %v5219, %v5224
  %v5226 = vadd.f32 %v5223, %v5225
  %v5227 = vpack.c.bf16 %v5202, %v5202
  %5228 = vmatprep.subr.bf16.mxu0 %v4003
  %5229 = vmatpush1.bf16.msra.mxu0 %v4002
  %5230 = vmatprep.subr.bf16.mxu0 %v4000
  %5231 = vmatpush1.bf16.msra.mxu0 %v3999
  %5232 = vmatprep.subr.bf16.mxu0 %v3997
  %5233 = vmatpush1.bf16.msra.mxu0 %v3996
  %5234 = vmatprep.subr.bf16.mxu0 %v3994
  %5235 = vmatpush1.bf16.msra.mxu0 %v3993
  %5236 = vmatprep.subr.bf16.mxu0 %v3991
  %5237 = vmatpush1.bf16.msra.mxu0 %v3990
  %5238 = vmatprep.subr.bf16.mxu0 %v3988
  %5239 = vmatpush1.bf16.msra.mxu0 %v3987
  %5240 = vmatprep.subr.bf16.mxu0 %v3985
  %5241 = vmatpush1.bf16.msra.mxu0 %v3984
  %5242 = vmatprep.subr.bf16.mxu0 %v3982
  %5243 = vmatpush1.bf16.msra.mxu0 %v3981
  %5244 = vmatprep.subr.bf16.mxu0 0
  %5245 = vmatpush2.bf16.msra.mxu0 0
  %5246 = vmatprep.subr.bf16.mxu0 0
  %5247 = vmatpush2.bf16.msra.mxu0 0
  %5248 = vmatprep.subr.bf16.mxu0 0
  %5249 = vmatpush2.bf16.msra.mxu0 0
  %5250 = vmatprep.subr.bf16.mxu0 0
  %5251 = vmatpush2.bf16.msra.mxu0 0
  %5252 = vmatprep.subr.bf16.mxu0 0
  %5253 = vmatpush2.bf16.msra.mxu0 0
  %5254 = vmatprep.subr.bf16.mxu0 0
  %5255 = vmatpush2.bf16.msra.mxu0 0
  %5256 = vmatprep.subr.bf16.mxu0 0
  %5257 = vmatpush2.bf16.msra.mxu0 0
  %5258 = vmatprep.subr.bf16.mxu0 0
  %5259 = vmatpush2.bf16.msra.mxu0 0
  %5260 = vmatprep.mubr.bf16.mxu0 0
  %5261 = vmatmul.mubr.bf16.gmra.mxu0 %v5227
  %v5262 = vpop.f32.mrf.mxu0
  %v5263 = vadd.f32 0.0, %v5262
  %v5264 = vpop.f32.mrf.mxu0
  %v5265 = vadd.f32 0.0, %v5264
  %v5266 = vpop.f32.mrf.mxu0
  %v5267 = vpop.f32.mrf.mxu0
  %5268 = vdwg.mxu0
  %5269 = vmatprep.subr.bf16.mxu0 0
  %5270 = vmatpush1.bf16.msra.mxu0 %v4004
  %5271 = vmatprep.subr.bf16.mxu0 0
  %5272 = vmatpush1.bf16.msra.mxu0 %v4001
  %5273 = vmatprep.subr.bf16.mxu0 0
  %5274 = vmatpush1.bf16.msra.mxu0 %v3998
  %5275 = vmatprep.subr.bf16.mxu0 0
  %5276 = vmatpush1.bf16.msra.mxu0 %v3995
  %5277 = vmatprep.subr.bf16.mxu0 0
  %5278 = vmatpush1.bf16.msra.mxu0 %v3992
  %5279 = vmatprep.subr.bf16.mxu0 0
  %5280 = vmatpush1.bf16.msra.mxu0 %v3989
  %5281 = vmatprep.subr.bf16.mxu0 0
  %5282 = vmatpush1.bf16.msra.mxu0 %v3986
  %5283 = vmatprep.subr.bf16.mxu0 0
  %5284 = vmatpush1.bf16.msra.mxu0 %v3983
  %5285 = vmatprep.subr.bf16.mxu0 0
  %5286 = vmatpush2.bf16.msra.mxu0 0
  %5287 = vmatprep.subr.bf16.mxu0 0
  %5288 = vmatpush2.bf16.msra.mxu0 0
  %5289 = vmatprep.subr.bf16.mxu0 0
  %5290 = vmatpush2.bf16.msra.mxu0 0
  %5291 = vmatprep.subr.bf16.mxu0 0
  %5292 = vmatpush2.bf16.msra.mxu0 0
  %5293 = vmatprep.subr.bf16.mxu0 0
  %5294 = vmatpush2.bf16.msra.mxu0 0
  %5295 = vmatprep.subr.bf16.mxu0 0
  %5296 = vmatpush2.bf16.msra.mxu0 0
  %5297 = vmatprep.subr.bf16.mxu0 0
  %5298 = vmatpush2.bf16.msra.mxu0 0
  %5299 = vmatprep.subr.bf16.mxu0 0
  %5300 = vmatpush2.bf16.msra.mxu0 0
  %5301 = vmatprep.mubr.bf16.mxu0 0
  %5302 = vmatmul.mubr.bf16.gmra.mxu0 %v5227
  %v5303 = vpop.f32.mrf.mxu0
  %v5304 = vadd.f32 0.0, %v5303
  %v5305 = vpop.f32.mrf.mxu0
  %v5306 = vpop.f32.mrf.mxu0
  %v5307 = vpop.f32.mrf.mxu0
  %5308 = vdwg.mxu0
  %v5309 = vpack.c.bf16 %v5226, %v5226
  %5310 = vmatprep.subr.bf16.mxu0 %v4212
  %5311 = vmatpush1.bf16.msra.mxu0 %v4211
  %5312 = vmatprep.subr.bf16.mxu0 %v4209
  %5313 = vmatpush1.bf16.msra.mxu0 %v4208
  %5314 = vmatprep.subr.bf16.mxu0 %v4206
  %5315 = vmatpush1.bf16.msra.mxu0 %v4205
  %5316 = vmatprep.subr.bf16.mxu0 %v4203
  %5317 = vmatpush1.bf16.msra.mxu0 %v4202
  %5318 = vmatprep.subr.bf16.mxu0 %v4200
  %5319 = vmatpush1.bf16.msra.mxu0 %v4199
  %5320 = vmatprep.subr.bf16.mxu0 %v4197
  %5321 = vmatpush1.bf16.msra.mxu0 %v4196
  %5322 = vmatprep.subr.bf16.mxu0 %v4194
  %5323 = vmatpush1.bf16.msra.mxu0 %v4193
  %5324 = vmatprep.subr.bf16.mxu0 %v4191
  %5325 = vmatpush1.bf16.msra.mxu0 %v4190
  %5326 = vmatprep.subr.bf16.mxu0 0
  %5327 = vmatpush2.bf16.msra.mxu0 0
  %5328 = vmatprep.subr.bf16.mxu0 0
  %5329 = vmatpush2.bf16.msra.mxu0 0
  %5330 = vmatprep.subr.bf16.mxu0 0
  %5331 = vmatpush2.bf16.msra.mxu0 0
  %5332 = vmatprep.subr.bf16.mxu0 0
  %5333 = vmatpush2.bf16.msra.mxu0 0
  %5334 = vmatprep.subr.bf16.mxu0 0
  %5335 = vmatpush2.bf16.msra.mxu0 0
  %5336 = vmatprep.subr.bf16.mxu0 0
  %5337 = vmatpush2.bf16.msra.mxu0 0
  %5338 = vmatprep.subr.bf16.mxu0 0
  %5339 = vmatpush2.bf16.msra.mxu0 0
  %5340 = vmatprep.subr.bf16.mxu0 0
  %5341 = vmatpush2.bf16.msra.mxu0 0
  %5342 = vmatprep.mubr.bf16.mxu0 0
  %5343 = vmatmul.mubr.bf16.gmra.mxu0 %v5309
  %v5344 = vpop.f32.mrf.mxu0
  %v5345 = vadd.f32 0.0, %v5344
  %v5346 = vpop.f32.mrf.mxu0
  %v5347 = vadd.f32 0.0, %v5346
  %v5348 = vpop.f32.mrf.mxu0
  %v5349 = vpop.f32.mrf.mxu0
  %5350 = vdwg.mxu0
  %5351 = vmatprep.subr.bf16.mxu0 0
  %5352 = vmatpush1.bf16.msra.mxu0 %v4213
  %5353 = vmatprep.subr.bf16.mxu0 0
  %5354 = vmatpush1.bf16.msra.mxu0 %v4210
  %5355 = vmatprep.subr.bf16.mxu0 0
  %5356 = vmatpush1.bf16.msra.mxu0 %v4207
  %5357 = vmatprep.subr.bf16.mxu0 0
  %5358 = vmatpush1.bf16.msra.mxu0 %v4204
  %5359 = vmatprep.subr.bf16.mxu0 0
  %5360 = vmatpush1.bf16.msra.mxu0 %v4201
  %5361 = vmatprep.subr.bf16.mxu0 0
  %5362 = vmatpush1.bf16.msra.mxu0 %v4198
  %5363 = vmatprep.subr.bf16.mxu0 0
  %5364 = vmatpush1.bf16.msra.mxu0 %v4195
  %5365 = vmatprep.subr.bf16.mxu0 0
  %5366 = vmatpush1.bf16.msra.mxu0 %v4192
  %5367 = vmatprep.subr.bf16.mxu0 0
  %5368 = vmatpush2.bf16.msra.mxu0 0
  %5369 = vmatprep.subr.bf16.mxu0 0
  %5370 = vmatpush2.bf16.msra.mxu0 0
  %5371 = vmatprep.subr.bf16.mxu0 0
  %5372 = vmatpush2.bf16.msra.mxu0 0
  %5373 = vmatprep.subr.bf16.mxu0 0
  %5374 = vmatpush2.bf16.msra.mxu0 0
  %5375 = vmatprep.subr.bf16.mxu0 0
  %5376 = vmatpush2.bf16.msra.mxu0 0
  %5377 = vmatprep.subr.bf16.mxu0 0
  %5378 = vmatpush2.bf16.msra.mxu0 0
  %5379 = vmatprep.subr.bf16.mxu0 0
  %5380 = vmatpush2.bf16.msra.mxu0 0
  %5381 = vmatprep.subr.bf16.mxu0 0
  %5382 = vmatpush2.bf16.msra.mxu0 0
  %5383 = vmatprep.mubr.bf16.mxu0 0
  %5384 = vmatmul.mubr.bf16.gmra.mxu0 %v5309
  %v5385 = vpop.f32.mrf.mxu0
  %v5386 = vadd.f32 0.0, %v5385
  %v5387 = vpop.f32.mrf.mxu0
  %v5388 = vpop.f32.mrf.mxu0
  %v5389 = vpop.f32.mrf.mxu0
  %5390 = vdwg.mxu0
  %v5391 = vld [vmem:[%s2330] sm:$0xff]
  %v5392 = vld [vmem:[%s2330 + $0x8] sm:$0xff]
  %v5393 = vld [vmem:[%s2330 + $0x10] sm:$0xff]
  %v5394 = vadd.f32 %v5391, %v5263
  %v5395 = vxor.u32 %v5394, 2147483648
  %v5396 = vmul.f32 %v5395, 1.442695
  %v5397 = vpow.pop %v5396
  %v5398 = vadd.f32 %v5397, 1.0
  %v5399 = vrcp.pop %v5398
  %v5400 = vmul.f32 1.0, %v5399
  %v5401 = vadd.f32 %v5392, %v5265
  %v5402 = vxor.u32 %v5401, 2147483648
  %v5403 = vmul.f32 %v5402, 1.442695
  %v5404 = vpow.pop %v5403
  %v5405 = vadd.f32 %v5404, 1.0
  %v5406 = vrcp.pop %v5405
  %v5407 = vmul.f32 1.0, %v5406
  %v5408 = vadd.f32 %v5304, %v4340
  %v5409 = vmul.f32 %v5400, %v5408
  %v5410 = vadd.f32 %v5393, %v5409
  %v5411 = vtanh.pop %v5410
  %v5412 = vsub.f32 %v5202, %v5411
  %v5413 = vmul.f32 %v5407, %v5412
  %v5414 = vadd.f32 %v5411, %v5413
  %v5415 = vld [vmem:[%s2356] sm:$0xff]
  %v5416 = vld [vmem:[%s2356 + $0x8] sm:$0xff]
  %v5417 = vld [vmem:[%s2356 + $0x10] sm:$0xff]
  %v5418 = vadd.f32 %v5415, %v5345
  %v5419 = vxor.u32 %v5418, 2147483648
  %v5420 = vmul.f32 %v5419, 1.442695
  %v5421 = vpow.pop %v5420
  %v5422 = vadd.f32 %v5421, 1.0
  %v5423 = vrcp.pop %v5422
  %v5424 = vmul.f32 1.0, %v5423
  %v5425 = vadd.f32 %v5416, %v5347
  %v5426 = vxor.u32 %v5425, 2147483648
  %v5427 = vmul.f32 %v5426, 1.442695
  %v5428 = vpow.pop %v5427
  %v5429 = vadd.f32 %v5428, 1.0
  %v5430 = vrcp.pop %v5429
  %v5431 = vmul.f32 1.0, %v5430
  %v5432 = vadd.f32 %v5386, %v4370
  %v5433 = vmul.f32 %v5424, %v5432
  %v5434 = vadd.f32 %v5417, %v5433
  %v5435 = vtanh.pop %v5434
  %v5436 = vsub.f32 %v5226, %v5435
  %v5437 = vmul.f32 %v5431, %v5436
  %v5438 = vadd.f32 %v5435, %v5437
  %v5439 = vpack.c.bf16 %v5414, %v5414
  %5440 = vmatprep.subr.bf16.mxu0 %v4003
  %5441 = vmatpush1.bf16.msra.mxu0 %v4002
  %5442 = vmatprep.subr.bf16.mxu0 %v4000
  %5443 = vmatpush1.bf16.msra.mxu0 %v3999
  %5444 = vmatprep.subr.bf16.mxu0 %v3997
  %5445 = vmatpush1.bf16.msra.mxu0 %v3996
  %5446 = vmatprep.subr.bf16.mxu0 %v3994
  %5447 = vmatpush1.bf16.msra.mxu0 %v3993
  %5448 = vmatprep.subr.bf16.mxu0 %v3991
  %5449 = vmatpush1.bf16.msra.mxu0 %v3990
  %5450 = vmatprep.subr.bf16.mxu0 %v3988
  %5451 = vmatpush1.bf16.msra.mxu0 %v3987
  %5452 = vmatprep.subr.bf16.mxu0 %v3985
  %5453 = vmatpush1.bf16.msra.mxu0 %v3984
  %5454 = vmatprep.subr.bf16.mxu0 %v3982
  %5455 = vmatpush1.bf16.msra.mxu0 %v3981
  %5456 = vmatprep.subr.bf16.mxu0 0
  %5457 = vmatpush2.bf16.msra.mxu0 0
  %5458 = vmatprep.subr.bf16.mxu0 0
  %5459 = vmatpush2.bf16.msra.mxu0 0
  %5460 = vmatprep.subr.bf16.mxu0 0
  %5461 = vmatpush2.bf16.msra.mxu0 0
  %5462 = vmatprep.subr.bf16.mxu0 0
  %5463 = vmatpush2.bf16.msra.mxu0 0
  %5464 = vmatprep.subr.bf16.mxu0 0
  %5465 = vmatpush2.bf16.msra.mxu0 0
  %5466 = vmatprep.subr.bf16.mxu0 0
  %5467 = vmatpush2.bf16.msra.mxu0 0
  %5468 = vmatprep.subr.bf16.mxu0 0
  %5469 = vmatpush2.bf16.msra.mxu0 0
  %5470 = vmatprep.subr.bf16.mxu0 0
  %5471 = vmatpush2.bf16.msra.mxu0 0
  %5472 = vmatprep.mubr.bf16.mxu0 0
  %5473 = vmatmul.mubr.bf16.gmra.mxu0 %v5439
  %v5474 = vpop.f32.mrf.mxu0
  %v5475 = vadd.f32 0.0, %v5474
  %v5476 = vpop.f32.mrf.mxu0
  %v5477 = vadd.f32 0.0, %v5476
  %v5478 = vpop.f32.mrf.mxu0
  %v5479 = vpop.f32.mrf.mxu0
  %5480 = vdwg.mxu0
  %5481 = vmatprep.subr.bf16.mxu0 0
  %5482 = vmatpush1.bf16.msra.mxu0 %v4004
  %5483 = vmatprep.subr.bf16.mxu0 0
  %5484 = vmatpush1.bf16.msra.mxu0 %v4001
  %5485 = vmatprep.subr.bf16.mxu0 0
  %5486 = vmatpush1.bf16.msra.mxu0 %v3998
  %5487 = vmatprep.subr.bf16.mxu0 0
  %5488 = vmatpush1.bf16.msra.mxu0 %v3995
  %5489 = vmatprep.subr.bf16.mxu0 0
  %5490 = vmatpush1.bf16.msra.mxu0 %v3992
  %5491 = vmatprep.subr.bf16.mxu0 0
  %5492 = vmatpush1.bf16.msra.mxu0 %v3989
  %5493 = vmatprep.subr.bf16.mxu0 0
  %5494 = vmatpush1.bf16.msra.mxu0 %v3986
  %5495 = vmatprep.subr.bf16.mxu0 0
  %5496 = vmatpush1.bf16.msra.mxu0 %v3983
  %5497 = vmatprep.subr.bf16.mxu0 0
  %5498 = vmatpush2.bf16.msra.mxu0 0
  %5499 = vmatprep.subr.bf16.mxu0 0
  %5500 = vmatpush2.bf16.msra.mxu0 0
  %5501 = vmatprep.subr.bf16.mxu0 0
  %5502 = vmatpush2.bf16.msra.mxu0 0
  %5503 = vmatprep.subr.bf16.mxu0 0
  %5504 = vmatpush2.bf16.msra.mxu0 0
  %5505 = vmatprep.subr.bf16.mxu0 0
  %5506 = vmatpush2.bf16.msra.mxu0 0
  %5507 = vmatprep.subr.bf16.mxu0 0
  %5508 = vmatpush2.bf16.msra.mxu0 0
  %5509 = vmatprep.subr.bf16.mxu0 0
  %5510 = vmatpush2.bf16.msra.mxu0 0
  %5511 = vmatprep.subr.bf16.mxu0 0
  %5512 = vmatpush2.bf16.msra.mxu0 0
  %5513 = vmatprep.mubr.bf16.mxu0 0
  %5514 = vmatmul.mubr.bf16.gmra.mxu0 %v5439
  %v5515 = vpop.f32.mrf.mxu0
  %v5516 = vadd.f32 0.0, %v5515
  %v5517 = vpop.f32.mrf.mxu0
  %v5518 = vpop.f32.mrf.mxu0
  %v5519 = vpop.f32.mrf.mxu0
  %5520 = vdwg.mxu0
  %v5521 = vpack.c.bf16 %v5438, %v5438
  %5522 = vmatprep.subr.bf16.mxu0 %v4212
  %5523 = vmatpush1.bf16.msra.mxu0 %v4211
  %5524 = vmatprep.subr.bf16.mxu0 %v4209
  %5525 = vmatpush1.bf16.msra.mxu0 %v4208
  %5526 = vmatprep.subr.bf16.mxu0 %v4206
  %5527 = vmatpush1.bf16.msra.mxu0 %v4205
  %5528 = vmatprep.subr.bf16.mxu0 %v4203
  %5529 = vmatpush1.bf16.msra.mxu0 %v4202
  %5530 = vmatprep.subr.bf16.mxu0 %v4200
  %5531 = vmatpush1.bf16.msra.mxu0 %v4199
  %5532 = vmatprep.subr.bf16.mxu0 %v4197
  %5533 = vmatpush1.bf16.msra.mxu0 %v4196
  %5534 = vmatprep.subr.bf16.mxu0 %v4194
  %5535 = vmatpush1.bf16.msra.mxu0 %v4193
  %5536 = vmatprep.subr.bf16.mxu0 %v4191
  %5537 = vmatpush1.bf16.msra.mxu0 %v4190
  %5538 = vmatprep.subr.bf16.mxu0 0
  %5539 = vmatpush2.bf16.msra.mxu0 0
  %5540 = vmatprep.subr.bf16.mxu0 0
  %5541 = vmatpush2.bf16.msra.mxu0 0
  %5542 = vmatprep.subr.bf16.mxu0 0
  %5543 = vmatpush2.bf16.msra.mxu0 0
  %5544 = vmatprep.subr.bf16.mxu0 0
  %5545 = vmatpush2.bf16.msra.mxu0 0
  %5546 = vmatprep.subr.bf16.mxu0 0
  %5547 = vmatpush2.bf16.msra.mxu0 0
  %5548 = vmatprep.subr.bf16.mxu0 0
  %5549 = vmatpush2.bf16.msra.mxu0 0
  %5550 = vmatprep.subr.bf16.mxu0 0
  %5551 = vmatpush2.bf16.msra.mxu0 0
  %5552 = vmatprep.subr.bf16.mxu0 0
  %5553 = vmatpush2.bf16.msra.mxu0 0
  %5554 = vmatprep.mubr.bf16.mxu0 0
  %5555 = vmatmul.mubr.bf16.gmra.mxu0 %v5521
  %v5556 = vpop.f32.mrf.mxu0
  %v5557 = vadd.f32 0.0, %v5556
  %v5558 = vpop.f32.mrf.mxu0
  %v5559 = vadd.f32 0.0, %v5558
  %v5560 = vpop.f32.mrf.mxu0
  %v5561 = vpop.f32.mrf.mxu0
  %5562 = vdwg.mxu0
  %5563 = vmatprep.subr.bf16.mxu0 0
  %5564 = vmatpush1.bf16.msra.mxu0 %v4213
  %5565 = vmatprep.subr.bf16.mxu0 0
  %5566 = vmatpush1.bf16.msra.mxu0 %v4210
  %5567 = vmatprep.subr.bf16.mxu0 0
  %5568 = vmatpush1.bf16.msra.mxu0 %v4207
  %5569 = vmatprep.subr.bf16.mxu0 0
  %5570 = vmatpush1.bf16.msra.mxu0 %v4204
  %5571 = vmatprep.subr.bf16.mxu0 0
  %5572 = vmatpush1.bf16.msra.mxu0 %v4201
  %5573 = vmatprep.subr.bf16.mxu0 0
  %5574 = vmatpush1.bf16.msra.mxu0 %v4198
  %5575 = vmatprep.subr.bf16.mxu0 0
  %5576 = vmatpush1.bf16.msra.mxu0 %v4195
  %5577 = vmatprep.subr.bf16.mxu0 0
  %5578 = vmatpush1.bf16.msra.mxu0 %v4192
  %5579 = vmatprep.subr.bf16.mxu0 0
  %5580 = vmatpush2.bf16.msra.mxu0 0
  %5581 = vmatprep.subr.bf16.mxu0 0
  %5582 = vmatpush2.bf16.msra.mxu0 0
  %5583 = vmatprep.subr.bf16.mxu0 0
  %5584 = vmatpush2.bf16.msra.mxu0 0
  %5585 = vmatprep.subr.bf16.mxu0 0
  %5586 = vmatpush2.bf16.msra.mxu0 0
  %5587 = vmatprep.subr.bf16.mxu0 0
  %5588 = vmatpush2.bf16.msra.mxu0 0
  %5589 = vmatprep.subr.bf16.mxu0 0
  %5590 = vmatpush2.bf16.msra.mxu0 0
  %5591 = vmatprep.subr.bf16.mxu0 0
  %5592 = vmatpush2.bf16.msra.mxu0 0
  %5593 = vmatprep.subr.bf16.mxu0 0
  %5594 = vmatpush2.bf16.msra.mxu0 0
  %5595 = vmatprep.mubr.bf16.mxu0 0
  %5596 = vmatmul.mubr.bf16.gmra.mxu0 %v5521
  %v5597 = vpop.f32.mrf.mxu0
  %v5598 = vadd.f32 0.0, %v5597
  %v5599 = vpop.f32.mrf.mxu0
  %v5600 = vpop.f32.mrf.mxu0
  %v5601 = vpop.f32.mrf.mxu0
  %5602 = vdwg.mxu0
  %v5603 = vld [vmem:[%s2546] sm:$0xff]
  %v5604 = vld [vmem:[%s2546 + $0x8] sm:$0xff]
  %v5605 = vld [vmem:[%s2546 + $0x10] sm:$0xff]
  %v5606 = vadd.f32 %v5603, %v5475
  %v5607 = vxor.u32 %v5606, 2147483648
  %v5608 = vmul.f32 %v5607, 1.442695
  %v5609 = vpow.pop %v5608
  %v5610 = vadd.f32 %v5609, 1.0
  %v5611 = vrcp.pop %v5610
  %v5612 = vmul.f32 1.0, %v5611
  %v5613 = vadd.f32 %v5604, %v5477
  %v5614 = vxor.u32 %v5613, 2147483648
  %v5615 = vmul.f32 %v5614, 1.442695
  %v5616 = vpow.pop %v5615
  %v5617 = vadd.f32 %v5616, 1.0
  %v5618 = vrcp.pop %v5617
  %v5619 = vmul.f32 1.0, %v5618
  %v5620 = vadd.f32 %v5516, %v4340
  %v5621 = vmul.f32 %v5612, %v5620
  %v5622 = vadd.f32 %v5605, %v5621
  %v5623 = vtanh.pop %v5622
  %v5624 = vsub.f32 %v5414, %v5623
  %v5625 = vmul.f32 %v5619, %v5624
  %v5626 = vadd.f32 %v5623, %v5625
  %v5627 = vld [vmem:[%s2572] sm:$0xff]
  %v5628 = vld [vmem:[%s2572 + $0x8] sm:$0xff]
  %v5629 = vld [vmem:[%s2572 + $0x10] sm:$0xff]
  %v5630 = vadd.f32 %v5627, %v5557
  %v5631 = vxor.u32 %v5630, 2147483648
  %v5632 = vmul.f32 %v5631, 1.442695
  %v5633 = vpow.pop %v5632
  %v5634 = vadd.f32 %v5633, 1.0
  %v5635 = vrcp.pop %v5634
  %v5636 = vmul.f32 1.0, %v5635
  %v5637 = vadd.f32 %v5628, %v5559
  %v5638 = vxor.u32 %v5637, 2147483648
  %v5639 = vmul.f32 %v5638, 1.442695
  %v5640 = vpow.pop %v5639
  %v5641 = vadd.f32 %v5640, 1.0
  %v5642 = vrcp.pop %v5641
  %v5643 = vmul.f32 1.0, %v5642
  %v5644 = vadd.f32 %v5598, %v4370
  %v5645 = vmul.f32 %v5636, %v5644
  %v5646 = vadd.f32 %v5629, %v5645
  %v5647 = vtanh.pop %v5646
  %v5648 = vsub.f32 %v5438, %v5647
  %v5649 = vmul.f32 %v5643, %v5648
  %v5650 = vadd.f32 %v5647, %v5649
  %v5651 = vpack.c.bf16 %v5626, %v5626
  %5652 = vmatprep.subr.bf16.mxu0 %v4003
  %5653 = vmatpush1.bf16.msra.mxu0 %v4002
  %5654 = vmatprep.subr.bf16.mxu0 %v4000
  %5655 = vmatpush1.bf16.msra.mxu0 %v3999
  %5656 = vmatprep.subr.bf16.mxu0 %v3997
  %5657 = vmatpush1.bf16.msra.mxu0 %v3996
  %5658 = vmatprep.subr.bf16.mxu0 %v3994
  %5659 = vmatpush1.bf16.msra.mxu0 %v3993
  %5660 = vmatprep.subr.bf16.mxu0 %v3991
  %5661 = vmatpush1.bf16.msra.mxu0 %v3990
  %5662 = vmatprep.subr.bf16.mxu0 %v3988
  %5663 = vmatpush1.bf16.msra.mxu0 %v3987
  %5664 = vmatprep.subr.bf16.mxu0 %v3985
  %5665 = vmatpush1.bf16.msra.mxu0 %v3984
  %5666 = vmatprep.subr.bf16.mxu0 %v3982
  %5667 = vmatpush1.bf16.msra.mxu0 %v3981
  %5668 = vmatprep.subr.bf16.mxu0 0
  %5669 = vmatpush2.bf16.msra.mxu0 0
  %5670 = vmatprep.subr.bf16.mxu0 0
  %5671 = vmatpush2.bf16.msra.mxu0 0
  %5672 = vmatprep.subr.bf16.mxu0 0
  %5673 = vmatpush2.bf16.msra.mxu0 0
  %5674 = vmatprep.subr.bf16.mxu0 0
  %5675 = vmatpush2.bf16.msra.mxu0 0
  %5676 = vmatprep.subr.bf16.mxu0 0
  %5677 = vmatpush2.bf16.msra.mxu0 0
  %5678 = vmatprep.subr.bf16.mxu0 0
  %5679 = vmatpush2.bf16.msra.mxu0 0
  %5680 = vmatprep.subr.bf16.mxu0 0
  %5681 = vmatpush2.bf16.msra.mxu0 0
  %5682 = vmatprep.subr.bf16.mxu0 0
  %5683 = vmatpush2.bf16.msra.mxu0 0
  %5684 = vmatprep.mubr.bf16.mxu0 0
  %5685 = vmatmul.mubr.bf16.gmra.mxu0 %v5651
  %v5686 = vpop.f32.mrf.mxu0
  %v5687 = vadd.f32 0.0, %v5686
  %v5688 = vpop.f32.mrf.mxu0
  %v5689 = vadd.f32 0.0, %v5688
  %v5690 = vpop.f32.mrf.mxu0
  %v5691 = vpop.f32.mrf.mxu0
  %5692 = vdwg.mxu0
  %5693 = vmatprep.subr.bf16.mxu0 0
  %5694 = vmatpush1.bf16.msra.mxu0 %v4004
  %5695 = vmatprep.subr.bf16.mxu0 0
  %5696 = vmatpush1.bf16.msra.mxu0 %v4001
  %5697 = vmatprep.subr.bf16.mxu0 0
  %5698 = vmatpush1.bf16.msra.mxu0 %v3998
  %5699 = vmatprep.subr.bf16.mxu0 0
  %5700 = vmatpush1.bf16.msra.mxu0 %v3995
  %5701 = vmatprep.subr.bf16.mxu0 0
  %5702 = vmatpush1.bf16.msra.mxu0 %v3992
  %5703 = vmatprep.subr.bf16.mxu0 0
  %5704 = vmatpush1.bf16.msra.mxu0 %v3989
  %5705 = vmatprep.subr.bf16.mxu0 0
  %5706 = vmatpush1.bf16.msra.mxu0 %v3986
  %5707 = vmatprep.subr.bf16.mxu0 0
  %5708 = vmatpush1.bf16.msra.mxu0 %v3983
  %5709 = vmatprep.subr.bf16.mxu0 0
  %5710 = vmatpush2.bf16.msra.mxu0 0
  %5711 = vmatprep.subr.bf16.mxu0 0
  %5712 = vmatpush2.bf16.msra.mxu0 0
  %5713 = vmatprep.subr.bf16.mxu0 0
  %5714 = vmatpush2.bf16.msra.mxu0 0
  %5715 = vmatprep.subr.bf16.mxu0 0
  %5716 = vmatpush2.bf16.msra.mxu0 0
  %5717 = vmatprep.subr.bf16.mxu0 0
  %5718 = vmatpush2.bf16.msra.mxu0 0
  %5719 = vmatprep.subr.bf16.mxu0 0
  %5720 = vmatpush2.bf16.msra.mxu0 0
  %5721 = vmatprep.subr.bf16.mxu0 0
  %5722 = vmatpush2.bf16.msra.mxu0 0
  %5723 = vmatprep.subr.bf16.mxu0 0
  %5724 = vmatpush2.bf16.msra.mxu0 0
  %5725 = vmatprep.mubr.bf16.mxu0 0
  %5726 = vmatmul.mubr.bf16.gmra.mxu0 %v5651
  %v5727 = vpop.f32.mrf.mxu0
  %v5728 = vadd.f32 0.0, %v5727
  %v5729 = vpop.f32.mrf.mxu0
  %v5730 = vpop.f32.mrf.mxu0
  %v5731 = vpop.f32.mrf.mxu0
  %5732 = vdwg.mxu0
  %v5733 = vpack.c.bf16 %v5650, %v5650
  %5734 = vmatprep.subr.bf16.mxu0 %v4212
  %5735 = vmatpush1.bf16.msra.mxu0 %v4211
  %5736 = vmatprep.subr.bf16.mxu0 %v4209
  %5737 = vmatpush1.bf16.msra.mxu0 %v4208
  %5738 = vmatprep.subr.bf16.mxu0 %v4206
  %5739 = vmatpush1.bf16.msra.mxu0 %v4205
  %5740 = vmatprep.subr.bf16.mxu0 %v4203
  %5741 = vmatpush1.bf16.msra.mxu0 %v4202
  %5742 = vmatprep.subr.bf16.mxu0 %v4200
  %5743 = vmatpush1.bf16.msra.mxu0 %v4199
  %5744 = vmatprep.subr.bf16.mxu0 %v4197
  %5745 = vmatpush1.bf16.msra.mxu0 %v4196
  %5746 = vmatprep.subr.bf16.mxu0 %v4194
  %5747 = vmatpush1.bf16.msra.mxu0 %v4193
  %5748 = vmatprep.subr.bf16.mxu0 %v4191
  %5749 = vmatpush1.bf16.msra.mxu0 %v4190
  %5750 = vmatprep.subr.bf16.mxu0 0
  %5751 = vmatpush2.bf16.msra.mxu0 0
  %5752 = vmatprep.subr.bf16.mxu0 0
  %5753 = vmatpush2.bf16.msra.mxu0 0
  %5754 = vmatprep.subr.bf16.mxu0 0
  %5755 = vmatpush2.bf16.msra.mxu0 0
  %5756 = vmatprep.subr.bf16.mxu0 0
  %5757 = vmatpush2.bf16.msra.mxu0 0
  %5758 = vmatprep.subr.bf16.mxu0 0
  %5759 = vmatpush2.bf16.msra.mxu0 0
  %5760 = vmatprep.subr.bf16.mxu0 0
  %5761 = vmatpush2.bf16.msra.mxu0 0
  %5762 = vmatprep.subr.bf16.mxu0 0
  %5763 = vmatpush2.bf16.msra.mxu0 0
  %5764 = vmatprep.subr.bf16.mxu0 0
  %5765 = vmatpush2.bf16.msra.mxu0 0
  %5766 = vmatprep.mubr.bf16.mxu0 0
  %5767 = vmatmul.mubr.bf16.gmra.mxu0 %v5733
  %v5768 = vpop.f32.mrf.mxu0
  %v5769 = vadd.f32 0.0, %v5768
  %v5770 = vpop.f32.mrf.mxu0
  %v5771 = vadd.f32 0.0, %v5770
  %v5772 = vpop.f32.mrf.mxu0
  %v5773 = vpop.f32.mrf.mxu0
  %5774 = vdwg.mxu0
  %5775 = vmatprep.subr.bf16.mxu0 0
  %5776 = vmatpush1.bf16.msra.mxu0 %v4213
  %5777 = vmatprep.subr.bf16.mxu0 0
  %5778 = vmatpush1.bf16.msra.mxu0 %v4210
  %5779 = vmatprep.subr.bf16.mxu0 0
  %5780 = vmatpush1.bf16.msra.mxu0 %v4207
  %5781 = vmatprep.subr.bf16.mxu0 0
  %5782 = vmatpush1.bf16.msra.mxu0 %v4204
  %5783 = vmatprep.subr.bf16.mxu0 0
  %5784 = vmatpush1.bf16.msra.mxu0 %v4201
  %5785 = vmatprep.subr.bf16.mxu0 0
  %5786 = vmatpush1.bf16.msra.mxu0 %v4198
  %5787 = vmatprep.subr.bf16.mxu0 0
  %5788 = vmatpush1.bf16.msra.mxu0 %v4195
  %5789 = vmatprep.subr.bf16.mxu0 0
  %5790 = vmatpush1.bf16.msra.mxu0 %v4192
  %5791 = vmatprep.subr.bf16.mxu0 0
  %5792 = vmatpush2.bf16.msra.mxu0 0
  %5793 = vmatprep.subr.bf16.mxu0 0
  %5794 = vmatpush2.bf16.msra.mxu0 0
  %5795 = vmatprep.subr.bf16.mxu0 0
  %5796 = vmatpush2.bf16.msra.mxu0 0
  %5797 = vmatprep.subr.bf16.mxu0 0
  %5798 = vmatpush2.bf16.msra.mxu0 0
  %5799 = vmatprep.subr.bf16.mxu0 0
  %5800 = vmatpush2.bf16.msra.mxu0 0
  %5801 = vmatprep.subr.bf16.mxu0 0
  %5802 = vmatpush2.bf16.msra.mxu0 0
  %5803 = vmatprep.subr.bf16.mxu0 0
  %5804 = vmatpush2.bf16.msra.mxu0 0
  %5805 = vmatprep.subr.bf16.mxu0 0
  %5806 = vmatpush2.bf16.msra.mxu0 0
  %5807 = vmatprep.mubr.bf16.mxu0 0
  %5808 = vmatmul.mubr.bf16.gmra.mxu0 %v5733
  %v5809 = vpop.f32.mrf.mxu0
  %v5810 = vadd.f32 0.0, %v5809
  %v5811 = vpop.f32.mrf.mxu0
  %v5812 = vpop.f32.mrf.mxu0
  %v5813 = vpop.f32.mrf.mxu0
  %5814 = vdwg.mxu0
  %v5815 = vld [vmem:[%s2762] sm:$0xff]
  %v5816 = vld [vmem:[%s2762 + $0x8] sm:$0xff]
  %v5817 = vld [vmem:[%s2762 + $0x10] sm:$0xff]
  %v5818 = vadd.f32 %v5815, %v5687
  %v5819 = vxor.u32 %v5818, 2147483648
  %v5820 = vmul.f32 %v5819, 1.442695
  %v5821 = vpow.pop %v5820
  %v5822 = vadd.f32 %v5821, 1.0
  %v5823 = vrcp.pop %v5822
  %v5824 = vmul.f32 1.0, %v5823
  %v5825 = vadd.f32 %v5816, %v5689
  %v5826 = vxor.u32 %v5825, 2147483648
  %v5827 = vmul.f32 %v5826, 1.442695
  %v5828 = vpow.pop %v5827
  %v5829 = vadd.f32 %v5828, 1.0
  %v5830 = vrcp.pop %v5829
  %v5831 = vmul.f32 1.0, %v5830
  %v5832 = vadd.f32 %v5728, %v4340
  %v5833 = vmul.f32 %v5824, %v5832
  %v5834 = vadd.f32 %v5817, %v5833
  %v5835 = vtanh.pop %v5834
  %v5836 = vsub.f32 %v5626, %v5835
  %v5837 = vmul.f32 %v5831, %v5836
  %v5838 = vadd.f32 %v5835, %v5837
  %v5839 = vld [vmem:[%s756] sm:$0xff]
  %v5840 = vld [vmem:[%s756 + $0x8] sm:$0xff]
  %v5841 = vld [vmem:[%s756 + $0x10] sm:$0xff]
  %v5842 = vadd.f32 %v5839, %v5769
  %v5843 = vxor.u32 %v5842, 2147483648
  %v5844 = vmul.f32 %v5843, 1.442695
  %v5845 = vpow.pop %v5844
  %v5846 = vadd.f32 %v5845, 1.0
  %v5847 = vrcp.pop %v5846
  %v5848 = vmul.f32 1.0, %v5847
  %v5849 = vadd.f32 %v5840, %v5771
  %v5850 = vxor.u32 %v5849, 2147483648
  %v5851 = vmul.f32 %v5850, 1.442695
  %v5852 = vpow.pop %v5851
  %v5853 = vadd.f32 %v5852, 1.0
  %v5854 = vrcp.pop %v5853
  %v5855 = vmul.f32 1.0, %v5854
  %v5856 = vadd.f32 %v5810, %v4370
  %v5857 = vmul.f32 %v5848, %v5856
  %v5858 = vadd.f32 %v5841, %v5857
  %v5859 = vtanh.pop %v5858
  %v5860 = vsub.f32 %v5650, %v5859
  %v5861 = vmul.f32 %v5855, %v5860
  %v5862 = vadd.f32 %v5859, %v5861
  %v5863 = vmax.f32 %v5838, %v5862
  %5864 = vst [vmem:[%s17] sm:$0xff] %v5863
  // Predicated region
  $region70: #{base_encoder_forward.1} parent=0 // pred_check
    _
  $region71: #{base_encoder_forward.1} parent=0 // pred_check_branch
    %5866 = sbr.rel (0) target = $region73
  $region72: #{base_encoder_forward.1} parent=0 // pred_region
    _
  $region73: #{base_encoder_forward.1} parent=0 // pred_fallthru
    _
  // Predicated region
  $region74: #{base_encoder_forward.1} parent=0 // pred_check
    _
  $region75: #{base_encoder_forward.1} parent=0 // pred_check_branch
    %5868 = sbr.rel (0) target = $region77
  $region76: #{base_encoder_forward.1} parent=0 // pred_region
    _
  $region77: #{base_encoder_forward.1} parent=0 // pred_fallthru
    _

</llo_original>
